<compile_context>
chip_gen: v7x
topology: tpu7x:2x2x1
jax: 0.10.0
libtpu: 0.0.40
codegen_flags: <defaults>
</compile_context>

<pallas_src>
import functools

import jax
import jax.numpy as jnp
from jax import lax
from jax.experimental import pallas as pl
from jax.experimental.pallas import tpu as pltpu

C = 64                       # channel width of the generator
NEG_SLOPE = 0.01             # PyTorch F.leaky_relu default
K_T, STRIDE_T, PAD_T = 16, 4, 6          # ConvTranspose1d params
PT = K_T - 1 - PAD_T                     # equivalent-conv padding (= 9)
PMAX = 9                                 # largest halo any conv reads (positions)
RIGHT = 16                               # right halo (positions), >= PMAX
TB = 4                                   # batch elements fused into the lane dim (TB*L = 128)


def _leaky(x):
    return jnp.where(x >= 0, x, NEG_SLOPE * x)


def _pick_group():
    """im2col taps per MXU chunk: 128-deep chunks on v5e, 256-deep on v6e/v7x."""
    try:
        kind = jax.devices()[0].device_kind.lower()
        if "v5e" in kind or "v5 lite" in kind:
            return 2
    except Exception:
        pass
    return 4


# ----------------------------- fused Pallas kernel -----------------------------

def _generator_kernel(
    z_ref, wfc_ref, bfc_ref, wt_ref, bt_ref,
    w1_ref, b1_ref, w2_ref, b2_ref, w3_ref, b3_ref,
    w4_ref, b4_ref, w5_ref, b5_ref, w6_ref, b6_ref,
    wo_ref, bo_ref, o_ref, pad_ref, im_ref, *, L0, group, left,
):
    """One batch block (TB elements, interleaved along lanes) per grid step.

    pad_ref : (C, (left+L+RIGHT)*TB) f32 scratch. Column (left+pos)*TB + t holds channel-c
              activation of batch element t at spatial position pos.  The halo columns are
              zeroed once and never written, so every conv reads correct zero padding.
    im_ref  : (group*C, TB*L) im2col scratch, filled in place (no concat temps).
    Conv weights are pre-flattened to (C_out, K*C_in) with tap-major columns.
    """
    L = 4 * L0                # spatial length after 4x upsampling
    NL = TB * L               # lane width of every activation slab (= 128)
    lo = left * TB            # interior lane offset (128 -> aligned, unmasked stores)

    def conv_from_pad(w_ref, b_ref, K, dil, pad):
        # chunked im2col: copy <=group shifted slabs into im_ref, one MXU dot per chunk
        base = (left - pad) * TB
        acc = None
        for k0 in range(0, K, group):
            kg = min(group, K - k0)
            for j in range(kg):
                s = base + (k0 + j) * dil * TB
                im_ref[j * C:(j + 1) * C, :] = pad_ref[:, s:s + NL]
            part = jnp.dot(w_ref[:, k0 * C:(k0 + kg) * C], im_ref[0:kg * C, :],
                           preferred_element_type=jnp.float32)
            acc = part if acc is None else acc + part
        return acc + b_ref[...]

    def conv(x, w_ref, b_ref, K, dil, pad, pre=False, post=None):
        if pre:                       # leaky(0)=0 -> safe to apply before the zero halo
            x = _leaky(x)
        pad_ref[:, lo:lo + NL] = x    # lane-aligned interior rewrite (halo stays zero)
        y = conv_from_pad(w_ref, b_ref, K, dil, pad)
        if post == "leaky":
            y = _leaky(y)
        return y

    # One buffer clear per grid step: zero halos for every conv AND the stride-4
    # stuffing gaps of the transposed-conv input.
    pad_ref[...] = jnp.zeros_like(pad_ref)

    # ---- Linear(latent -> 64*L0) as ONE dot + stride-4 zero-stuff into pad_ref ----
    y_fc = jnp.dot(wfc_ref[...], z_ref[0],
                   preferred_element_type=jnp.float32) + bfc_ref[...]   # (L0*C, TB)
    for l in range(L0):
        col = lo + STRIDE_T * l * TB
        pad_ref[:, col:col + TB] = y_fc[l * C:(l + 1) * C, :]

    # ---- ConvTranspose1d(64,64,K=16,s=4,p=6) == conv(K=16, pad=9) on stuffed input ----
    x0 = _leaky(conv_from_pad(wt_ref, bt_ref, K_T, 1, PT))

    # ---- ResidualStack(64): convs + residual adds all in VMEM ----
    l1 = conv(x0, w1_ref, b1_ref, 3, 1, 1, post="leaky")
    add1 = conv(l1, w2_ref, b2_ref, 3, 1, 1) + x0
    l3 = conv(add1, w3_ref, b3_ref, 3, 3, 3, pre=True, post="leaky")
    add2 = conv(l3, w4_ref, b4_ref, 3, 1, 1) + add1
    l5 = conv(add2, w5_ref, b5_ref, 3, 9, 9, pre=True, post="leaky")
    add3 = conv(l5, w6_ref, b6_ref, 3, 1, 1) + add2

    # ---- trailing leaky + Conv1d(64 -> 1, K=7, pad=3) + tanh on VPU/XLU (M=1: skip MXU) ----
    pad_ref[:, lo:lo + NL] = _leaky(add3)
    base = (left - 3) * TB
    acc = None
    for k in range(7):
        sl = pad_ref[:, base + k * TB: base + k * TB + NL]      # (C, NL)
        term = wo_ref[:, k:k + 1] * sl
        acc = term if acc is None else acc + term
    out = jnp.tanh(jnp.sum(acc, axis=0, keepdims=True) + bo_ref[...])   # (1, NL)
    o_ref[0] = out.astype(o_ref.dtype)


def generator_forward(z, p, L0):
    """z: (B, latent). Returns (B, 1, 4*L0)."""
    B, latent = z.shape
    L = 4 * L0
    NL = TB * L
    group = _pick_group()
    left = max(PMAX, (128 + TB - 1) // TB)   # 32 -> interior starts at lane 128 (aligned)

    NB = -(-B // TB)
    Bp = NB * TB
    zp = z if Bp == B else jnp.concatenate(
        [z, jnp.zeros((Bp - B, latent), z.dtype)], axis=0)
    z_blk = zp.reshape(NB, TB, latent).transpose(0, 2, 1)      # (NB, latent, TB)

    def const_spec(shape):
        n = len(shape)
        return pl.BlockSpec(shape, lambda i, n=n: (0,) * n)

    names = ["wfc", "bfc", "wt", "bt", "w1", "b1", "w2", "b2", "w3", "b3",
             "w4", "b4", "w5", "b5", "w6", "b6", "wo", "bo"]
    in_specs = [pl.BlockSpec((1, latent, TB), lambda i: (i, 0, 0))]
    in_specs += [const_spec(p[n].shape) for n in names]

    out_slab = pl.pallas_call(
        functools.partial(_generator_kernel, L0=L0, group=group, left=left),
        out_shape=jax.ShapeDtypeStruct((NB, 1, NL), z.dtype),
        grid=(NB,),
        in_specs=in_specs,
        out_specs=pl.BlockSpec((1, 1, NL), lambda i: (i, 0, 0)),
        scratch_shapes=[pltpu.VMEM((C, (left + L + RIGHT) * TB), jnp.float32),
                        pltpu.VMEM((group * C, NL), jnp.float32)],
        compiler_params=pltpu.CompilerParams(dimension_semantics=("parallel",)),
    )(z_blk, *[p[n] for n in names])

    # de-interleave (lane = l*TB + t) back to (B, 1, L) in the wrapper
    out = out_slab.reshape(NB, 1, L, TB).transpose(0, 3, 1, 2).reshape(Bp, 1, L)
    return out[:B]


# ----------------------------- parameter preparation -----------------------------

def prepare_params(raw, L0, latent):
    """Convert PyTorch-layout weights into the fused-kernel layouts."""
    def flat_conv(w):   # (C_out, C_in, K) -> (C_out, K*C_in), tap-major columns
        return jnp.transpose(w, (0, 2, 1)).reshape(w.shape[0], -1)

    # ConvTranspose1d weight (in, out, K) -> equivalent regular-conv weight:
    # flip taps, swap in/out -> (out, in, K); then flatten tap-major.
    wt_eq = jnp.transpose(raw["wt"][:, :, ::-1], (1, 0, 2))

    p = {
        # FC weight rows reordered to (l0, c) so row block l0*C:(l0+1)*C is one spatial column
        "wfc": raw["fc_w"].reshape(C, L0, latent).transpose(1, 0, 2).reshape(L0 * C, latent),
        "bfc": raw["fc_b"].reshape(C, L0).T.reshape(L0 * C, 1),
        "wt": flat_conv(wt_eq),                                        # (C, 16*C)
        "bt": raw["bt"].reshape(C, 1),
        "wo": raw["wo"][0],                                            # (C, 7) for VPU conv
        "bo": raw["bo"].reshape(1, 1),
    }
    for i in range(1, 7):
        p[f"w{i}"] = flat_conv(raw[f"w{i}"])                           # (C, 3*C)
        p[f"b{i}"] = raw[f"b{i}"].reshape(C, 1)
    return p


# ----------------------------- pure-JAX reference -----------------------------

def ref_forward(z, raw, L0):
    B = z.shape[0]
    dn = ("NCH", "OIH", "NCH")
    prec = lax.Precision.HIGHEST
    x = (jnp.dot(z, raw["fc_w"].T, precision=prec) + raw["fc_b"]).reshape(B, C, L0)

    wt_oih = jnp.transpose(raw["wt"][:, :, ::-1], (1, 0, 2))   # (out, in, K)
    y = lax.conv_general_dilated(
        x, wt_oih, window_strides=(1,), padding=[(PT, PT)],
        lhs_dilation=(STRIDE_T,), dimension_numbers=dn, precision=prec
    ) + raw["bt"][None, :, None]
    y = _leaky(y)

    def conv(xx, w, b, d, p_):
        return lax.conv_general_dilated(
            xx, w, (1,), [(p_, p_)], rhs_dilation=(d,),
            dimension_numbers=dn, precision=prec
        ) + b[None, :, None]

    x0 = y
    l1 = _leaky(conv(x0, raw["w1"], raw["b1"], 1, 1))
    add1 = conv(l1, raw["w2"], raw["b2"], 1, 1) + x0
    l3 = _leaky(conv(_leaky(add1), raw["w3"], raw["b3"], 3, 3))
    add2 = conv(l3, raw["w4"], raw["b4"], 1, 1) + add1
    l5 = _leaky(conv(_leaky(add2), raw["w5"], raw["b5"], 9, 9))
    add3 = conv(l5, raw["w6"], raw["b6"], 1, 1) + add2
    return jnp.tanh(conv(_leaky(add3), raw["wo"], raw["bo"], 1, 3))


# ----------------------------- main -----------------------------

if __name__ == "__main__":
    latent_dim = 32
    input_shape = 32      # output waveform length
    B = 8                 # small batch; TB=4 -> grid=(2,) keeps 2 TCs busy on v7x
    L0 = round(input_shape / 4)      # 8
    n_nodes = C * L0                 # 512

    key = jax.random.PRNGKey(0)
    ks = list(jax.random.split(key, 24))
    nrm = lambda k, shape: jax.random.normal(k, shape, jnp.float32) * 0.05

    # raw parameters in PyTorch layouts (weight_norm at init is identity)
    raw = {
        "fc_w": nrm(ks[0], (n_nodes, latent_dim)),
        "fc_b": nrm(ks[1], (n_nodes,)),
        "wt": nrm(ks[2], (C, C, K_T)),     # ConvTranspose1d weight: (in, out, K)
        "bt": nrm(ks[3], (C,)),
        "w1": nrm(ks[4], (C, C, 3)), "b1": nrm(ks[5], (C,)),
        "w2": nrm(ks[6], (C, C, 3)), "b2": nrm(ks[7], (C,)),
        "w3": nrm(ks[8], (C, C, 3)), "b3": nrm(ks[9], (C,)),
        "w4": nrm(ks[10], (C, C, 3)), "b4": nrm(ks[11], (C,)),
        "w5": nrm(ks[12], (C, C, 3)), "b5": nrm(ks[13], (C,)),
        "w6": nrm(ks[14], (C, C, 3)), "b6": nrm(ks[15], (C,)),
        "wo": nrm(ks[16], (1, C, 7)), "bo": nrm(ks[17], (1,)),
    }
    params = prepare_params(raw, L0, latent_dim)

    z = jax.random.normal(ks[18], (B, latent_dim), jnp.float32)

    out = jax.block_until_ready(generator_forward(z, params, L0))
    assert out.shape == (B, 1, input_shape), out.shape

    ref = jax.block_until_ready(ref_forward(z, raw, L0))
    max_diff = float(jnp.max(jnp.abs(out - ref)))
    assert max_diff < 1e-3, f"mismatch vs reference: {max_diff}"

    print("KERNEL_OK")
</pallas_src>

<mosaic_0001>
module attributes {stable_mosaic.version = 11 : i64} {
  func.func @_generator_kernel(%arg0: i32, %arg1: memref<1x32x4xf32, #tpu.memory_space<vmem>>, %arg2: memref<512x32xf32, #tpu.memory_space<vmem>>, %arg3: memref<512x1xf32, #tpu.memory_space<vmem>>, %arg4: memref<64x1024xf32, #tpu.memory_space<vmem>>, %arg5: memref<64x1xf32, #tpu.memory_space<vmem>>, %arg6: memref<64x192xf32, #tpu.memory_space<vmem>>, %arg7: memref<64x1xf32, #tpu.memory_space<vmem>>, %arg8: memref<64x192xf32, #tpu.memory_space<vmem>>, %arg9: memref<64x1xf32, #tpu.memory_space<vmem>>, %arg10: memref<64x192xf32, #tpu.memory_space<vmem>>, %arg11: memref<64x1xf32, #tpu.memory_space<vmem>>, %arg12: memref<64x192xf32, #tpu.memory_space<vmem>>, %arg13: memref<64x1xf32, #tpu.memory_space<vmem>>, %arg14: memref<64x192xf32, #tpu.memory_space<vmem>>, %arg15: memref<64x1xf32, #tpu.memory_space<vmem>>, %arg16: memref<64x192xf32, #tpu.memory_space<vmem>>, %arg17: memref<64x1xf32, #tpu.memory_space<vmem>>, %arg18: memref<64x7xf32, #tpu.memory_space<vmem>>, %arg19: memref<1x1xf32, #tpu.memory_space<vmem>>, %arg20: memref<1x1x128xf32, #tpu.memory_space<vmem>>, %arg21: memref<64x320xf32, #tpu.memory_space<vmem>>, %arg22: memref<256x128xf32, #tpu.memory_space<vmem>>) attributes {dimension_semantics = [#tpu.dimension_semantics<parallel>], iteration_bounds = array<i64: 2>, scalar_prefetch = 0 : i64, scratch_operands = 2 : i64, tpu.core_type = #tpu.core_type<tc>, window_params = [{transform_indices = @transform_0, window_bounds = array<i64: 1, 32, 4>}, {pipeline_mode = #tpu.pipeline_mode<synchronous>, transform_indices = @transform_1, window_bounds = array<i64: 512, 32>}, {pipeline_mode = #tpu.pipeline_mode<synchronous>, transform_indices = @transform_2, window_bounds = array<i64: 512, 1>}, {pipeline_mode = #tpu.pipeline_mode<synchronous>, transform_indices = @transform_3, window_bounds = array<i64: 64, 1024>}, {pipeline_mode = #tpu.pipeline_mode<synchronous>, transform_indices = @transform_4, window_bounds = array<i64: 64, 1>}, {pipeline_mode = #tpu.pipeline_mode<synchronous>, transform_indices = @transform_5, window_bounds = array<i64: 64, 192>}, {pipeline_mode = #tpu.pipeline_mode<synchronous>, transform_indices = @transform_6, window_bounds = array<i64: 64, 1>}, {pipeline_mode = #tpu.pipeline_mode<synchronous>, transform_indices = @transform_7, window_bounds = array<i64: 64, 192>}, {pipeline_mode = #tpu.pipeline_mode<synchronous>, transform_indices = @transform_8, window_bounds = array<i64: 64, 1>}, {pipeline_mode = #tpu.pipeline_mode<synchronous>, transform_indices = @transform_9, window_bounds = array<i64: 64, 192>}, {pipeline_mode = #tpu.pipeline_mode<synchronous>, transform_indices = @transform_10, window_bounds = array<i64: 64, 1>}, {pipeline_mode = #tpu.pipeline_mode<synchronous>, transform_indices = @transform_11, window_bounds = array<i64: 64, 192>}, {pipeline_mode = #tpu.pipeline_mode<synchronous>, transform_indices = @transform_12, window_bounds = array<i64: 64, 1>}, {pipeline_mode = #tpu.pipeline_mode<synchronous>, transform_indices = @transform_13, window_bounds = array<i64: 64, 192>}, {pipeline_mode = #tpu.pipeline_mode<synchronous>, transform_indices = @transform_14, window_bounds = array<i64: 64, 1>}, {pipeline_mode = #tpu.pipeline_mode<synchronous>, transform_indices = @transform_15, window_bounds = array<i64: 64, 192>}, {pipeline_mode = #tpu.pipeline_mode<synchronous>, transform_indices = @transform_16, window_bounds = array<i64: 64, 1>}, {pipeline_mode = #tpu.pipeline_mode<synchronous>, transform_indices = @transform_17, window_bounds = array<i64: 64, 7>}, {pipeline_mode = #tpu.pipeline_mode<synchronous>, transform_indices = @transform_18, window_bounds = array<i64: 1, 1>}, {transform_indices = @transform_19, window_bounds = array<i64: 1, 1, 128>}]} {
    %cst = arith.constant 0.000000e+00 : f32
    %0 = vector.broadcast %cst : f32 to vector<64x320xf32>
    %c0 = arith.constant 0 : index
    %c0_0 = arith.constant 0 : index
    %1 = vector.load %arg21[%c0, %c0_0] : memref<64x320xf32, #tpu.memory_space<vmem>>, vector<64x320xf32>
    tpu.vector_store %arg21[%c0, %c0_0], %0 {strides = array<i32>} : memref<64x320xf32, #tpu.memory_space<vmem>>, vector<64x320xf32>,
    %c0_1 = arith.constant 0 : index
    %c0_2 = arith.constant 0 : index
    %2 = vector.load %arg2[%c0_1, %c0_2] : memref<512x32xf32, #tpu.memory_space<vmem>>, vector<512x32xf32>
    %c0_3 = arith.constant 0 : index
    %c0_4 = arith.constant 0 : index
    %c0_5 = arith.constant 0 : index
    %3 = vector.load %arg1[%c0_3, %c0_4, %c0_5] : memref<1x32x4xf32, #tpu.memory_space<vmem>>, vector<1x32x4xf32>
    %4 = vector.shape_cast %3 : vector<1x32x4xf32> to vector<32x4xf32>
    %cst_6 = arith.constant dense<0.000000e+00> : vector<512x4xf32>
    %5 = tpu.matmul %2, %4, %cst_6 {dimension_numbers = #tpu.dot_dimension_numbers<[1], [0], [0], [1], [0, 0, 1, 1], [], []>} : vector<512x32xf32>, vector<32x4xf32>, vector<512x4xf32> -> vector<512x4xf32>
    %c0_7 = arith.constant 0 : index
    %c0_8 = arith.constant 0 : index
    %6 = vector.load %arg3[%c0_7, %c0_8] : memref<512x1xf32, #tpu.memory_space<vmem>>, vector<512x1xf32>
    %7 = vector.broadcast %6 : vector<512x1xf32> to vector<512x4xf32>
    %8 = arith.addf %5, %7 : vector<512x4xf32>
    %9 = vector.extract_strided_slice %8 {offsets = [0, 0], sizes = [64, 4], strides = [1, 1]} : vector<512x4xf32> to vector<64x4xf32>
    %c0_9 = arith.constant 0 : index
    %c128 = arith.constant 128 : index
    %10 = vector.load %arg21[%c0_9, %c128] : memref<64x320xf32, #tpu.memory_space<vmem>>, vector<64x4xf32>
    tpu.vector_store %arg21[%c0_9, %c128], %9 {strides = array<i32>} : memref<64x320xf32, #tpu.memory_space<vmem>>, vector<64x4xf32>,
    %11 = vector.extract_strided_slice %8 {offsets = [64, 0], sizes = [64, 4], strides = [1, 1]} : vector<512x4xf32> to vector<64x4xf32>
    %c0_10 = arith.constant 0 : index
    %c144 = arith.constant 144 : index
    %12 = vector.load %arg21[%c0_10, %c144] : memref<64x320xf32, #tpu.memory_space<vmem>>, vector<64x4xf32>
    tpu.vector_store %arg21[%c0_10, %c144], %11 {strides = array<i32>} : memref<64x320xf32, #tpu.memory_space<vmem>>, vector<64x4xf32>,
    %13 = vector.extract_strided_slice %8 {offsets = [128, 0], sizes = [64, 4], strides = [1, 1]} : vector<512x4xf32> to vector<64x4xf32>
    %c0_11 = arith.constant 0 : index
    %c160 = arith.constant 160 : index
    %14 = vector.load %arg21[%c0_11, %c160] : memref<64x320xf32, #tpu.memory_space<vmem>>, vector<64x4xf32>
    tpu.vector_store %arg21[%c0_11, %c160], %13 {strides = array<i32>} : memref<64x320xf32, #tpu.memory_space<vmem>>, vector<64x4xf32>,
    %15 = vector.extract_strided_slice %8 {offsets = [192, 0], sizes = [64, 4], strides = [1, 1]} : vector<512x4xf32> to vector<64x4xf32>
    %c0_12 = arith.constant 0 : index
    %c176 = arith.constant 176 : index
    %16 = vector.load %arg21[%c0_12, %c176] : memref<64x320xf32, #tpu.memory_space<vmem>>, vector<64x4xf32>
    tpu.vector_store %arg21[%c0_12, %c176], %15 {strides = array<i32>} : memref<64x320xf32, #tpu.memory_space<vmem>>, vector<64x4xf32>,
    %17 = vector.extract_strided_slice %8 {offsets = [256, 0], sizes = [64, 4], strides = [1, 1]} : vector<512x4xf32> to vector<64x4xf32>
    %c0_13 = arith.constant 0 : index
    %c192 = arith.constant 192 : index
    %18 = vector.load %arg21[%c0_13, %c192] : memref<64x320xf32, #tpu.memory_space<vmem>>, vector<64x4xf32>
    tpu.vector_store %arg21[%c0_13, %c192], %17 {strides = array<i32>} : memref<64x320xf32, #tpu.memory_space<vmem>>, vector<64x4xf32>,
    %19 = vector.extract_strided_slice %8 {offsets = [320, 0], sizes = [64, 4], strides = [1, 1]} : vector<512x4xf32> to vector<64x4xf32>
    %c0_14 = arith.constant 0 : index
    %c208 = arith.constant 208 : index
    %20 = vector.load %arg21[%c0_14, %c208] : memref<64x320xf32, #tpu.memory_space<vmem>>, vector<64x4xf32>
    tpu.vector_store %arg21[%c0_14, %c208], %19 {strides = array<i32>} : memref<64x320xf32, #tpu.memory_space<vmem>>, vector<64x4xf32>,
    %21 = vector.extract_strided_slice %8 {offsets = [384, 0], sizes = [64, 4], strides = [1, 1]} : vector<512x4xf32> to vector<64x4xf32>
    %c0_15 = arith.constant 0 : index
    %c224 = arith.constant 224 : index
    %22 = vector.load %arg21[%c0_15, %c224] : memref<64x320xf32, #tpu.memory_space<vmem>>, vector<64x4xf32>
    tpu.vector_store %arg21[%c0_15, %c224], %21 {strides = array<i32>} : memref<64x320xf32, #tpu.memory_space<vmem>>, vector<64x4xf32>,
    %23 = vector.extract_strided_slice %8 {offsets = [448, 0], sizes = [64, 4], strides = [1, 1]} : vector<512x4xf32> to vector<64x4xf32>
    %c0_16 = arith.constant 0 : index
    %c240 = arith.constant 240 : index
    %24 = vector.load %arg21[%c0_16, %c240] : memref<64x320xf32, #tpu.memory_space<vmem>>, vector<64x4xf32>
    tpu.vector_store %arg21[%c0_16, %c240], %23 {strides = array<i32>} : memref<64x320xf32, #tpu.memory_space<vmem>>, vector<64x4xf32>,
    %c0_17 = arith.constant 0 : index
    %c92 = arith.constant 92 : index
    %25 = vector.load %arg21[%c0_17, %c92] : memref<64x320xf32, #tpu.memory_space<vmem>>, vector<64x128xf32>
    %c0_18 = arith.constant 0 : index
    %c0_19 = arith.constant 0 : index
    %26 = vector.load %arg22[%c0_18, %c0_19] : memref<256x128xf32, #tpu.memory_space<vmem>>, vector<64x128xf32>
    tpu.vector_store %arg22[%c0_18, %c0_19], %25 {strides = array<i32>} : memref<256x128xf32, #tpu.memory_space<vmem>>, vector<64x128xf32>,
    %c0_20 = arith.constant 0 : index
    %c96 = arith.constant 96 : index
    %27 = vector.load %arg21[%c0_20, %c96] : memref<64x320xf32, #tpu.memory_space<vmem>>, vector<64x128xf32>
    %c64 = arith.constant 64 : index
    %c0_21 = arith.constant 0 : index
    %28 = vector.load %arg22[%c64, %c0_21] : memref<256x128xf32, #tpu.memory_space<vmem>>, vector<64x128xf32>
    tpu.vector_store %arg22[%c64, %c0_21], %27 {strides = array<i32>} : memref<256x128xf32, #tpu.memory_space<vmem>>, vector<64x128xf32>,
    %c0_22 = arith.constant 0 : index
    %c100 = arith.constant 100 : index
    %29 = vector.load %arg21[%c0_22, %c100] : memref<64x320xf32, #tpu.memory_space<vmem>>, vector<64x128xf32>
    %c128_23 = arith.constant 128 : index
    %c0_24 = arith.constant 0 : index
    %30 = vector.load %arg22[%c128_23, %c0_24] : memref<256x128xf32, #tpu.memory_space<vmem>>, vector<64x128xf32>
    tpu.vector_store %arg22[%c128_23, %c0_24], %29 {strides = array<i32>} : memref<256x128xf32, #tpu.memory_space<vmem>>, vector<64x128xf32>,
    %c0_25 = arith.constant 0 : index
    %c104 = arith.constant 104 : index
    %31 = vector.load %arg21[%c0_25, %c104] : memref<64x320xf32, #tpu.memory_space<vmem>>, vector<64x128xf32>
    %c192_26 = arith.constant 192 : index
    %c0_27 = arith.constant 0 : index
    %32 = vector.load %arg22[%c192_26, %c0_27] : memref<256x128xf32, #tpu.memory_space<vmem>>, vector<64x128xf32>
    tpu.vector_store %arg22[%c192_26, %c0_27], %31 {strides = array<i32>} : memref<256x128xf32, #tpu.memory_space<vmem>>, vector<64x128xf32>,
    %c0_28 = arith.constant 0 : index
    %c0_29 = arith.constant 0 : index
    %33 = vector.load %arg4[%c0_28, %c0_29] : memref<64x1024xf32, #tpu.memory_space<vmem>>, vector<64x256xf32>
    %c0_30 = arith.constant 0 : index
    %c0_31 = arith.constant 0 : index
    %34 = vector.load %arg22[%c0_30, %c0_31] : memref<256x128xf32, #tpu.memory_space<vmem>>, vector<256x128xf32>
    %cst_32 = arith.constant dense<0.000000e+00> : vector<64x128xf32>
    %35 = tpu.matmul %33, %34, %cst_32 {dimension_numbers = #tpu.dot_dimension_numbers<[1], [0], [0], [1], [0, 0, 1, 1], [], []>} : vector<64x256xf32>, vector<256x128xf32>, vector<64x128xf32> -> vector<64x128xf32>
    %c0_33 = arith.constant 0 : index
    %c108 = arith.constant 108 : index
    %36 = vector.load %arg21[%c0_33, %c108] : memref<64x320xf32, #tpu.memory_space<vmem>>, vector<64x128xf32>
    %c0_34 = arith.constant 0 : index
    %c0_35 = arith.constant 0 : index
    %37 = vector.load %arg22[%c0_34, %c0_35] : memref<256x128xf32, #tpu.memory_space<vmem>>, vector<64x128xf32>
    tpu.vector_store %arg22[%c0_34, %c0_35], %36 {strides = array<i32>} : memref<256x128xf32, #tpu.memory_space<vmem>>, vector<64x128xf32>,
    %c0_36 = arith.constant 0 : index
    %c112 = arith.constant 112 : index
    %38 = vector.load %arg21[%c0_36, %c112] : memref<64x320xf32, #tpu.memory_space<vmem>>, vector<64x128xf32>
    %c64_37 = arith.constant 64 : index
    %c0_38 = arith.constant 0 : index
    %39 = vector.load %arg22[%c64_37, %c0_38] : memref<256x128xf32, #tpu.memory_space<vmem>>, vector<64x128xf32>
    tpu.vector_store %arg22[%c64_37, %c0_38], %38 {strides = array<i32>} : memref<256x128xf32, #tpu.memory_space<vmem>>, vector<64x128xf32>,
    %c0_39 = arith.constant 0 : index
    %c116 = arith.constant 116 : index
    %40 = vector.load %arg21[%c0_39, %c116] : memref<64x320xf32, #tpu.memory_space<vmem>>, vector<64x128xf32>
    %c128_40 = arith.constant 128 : index
    %c0_41 = arith.constant 0 : index
    %41 = vector.load %arg22[%c128_40, %c0_41] : memref<256x128xf32, #tpu.memory_space<vmem>>, vector<64x128xf32>
    tpu.vector_store %arg22[%c128_40, %c0_41], %40 {strides = array<i32>} : memref<256x128xf32, #tpu.memory_space<vmem>>, vector<64x128xf32>,
    %c0_42 = arith.constant 0 : index
    %c120 = arith.constant 120 : index
    %42 = vector.load %arg21[%c0_42, %c120] : memref<64x320xf32, #tpu.memory_space<vmem>>, vector<64x128xf32>
    %c192_43 = arith.constant 192 : index
    %c0_44 = arith.constant 0 : index
    %43 = vector.load %arg22[%c192_43, %c0_44] : memref<256x128xf32, #tpu.memory_space<vmem>>, vector<64x128xf32>
    tpu.vector_store %arg22[%c192_43, %c0_44], %42 {strides = array<i32>} : memref<256x128xf32, #tpu.memory_space<vmem>>, vector<64x128xf32>,
    %c0_45 = arith.constant 0 : index
    %c256 = arith.constant 256 : index
    %44 = vector.load %arg4[%c0_45, %c256] : memref<64x1024xf32, #tpu.memory_space<vmem>>, vector<64x256xf32>
    %c0_46 = arith.constant 0 : index
    %c0_47 = arith.constant 0 : index
    %45 = vector.load %arg22[%c0_46, %c0_47] : memref<256x128xf32, #tpu.memory_space<vmem>>, vector<256x128xf32>
    %cst_48 = arith.constant dense<0.000000e+00> : vector<64x128xf32>
    %46 = tpu.matmul %44, %45, %cst_48 {dimension_numbers = #tpu.dot_dimension_numbers<[1], [0], [0], [1], [0, 0, 1, 1], [], []>} : vector<64x256xf32>, vector<256x128xf32>, vector<64x128xf32> -> vector<64x128xf32>
    %47 = arith.addf %35, %46 : vector<64x128xf32>
    %c0_49 = arith.constant 0 : index
    %c124 = arith.constant 124 : index
    %48 = vector.load %arg21[%c0_49, %c124] : memref<64x320xf32, #tpu.memory_space<vmem>>, vector<64x128xf32>
    %c0_50 = arith.constant 0 : index
    %c0_51 = arith.constant 0 : index
    %49 = vector.load %arg22[%c0_50, %c0_51] : memref<256x128xf32, #tpu.memory_space<vmem>>, vector<64x128xf32>
    tpu.vector_store %arg22[%c0_50, %c0_51], %48 {strides = array<i32>} : memref<256x128xf32, #tpu.memory_space<vmem>>, vector<64x128xf32>,
    %c0_52 = arith.constant 0 : index
    %c128_53 = arith.constant 128 : index
    %50 = vector.load %arg21[%c0_52, %c128_53] : memref<64x320xf32, #tpu.memory_space<vmem>>, vector<64x128xf32>
    %c64_54 = arith.constant 64 : index
    %c0_55 = arith.constant 0 : index
    %51 = vector.load %arg22[%c64_54, %c0_55] : memref<256x128xf32, #tpu.memory_space<vmem>>, vector<64x128xf32>
    tpu.vector_store %arg22[%c64_54, %c0_55], %50 {strides = array<i32>} : memref<256x128xf32, #tpu.memory_space<vmem>>, vector<64x128xf32>,
    %c0_56 = arith.constant 0 : index
    %c132 = arith.constant 132 : index
    %52 = vector.load %arg21[%c0_56, %c132] : memref<64x320xf32, #tpu.memory_space<vmem>>, vector<64x128xf32>
    %c128_57 = arith.constant 128 : index
    %c0_58 = arith.constant 0 : index
    %53 = vector.load %arg22[%c128_57, %c0_58] : memref<256x128xf32, #tpu.memory_space<vmem>>, vector<64x128xf32>
    tpu.vector_store %arg22[%c128_57, %c0_58], %52 {strides = array<i32>} : memref<256x128xf32, #tpu.memory_space<vmem>>, vector<64x128xf32>,
    %c0_59 = arith.constant 0 : index
    %c136 = arith.constant 136 : index
    %54 = vector.load %arg21[%c0_59, %c136] : memref<64x320xf32, #tpu.memory_space<vmem>>, vector<64x128xf32>
    %c192_60 = arith.constant 192 : index
    %c0_61 = arith.constant 0 : index
    %55 = vector.load %arg22[%c192_60, %c0_61] : memref<256x128xf32, #tpu.memory_space<vmem>>, vector<64x128xf32>
    tpu.vector_store %arg22[%c192_60, %c0_61], %54 {strides = array<i32>} : memref<256x128xf32, #tpu.memory_space<vmem>>, vector<64x128xf32>,
    %c0_62 = arith.constant 0 : index
    %c512 = arith.constant 512 : index
    %56 = vector.load %arg4[%c0_62, %c512] : memref<64x1024xf32, #tpu.memory_space<vmem>>, vector<64x256xf32>
    %c0_63 = arith.constant 0 : index
    %c0_64 = arith.constant 0 : index
    %57 = vector.load %arg22[%c0_63, %c0_64] : memref<256x128xf32, #tpu.memory_space<vmem>>, vector<256x128xf32>
    %cst_65 = arith.constant dense<0.000000e+00> : vector<64x128xf32>
    %58 = tpu.matmul %56, %57, %cst_65 {dimension_numbers = #tpu.dot_dimension_numbers<[1], [0], [0], [1], [0, 0, 1, 1], [], []>} : vector<64x256xf32>, vector<256x128xf32>, vector<64x128xf32> -> vector<64x128xf32>
    %59 = arith.addf %47, %58 : vector<64x128xf32>
    %c0_66 = arith.constant 0 : index
    %c140 = arith.constant 140 : index
    %60 = vector.load %arg21[%c0_66, %c140] : memref<64x320xf32, #tpu.memory_space<vmem>>, vector<64x128xf32>
    %c0_67 = arith.constant 0 : index
    %c0_68 = arith.constant 0 : index
    %61 = vector.load %arg22[%c0_67, %c0_68] : memref<256x128xf32, #tpu.memory_space<vmem>>, vector<64x128xf32>
    tpu.vector_store %arg22[%c0_67, %c0_68], %60 {strides = array<i32>} : memref<256x128xf32, #tpu.memory_space<vmem>>, vector<64x128xf32>,
    %c0_69 = arith.constant 0 : index
    %c144_70 = arith.constant 144 : index
    %62 = vector.load %arg21[%c0_69, %c144_70] : memref<64x320xf32, #tpu.memory_space<vmem>>, vector<64x128xf32>
    %c64_71 = arith.constant 64 : index
    %c0_72 = arith.constant 0 : index
    %63 = vector.load %arg22[%c64_71, %c0_72] : memref<256x128xf32, #tpu.memory_space<vmem>>, vector<64x128xf32>
    tpu.vector_store %arg22[%c64_71, %c0_72], %62 {strides = array<i32>} : memref<256x128xf32, #tpu.memory_space<vmem>>, vector<64x128xf32>,
    %c0_73 = arith.constant 0 : index
    %c148 = arith.constant 148 : index
    %64 = vector.load %arg21[%c0_73, %c148] : memref<64x320xf32, #tpu.memory_space<vmem>>, vector<64x128xf32>
    %c128_74 = arith.constant 128 : index
    %c0_75 = arith.constant 0 : index
    %65 = vector.load %arg22[%c128_74, %c0_75] : memref<256x128xf32, #tpu.memory_space<vmem>>, vector<64x128xf32>
    tpu.vector_store %arg22[%c128_74, %c0_75], %64 {strides = array<i32>} : memref<256x128xf32, #tpu.memory_space<vmem>>, vector<64x128xf32>,
    %c0_76 = arith.constant 0 : index
    %c152 = arith.constant 152 : index
    %66 = vector.load %arg21[%c0_76, %c152] : memref<64x320xf32, #tpu.memory_space<vmem>>, vector<64x128xf32>
    %c192_77 = arith.constant 192 : index
    %c0_78 = arith.constant 0 : index
    %67 = vector.load %arg22[%c192_77, %c0_78] : memref<256x128xf32, #tpu.memory_space<vmem>>, vector<64x128xf32>
    tpu.vector_store %arg22[%c192_77, %c0_78], %66 {strides = array<i32>} : memref<256x128xf32, #tpu.memory_space<vmem>>, vector<64x128xf32>,
    %c0_79 = arith.constant 0 : index
    %c768 = arith.constant 768 : index
    %68 = vector.load %arg4[%c0_79, %c768] : memref<64x1024xf32, #tpu.memory_space<vmem>>, vector<64x256xf32>
    %c0_80 = arith.constant 0 : index
    %c0_81 = arith.constant 0 : index
    %69 = vector.load %arg22[%c0_80, %c0_81] : memref<256x128xf32, #tpu.memory_space<vmem>>, vector<256x128xf32>
    %cst_82 = arith.constant dense<0.000000e+00> : vector<64x128xf32>
    %70 = tpu.matmul %68, %69, %cst_82 {dimension_numbers = #tpu.dot_dimension_numbers<[1], [0], [0], [1], [0, 0, 1, 1], [], []>} : vector<64x256xf32>, vector<256x128xf32>, vector<64x128xf32> -> vector<64x128xf32>
    %71 = arith.addf %59, %70 : vector<64x128xf32>
    %c0_83 = arith.constant 0 : index
    %c0_84 = arith.constant 0 : index
    %72 = vector.load %arg5[%c0_83, %c0_84] : memref<64x1xf32, #tpu.memory_space<vmem>>, vector<64x1xf32>
    %73 = vector.broadcast %72 : vector<64x1xf32> to vector<64x128xf32>
    %74 = arith.addf %71, %73 : vector<64x128xf32>
    %cst_85 = arith.constant 0.000000e+00 : f32
    %75 = vector.broadcast %cst_85 : f32 to vector<64x128xf32>
    %76 = arith.cmpf oge, %74, %75 : vector<64x128xf32>
    %cst_86 = arith.constant 0.00999999977 : f32
    %77 = vector.broadcast %cst_86 : f32 to vector<64x128xf32>
    %78 = arith.mulf %77, %74 : vector<64x128xf32>
    %79 = arith.select %76, %74, %78 : vector<64x128xi1>, vector<64x128xf32>
    %c0_87 = arith.constant 0 : index
    %c128_88 = arith.constant 128 : index
    %80 = vector.load %arg21[%c0_87, %c128_88] : memref<64x320xf32, #tpu.memory_space<vmem>>, vector<64x128xf32>
    tpu.vector_store %arg21[%c0_87, %c128_88], %79 {strides = array<i32>} : memref<64x320xf32, #tpu.memory_space<vmem>>, vector<64x128xf32>,
    %c0_89 = arith.constant 0 : index
    %c124_90 = arith.constant 124 : index
    %81 = vector.load %arg21[%c0_89, %c124_90] : memref<64x320xf32, #tpu.memory_space<vmem>>, vector<64x128xf32>
    %c0_91 = arith.constant 0 : index
    %c0_92 = arith.constant 0 : index
    %82 = vector.load %arg22[%c0_91, %c0_92] : memref<256x128xf32, #tpu.memory_space<vmem>>, vector<64x128xf32>
    tpu.vector_store %arg22[%c0_91, %c0_92], %81 {strides = array<i32>} : memref<256x128xf32, #tpu.memory_space<vmem>>, vector<64x128xf32>,
    %c0_93 = arith.constant 0 : index
    %c128_94 = arith.constant 128 : index
    %83 = vector.load %arg21[%c0_93, %c128_94] : memref<64x320xf32, #tpu.memory_space<vmem>>, vector<64x128xf32>
    %c64_95 = arith.constant 64 : index
    %c0_96 = arith.constant 0 : index
    %84 = vector.load %arg22[%c64_95, %c0_96] : memref<256x128xf32, #tpu.memory_space<vmem>>, vector<64x128xf32>
    tpu.vector_store %arg22[%c64_95, %c0_96], %83 {strides = array<i32>} : memref<256x128xf32, #tpu.memory_space<vmem>>, vector<64x128xf32>,
    %c0_97 = arith.constant 0 : index
    %c132_98 = arith.constant 132 : index
    %85 = vector.load %arg21[%c0_97, %c132_98] : memref<64x320xf32, #tpu.memory_space<vmem>>, vector<64x128xf32>
    %c128_99 = arith.constant 128 : index
    %c0_100 = arith.constant 0 : index
    %86 = vector.load %arg22[%c128_99, %c0_100] : memref<256x128xf32, #tpu.memory_space<vmem>>, vector<64x128xf32>
    tpu.vector_store %arg22[%c128_99, %c0_100], %85 {strides = array<i32>} : memref<256x128xf32, #tpu.memory_space<vmem>>, vector<64x128xf32>,
    %c0_101 = arith.constant 0 : index
    %c0_102 = arith.constant 0 : index
    %87 = vector.load %arg6[%c0_101, %c0_102] : memref<64x192xf32, #tpu.memory_space<vmem>>, vector<64x192xf32>
    %c0_103 = arith.constant 0 : index
    %c0_104 = arith.constant 0 : index
    %88 = vector.load %arg22[%c0_103, %c0_104] : memref<256x128xf32, #tpu.memory_space<vmem>>, vector<192x128xf32>
    %cst_105 = arith.constant dense<0.000000e+00> : vector<64x128xf32>
    %89 = tpu.matmul %87, %88, %cst_105 {dimension_numbers = #tpu.dot_dimension_numbers<[1], [0], [0], [1], [0, 0, 1, 1], [], []>} : vector<64x192xf32>, vector<192x128xf32>, vector<64x128xf32> -> vector<64x128xf32>
    %c0_106 = arith.constant 0 : index
    %c0_107 = arith.constant 0 : index
    %90 = vector.load %arg7[%c0_106, %c0_107] : memref<64x1xf32, #tpu.memory_space<vmem>>, vector<64x1xf32>
    %91 = vector.broadcast %90 : vector<64x1xf32> to vector<64x128xf32>
    %92 = arith.addf %89, %91 : vector<64x128xf32>
    %cst_108 = arith.constant 0.000000e+00 : f32
    %93 = vector.broadcast %cst_108 : f32 to vector<64x128xf32>
    %94 = arith.cmpf oge, %92, %93 : vector<64x128xf32>
    %cst_109 = arith.constant 0.00999999977 : f32
    %95 = vector.broadcast %cst_109 : f32 to vector<64x128xf32>
    %96 = arith.mulf %95, %92 : vector<64x128xf32>
    %97 = arith.select %94, %92, %96 : vector<64x128xi1>, vector<64x128xf32>
    %c0_110 = arith.constant 0 : index
    %c128_111 = arith.constant 128 : index
    %98 = vector.load %arg21[%c0_110, %c128_111] : memref<64x320xf32, #tpu.memory_space<vmem>>, vector<64x128xf32>
    tpu.vector_store %arg21[%c0_110, %c128_111], %97 {strides = array<i32>} : memref<64x320xf32, #tpu.memory_space<vmem>>, vector<64x128xf32>,
    %c0_112 = arith.constant 0 : index
    %c124_113 = arith.constant 124 : index
    %99 = vector.load %arg21[%c0_112, %c124_113] : memref<64x320xf32, #tpu.memory_space<vmem>>, vector<64x128xf32>
    %c0_114 = arith.constant 0 : index
    %c0_115 = arith.constant 0 : index
    %100 = vector.load %arg22[%c0_114, %c0_115] : memref<256x128xf32, #tpu.memory_space<vmem>>, vector<64x128xf32>
    tpu.vector_store %arg22[%c0_114, %c0_115], %99 {strides = array<i32>} : memref<256x128xf32, #tpu.memory_space<vmem>>, vector<64x128xf32>,
    %c0_116 = arith.constant 0 : index
    %c128_117 = arith.constant 128 : index
    %101 = vector.load %arg21[%c0_116, %c128_117] : memref<64x320xf32, #tpu.memory_space<vmem>>, vector<64x128xf32>
    %c64_118 = arith.constant 64 : index
    %c0_119 = arith.constant 0 : index
    %102 = vector.load %arg22[%c64_118, %c0_119] : memref<256x128xf32, #tpu.memory_space<vmem>>, vector<64x128xf32>
    tpu.vector_store %arg22[%c64_118, %c0_119], %101 {strides = array<i32>} : memref<256x128xf32, #tpu.memory_space<vmem>>, vector<64x128xf32>,
    %c0_120 = arith.constant 0 : index
    %c132_121 = arith.constant 132 : index
    %103 = vector.load %arg21[%c0_120, %c132_121] : memref<64x320xf32, #tpu.memory_space<vmem>>, vector<64x128xf32>
    %c128_122 = arith.constant 128 : index
    %c0_123 = arith.constant 0 : index
    %104 = vector.load %arg22[%c128_122, %c0_123] : memref<256x128xf32, #tpu.memory_space<vmem>>, vector<64x128xf32>
    tpu.vector_store %arg22[%c128_122, %c0_123], %103 {strides = array<i32>} : memref<256x128xf32, #tpu.memory_space<vmem>>, vector<64x128xf32>,
    %c0_124 = arith.constant 0 : index
    %c0_125 = arith.constant 0 : index
    %105 = vector.load %arg8[%c0_124, %c0_125] : memref<64x192xf32, #tpu.memory_space<vmem>>, vector<64x192xf32>
    %c0_126 = arith.constant 0 : index
    %c0_127 = arith.constant 0 : index
    %106 = vector.load %arg22[%c0_126, %c0_127] : memref<256x128xf32, #tpu.memory_space<vmem>>, vector<192x128xf32>
    %cst_128 = arith.constant dense<0.000000e+00> : vector<64x128xf32>
    %107 = tpu.matmul %105, %106, %cst_128 {dimension_numbers = #tpu.dot_dimension_numbers<[1], [0], [0], [1], [0, 0, 1, 1], [], []>} : vector<64x192xf32>, vector<192x128xf32>, vector<64x128xf32> -> vector<64x128xf32>
    %c0_129 = arith.constant 0 : index
    %c0_130 = arith.constant 0 : index
    %108 = vector.load %arg9[%c0_129, %c0_130] : memref<64x1xf32, #tpu.memory_space<vmem>>, vector<64x1xf32>
    %109 = vector.broadcast %108 : vector<64x1xf32> to vector<64x128xf32>
    %110 = arith.addf %107, %109 : vector<64x128xf32>
    %111 = arith.addf %110, %79 : vector<64x128xf32>
    %cst_131 = arith.constant 0.000000e+00 : f32
    %112 = vector.broadcast %cst_131 : f32 to vector<64x128xf32>
    %113 = arith.cmpf oge, %111, %112 : vector<64x128xf32>
    %cst_132 = arith.constant 0.00999999977 : f32
    %114 = vector.broadcast %cst_132 : f32 to vector<64x128xf32>
    %115 = arith.mulf %114, %111 : vector<64x128xf32>
    %116 = arith.select %113, %111, %115 : vector<64x128xi1>, vector<64x128xf32>
    %c0_133 = arith.constant 0 : index
    %c128_134 = arith.constant 128 : index
    %117 = vector.load %arg21[%c0_133, %c128_134] : memref<64x320xf32, #tpu.memory_space<vmem>>, vector<64x128xf32>
    tpu.vector_store %arg21[%c0_133, %c128_134], %116 {strides = array<i32>} : memref<64x320xf32, #tpu.memory_space<vmem>>, vector<64x128xf32>,
    %c0_135 = arith.constant 0 : index
    %c116_136 = arith.constant 116 : index
    %118 = vector.load %arg21[%c0_135, %c116_136] : memref<64x320xf32, #tpu.memory_space<vmem>>, vector<64x128xf32>
    %c0_137 = arith.constant 0 : index
    %c0_138 = arith.constant 0 : index
    %119 = vector.load %arg22[%c0_137, %c0_138] : memref<256x128xf32, #tpu.memory_space<vmem>>, vector<64x128xf32>
    tpu.vector_store %arg22[%c0_137, %c0_138], %118 {strides = array<i32>} : memref<256x128xf32, #tpu.memory_space<vmem>>, vector<64x128xf32>,
    %c0_139 = arith.constant 0 : index
    %c128_140 = arith.constant 128 : index
    %120 = vector.load %arg21[%c0_139, %c128_140] : memref<64x320xf32, #tpu.memory_space<vmem>>, vector<64x128xf32>
    %c64_141 = arith.constant 64 : index
    %c0_142 = arith.constant 0 : index
    %121 = vector.load %arg22[%c64_141, %c0_142] : memref<256x128xf32, #tpu.memory_space<vmem>>, vector<64x128xf32>
    tpu.vector_store %arg22[%c64_141, %c0_142], %120 {strides = array<i32>} : memref<256x128xf32, #tpu.memory_space<vmem>>, vector<64x128xf32>,
    %c0_143 = arith.constant 0 : index
    %c140_144 = arith.constant 140 : index
    %122 = vector.load %arg21[%c0_143, %c140_144] : memref<64x320xf32, #tpu.memory_space<vmem>>, vector<64x128xf32>
    %c128_145 = arith.constant 128 : index
    %c0_146 = arith.constant 0 : index
    %123 = vector.load %arg22[%c128_145, %c0_146] : memref<256x128xf32, #tpu.memory_space<vmem>>, vector<64x128xf32>
    tpu.vector_store %arg22[%c128_145, %c0_146], %122 {strides = array<i32>} : memref<256x128xf32, #tpu.memory_space<vmem>>, vector<64x128xf32>,
    %c0_147 = arith.constant 0 : index
    %c0_148 = arith.constant 0 : index
    %124 = vector.load %arg10[%c0_147, %c0_148] : memref<64x192xf32, #tpu.memory_space<vmem>>, vector<64x192xf32>
    %c0_149 = arith.constant 0 : index
    %c0_150 = arith.constant 0 : index
    %125 = vector.load %arg22[%c0_149, %c0_150] : memref<256x128xf32, #tpu.memory_space<vmem>>, vector<192x128xf32>
    %cst_151 = arith.constant dense<0.000000e+00> : vector<64x128xf32>
    %126 = tpu.matmul %124, %125, %cst_151 {dimension_numbers = #tpu.dot_dimension_numbers<[1], [0], [0], [1], [0, 0, 1, 1], [], []>} : vector<64x192xf32>, vector<192x128xf32>, vector<64x128xf32> -> vector<64x128xf32>
    %c0_152 = arith.constant 0 : index
    %c0_153 = arith.constant 0 : index
    %127 = vector.load %arg11[%c0_152, %c0_153] : memref<64x1xf32, #tpu.memory_space<vmem>>, vector<64x1xf32>
    %128 = vector.broadcast %127 : vector<64x1xf32> to vector<64x128xf32>
    %129 = arith.addf %126, %128 : vector<64x128xf32>
    %cst_154 = arith.constant 0.000000e+00 : f32
    %130 = vector.broadcast %cst_154 : f32 to vector<64x128xf32>
    %131 = arith.cmpf oge, %129, %130 : vector<64x128xf32>
    %cst_155 = arith.constant 0.00999999977 : f32
    %132 = vector.broadcast %cst_155 : f32 to vector<64x128xf32>
    %133 = arith.mulf %132, %129 : vector<64x128xf32>
    %134 = arith.select %131, %129, %133 : vector<64x128xi1>, vector<64x128xf32>
    %c0_156 = arith.constant 0 : index
    %c128_157 = arith.constant 128 : index
    %135 = vector.load %arg21[%c0_156, %c128_157] : memref<64x320xf32, #tpu.memory_space<vmem>>, vector<64x128xf32>
    tpu.vector_store %arg21[%c0_156, %c128_157], %134 {strides = array<i32>} : memref<64x320xf32, #tpu.memory_space<vmem>>, vector<64x128xf32>,
    %c0_158 = arith.constant 0 : index
    %c124_159 = arith.constant 124 : index
    %136 = vector.load %arg21[%c0_158, %c124_159] : memref<64x320xf32, #tpu.memory_space<vmem>>, vector<64x128xf32>
    %c0_160 = arith.constant 0 : index
    %c0_161 = arith.constant 0 : index
    %137 = vector.load %arg22[%c0_160, %c0_161] : memref<256x128xf32, #tpu.memory_space<vmem>>, vector<64x128xf32>
    tpu.vector_store %arg22[%c0_160, %c0_161], %136 {strides = array<i32>} : memref<256x128xf32, #tpu.memory_space<vmem>>, vector<64x128xf32>,
    %c0_162 = arith.constant 0 : index
    %c128_163 = arith.constant 128 : index
    %138 = vector.load %arg21[%c0_162, %c128_163] : memref<64x320xf32, #tpu.memory_space<vmem>>, vector<64x128xf32>
    %c64_164 = arith.constant 64 : index
    %c0_165 = arith.constant 0 : index
    %139 = vector.load %arg22[%c64_164, %c0_165] : memref<256x128xf32, #tpu.memory_space<vmem>>, vector<64x128xf32>
    tpu.vector_store %arg22[%c64_164, %c0_165], %138 {strides = array<i32>} : memref<256x128xf32, #tpu.memory_space<vmem>>, vector<64x128xf32>,
    %c0_166 = arith.constant 0 : index
    %c132_167 = arith.constant 132 : index
    %140 = vector.load %arg21[%c0_166, %c132_167] : memref<64x320xf32, #tpu.memory_space<vmem>>, vector<64x128xf32>
    %c128_168 = arith.constant 128 : index
    %c0_169 = arith.constant 0 : index
    %141 = vector.load %arg22[%c128_168, %c0_169] : memref<256x128xf32, #tpu.memory_space<vmem>>, vector<64x128xf32>
    tpu.vector_store %arg22[%c128_168, %c0_169], %140 {strides = array<i32>} : memref<256x128xf32, #tpu.memory_space<vmem>>, vector<64x128xf32>,
    %c0_170 = arith.constant 0 : index
    %c0_171 = arith.constant 0 : index
    %142 = vector.load %arg12[%c0_170, %c0_171] : memref<64x192xf32, #tpu.memory_space<vmem>>, vector<64x192xf32>
    %c0_172 = arith.constant 0 : index
    %c0_173 = arith.constant 0 : index
    %143 = vector.load %arg22[%c0_172, %c0_173] : memref<256x128xf32, #tpu.memory_space<vmem>>, vector<192x128xf32>
    %cst_174 = arith.constant dense<0.000000e+00> : vector<64x128xf32>
    %144 = tpu.matmul %142, %143, %cst_174 {dimension_numbers = #tpu.dot_dimension_numbers<[1], [0], [0], [1], [0, 0, 1, 1], [], []>} : vector<64x192xf32>, vector<192x128xf32>, vector<64x128xf32> -> vector<64x128xf32>
    %c0_175 = arith.constant 0 : index
    %c0_176 = arith.constant 0 : index
    %145 = vector.load %arg13[%c0_175, %c0_176] : memref<64x1xf32, #tpu.memory_space<vmem>>, vector<64x1xf32>
    %146 = vector.broadcast %145 : vector<64x1xf32> to vector<64x128xf32>
    %147 = arith.addf %144, %146 : vector<64x128xf32>
    %148 = arith.addf %147, %111 : vector<64x128xf32>
    %cst_177 = arith.constant 0.000000e+00 : f32
    %149 = vector.broadcast %cst_177 : f32 to vector<64x128xf32>
    %150 = arith.cmpf oge, %148, %149 : vector<64x128xf32>
    %cst_178 = arith.constant 0.00999999977 : f32
    %151 = vector.broadcast %cst_178 : f32 to vector<64x128xf32>
    %152 = arith.mulf %151, %148 : vector<64x128xf32>
    %153 = arith.select %150, %148, %152 : vector<64x128xi1>, vector<64x128xf32>
    %c0_179 = arith.constant 0 : index
    %c128_180 = arith.constant 128 : index
    %154 = vector.load %arg21[%c0_179, %c128_180] : memref<64x320xf32, #tpu.memory_space<vmem>>, vector<64x128xf32>
    tpu.vector_store %arg21[%c0_179, %c128_180], %153 {strides = array<i32>} : memref<64x320xf32, #tpu.memory_space<vmem>>, vector<64x128xf32>,
    %c0_181 = arith.constant 0 : index
    %c92_182 = arith.constant 92 : index
    %155 = vector.load %arg21[%c0_181, %c92_182] : memref<64x320xf32, #tpu.memory_space<vmem>>, vector<64x128xf32>
    %c0_183 = arith.constant 0 : index
    %c0_184 = arith.constant 0 : index
    %156 = vector.load %arg22[%c0_183, %c0_184] : memref<256x128xf32, #tpu.memory_space<vmem>>, vector<64x128xf32>
    tpu.vector_store %arg22[%c0_183, %c0_184], %155 {strides = array<i32>} : memref<256x128xf32, #tpu.memory_space<vmem>>, vector<64x128xf32>,
    %c0_185 = arith.constant 0 : index
    %c128_186 = arith.constant 128 : index
    %157 = vector.load %arg21[%c0_185, %c128_186] : memref<64x320xf32, #tpu.memory_space<vmem>>, vector<64x128xf32>
    %c64_187 = arith.constant 64 : index
    %c0_188 = arith.constant 0 : index
    %158 = vector.load %arg22[%c64_187, %c0_188] : memref<256x128xf32, #tpu.memory_space<vmem>>, vector<64x128xf32>
    tpu.vector_store %arg22[%c64_187, %c0_188], %157 {strides = array<i32>} : memref<256x128xf32, #tpu.memory_space<vmem>>, vector<64x128xf32>,
    %c0_189 = arith.constant 0 : index
    %c164 = arith.constant 164 : index
    %159 = vector.load %arg21[%c0_189, %c164] : memref<64x320xf32, #tpu.memory_space<vmem>>, vector<64x128xf32>
    %c128_190 = arith.constant 128 : index
    %c0_191 = arith.constant 0 : index
    %160 = vector.load %arg22[%c128_190, %c0_191] : memref<256x128xf32, #tpu.memory_space<vmem>>, vector<64x128xf32>
    tpu.vector_store %arg22[%c128_190, %c0_191], %159 {strides = array<i32>} : memref<256x128xf32, #tpu.memory_space<vmem>>, vector<64x128xf32>,
    %c0_192 = arith.constant 0 : index
    %c0_193 = arith.constant 0 : index
    %161 = vector.load %arg14[%c0_192, %c0_193] : memref<64x192xf32, #tpu.memory_space<vmem>>, vector<64x192xf32>
    %c0_194 = arith.constant 0 : index
    %c0_195 = arith.constant 0 : index
    %162 = vector.load %arg22[%c0_194, %c0_195] : memref<256x128xf32, #tpu.memory_space<vmem>>, vector<192x128xf32>
    %cst_196 = arith.constant dense<0.000000e+00> : vector<64x128xf32>
    %163 = tpu.matmul %161, %162, %cst_196 {dimension_numbers = #tpu.dot_dimension_numbers<[1], [0], [0], [1], [0, 0, 1, 1], [], []>} : vector<64x192xf32>, vector<192x128xf32>, vector<64x128xf32> -> vector<64x128xf32>
    %c0_197 = arith.constant 0 : index
    %c0_198 = arith.constant 0 : index
    %164 = vector.load %arg15[%c0_197, %c0_198] : memref<64x1xf32, #tpu.memory_space<vmem>>, vector<64x1xf32>
    %165 = vector.broadcast %164 : vector<64x1xf32> to vector<64x128xf32>
    %166 = arith.addf %163, %165 : vector<64x128xf32>
    %cst_199 = arith.constant 0.000000e+00 : f32
    %167 = vector.broadcast %cst_199 : f32 to vector<64x128xf32>
    %168 = arith.cmpf oge, %166, %167 : vector<64x128xf32>
    %cst_200 = arith.constant 0.00999999977 : f32
    %169 = vector.broadcast %cst_200 : f32 to vector<64x128xf32>
    %170 = arith.mulf %169, %166 : vector<64x128xf32>
    %171 = arith.select %168, %166, %170 : vector<64x128xi1>, vector<64x128xf32>
    %c0_201 = arith.constant 0 : index
    %c128_202 = arith.constant 128 : index
    %172 = vector.load %arg21[%c0_201, %c128_202] : memref<64x320xf32, #tpu.memory_space<vmem>>, vector<64x128xf32>
    tpu.vector_store %arg21[%c0_201, %c128_202], %171 {strides = array<i32>} : memref<64x320xf32, #tpu.memory_space<vmem>>, vector<64x128xf32>,
    %c0_203 = arith.constant 0 : index
    %c124_204 = arith.constant 124 : index
    %173 = vector.load %arg21[%c0_203, %c124_204] : memref<64x320xf32, #tpu.memory_space<vmem>>, vector<64x128xf32>
    %c0_205 = arith.constant 0 : index
    %c0_206 = arith.constant 0 : index
    %174 = vector.load %arg22[%c0_205, %c0_206] : memref<256x128xf32, #tpu.memory_space<vmem>>, vector<64x128xf32>
    tpu.vector_store %arg22[%c0_205, %c0_206], %173 {strides = array<i32>} : memref<256x128xf32, #tpu.memory_space<vmem>>, vector<64x128xf32>,
    %c0_207 = arith.constant 0 : index
    %c128_208 = arith.constant 128 : index
    %175 = vector.load %arg21[%c0_207, %c128_208] : memref<64x320xf32, #tpu.memory_space<vmem>>, vector<64x128xf32>
    %c64_209 = arith.constant 64 : index
    %c0_210 = arith.constant 0 : index
    %176 = vector.load %arg22[%c64_209, %c0_210] : memref<256x128xf32, #tpu.memory_space<vmem>>, vector<64x128xf32>
    tpu.vector_store %arg22[%c64_209, %c0_210], %175 {strides = array<i32>} : memref<256x128xf32, #tpu.memory_space<vmem>>, vector<64x128xf32>,
    %c0_211 = arith.constant 0 : index
    %c132_212 = arith.constant 132 : index
    %177 = vector.load %arg21[%c0_211, %c132_212] : memref<64x320xf32, #tpu.memory_space<vmem>>, vector<64x128xf32>
    %c128_213 = arith.constant 128 : index
    %c0_214 = arith.constant 0 : index
    %178 = vector.load %arg22[%c128_213, %c0_214] : memref<256x128xf32, #tpu.memory_space<vmem>>, vector<64x128xf32>
    tpu.vector_store %arg22[%c128_213, %c0_214], %177 {strides = array<i32>} : memref<256x128xf32, #tpu.memory_space<vmem>>, vector<64x128xf32>,
    %c0_215 = arith.constant 0 : index
    %c0_216 = arith.constant 0 : index
    %179 = vector.load %arg16[%c0_215, %c0_216] : memref<64x192xf32, #tpu.memory_space<vmem>>, vector<64x192xf32>
    %c0_217 = arith.constant 0 : index
    %c0_218 = arith.constant 0 : index
    %180 = vector.load %arg22[%c0_217, %c0_218] : memref<256x128xf32, #tpu.memory_space<vmem>>, vector<192x128xf32>
    %cst_219 = arith.constant dense<0.000000e+00> : vector<64x128xf32>
    %181 = tpu.matmul %179, %180, %cst_219 {dimension_numbers = #tpu.dot_dimension_numbers<[1], [0], [0], [1], [0, 0, 1, 1], [], []>} : vector<64x192xf32>, vector<192x128xf32>, vector<64x128xf32> -> vector<64x128xf32>
    %c0_220 = arith.constant 0 : index
    %c0_221 = arith.constant 0 : index
    %182 = vector.load %arg17[%c0_220, %c0_221] : memref<64x1xf32, #tpu.memory_space<vmem>>, vector<64x1xf32>
    %183 = vector.broadcast %182 : vector<64x1xf32> to vector<64x128xf32>
    %184 = arith.addf %181, %183 : vector<64x128xf32>
    %185 = arith.addf %184, %148 : vector<64x128xf32>
    %cst_222 = arith.constant 0.000000e+00 : f32
    %186 = vector.broadcast %cst_222 : f32 to vector<64x128xf32>
    %187 = arith.cmpf oge, %185, %186 : vector<64x128xf32>
    %cst_223 = arith.constant 0.00999999977 : f32
    %188 = vector.broadcast %cst_223 : f32 to vector<64x128xf32>
    %189 = arith.mulf %188, %185 : vector<64x128xf32>
    %190 = arith.select %187, %185, %189 : vector<64x128xi1>, vector<64x128xf32>
    %c0_224 = arith.constant 0 : index
    %c128_225 = arith.constant 128 : index
    %191 = vector.load %arg21[%c0_224, %c128_225] : memref<64x320xf32, #tpu.memory_space<vmem>>, vector<64x128xf32>
    tpu.vector_store %arg21[%c0_224, %c128_225], %190 {strides = array<i32>} : memref<64x320xf32, #tpu.memory_space<vmem>>, vector<64x128xf32>,
    %c0_226 = arith.constant 0 : index
    %c116_227 = arith.constant 116 : index
    %192 = vector.load %arg21[%c0_226, %c116_227] : memref<64x320xf32, #tpu.memory_space<vmem>>, vector<64x128xf32>
    %c0_228 = arith.constant 0 : index
    %c0_229 = arith.constant 0 : index
    %193 = vector.load %arg18[%c0_228, %c0_229] : memref<64x7xf32, #tpu.memory_space<vmem>>, vector<64x1xf32>
    %194 = vector.broadcast %193 : vector<64x1xf32> to vector<64x128xf32>
    %195 = arith.mulf %194, %192 : vector<64x128xf32>
    %c0_230 = arith.constant 0 : index
    %c120_231 = arith.constant 120 : index
    %196 = vector.load %arg21[%c0_230, %c120_231] : memref<64x320xf32, #tpu.memory_space<vmem>>, vector<64x128xf32>
    %c0_232 = arith.constant 0 : index
    %c1 = arith.constant 1 : index
    %197 = vector.load %arg18[%c0_232, %c1] : memref<64x7xf32, #tpu.memory_space<vmem>>, vector<64x1xf32>
    %198 = vector.broadcast %197 : vector<64x1xf32> to vector<64x128xf32>
    %199 = arith.mulf %198, %196 : vector<64x128xf32>
    %200 = arith.addf %195, %199 : vector<64x128xf32>
    %c0_233 = arith.constant 0 : index
    %c124_234 = arith.constant 124 : index
    %201 = vector.load %arg21[%c0_233, %c124_234] : memref<64x320xf32, #tpu.memory_space<vmem>>, vector<64x128xf32>
    %c0_235 = arith.constant 0 : index
    %c2 = arith.constant 2 : index
    %202 = vector.load %arg18[%c0_235, %c2] : memref<64x7xf32, #tpu.memory_space<vmem>>, vector<64x1xf32>
    %203 = vector.broadcast %202 : vector<64x1xf32> to vector<64x128xf32>
    %204 = arith.mulf %203, %201 : vector<64x128xf32>
    %205 = arith.addf %200, %204 : vector<64x128xf32>
    %c0_236 = arith.constant 0 : index
    %c128_237 = arith.constant 128 : index
    %206 = vector.load %arg21[%c0_236, %c128_237] : memref<64x320xf32, #tpu.memory_space<vmem>>, vector<64x128xf32>
    %c0_238 = arith.constant 0 : index
    %c3 = arith.constant 3 : index
    %207 = vector.load %arg18[%c0_238, %c3] : memref<64x7xf32, #tpu.memory_space<vmem>>, vector<64x1xf32>
    %208 = vector.broadcast %207 : vector<64x1xf32> to vector<64x128xf32>
    %209 = arith.mulf %208, %206 : vector<64x128xf32>
    %210 = arith.addf %205, %209 : vector<64x128xf32>
    %c0_239 = arith.constant 0 : index
    %c132_240 = arith.constant 132 : index
    %211 = vector.load %arg21[%c0_239, %c132_240] : memref<64x320xf32, #tpu.memory_space<vmem>>, vector<64x128xf32>
    %c0_241 = arith.constant 0 : index
    %c4 = arith.constant 4 : index
    %212 = vector.load %arg18[%c0_241, %c4] : memref<64x7xf32, #tpu.memory_space<vmem>>, vector<64x1xf32>
    %213 = vector.broadcast %212 : vector<64x1xf32> to vector<64x128xf32>
    %214 = arith.mulf %213, %211 : vector<64x128xf32>
    %215 = arith.addf %210, %214 : vector<64x128xf32>
    %c0_242 = arith.constant 0 : index
    %c136_243 = arith.constant 136 : index
    %216 = vector.load %arg21[%c0_242, %c136_243] : memref<64x320xf32, #tpu.memory_space<vmem>>, vector<64x128xf32>
    %c0_244 = arith.constant 0 : index
    %c5 = arith.constant 5 : index
    %217 = vector.load %arg18[%c0_244, %c5] : memref<64x7xf32, #tpu.memory_space<vmem>>, vector<64x1xf32>
    %218 = vector.broadcast %217 : vector<64x1xf32> to vector<64x128xf32>
    %219 = arith.mulf %218, %216 : vector<64x128xf32>
    %220 = arith.addf %215, %219 : vector<64x128xf32>
    %c0_245 = arith.constant 0 : index
    %c140_246 = arith.constant 140 : index
    %221 = vector.load %arg21[%c0_245, %c140_246] : memref<64x320xf32, #tpu.memory_space<vmem>>, vector<64x128xf32>
    %c0_247 = arith.constant 0 : index
    %c6 = arith.constant 6 : index
    %222 = vector.load %arg18[%c0_247, %c6] : memref<64x7xf32, #tpu.memory_space<vmem>>, vector<64x1xf32>
    %223 = vector.broadcast %222 : vector<64x1xf32> to vector<64x128xf32>
    %224 = arith.mulf %223, %221 : vector<64x128xf32>
    %225 = arith.addf %220, %224 : vector<64x128xf32>
    %cst_248 = arith.constant dense<0.000000e+00> : vector<128xf32>
    %226 = vector.multi_reduction <add>, %225, %cst_248 [0] : vector<64x128xf32> to vector<128xf32>
    %227 = vector.shape_cast %226 : vector<128xf32> to vector<1x128xf32>
    %c0_249 = arith.constant 0 : index
    %c0_250 = arith.constant 0 : index
    %228 = vector.load %arg19[%c0_249, %c0_250] : memref<1x1xf32, #tpu.memory_space<vmem>>, vector<1x1xf32>
    %229 = vector.broadcast %228 : vector<1x1xf32> to vector<1x128xf32>
    %230 = arith.addf %227, %229 : vector<1x128xf32>
    %231 = math.tanh %230 : vector<1x128xf32>
    %c0_251 = arith.constant 0 : index
    %c0_252 = arith.constant 0 : index
    %c0_253 = arith.constant 0 : index
    %232 = vector.load %arg20[%c0_251, %c0_252, %c0_253] : memref<1x1x128xf32, #tpu.memory_space<vmem>>, vector<1x1x128xf32>
    %233 = vector.shape_cast %232 : vector<1x1x128xf32> to vector<1x128xf32>
    %234 = vector.shape_cast %231 : vector<1x128xf32> to vector<1x1x128xf32>
    tpu.vector_store %arg20[%c0_251, %c0_252, %c0_253], %234 {strides = array<i32>} : memref<1x1x128xf32, #tpu.memory_space<vmem>>, vector<1x1x128xf32>,
    return
  }
  func.func @transform_0(%arg0: i32) -> (i32, i32, i32) {
    %c0_i32 = arith.constant 0 : i32
    %c0_i32_0 = arith.constant 0 : i32
    %c0_i32_1 = arith.constant 0 : i32
    return %arg0, %c0_i32, %c0_i32_0 : i32, i32, i32
  }
  func.func @transform_1(%arg0: i32) -> (i32, i32) {
    %c0_i32 = arith.constant 0 : i32
    %c0_i32_0 = arith.constant 0 : i32
    %c0_i32_1 = arith.constant 0 : i32
    return %c0_i32, %c0_i32_0 : i32, i32
  }
  func.func @transform_2(%arg0: i32) -> (i32, i32) {
    %c0_i32 = arith.constant 0 : i32
    %c0_i32_0 = arith.constant 0 : i32
    %c0_i32_1 = arith.constant 0 : i32
    return %c0_i32, %c0_i32_0 : i32, i32
  }
  func.func @transform_3(%arg0: i32) -> (i32, i32) {
    %c0_i32 = arith.constant 0 : i32
    %c0_i32_0 = arith.constant 0 : i32
    %c0_i32_1 = arith.constant 0 : i32
    return %c0_i32, %c0_i32_0 : i32, i32
  }
  func.func @transform_4(%arg0: i32) -> (i32, i32) {
    %c0_i32 = arith.constant 0 : i32
    %c0_i32_0 = arith.constant 0 : i32
    %c0_i32_1 = arith.constant 0 : i32
    return %c0_i32, %c0_i32_0 : i32, i32
  }
  func.func @transform_5(%arg0: i32) -> (i32, i32) {
    %c0_i32 = arith.constant 0 : i32
    %c0_i32_0 = arith.constant 0 : i32
    %c0_i32_1 = arith.constant 0 : i32
    return %c0_i32, %c0_i32_0 : i32, i32
  }
  func.func @transform_6(%arg0: i32) -> (i32, i32) {
    %c0_i32 = arith.constant 0 : i32
    %c0_i32_0 = arith.constant 0 : i32
    %c0_i32_1 = arith.constant 0 : i32
    return %c0_i32, %c0_i32_0 : i32, i32
  }
  func.func @transform_7(%arg0: i32) -> (i32, i32) {
    %c0_i32 = arith.constant 0 : i32
    %c0_i32_0 = arith.constant 0 : i32
    %c0_i32_1 = arith.constant 0 : i32
    return %c0_i32, %c0_i32_0 : i32, i32
  }
  func.func @transform_8(%arg0: i32) -> (i32, i32) {
    %c0_i32 = arith.constant 0 : i32
    %c0_i32_0 = arith.constant 0 : i32
    %c0_i32_1 = arith.constant 0 : i32
    return %c0_i32, %c0_i32_0 : i32, i32
  }
  func.func @transform_9(%arg0: i32) -> (i32, i32) {
    %c0_i32 = arith.constant 0 : i32
    %c0_i32_0 = arith.constant 0 : i32
    %c0_i32_1 = arith.constant 0 : i32
    return %c0_i32, %c0_i32_0 : i32, i32
  }
  func.func @transform_10(%arg0: i32) -> (i32, i32) {
    %c0_i32 = arith.constant 0 : i32
    %c0_i32_0 = arith.constant 0 : i32
    %c0_i32_1 = arith.constant 0 : i32
    return %c0_i32, %c0_i32_0 : i32, i32
  }
  func.func @transform_11(%arg0: i32) -> (i32, i32) {
    %c0_i32 = arith.constant 0 : i32
    %c0_i32_0 = arith.constant 0 : i32
    %c0_i32_1 = arith.constant 0 : i32
    return %c0_i32, %c0_i32_0 : i32, i32
  }
  func.func @transform_12(%arg0: i32) -> (i32, i32) {
    %c0_i32 = arith.constant 0 : i32
    %c0_i32_0 = arith.constant 0 : i32
    %c0_i32_1 = arith.constant 0 : i32
    return %c0_i32, %c0_i32_0 : i32, i32
  }
  func.func @transform_13(%arg0: i32) -> (i32, i32) {
    %c0_i32 = arith.constant 0 : i32
    %c0_i32_0 = arith.constant 0 : i32
    %c0_i32_1 = arith.constant 0 : i32
    return %c0_i32, %c0_i32_0 : i32, i32
  }
  func.func @transform_14(%arg0: i32) -> (i32, i32) {
    %c0_i32 = arith.constant 0 : i32
    %c0_i32_0 = arith.constant 0 : i32
    %c0_i32_1 = arith.constant 0 : i32
    return %c0_i32, %c0_i32_0 : i32, i32
  }
  func.func @transform_15(%arg0: i32) -> (i32, i32) {
    %c0_i32 = arith.constant 0 : i32
    %c0_i32_0 = arith.constant 0 : i32
    %c0_i32_1 = arith.constant 0 : i32
    return %c0_i32, %c0_i32_0 : i32, i32
  }
  func.func @transform_16(%arg0: i32) -> (i32, i32) {
    %c0_i32 = arith.constant 0 : i32
    %c0_i32_0 = arith.constant 0 : i32
    %c0_i32_1 = arith.constant 0 : i32
    return %c0_i32, %c0_i32_0 : i32, i32
  }
  func.func @transform_17(%arg0: i32) -> (i32, i32) {
    %c0_i32 = arith.constant 0 : i32
    %c0_i32_0 = arith.constant 0 : i32
    %c0_i32_1 = arith.constant 0 : i32
    return %c0_i32, %c0_i32_0 : i32, i32
  }
  func.func @transform_18(%arg0: i32) -> (i32, i32) {
    %c0_i32 = arith.constant 0 : i32
    %c0_i32_0 = arith.constant 0 : i32
    %c0_i32_1 = arith.constant 0 : i32
    return %c0_i32, %c0_i32_0 : i32, i32
  }
  func.func @transform_19(%arg0: i32) -> (i32, i32, i32) {
    %c0_i32 = arith.constant 0 : i32
    %c0_i32_0 = arith.constant 0 : i32
    %c0_i32_1 = arith.constant 0 : i32
    return %arg0, %c0_i32, %c0_i32_0 : i32, i32, i32
  }
}

</mosaic_0001>

<llo_original>
// kernel: tpu_custom_call.1
$region0: #{tpu_custom_call.1}
  #allocation0 [shape = 'u32[]', space=smem, size = 0x4, offset = 0x4, fixed_abs, tag = 'smem constant byte address 0x4 - core index']
  #allocation1 [shape = 'u32[144,128]{1,0:T(1,128)}', space=vmem, size = 0x12000, scoped, tag = 'internal scratch']
  #allocation2 [shape = 'f32[64,320]{1,0:T(8,128)}', space=vmem, size = 0x18000, scoped, tag = 'scratch operand']
  #allocation3 [shape = 'f32[256,128]{1,0:T(8,128)}', space=vmem, size = 0x20000, scoped, tag = 'scratch operand']
  #allocation4 [shape = 'f32[1,1]{1,0:T(1,128)S(1)}', space=vmem, size = 0x200, scoped, tag = 'scoped memory for tpu_custom_call.1']
  %s0 = inlined_call_operand.vmem [shape: f32[2,32,4], index: 0, kind: input, shape index: {}]
  %s1 = inlined_call_operand.vmem [shape: f32[512,32], index: 1, kind: input, shape index: {}]
  %s2 = inlined_call_operand.vmem [shape: f32[512,1], index: 2, kind: input, shape index: {}]
  %s3 = inlined_call_operand.vmem [shape: f32[64,1024], index: 3, kind: input, shape index: {}]
  %s4 = inlined_call_operand.vmem [shape: f32[64,1], index: 4, kind: input, shape index: {}]
  %s5 = inlined_call_operand.vmem [shape: f32[64,192], index: 5, kind: input, shape index: {}]
  %s6 = inlined_call_operand.vmem [shape: f32[64,1], index: 6, kind: input, shape index: {}]
  %s7 = inlined_call_operand.vmem [shape: f32[64,192], index: 7, kind: input, shape index: {}]
  %s8 = inlined_call_operand.vmem [shape: f32[64,1], index: 8, kind: input, shape index: {}]
  %s9 = inlined_call_operand.vmem [shape: f32[64,192], index: 9, kind: input, shape index: {}]
  %s10 = inlined_call_operand.vmem [shape: f32[64,1], index: 10, kind: input, shape index: {}]
  %s11 = inlined_call_operand.vmem [shape: f32[64,192], index: 11, kind: input, shape index: {}]
  %s12 = inlined_call_operand.vmem [shape: f32[64,1], index: 12, kind: input, shape index: {}]
  %s13 = inlined_call_operand.vmem [shape: f32[64,192], index: 13, kind: input, shape index: {}]
  %s14 = inlined_call_operand.vmem [shape: f32[64,1], index: 14, kind: input, shape index: {}]
  %s15 = inlined_call_operand.vmem [shape: f32[64,192], index: 15, kind: input, shape index: {}]
  %s16 = inlined_call_operand.vmem [shape: f32[64,1], index: 16, kind: input, shape index: {}]
  %s17 = inlined_call_operand.vmem [shape: f32[64,7], index: 17, kind: input, shape index: {}]
  %s18 = inlined_call_operand.<no memory space> [shape: f32[1,1], index: 18, kind: input, shape index: {}]
  %s19 = inlined_call_operand.hbm [shape: f32[2,1,128], index: 19, kind: output, shape index: {}]
  %s20 = sld [smem:[#allocation0]]
  $region109: #{tpu_custom_call.1} parent=0
    _
  %s22 = ssub.s32 1, %s20
  %s23 = scalar_select 0, %s22, %s20
  %v24 = vstv %s18
  %25 = vst [vmem:[#allocation4] sm:$0x1] %v24
  $region1: #{tpu_custom_call.1} parent=0
    #allocation5 [shape = 'u8[1024]{0}', space=vmem, size = 0x400, scoped, tag = 'output window, operand 0']
    #allocation6 [shape = 's32[2]{0}', space=sflag, size = 0x8, scoped, tag = 'scoped memory for tpu_custom_call.1']
    %26 = vsyncpa [#allocation6], 0
    %s27 = scalar_lea.sflag [#allocation6], 1
    %28 = vsyncpa %s27, 0
    loop: start=0, step=1, limit=4
    $region2: #{tpu_custom_call.1} parent=1 // loop_pre_header
      _
    $region3: #{tpu_custom_call.1} parent=1 // loop_header
      %s30 = sphi 0, %s34
      %p31 = scmp.ge.s32.totalorder %s30, 4
      %s40 = sphi 0, %s42
      %s43 = sphi 0, %s40
      %s44 = sphi 0, %s43
      %s60 = sphi 0, %s44
      %s64 = sphi 0, %s64
      %s66 = sphi 0, %s64
      %s67 = sphi 0, %s66
      %s81 = sphi 0, %s67
      %s85 = sphi 0, %s85
      %s87 = sphi 0, %s85
      %s88 = sphi 0, %s87
      %s102 = sphi 0, %s88
      %s106 = sphi 0, %s106
      %s108 = sphi 0, %s106
      %s109 = sphi 0, %s108
      %s123 = sphi 0, %s109
      %s127 = sphi 0, %s127
      %s129 = sphi 0, %s127
      %s130 = sphi 0, %s129
      %s144 = sphi 0, %s130
      %s148 = sphi 0, %s148
      %s150 = sphi 0, %s148
      %s151 = sphi 0, %s150
      %s165 = sphi 0, %s151
      %s169 = sphi 0, %s169
      %s171 = sphi 0, %s169
      %s172 = sphi 0, %s171
      %s186 = sphi 0, %s172
      %s190 = sphi 0, %s190
      %s192 = sphi 0, %s190
      %s193 = sphi 0, %s192
      %s207 = sphi 0, %s193
      %s211 = sphi 0, %s211
      %s213 = sphi 0, %s211
      %s214 = sphi 0, %s213
      %s228 = sphi 0, %s214
      %s232 = sphi 0, %s232
      %s234 = sphi 0, %s232
      %s235 = sphi 0, %s234
      %s249 = sphi 0, %s235
      %s253 = sphi 0, %s253
      %s255 = sphi 0, %s253
      %s256 = sphi 0, %s255
      %s270 = sphi 0, %s256
      %s274 = sphi 0, %s274
      %s276 = sphi 0, %s274
      %s277 = sphi 0, %s276
      %s291 = sphi 0, %s277
      %s295 = sphi 0, %s295
      %s297 = sphi 0, %s295
      %s298 = sphi 0, %s297
      %s312 = sphi 0, %s298
      %s316 = sphi 0, %s316
      %s318 = sphi 0, %s316
      %s319 = sphi 0, %s318
      %s333 = sphi 0, %s319
      %s337 = sphi 0, %s337
      %s339 = sphi 0, %s337
      %s340 = sphi 0, %s339
      %s354 = sphi 0, %s340
      %s358 = sphi 0, %s358
      %s360 = sphi 0, %s358
      %s361 = sphi 0, %s360
      %s375 = sphi 0, %s361
      %s379 = sphi 0, %s379
      %s381 = sphi 0, %s379
      %s382 = sphi 0, %s381
      %s396 = sphi 0, %s382
      %s400 = sphi 0, %s400
      %s402 = sphi 0, %s400
      %s403 = sphi 0, %s402
      %s417 = sphi 0, %s403
      %s421 = sphi 0, %s421
      %s423 = sphi 0, %s421
      %s424 = sphi 0, %s423
      %s438 = sphi 0, %s424
      %s444 = sphi 0, %s446
      %s447 = sphi 0, %s444
      %s448 = sphi 0, %s447
      %s464 = sphi 0, %s448
    $region4: #{tpu_custom_call.1} parent=1 // loop_header_branch
      %33 = sbr.rel (%p31) target = $region8
    $region5: #{tpu_custom_call.1} parent=1 // loop_body
      %s35 = ssub.s32 %s30, 1
      %s36 = ssub.s32 %s30, 2
      %s37 = sadd.s32 %s30, 1
      %s38 = ssub.s32 %s30, %s37
      %p39 = scmp.eq.s32.totalorder %s38, 0
      %s41 = sadd.s32 %s40, 1
      %s42 = scalar_select %p39, %s40, %s41
      %p45 = pneg %p39
      %p46 = scmp.eq.s32.totalorder %s30, 1
      %p47 = por %p45, %p46
      %p48 = scmp.ne.s32.totalorder %s40, %s43
      %p49 = scmp.eq.s32.totalorder %s30, 0
      %p50 = por %p48, %p49
      %p51 = scmp.ne.s32.totalorder %s40, %s43
      %p52 = scmp.eq.s32.totalorder %s35, 1
      %p53 = por %p51, %p52
      %p54 = scmp.ne.s32.totalorder %s43, %s44
      %p55 = scmp.eq.s32.totalorder %s35, 0
      %p56 = por %p54, %p55
      %p57 = scmp.ne.s32.totalorder %s43, %s44
      %p58 = scmp.eq.s32.totalorder %s36, 1
      %p59 = por %p57, %p58
      %p61 = scmp.ne.s32.totalorder %s44, %s60
      %p62 = scmp.eq.s32.totalorder %s36, 0
      %p63 = por %p61, %p62
      %s65 = sadd.s32 %s64, 1
      %p68 = scmp.eq.s32.totalorder %s30, 1
      %p69 = scmp.ne.s32.totalorder %s64, %s66
      %p70 = scmp.eq.s32.totalorder %s30, 0
      %p71 = por %p69, %p70
      %p72 = scmp.ne.s32.totalorder %s64, %s66
      %p73 = scmp.eq.s32.totalorder %s35, 1
      %p74 = por %p72, %p73
      %p75 = scmp.ne.s32.totalorder %s66, %s67
      %p76 = scmp.eq.s32.totalorder %s35, 0
      %p77 = por %p75, %p76
      %p78 = scmp.ne.s32.totalorder %s66, %s67
      %p79 = scmp.eq.s32.totalorder %s36, 1
      %p80 = por %p78, %p79
      %p82 = scmp.ne.s32.totalorder %s67, %s81
      %p83 = scmp.eq.s32.totalorder %s36, 0
      %p84 = por %p82, %p83
      %s86 = sadd.s32 %s85, 1
      %p89 = scmp.eq.s32.totalorder %s30, 1
      %p90 = scmp.ne.s32.totalorder %s85, %s87
      %p91 = scmp.eq.s32.totalorder %s30, 0
      %p92 = por %p90, %p91
      %p93 = scmp.ne.s32.totalorder %s85, %s87
      %p94 = scmp.eq.s32.totalorder %s35, 1
      %p95 = por %p93, %p94
      %p96 = scmp.ne.s32.totalorder %s87, %s88
      %p97 = scmp.eq.s32.totalorder %s35, 0
      %p98 = por %p96, %p97
      %p99 = scmp.ne.s32.totalorder %s87, %s88
      %p100 = scmp.eq.s32.totalorder %s36, 1
      %p101 = por %p99, %p100
      %p103 = scmp.ne.s32.totalorder %s88, %s102
      %p104 = scmp.eq.s32.totalorder %s36, 0
      %p105 = por %p103, %p104
      %s107 = sadd.s32 %s106, 1
      %p110 = scmp.eq.s32.totalorder %s30, 1
      %p111 = scmp.ne.s32.totalorder %s106, %s108
      %p112 = scmp.eq.s32.totalorder %s30, 0
      %p113 = por %p111, %p112
      %p114 = scmp.ne.s32.totalorder %s106, %s108
      %p115 = scmp.eq.s32.totalorder %s35, 1
      %p116 = por %p114, %p115
      %p117 = scmp.ne.s32.totalorder %s108, %s109
      %p118 = scmp.eq.s32.totalorder %s35, 0
      %p119 = por %p117, %p118
      %p120 = scmp.ne.s32.totalorder %s108, %s109
      %p121 = scmp.eq.s32.totalorder %s36, 1
      %p122 = por %p120, %p121
      %p124 = scmp.ne.s32.totalorder %s109, %s123
      %p125 = scmp.eq.s32.totalorder %s36, 0
      %p126 = por %p124, %p125
      %s128 = sadd.s32 %s127, 1
      %p131 = scmp.eq.s32.totalorder %s30, 1
      %p132 = scmp.ne.s32.totalorder %s127, %s129
      %p133 = scmp.eq.s32.totalorder %s30, 0
      %p134 = por %p132, %p133
      %p135 = scmp.ne.s32.totalorder %s127, %s129
      %p136 = scmp.eq.s32.totalorder %s35, 1
      %p137 = por %p135, %p136
      %p138 = scmp.ne.s32.totalorder %s129, %s130
      %p139 = scmp.eq.s32.totalorder %s35, 0
      %p140 = por %p138, %p139
      %p141 = scmp.ne.s32.totalorder %s129, %s130
      %p142 = scmp.eq.s32.totalorder %s36, 1
      %p143 = por %p141, %p142
      %p145 = scmp.ne.s32.totalorder %s130, %s144
      %p146 = scmp.eq.s32.totalorder %s36, 0
      %p147 = por %p145, %p146
      %s149 = sadd.s32 %s148, 1
      %p152 = scmp.eq.s32.totalorder %s30, 1
      %p153 = scmp.ne.s32.totalorder %s148, %s150
      %p154 = scmp.eq.s32.totalorder %s30, 0
      %p155 = por %p153, %p154
      %p156 = scmp.ne.s32.totalorder %s148, %s150
      %p157 = scmp.eq.s32.totalorder %s35, 1
      %p158 = por %p156, %p157
      %p159 = scmp.ne.s32.totalorder %s150, %s151
      %p160 = scmp.eq.s32.totalorder %s35, 0
      %p161 = por %p159, %p160
      %p162 = scmp.ne.s32.totalorder %s150, %s151
      %p163 = scmp.eq.s32.totalorder %s36, 1
      %p164 = por %p162, %p163
      %p166 = scmp.ne.s32.totalorder %s151, %s165
      %p167 = scmp.eq.s32.totalorder %s36, 0
      %p168 = por %p166, %p167
      %s170 = sadd.s32 %s169, 1
      %p173 = scmp.eq.s32.totalorder %s30, 1
      %p174 = scmp.ne.s32.totalorder %s169, %s171
      %p175 = scmp.eq.s32.totalorder %s30, 0
      %p176 = por %p174, %p175
      %p177 = scmp.ne.s32.totalorder %s169, %s171
      %p178 = scmp.eq.s32.totalorder %s35, 1
      %p179 = por %p177, %p178
      %p180 = scmp.ne.s32.totalorder %s171, %s172
      %p181 = scmp.eq.s32.totalorder %s35, 0
      %p182 = por %p180, %p181
      %p183 = scmp.ne.s32.totalorder %s171, %s172
      %p184 = scmp.eq.s32.totalorder %s36, 1
      %p185 = por %p183, %p184
      %p187 = scmp.ne.s32.totalorder %s172, %s186
      %p188 = scmp.eq.s32.totalorder %s36, 0
      %p189 = por %p187, %p188
      %s191 = sadd.s32 %s190, 1
      %p194 = scmp.eq.s32.totalorder %s30, 1
      %p195 = scmp.ne.s32.totalorder %s190, %s192
      %p196 = scmp.eq.s32.totalorder %s30, 0
      %p197 = por %p195, %p196
      %p198 = scmp.ne.s32.totalorder %s190, %s192
      %p199 = scmp.eq.s32.totalorder %s35, 1
      %p200 = por %p198, %p199
      %p201 = scmp.ne.s32.totalorder %s192, %s193
      %p202 = scmp.eq.s32.totalorder %s35, 0
      %p203 = por %p201, %p202
      %p204 = scmp.ne.s32.totalorder %s192, %s193
      %p205 = scmp.eq.s32.totalorder %s36, 1
      %p206 = por %p204, %p205
      %p208 = scmp.ne.s32.totalorder %s193, %s207
      %p209 = scmp.eq.s32.totalorder %s36, 0
      %p210 = por %p208, %p209
      %s212 = sadd.s32 %s211, 1
      %p215 = scmp.eq.s32.totalorder %s30, 1
      %p216 = scmp.ne.s32.totalorder %s211, %s213
      %p217 = scmp.eq.s32.totalorder %s30, 0
      %p218 = por %p216, %p217
      %p219 = scmp.ne.s32.totalorder %s211, %s213
      %p220 = scmp.eq.s32.totalorder %s35, 1
      %p221 = por %p219, %p220
      %p222 = scmp.ne.s32.totalorder %s213, %s214
      %p223 = scmp.eq.s32.totalorder %s35, 0
      %p224 = por %p222, %p223
      %p225 = scmp.ne.s32.totalorder %s213, %s214
      %p226 = scmp.eq.s32.totalorder %s36, 1
      %p227 = por %p225, %p226
      %p229 = scmp.ne.s32.totalorder %s214, %s228
      %p230 = scmp.eq.s32.totalorder %s36, 0
      %p231 = por %p229, %p230
      %s233 = sadd.s32 %s232, 1
      %p236 = scmp.eq.s32.totalorder %s30, 1
      %p237 = scmp.ne.s32.totalorder %s232, %s234
      %p238 = scmp.eq.s32.totalorder %s30, 0
      %p239 = por %p237, %p238
      %p240 = scmp.ne.s32.totalorder %s232, %s234
      %p241 = scmp.eq.s32.totalorder %s35, 1
      %p242 = por %p240, %p241
      %p243 = scmp.ne.s32.totalorder %s234, %s235
      %p244 = scmp.eq.s32.totalorder %s35, 0
      %p245 = por %p243, %p244
      %p246 = scmp.ne.s32.totalorder %s234, %s235
      %p247 = scmp.eq.s32.totalorder %s36, 1
      %p248 = por %p246, %p247
      %p250 = scmp.ne.s32.totalorder %s235, %s249
      %p251 = scmp.eq.s32.totalorder %s36, 0
      %p252 = por %p250, %p251
      %s254 = sadd.s32 %s253, 1
      %p257 = scmp.eq.s32.totalorder %s30, 1
      %p258 = scmp.ne.s32.totalorder %s253, %s255
      %p259 = scmp.eq.s32.totalorder %s30, 0
      %p260 = por %p258, %p259
      %p261 = scmp.ne.s32.totalorder %s253, %s255
      %p262 = scmp.eq.s32.totalorder %s35, 1
      %p263 = por %p261, %p262
      %p264 = scmp.ne.s32.totalorder %s255, %s256
      %p265 = scmp.eq.s32.totalorder %s35, 0
      %p266 = por %p264, %p265
      %p267 = scmp.ne.s32.totalorder %s255, %s256
      %p268 = scmp.eq.s32.totalorder %s36, 1
      %p269 = por %p267, %p268
      %p271 = scmp.ne.s32.totalorder %s256, %s270
      %p272 = scmp.eq.s32.totalorder %s36, 0
      %p273 = por %p271, %p272
      %s275 = sadd.s32 %s274, 1
      %p278 = scmp.eq.s32.totalorder %s30, 1
      %p279 = scmp.ne.s32.totalorder %s274, %s276
      %p280 = scmp.eq.s32.totalorder %s30, 0
      %p281 = por %p279, %p280
      %p282 = scmp.ne.s32.totalorder %s274, %s276
      %p283 = scmp.eq.s32.totalorder %s35, 1
      %p284 = por %p282, %p283
      %p285 = scmp.ne.s32.totalorder %s276, %s277
      %p286 = scmp.eq.s32.totalorder %s35, 0
      %p287 = por %p285, %p286
      %p288 = scmp.ne.s32.totalorder %s276, %s277
      %p289 = scmp.eq.s32.totalorder %s36, 1
      %p290 = por %p288, %p289
      %p292 = scmp.ne.s32.totalorder %s277, %s291
      %p293 = scmp.eq.s32.totalorder %s36, 0
      %p294 = por %p292, %p293
      %s296 = sadd.s32 %s295, 1
      %p299 = scmp.eq.s32.totalorder %s30, 1
      %p300 = scmp.ne.s32.totalorder %s295, %s297
      %p301 = scmp.eq.s32.totalorder %s30, 0
      %p302 = por %p300, %p301
      %p303 = scmp.ne.s32.totalorder %s295, %s297
      %p304 = scmp.eq.s32.totalorder %s35, 1
      %p305 = por %p303, %p304
      %p306 = scmp.ne.s32.totalorder %s297, %s298
      %p307 = scmp.eq.s32.totalorder %s35, 0
      %p308 = por %p306, %p307
      %p309 = scmp.ne.s32.totalorder %s297, %s298
      %p310 = scmp.eq.s32.totalorder %s36, 1
      %p311 = por %p309, %p310
      %p313 = scmp.ne.s32.totalorder %s298, %s312
      %p314 = scmp.eq.s32.totalorder %s36, 0
      %p315 = por %p313, %p314
      %s317 = sadd.s32 %s316, 1
      %p320 = scmp.eq.s32.totalorder %s30, 1
      %p321 = scmp.ne.s32.totalorder %s316, %s318
      %p322 = scmp.eq.s32.totalorder %s30, 0
      %p323 = por %p321, %p322
      %p324 = scmp.ne.s32.totalorder %s316, %s318
      %p325 = scmp.eq.s32.totalorder %s35, 1
      %p326 = por %p324, %p325
      %p327 = scmp.ne.s32.totalorder %s318, %s319
      %p328 = scmp.eq.s32.totalorder %s35, 0
      %p329 = por %p327, %p328
      %p330 = scmp.ne.s32.totalorder %s318, %s319
      %p331 = scmp.eq.s32.totalorder %s36, 1
      %p332 = por %p330, %p331
      %p334 = scmp.ne.s32.totalorder %s319, %s333
      %p335 = scmp.eq.s32.totalorder %s36, 0
      %p336 = por %p334, %p335
      %s338 = sadd.s32 %s337, 1
      %p341 = scmp.eq.s32.totalorder %s30, 1
      %p342 = scmp.ne.s32.totalorder %s337, %s339
      %p343 = scmp.eq.s32.totalorder %s30, 0
      %p344 = por %p342, %p343
      %p345 = scmp.ne.s32.totalorder %s337, %s339
      %p346 = scmp.eq.s32.totalorder %s35, 1
      %p347 = por %p345, %p346
      %p348 = scmp.ne.s32.totalorder %s339, %s340
      %p349 = scmp.eq.s32.totalorder %s35, 0
      %p350 = por %p348, %p349
      %p351 = scmp.ne.s32.totalorder %s339, %s340
      %p352 = scmp.eq.s32.totalorder %s36, 1
      %p353 = por %p351, %p352
      %p355 = scmp.ne.s32.totalorder %s340, %s354
      %p356 = scmp.eq.s32.totalorder %s36, 0
      %p357 = por %p355, %p356
      %s359 = sadd.s32 %s358, 1
      %p362 = scmp.eq.s32.totalorder %s30, 1
      %p363 = scmp.ne.s32.totalorder %s358, %s360
      %p364 = scmp.eq.s32.totalorder %s30, 0
      %p365 = por %p363, %p364
      %p366 = scmp.ne.s32.totalorder %s358, %s360
      %p367 = scmp.eq.s32.totalorder %s35, 1
      %p368 = por %p366, %p367
      %p369 = scmp.ne.s32.totalorder %s360, %s361
      %p370 = scmp.eq.s32.totalorder %s35, 0
      %p371 = por %p369, %p370
      %p372 = scmp.ne.s32.totalorder %s360, %s361
      %p373 = scmp.eq.s32.totalorder %s36, 1
      %p374 = por %p372, %p373
      %p376 = scmp.ne.s32.totalorder %s361, %s375
      %p377 = scmp.eq.s32.totalorder %s36, 0
      %p378 = por %p376, %p377
      %s380 = sadd.s32 %s379, 1
      %p383 = scmp.eq.s32.totalorder %s30, 1
      %p384 = scmp.ne.s32.totalorder %s379, %s381
      %p385 = scmp.eq.s32.totalorder %s30, 0
      %p386 = por %p384, %p385
      %p387 = scmp.ne.s32.totalorder %s379, %s381
      %p388 = scmp.eq.s32.totalorder %s35, 1
      %p389 = por %p387, %p388
      %p390 = scmp.ne.s32.totalorder %s381, %s382
      %p391 = scmp.eq.s32.totalorder %s35, 0
      %p392 = por %p390, %p391
      %p393 = scmp.ne.s32.totalorder %s381, %s382
      %p394 = scmp.eq.s32.totalorder %s36, 1
      %p395 = por %p393, %p394
      %p397 = scmp.ne.s32.totalorder %s382, %s396
      %p398 = scmp.eq.s32.totalorder %s36, 0
      %p399 = por %p397, %p398
      %s401 = sadd.s32 %s400, 1
      %p404 = scmp.eq.s32.totalorder %s30, 1
      %p405 = scmp.ne.s32.totalorder %s400, %s402
      %p406 = scmp.eq.s32.totalorder %s30, 0
      %p407 = por %p405, %p406
      %p408 = scmp.ne.s32.totalorder %s400, %s402
      %p409 = scmp.eq.s32.totalorder %s35, 1
      %p410 = por %p408, %p409
      %p411 = scmp.ne.s32.totalorder %s402, %s403
      %p412 = scmp.eq.s32.totalorder %s35, 0
      %p413 = por %p411, %p412
      %p414 = scmp.ne.s32.totalorder %s402, %s403
      %p415 = scmp.eq.s32.totalorder %s36, 1
      %p416 = por %p414, %p415
      %p418 = scmp.ne.s32.totalorder %s403, %s417
      %p419 = scmp.eq.s32.totalorder %s36, 0
      %p420 = por %p418, %p419
      %s422 = sadd.s32 %s421, 1
      %p425 = scmp.eq.s32.totalorder %s30, 1
      %p426 = scmp.ne.s32.totalorder %s421, %s423
      %p427 = scmp.eq.s32.totalorder %s30, 0
      %p428 = por %p426, %p427
      %p429 = scmp.ne.s32.totalorder %s421, %s423
      %p430 = scmp.eq.s32.totalorder %s35, 1
      %p431 = por %p429, %p430
      %p432 = scmp.ne.s32.totalorder %s423, %s424
      %p433 = scmp.eq.s32.totalorder %s35, 0
      %p434 = por %p432, %p433
      %p435 = scmp.ne.s32.totalorder %s423, %s424
      %p436 = scmp.eq.s32.totalorder %s36, 1
      %p437 = por %p435, %p436
      %p439 = scmp.ne.s32.totalorder %s424, %s438
      %p440 = scmp.eq.s32.totalorder %s36, 0
      %p441 = por %p439, %p440
      %s442 = ssub.s32 %s30, %s37
      %p443 = scmp.eq.s32.totalorder %s442, 0
      %s445 = sadd.s32 %s444, 1
      %s446 = scalar_select %p443, %s444, %s445
      %p449 = pneg %p443
      %p450 = scmp.eq.s32.totalorder %s30, 1
      %p451 = por %p449, %p450
      %p452 = scmp.ne.s32.totalorder %s444, %s447
      %p453 = scmp.eq.s32.totalorder %s30, 0
      %p454 = por %p452, %p453
      %p455 = scmp.ne.s32.totalorder %s444, %s447
      %p456 = scmp.eq.s32.totalorder %s35, 1
      %p457 = por %p455, %p456
      %p458 = scmp.ne.s32.totalorder %s447, %s448
      %p459 = scmp.eq.s32.totalorder %s35, 0
      %p460 = por %p458, %p459
      %p461 = scmp.ne.s32.totalorder %s447, %s448
      %p462 = scmp.eq.s32.totalorder %s36, 1
      %p463 = por %p461, %p462
      %p465 = scmp.ne.s32.totalorder %s448, %s464
      %p466 = scmp.eq.s32.totalorder %s36, 0
      %p467 = por %p465, %p466
      %p468 = scmp.le.s32.totalorder 1, %s30
      %p469 = scmp.lt.s32.totalorder %s30, 3
      %p470 = pnand %p468, %p469
      %p471 = pneg %p470
      // Predicated region
      $region9: #{tpu_custom_call.1} parent=5 // pred_check
        _
      $region10: #{tpu_custom_call.1} parent=5 // pred_check_branch
        %473 = sbr.rel (%p470) target = $region12
      $region11: #{tpu_custom_call.1} parent=5 // pred_region
        %s474 = ssub.s32 %s30, 1
        // Predicated region
        $region13: #{tpu_custom_call.1} parent=11 // pred_check
          %p475 = pneg %p77
        $region14: #{tpu_custom_call.1} parent=11 // pred_check_branch
          %477 = sbr.rel (%p475) target = $region16
        $region15: #{tpu_custom_call.1} parent=11 // pred_region
          _
        $region16: #{tpu_custom_call.1} parent=11 // pred_fallthru
          _
        // Predicated region
        $region17: #{tpu_custom_call.1} parent=11 // pred_check
          %p478 = pneg %p98
        $region18: #{tpu_custom_call.1} parent=11 // pred_check_branch
          %480 = sbr.rel (%p478) target = $region20
        $region19: #{tpu_custom_call.1} parent=11 // pred_region
          _
        $region20: #{tpu_custom_call.1} parent=11 // pred_fallthru
          _
        // Predicated region
        $region21: #{tpu_custom_call.1} parent=11 // pred_check
          %p481 = pneg %p119
        $region22: #{tpu_custom_call.1} parent=11 // pred_check_branch
          %483 = sbr.rel (%p481) target = $region24
        $region23: #{tpu_custom_call.1} parent=11 // pred_region
          _
        $region24: #{tpu_custom_call.1} parent=11 // pred_fallthru
          _
        // Predicated region
        $region25: #{tpu_custom_call.1} parent=11 // pred_check
          %p484 = pneg %p140
        $region26: #{tpu_custom_call.1} parent=11 // pred_check_branch
          %486 = sbr.rel (%p484) target = $region28
        $region27: #{tpu_custom_call.1} parent=11 // pred_region
          _
        $region28: #{tpu_custom_call.1} parent=11 // pred_fallthru
          _
        // Predicated region
        $region29: #{tpu_custom_call.1} parent=11 // pred_check
          %p487 = pneg %p161
        $region30: #{tpu_custom_call.1} parent=11 // pred_check_branch
          %489 = sbr.rel (%p487) target = $region32
        $region31: #{tpu_custom_call.1} parent=11 // pred_region
          _
        $region32: #{tpu_custom_call.1} parent=11 // pred_fallthru
          _
        // Predicated region
        $region33: #{tpu_custom_call.1} parent=11 // pred_check
          %p490 = pneg %p182
        $region34: #{tpu_custom_call.1} parent=11 // pred_check_branch
          %492 = sbr.rel (%p490) target = $region36
        $region35: #{tpu_custom_call.1} parent=11 // pred_region
          _
        $region36: #{tpu_custom_call.1} parent=11 // pred_fallthru
          _
        // Predicated region
        $region37: #{tpu_custom_call.1} parent=11 // pred_check
          %p493 = pneg %p203
        $region38: #{tpu_custom_call.1} parent=11 // pred_check_branch
          %495 = sbr.rel (%p493) target = $region40
        $region39: #{tpu_custom_call.1} parent=11 // pred_region
          _
        $region40: #{tpu_custom_call.1} parent=11 // pred_fallthru
          _
        // Predicated region
        $region41: #{tpu_custom_call.1} parent=11 // pred_check
          %p496 = pneg %p224
        $region42: #{tpu_custom_call.1} parent=11 // pred_check_branch
          %498 = sbr.rel (%p496) target = $region44
        $region43: #{tpu_custom_call.1} parent=11 // pred_region
          _
        $region44: #{tpu_custom_call.1} parent=11 // pred_fallthru
          _
        // Predicated region
        $region45: #{tpu_custom_call.1} parent=11 // pred_check
          %p499 = pneg %p245
        $region46: #{tpu_custom_call.1} parent=11 // pred_check_branch
          %501 = sbr.rel (%p499) target = $region48
        $region47: #{tpu_custom_call.1} parent=11 // pred_region
          _
        $region48: #{tpu_custom_call.1} parent=11 // pred_fallthru
          _
        // Predicated region
        $region49: #{tpu_custom_call.1} parent=11 // pred_check
          %p502 = pneg %p266
        $region50: #{tpu_custom_call.1} parent=11 // pred_check_branch
          %504 = sbr.rel (%p502) target = $region52
        $region51: #{tpu_custom_call.1} parent=11 // pred_region
          _
        $region52: #{tpu_custom_call.1} parent=11 // pred_fallthru
          _
        // Predicated region
        $region53: #{tpu_custom_call.1} parent=11 // pred_check
          %p505 = pneg %p287
        $region54: #{tpu_custom_call.1} parent=11 // pred_check_branch
          %507 = sbr.rel (%p505) target = $region56
        $region55: #{tpu_custom_call.1} parent=11 // pred_region
          _
        $region56: #{tpu_custom_call.1} parent=11 // pred_fallthru
          _
        // Predicated region
        $region57: #{tpu_custom_call.1} parent=11 // pred_check
          %p508 = pneg %p308
        $region58: #{tpu_custom_call.1} parent=11 // pred_check_branch
          %510 = sbr.rel (%p508) target = $region60
        $region59: #{tpu_custom_call.1} parent=11 // pred_region
          _
        $region60: #{tpu_custom_call.1} parent=11 // pred_fallthru
          _
        // Predicated region
        $region61: #{tpu_custom_call.1} parent=11 // pred_check
          %p511 = pneg %p329
        $region62: #{tpu_custom_call.1} parent=11 // pred_check_branch
          %513 = sbr.rel (%p511) target = $region64
        $region63: #{tpu_custom_call.1} parent=11 // pred_region
          _
        $region64: #{tpu_custom_call.1} parent=11 // pred_fallthru
          _
        // Predicated region
        $region65: #{tpu_custom_call.1} parent=11 // pred_check
          %p514 = pneg %p350
        $region66: #{tpu_custom_call.1} parent=11 // pred_check_branch
          %516 = sbr.rel (%p514) target = $region68
        $region67: #{tpu_custom_call.1} parent=11 // pred_region
          _
        $region68: #{tpu_custom_call.1} parent=11 // pred_fallthru
          _
        // Predicated region
        $region69: #{tpu_custom_call.1} parent=11 // pred_check
          %p517 = pneg %p371
        $region70: #{tpu_custom_call.1} parent=11 // pred_check_branch
          %519 = sbr.rel (%p517) target = $region72
        $region71: #{tpu_custom_call.1} parent=11 // pred_region
          _
        $region72: #{tpu_custom_call.1} parent=11 // pred_fallthru
          _
        // Predicated region
        $region73: #{tpu_custom_call.1} parent=11 // pred_check
          %p520 = pneg %p392
        $region74: #{tpu_custom_call.1} parent=11 // pred_check_branch
          %522 = sbr.rel (%p520) target = $region76
        $region75: #{tpu_custom_call.1} parent=11 // pred_region
          _
        $region76: #{tpu_custom_call.1} parent=11 // pred_fallthru
          _
        // Predicated region
        $region77: #{tpu_custom_call.1} parent=11 // pred_check
          %p523 = pneg %p413
        $region78: #{tpu_custom_call.1} parent=11 // pred_check_branch
          %525 = sbr.rel (%p523) target = $region80
        $region79: #{tpu_custom_call.1} parent=11 // pred_region
          _
        $region80: #{tpu_custom_call.1} parent=11 // pred_fallthru
          _
        // Predicated region
        $region81: #{tpu_custom_call.1} parent=11 // pred_check
          %p526 = pneg %p434
        $region82: #{tpu_custom_call.1} parent=11 // pred_check_branch
          %528 = sbr.rel (%p526) target = $region84
        $region83: #{tpu_custom_call.1} parent=11 // pred_region
          _
        $region84: #{tpu_custom_call.1} parent=11 // pred_fallthru
          _
      $region12: #{tpu_custom_call.1} parent=5 // pred_fallthru
        _
      %p529 = scmp.lt.s32.totalorder %s30, 2
      // Predicated region
      $region85: #{tpu_custom_call.1} parent=5 // pred_check
        %p530 = pneg %p529
      $region86: #{tpu_custom_call.1} parent=5 // pred_check_branch
        %532 = sbr.rel (%p530) target = $region88
      $region87: #{tpu_custom_call.1} parent=5 // pred_region
        // Predicated region
        $region89: #{tpu_custom_call.1} parent=87 // pred_check
          %p533 = pneg %p50
        $region90: #{tpu_custom_call.1} parent=87 // pred_check_branch
          %535 = sbr.rel (%p533) target = $region92
        $region91: #{tpu_custom_call.1} parent=87 // pred_region
          %p536 = scmp.lt.s32.totalorder %s30, 1
          %s537 = scalar_select %p536, %s30, 1
          %s538 = smul.addr %s537, 4
          %s539 = smul.addr %s538, 8
          %s540 = scalar_lea.vmem %s0, %s539
        $region92: #{tpu_custom_call.1} parent=87 // pred_fallthru
          _
      $region88: #{tpu_custom_call.1} parent=5 // pred_fallthru
        _
      %p541 = scmp.le.s32.totalorder 1, %s30
      %p542 = scmp.lt.s32.totalorder %s30, 3
      %p543 = pnand %p541, %p542
      %p544 = pneg %p543
      // Predicated region
      $region93: #{tpu_custom_call.1} parent=5 // pred_check
        _
      $region94: #{tpu_custom_call.1} parent=5 // pred_check_branch
        %546 = sbr.rel (%p543) target = $region96
      $region95: #{tpu_custom_call.1} parent=5 // pred_region
        %s547 = ssub.s32 %s30, 1
        %p548 = scmp.lt.s32.totalorder %s35, 1
        %s549 = scalar_select %p548, %s35, 1
        %s550 = smul.addr %s549, 4
        %s551 = smul.addr %s550, 8
        %s552 = scalar_lea.vmem %s0, %s551
        %p553 = pneg %p56
        %p554 = pneg %p53
        %p555 = pneg %p77
        %p556 = pneg %p74
        %p557 = pneg %p98
        %p558 = pneg %p95
        %p559 = pneg %p119
        %p560 = pneg %p116
        %p561 = pneg %p140
        %p562 = pneg %p137
        %p563 = pneg %p161
        %p564 = pneg %p158
        %p565 = pneg %p182
        %p566 = pneg %p179
        %p567 = pneg %p203
        %p568 = pneg %p200
        %p569 = pneg %p224
        %p570 = pneg %p221
        %p571 = pneg %p245
        %p572 = pneg %p242
        %p573 = pneg %p266
        %p574 = pneg %p263
        %p575 = pneg %p287
        %p576 = pneg %p284
        %p577 = pneg %p308
        %p578 = pneg %p305
        %p579 = pneg %p329
        %p580 = pneg %p326
        %p581 = pneg %p350
        %p582 = pneg %p347
        %p583 = pneg %p371
        %p584 = pneg %p368
        %p585 = pneg %p392
        %p586 = pneg %p389
        %p587 = pneg %p413
        %p588 = pneg %p410
        %p589 = pneg %p434
        %p590 = pneg %p431
        %p591 = pneg %p460
        %p592 = pneg %p457
        %s593 = sand.u32 %s447, 1
        %s594 = scalar_lea.sflag [#allocation6], %s593
        %s595 = sand.u32 %s447, 1
        %s596 = scalar_lea.vmem [#allocation5], %s595
        %p597 = scmp.lt.s32.totalorder %s35, 1
        %s598 = scalar_select %p597, %s35, 1
        %s599 = smul.addr %s598, 4
        %s600 = smul.addr %s599, 8
        %s601 = scalar_lea.vmem %s0, %s600
        %602 = vst [vmem:[#allocation2] sm:$0xff] 0.0
        %603 = vst [vmem:[#allocation2 + $0x8] sm:$0xff] 0.0
        %vm604 = vcmask 523264
        %605 = vst.msk [vmem:[#allocation2 + $0x10] sm:$0xff] %vm604, 0.0
        %606 = vst [vmem:[#allocation2 + $0x18] sm:$0xff] 0.0
        %607 = vst [vmem:[#allocation2 + $0x20] sm:$0xff] 0.0
        %608 = vst.msk [vmem:[#allocation2 + $0x28] sm:$0xff] %vm604, 0.0
        %609 = vst [vmem:[#allocation2 + $0x30] sm:$0xff] 0.0
        %610 = vst [vmem:[#allocation2 + $0x38] sm:$0xff] 0.0
        %611 = vst.msk [vmem:[#allocation2 + $0x40] sm:$0xff] %vm604, 0.0
        %612 = vst [vmem:[#allocation2 + $0x48] sm:$0xff] 0.0
        %613 = vst [vmem:[#allocation2 + $0x50] sm:$0xff] 0.0
        %614 = vst.msk [vmem:[#allocation2 + $0x58] sm:$0xff] %vm604, 0.0
        %615 = vst [vmem:[#allocation2 + $0x60] sm:$0xff] 0.0
        %616 = vst [vmem:[#allocation2 + $0x68] sm:$0xff] 0.0
        %617 = vst.msk [vmem:[#allocation2 + $0x70] sm:$0xff] %vm604, 0.0
        %618 = vst [vmem:[#allocation2 + $0x78] sm:$0xff] 0.0
        %619 = vst [vmem:[#allocation2 + $0x80] sm:$0xff] 0.0
        %620 = vst.msk [vmem:[#allocation2 + $0x88] sm:$0xff] %vm604, 0.0
        %621 = vst [vmem:[#allocation2 + $0x90] sm:$0xff] 0.0
        %622 = vst [vmem:[#allocation2 + $0x98] sm:$0xff] 0.0
        %623 = vst.msk [vmem:[#allocation2 + $0xa0] sm:$0xff] %vm604, 0.0
        %624 = vst [vmem:[#allocation2 + $0xa8] sm:$0xff] 0.0
        %625 = vst [vmem:[#allocation2 + $0xb0] sm:$0xff] 0.0
        %626 = vst.msk [vmem:[#allocation2 + $0xb8] sm:$0xff] %vm604, 0.0
        %v627 = vld [vmem:[%s1] sm:$0xff]
        %v628 = vld [vmem:[%s1 + $0x8] sm:$0xff]
        %v629 = vld [vmem:[%s1 + $0x10] sm:$0xff]
        %v630 = vld [vmem:[%s1 + $0x18] sm:$0xff]
        %v631 = vld [vmem:[%s1 + $0x20] sm:$0xff]
        %v632 = vld [vmem:[%s1 + $0x28] sm:$0xff]
        %v633 = vld [vmem:[%s1 + $0x30] sm:$0xff]
        %v634 = vld [vmem:[%s1 + $0x38] sm:$0xff]
        %v635 = vld [vmem:[%s1 + $0x40] sm:$0xff]
        %v636 = vld [vmem:[%s1 + $0x48] sm:$0xff]
        %v637 = vld [vmem:[%s1 + $0x50] sm:$0xff]
        %v638 = vld [vmem:[%s1 + $0x58] sm:$0xff]
        %v639 = vld [vmem:[%s1 + $0x60] sm:$0xff]
        %v640 = vld [vmem:[%s1 + $0x68] sm:$0xff]
        %v641 = vld [vmem:[%s1 + $0x70] sm:$0xff]
        %v642 = vld [vmem:[%s1 + $0x78] sm:$0xff]
        %v643 = vld [vmem:[%s1 + $0x80] sm:$0xff]
        %v644 = vld [vmem:[%s1 + $0x88] sm:$0xff]
        %v645 = vld [vmem:[%s1 + $0x90] sm:$0xff]
        %v646 = vld [vmem:[%s1 + $0x98] sm:$0xff]
        %v647 = vld [vmem:[%s1 + $0xa0] sm:$0xff]
        %v648 = vld [vmem:[%s1 + $0xa8] sm:$0xff]
        %v649 = vld [vmem:[%s1 + $0xb0] sm:$0xff]
        %v650 = vld [vmem:[%s1 + $0xb8] sm:$0xff]
        %v651 = vld [vmem:[%s1 + $0xc0] sm:$0xff]
        %v652 = vld [vmem:[%s1 + $0xc8] sm:$0xff]
        %v653 = vld [vmem:[%s1 + $0xd0] sm:$0xff]
        %v654 = vld [vmem:[%s1 + $0xd8] sm:$0xff]
        %v655 = vld [vmem:[%s1 + $0xe0] sm:$0xff]
        %v656 = vld [vmem:[%s1 + $0xe8] sm:$0xff]
        %v657 = vld [vmem:[%s1 + $0xf0] sm:$0xff]
        %v658 = vld [vmem:[%s1 + $0xf8] sm:$0xff]
        %v659 = vld [vmem:[%s1 + $0x100] sm:$0xff]
        %v660 = vld [vmem:[%s1 + $0x108] sm:$0xff]
        %v661 = vld [vmem:[%s1 + $0x110] sm:$0xff]
        %v662 = vld [vmem:[%s1 + $0x118] sm:$0xff]
        %v663 = vld [vmem:[%s1 + $0x120] sm:$0xff]
        %v664 = vld [vmem:[%s1 + $0x128] sm:$0xff]
        %v665 = vld [vmem:[%s1 + $0x130] sm:$0xff]
        %v666 = vld [vmem:[%s1 + $0x138] sm:$0xff]
        %v667 = vld [vmem:[%s1 + $0x140] sm:$0xff]
        %v668 = vld [vmem:[%s1 + $0x148] sm:$0xff]
        %v669 = vld [vmem:[%s1 + $0x150] sm:$0xff]
        %v670 = vld [vmem:[%s1 + $0x158] sm:$0xff]
        %v671 = vld [vmem:[%s1 + $0x160] sm:$0xff]
        %v672 = vld [vmem:[%s1 + $0x168] sm:$0xff]
        %v673 = vld [vmem:[%s1 + $0x170] sm:$0xff]
        %v674 = vld [vmem:[%s1 + $0x178] sm:$0xff]
        %v675 = vld [vmem:[%s1 + $0x180] sm:$0xff]
        %v676 = vld [vmem:[%s1 + $0x188] sm:$0xff]
        %v677 = vld [vmem:[%s1 + $0x190] sm:$0xff]
        %v678 = vld [vmem:[%s1 + $0x198] sm:$0xff]
        %v679 = vld [vmem:[%s1 + $0x1a0] sm:$0xff]
        %v680 = vld [vmem:[%s1 + $0x1a8] sm:$0xff]
        %v681 = vld [vmem:[%s1 + $0x1b0] sm:$0xff]
        %v682 = vld [vmem:[%s1 + $0x1b8] sm:$0xff]
        %v683 = vld [vmem:[%s1 + $0x1c0] sm:$0xff]
        %v684 = vld [vmem:[%s1 + $0x1c8] sm:$0xff]
        %v685 = vld [vmem:[%s1 + $0x1d0] sm:$0xff]
        %v686 = vld [vmem:[%s1 + $0x1d8] sm:$0xff]
        %v687 = vld [vmem:[%s1 + $0x1e0] sm:$0xff]
        %v688 = vld [vmem:[%s1 + $0x1e8] sm:$0xff]
        %v689 = vld [vmem:[%s1 + $0x1f0] sm:$0xff]
        %v690 = vld [vmem:[%s1 + $0x1f8] sm:$0xff]
        %v691 = vld [vmem:[%s601] sm:$0xff]
        %v692 = vld [vmem:[%s601 + $0x8] sm:$0xff]
        %v693 = vld [vmem:[%s601 + $0x10] sm:$0xff]
        %v694 = vld [vmem:[%s601 + $0x18] sm:$0xff]
        %v695 = vld [vmem:[%s2] sm:$0xff]
        %v696 = vld [vmem:[%s2 + $0x8] sm:$0xff]
        %v697 = vld [vmem:[%s2 + $0x10] sm:$0xff]
        %v698 = vld [vmem:[%s2 + $0x18] sm:$0xff]
        %v699 = vld [vmem:[%s2 + $0x20] sm:$0xff]
        %v700 = vld [vmem:[%s2 + $0x28] sm:$0xff]
        %v701 = vld [vmem:[%s2 + $0x30] sm:$0xff]
        %v702 = vld [vmem:[%s2 + $0x38] sm:$0xff]
        %v703 = vld [vmem:[%s2 + $0x40] sm:$0xff]
        %v704 = vld [vmem:[%s2 + $0x48] sm:$0xff]
        %v705 = vld [vmem:[%s2 + $0x50] sm:$0xff]
        %v706 = vld [vmem:[%s2 + $0x58] sm:$0xff]
        %v707 = vld [vmem:[%s2 + $0x60] sm:$0xff]
        %v708 = vld [vmem:[%s2 + $0x68] sm:$0xff]
        %v709 = vld [vmem:[%s2 + $0x70] sm:$0xff]
        %v710 = vld [vmem:[%s2 + $0x78] sm:$0xff]
        %v711 = vld [vmem:[%s2 + $0x80] sm:$0xff]
        %v712 = vld [vmem:[%s2 + $0x88] sm:$0xff]
        %v713 = vld [vmem:[%s2 + $0x90] sm:$0xff]
        %v714 = vld [vmem:[%s2 + $0x98] sm:$0xff]
        %v715 = vld [vmem:[%s2 + $0xa0] sm:$0xff]
        %v716 = vld [vmem:[%s2 + $0xa8] sm:$0xff]
        %v717 = vld [vmem:[%s2 + $0xb0] sm:$0xff]
        %v718 = vld [vmem:[%s2 + $0xb8] sm:$0xff]
        %v719 = vld [vmem:[%s2 + $0xc0] sm:$0xff]
        %v720 = vld [vmem:[%s2 + $0xc8] sm:$0xff]
        %v721 = vld [vmem:[%s2 + $0xd0] sm:$0xff]
        %v722 = vld [vmem:[%s2 + $0xd8] sm:$0xff]
        %v723 = vld [vmem:[%s2 + $0xe0] sm:$0xff]
        %v724 = vld [vmem:[%s2 + $0xe8] sm:$0xff]
        %v725 = vld [vmem:[%s2 + $0xf0] sm:$0xff]
        %v726 = vld [vmem:[%s2 + $0xf8] sm:$0xff]
        %v727 = vld [vmem:[%s2 + $0x100] sm:$0xff]
        %v728 = vld [vmem:[%s2 + $0x108] sm:$0xff]
        %v729 = vld [vmem:[%s2 + $0x110] sm:$0xff]
        %v730 = vld [vmem:[%s2 + $0x118] sm:$0xff]
        %v731 = vld [vmem:[%s2 + $0x120] sm:$0xff]
        %v732 = vld [vmem:[%s2 + $0x128] sm:$0xff]
        %v733 = vld [vmem:[%s2 + $0x130] sm:$0xff]
        %v734 = vld [vmem:[%s2 + $0x138] sm:$0xff]
        %v735 = vld [vmem:[%s2 + $0x140] sm:$0xff]
        %v736 = vld [vmem:[%s2 + $0x148] sm:$0xff]
        %v737 = vld [vmem:[%s2 + $0x150] sm:$0xff]
        %v738 = vld [vmem:[%s2 + $0x158] sm:$0xff]
        %v739 = vld [vmem:[%s2 + $0x160] sm:$0xff]
        %v740 = vld [vmem:[%s2 + $0x168] sm:$0xff]
        %v741 = vld [vmem:[%s2 + $0x170] sm:$0xff]
        %v742 = vld [vmem:[%s2 + $0x178] sm:$0xff]
        %v743 = vld [vmem:[%s2 + $0x180] sm:$0xff]
        %v744 = vld [vmem:[%s2 + $0x188] sm:$0xff]
        %v745 = vld [vmem:[%s2 + $0x190] sm:$0xff]
        %v746 = vld [vmem:[%s2 + $0x198] sm:$0xff]
        %v747 = vld [vmem:[%s2 + $0x1a0] sm:$0xff]
        %v748 = vld [vmem:[%s2 + $0x1a8] sm:$0xff]
        %v749 = vld [vmem:[%s2 + $0x1b0] sm:$0xff]
        %v750 = vld [vmem:[%s2 + $0x1b8] sm:$0xff]
        %v751 = vld [vmem:[%s2 + $0x1c0] sm:$0xff]
        %v752 = vld [vmem:[%s2 + $0x1c8] sm:$0xff]
        %v753 = vld [vmem:[%s2 + $0x1d0] sm:$0xff]
        %v754 = vld [vmem:[%s2 + $0x1d8] sm:$0xff]
        %v755 = vld [vmem:[%s2 + $0x1e0] sm:$0xff]
        %v756 = vld [vmem:[%s2 + $0x1e8] sm:$0xff]
        %v757 = vld [vmem:[%s2 + $0x1f0] sm:$0xff]
        %v758 = vld [vmem:[%s2 + $0x1f8] sm:$0xff]
        %760 = vset.pattern.permute.xlu0 0
        %761 = vperm.xlu0 %760, %v695
        %v762 = vpop.permute.xlu0 %761
        %765 = vset.pattern.permute.xlu0 0
        %766 = vperm.xlu0 %765, %v696
        %v767 = vpop.permute.xlu0 %766
        %770 = vset.pattern.permute.xlu0 0
        %771 = vperm.xlu0 %770, %v697
        %v772 = vpop.permute.xlu0 %771
        %775 = vset.pattern.permute.xlu0 0
        %776 = vperm.xlu0 %775, %v698
        %v777 = vpop.permute.xlu0 %776
        %780 = vset.pattern.permute.xlu0 0
        %781 = vperm.xlu0 %780, %v699
        %v782 = vpop.permute.xlu0 %781
        %785 = vset.pattern.permute.xlu0 0
        %786 = vperm.xlu0 %785, %v700
        %v787 = vpop.permute.xlu0 %786
        %790 = vset.pattern.permute.xlu0 0
        %791 = vperm.xlu0 %790, %v701
        %v792 = vpop.permute.xlu0 %791
        %795 = vset.pattern.permute.xlu0 0
        %796 = vperm.xlu0 %795, %v702
        %v797 = vpop.permute.xlu0 %796
        %800 = vset.pattern.permute.xlu0 0
        %801 = vperm.xlu0 %800, %v703
        %v802 = vpop.permute.xlu0 %801
        %805 = vset.pattern.permute.xlu0 0
        %806 = vperm.xlu0 %805, %v704
        %v807 = vpop.permute.xlu0 %806
        %810 = vset.pattern.permute.xlu0 0
        %811 = vperm.xlu0 %810, %v705
        %v812 = vpop.permute.xlu0 %811
        %815 = vset.pattern.permute.xlu0 0
        %816 = vperm.xlu0 %815, %v706
        %v817 = vpop.permute.xlu0 %816
        %820 = vset.pattern.permute.xlu0 0
        %821 = vperm.xlu0 %820, %v707
        %v822 = vpop.permute.xlu0 %821
        %825 = vset.pattern.permute.xlu0 0
        %826 = vperm.xlu0 %825, %v708
        %v827 = vpop.permute.xlu0 %826
        %830 = vset.pattern.permute.xlu0 0
        %831 = vperm.xlu0 %830, %v709
        %v832 = vpop.permute.xlu0 %831
        %835 = vset.pattern.permute.xlu0 0
        %836 = vperm.xlu0 %835, %v710
        %v837 = vpop.permute.xlu0 %836
        %840 = vset.pattern.permute.xlu0 0
        %841 = vperm.xlu0 %840, %v711
        %v842 = vpop.permute.xlu0 %841
        %845 = vset.pattern.permute.xlu0 0
        %846 = vperm.xlu0 %845, %v712
        %v847 = vpop.permute.xlu0 %846
        %850 = vset.pattern.permute.xlu0 0
        %851 = vperm.xlu0 %850, %v713
        %v852 = vpop.permute.xlu0 %851
        %855 = vset.pattern.permute.xlu0 0
        %856 = vperm.xlu0 %855, %v714
        %v857 = vpop.permute.xlu0 %856
        %860 = vset.pattern.permute.xlu0 0
        %861 = vperm.xlu0 %860, %v715
        %v862 = vpop.permute.xlu0 %861
        %865 = vset.pattern.permute.xlu0 0
        %866 = vperm.xlu0 %865, %v716
        %v867 = vpop.permute.xlu0 %866
        %870 = vset.pattern.permute.xlu0 0
        %871 = vperm.xlu0 %870, %v717
        %v872 = vpop.permute.xlu0 %871
        %875 = vset.pattern.permute.xlu0 0
        %876 = vperm.xlu0 %875, %v718
        %v877 = vpop.permute.xlu0 %876
        %880 = vset.pattern.permute.xlu0 0
        %881 = vperm.xlu0 %880, %v719
        %v882 = vpop.permute.xlu0 %881
        %885 = vset.pattern.permute.xlu0 0
        %886 = vperm.xlu0 %885, %v720
        %v887 = vpop.permute.xlu0 %886
        %890 = vset.pattern.permute.xlu0 0
        %891 = vperm.xlu0 %890, %v721
        %v892 = vpop.permute.xlu0 %891
        %895 = vset.pattern.permute.xlu0 0
        %896 = vperm.xlu0 %895, %v722
        %v897 = vpop.permute.xlu0 %896
        %900 = vset.pattern.permute.xlu0 0
        %901 = vperm.xlu0 %900, %v723
        %v902 = vpop.permute.xlu0 %901
        %905 = vset.pattern.permute.xlu0 0
        %906 = vperm.xlu0 %905, %v724
        %v907 = vpop.permute.xlu0 %906
        %910 = vset.pattern.permute.xlu0 0
        %911 = vperm.xlu0 %910, %v725
        %v912 = vpop.permute.xlu0 %911
        %915 = vset.pattern.permute.xlu0 0
        %916 = vperm.xlu0 %915, %v726
        %v917 = vpop.permute.xlu0 %916
        %920 = vset.pattern.permute.xlu0 0
        %921 = vperm.xlu0 %920, %v727
        %v922 = vpop.permute.xlu0 %921
        %925 = vset.pattern.permute.xlu0 0
        %926 = vperm.xlu0 %925, %v728
        %v927 = vpop.permute.xlu0 %926
        %930 = vset.pattern.permute.xlu0 0
        %931 = vperm.xlu0 %930, %v729
        %v932 = vpop.permute.xlu0 %931
        %935 = vset.pattern.permute.xlu0 0
        %936 = vperm.xlu0 %935, %v730
        %v937 = vpop.permute.xlu0 %936
        %940 = vset.pattern.permute.xlu0 0
        %941 = vperm.xlu0 %940, %v731
        %v942 = vpop.permute.xlu0 %941
        %945 = vset.pattern.permute.xlu0 0
        %946 = vperm.xlu0 %945, %v732
        %v947 = vpop.permute.xlu0 %946
        %950 = vset.pattern.permute.xlu0 0
        %951 = vperm.xlu0 %950, %v733
        %v952 = vpop.permute.xlu0 %951
        %955 = vset.pattern.permute.xlu0 0
        %956 = vperm.xlu0 %955, %v734
        %v957 = vpop.permute.xlu0 %956
        %960 = vset.pattern.permute.xlu0 0
        %961 = vperm.xlu0 %960, %v735
        %v962 = vpop.permute.xlu0 %961
        %965 = vset.pattern.permute.xlu0 0
        %966 = vperm.xlu0 %965, %v736
        %v967 = vpop.permute.xlu0 %966
        %970 = vset.pattern.permute.xlu0 0
        %971 = vperm.xlu0 %970, %v737
        %v972 = vpop.permute.xlu0 %971
        %975 = vset.pattern.permute.xlu0 0
        %976 = vperm.xlu0 %975, %v738
        %v977 = vpop.permute.xlu0 %976
        %980 = vset.pattern.permute.xlu0 0
        %981 = vperm.xlu0 %980, %v739
        %v982 = vpop.permute.xlu0 %981
        %985 = vset.pattern.permute.xlu0 0
        %986 = vperm.xlu0 %985, %v740
        %v987 = vpop.permute.xlu0 %986
        %990 = vset.pattern.permute.xlu0 0
        %991 = vperm.xlu0 %990, %v741
        %v992 = vpop.permute.xlu0 %991
        %995 = vset.pattern.permute.xlu0 0
        %996 = vperm.xlu0 %995, %v742
        %v997 = vpop.permute.xlu0 %996
        %1000 = vset.pattern.permute.xlu0 0
        %1001 = vperm.xlu0 %1000, %v743
        %v1002 = vpop.permute.xlu0 %1001
        %1005 = vset.pattern.permute.xlu0 0
        %1006 = vperm.xlu0 %1005, %v744
        %v1007 = vpop.permute.xlu0 %1006
        %1010 = vset.pattern.permute.xlu0 0
        %1011 = vperm.xlu0 %1010, %v745
        %v1012 = vpop.permute.xlu0 %1011
        %1015 = vset.pattern.permute.xlu0 0
        %1016 = vperm.xlu0 %1015, %v746
        %v1017 = vpop.permute.xlu0 %1016
        %1020 = vset.pattern.permute.xlu0 0
        %1021 = vperm.xlu0 %1020, %v747
        %v1022 = vpop.permute.xlu0 %1021
        %1025 = vset.pattern.permute.xlu0 0
        %1026 = vperm.xlu0 %1025, %v748
        %v1027 = vpop.permute.xlu0 %1026
        %1030 = vset.pattern.permute.xlu0 0
        %1031 = vperm.xlu0 %1030, %v749
        %v1032 = vpop.permute.xlu0 %1031
        %1035 = vset.pattern.permute.xlu0 0
        %1036 = vperm.xlu0 %1035, %v750
        %v1037 = vpop.permute.xlu0 %1036
        %1040 = vset.pattern.permute.xlu0 0
        %1041 = vperm.xlu0 %1040, %v751
        %v1042 = vpop.permute.xlu0 %1041
        %1045 = vset.pattern.permute.xlu0 0
        %1046 = vperm.xlu0 %1045, %v752
        %v1047 = vpop.permute.xlu0 %1046
        %1050 = vset.pattern.permute.xlu0 0
        %1051 = vperm.xlu0 %1050, %v753
        %v1052 = vpop.permute.xlu0 %1051
        %1055 = vset.pattern.permute.xlu0 0
        %1056 = vperm.xlu0 %1055, %v754
        %v1057 = vpop.permute.xlu0 %1056
        %1060 = vset.pattern.permute.xlu0 0
        %1061 = vperm.xlu0 %1060, %v755
        %v1062 = vpop.permute.xlu0 %1061
        %1065 = vset.pattern.permute.xlu0 0
        %1066 = vperm.xlu0 %1065, %v756
        %v1067 = vpop.permute.xlu0 %1066
        %1070 = vset.pattern.permute.xlu0 0
        %1071 = vperm.xlu0 %1070, %v757
        %v1072 = vpop.permute.xlu0 %1071
        %1075 = vset.pattern.permute.xlu0 0
        %1076 = vperm.xlu0 %1075, %v758
        %v1077 = vpop.permute.xlu0 %1076
        %vm1079 = vcmask 261120
        %v1081 = vsel %vm1079, %v627, 0
        %v1084 = vsel %vm1079, %v628, 0
        %v1087 = vsel %vm1079, %v629, 0
        %v1090 = vsel %vm1079, %v630, 0
        %v1093 = vsel %vm1079, %v631, 0
        %v1096 = vsel %vm1079, %v632, 0
        %v1099 = vsel %vm1079, %v633, 0
        %v1102 = vsel %vm1079, %v634, 0
        %v1105 = vsel %vm1079, %v635, 0
        %v1108 = vsel %vm1079, %v636, 0
        %v1111 = vsel %vm1079, %v637, 0
        %v1114 = vsel %vm1079, %v638, 0
        %v1117 = vsel %vm1079, %v639, 0
        %v1120 = vsel %vm1079, %v640, 0
        %v1123 = vsel %vm1079, %v641, 0
        %v1126 = vsel %vm1079, %v642, 0
        %v1129 = vsel %vm1079, %v643, 0
        %v1132 = vsel %vm1079, %v644, 0
        %v1135 = vsel %vm1079, %v645, 0
        %v1138 = vsel %vm1079, %v646, 0
        %v1141 = vsel %vm1079, %v647, 0
        %v1144 = vsel %vm1079, %v648, 0
        %v1147 = vsel %vm1079, %v649, 0
        %v1150 = vsel %vm1079, %v650, 0
        %v1153 = vsel %vm1079, %v651, 0
        %v1156 = vsel %vm1079, %v652, 0
        %v1159 = vsel %vm1079, %v653, 0
        %v1162 = vsel %vm1079, %v654, 0
        %v1165 = vsel %vm1079, %v655, 0
        %v1168 = vsel %vm1079, %v656, 0
        %v1171 = vsel %vm1079, %v657, 0
        %v1174 = vsel %vm1079, %v658, 0
        %v1177 = vsel %vm1079, %v659, 0
        %v1180 = vsel %vm1079, %v660, 0
        %v1183 = vsel %vm1079, %v661, 0
        %v1186 = vsel %vm1079, %v662, 0
        %v1189 = vsel %vm1079, %v663, 0
        %v1192 = vsel %vm1079, %v664, 0
        %v1195 = vsel %vm1079, %v665, 0
        %v1198 = vsel %vm1079, %v666, 0
        %v1201 = vsel %vm1079, %v667, 0
        %v1204 = vsel %vm1079, %v668, 0
        %v1207 = vsel %vm1079, %v669, 0
        %v1210 = vsel %vm1079, %v670, 0
        %v1213 = vsel %vm1079, %v671, 0
        %v1216 = vsel %vm1079, %v672, 0
        %v1219 = vsel %vm1079, %v673, 0
        %v1222 = vsel %vm1079, %v674, 0
        %v1225 = vsel %vm1079, %v675, 0
        %v1228 = vsel %vm1079, %v676, 0
        %v1231 = vsel %vm1079, %v677, 0
        %v1234 = vsel %vm1079, %v678, 0
        %v1237 = vsel %vm1079, %v679, 0
        %v1240 = vsel %vm1079, %v680, 0
        %v1243 = vsel %vm1079, %v681, 0
        %v1246 = vsel %vm1079, %v682, 0
        %v1249 = vsel %vm1079, %v683, 0
        %v1252 = vsel %vm1079, %v684, 0
        %v1255 = vsel %vm1079, %v685, 0
        %v1258 = vsel %vm1079, %v686, 0
        %v1261 = vsel %vm1079, %v687, 0
        %v1264 = vsel %vm1079, %v688, 0
        %v1267 = vsel %vm1079, %v689, 0
        %v1270 = vsel %vm1079, %v690, 0
        %1272 = vmatprep.subr.mxu0 0.0
        %1273 = vmatpush1.msra.mxu0 %v691
        %1274 = vmatprep.subr.mxu0 0.0
        %1275 = vmatpush1.msra.mxu0 %v692
        %1276 = vmatprep.subr.mxu0 0.0
        %1277 = vmatpush1.msra.mxu0 %v693
        %1278 = vmatprep.subr.mxu0 0.0
        %1279 = vmatpush1.msra.mxu0 %v694
        %1280 = vmatprep.subr.mxu0 0.0
        %1281 = vmatpush1.msra.mxu0 0.0
        %1282 = vmatprep.subr.mxu0 0.0
        %1283 = vmatpush1.msra.mxu0 0.0
        %1284 = vmatprep.subr.mxu0 0.0
        %1285 = vmatpush1.msra.mxu0 0.0
        %1286 = vmatprep.subr.mxu0 0.0
        %1287 = vmatpush1.msra.mxu0 0.0
        %1288 = vmatprep.subr.mxu0 0.0
        %1289 = vmatpush1.msra.mxu0 0.0
        %1290 = vmatprep.subr.mxu0 0.0
        %1291 = vmatpush1.msra.mxu0 0.0
        %1292 = vmatprep.subr.mxu0 0.0
        %1293 = vmatpush1.msra.mxu0 0.0
        %1294 = vmatprep.subr.mxu0 0.0
        %1295 = vmatpush1.msra.mxu0 0.0
        %1296 = vmatprep.subr.mxu0 0.0
        %1297 = vmatpush1.msra.mxu0 0.0
        %1298 = vmatprep.subr.mxu0 0.0
        %1299 = vmatpush1.msra.mxu0 0.0
        %1300 = vmatprep.subr.mxu0 0.0
        %1301 = vmatpush1.msra.mxu0 0.0
        %1302 = vmatprep.subr.mxu0 0.0
        %1303 = vmatpush1.msra.mxu0 0.0
        %1304 = vmatprep.subr.mxu0 0.0
        %1305 = vmatpush1.msra.mxu0 0.0
        %1306 = vmatprep.subr.mxu0 0.0
        %1307 = vmatpush1.msra.mxu0 0.0
        %1308 = vmatprep.subr.mxu0 0.0
        %1309 = vmatpush1.msra.mxu0 0.0
        %1310 = vmatprep.subr.mxu0 0.0
        %1311 = vmatpush1.msra.mxu0 0.0
        %1312 = vmatprep.subr.mxu0 0.0
        %1313 = vmatpush1.msra.mxu0 0.0
        %1314 = vmatprep.subr.mxu0 0.0
        %1315 = vmatpush1.msra.mxu0 0.0
        %1316 = vmatprep.subr.mxu0 0.0
        %1317 = vmatpush1.msra.mxu0 0.0
        %1318 = vmatprep.subr.mxu0 0.0
        %1319 = vmatpush1.msra.mxu0 0.0
        %1320 = vmatprep.subr.mxu0 0.0
        %1321 = vmatpush1.msra.mxu0 0.0
        %1322 = vmatprep.subr.mxu0 0.0
        %1323 = vmatpush1.msra.mxu0 0.0
        %1324 = vmatprep.subr.mxu0 0.0
        %1325 = vmatpush1.msra.mxu0 0.0
        %1326 = vmatprep.subr.mxu0 0.0
        %1327 = vmatpush1.msra.mxu0 0.0
        %1328 = vmatprep.subr.mxu0 0.0
        %1329 = vmatpush1.msra.mxu0 0.0
        %1330 = vmatprep.subr.mxu0 0.0
        %1331 = vmatpush1.msra.mxu0 0.0
        %1332 = vmatprep.subr.mxu0 0.0
        %1333 = vmatpush1.msra.mxu0 0.0
        %1334 = vmatprep.subr.mxu0 0.0
        %1335 = vmatpush1.msra.mxu0 0.0
        %1336 = vmatprep.mubr.f32.mxu0 0.0
        %1337 = vmatmul.mubr.f32.gmra.mrb[0].mxu0 %v1081
        %v1338 = vpop.f32.mrb[0].mxu0
        %v1339 = vadd.f32 %v762, %v1338
        %v1340 = vpop.f32.mrb[0].mxu0
        %1341 = vmatprep.mubr.f32.mxu0 0.0
        %1342 = vmatmul.mubr.f32.gmra.mrb[0].mxu0 %v1084
        %v1343 = vpop.f32.mrb[0].mxu0
        %v1344 = vadd.f32 %v767, %v1343
        %v1345 = vpop.f32.mrb[0].mxu0
        %1346 = vmatprep.mubr.f32.mxu0 0.0
        %1347 = vmatmul.mubr.f32.gmra.mrb[0].mxu0 %v1087
        %v1348 = vpop.f32.mrb[0].mxu0
        %v1349 = vadd.f32 %v772, %v1348
        %v1350 = vpop.f32.mrb[0].mxu0
        %1351 = vmatprep.mubr.f32.mxu0 0.0
        %1352 = vmatmul.mubr.f32.gmra.mrb[0].mxu0 %v1090
        %v1353 = vpop.f32.mrb[0].mxu0
        %v1354 = vadd.f32 %v777, %v1353
        %v1355 = vpop.f32.mrb[0].mxu0
        %1356 = vmatprep.mubr.f32.mxu0 0.0
        %1357 = vmatmul.mubr.f32.gmra.mrb[0].mxu0 %v1093
        %v1358 = vpop.f32.mrb[0].mxu0
        %v1359 = vadd.f32 %v782, %v1358
        %v1360 = vpop.f32.mrb[0].mxu0
        %1361 = vmatprep.mubr.f32.mxu0 0.0
        %1362 = vmatmul.mubr.f32.gmra.mrb[0].mxu0 %v1096
        %v1363 = vpop.f32.mrb[0].mxu0
        %v1364 = vadd.f32 %v787, %v1363
        %v1365 = vpop.f32.mrb[0].mxu0
        %1366 = vmatprep.mubr.f32.mxu0 0.0
        %1367 = vmatmul.mubr.f32.gmra.mrb[0].mxu0 %v1099
        %v1368 = vpop.f32.mrb[0].mxu0
        %v1369 = vadd.f32 %v792, %v1368
        %v1370 = vpop.f32.mrb[0].mxu0
        %1371 = vmatprep.mubr.f32.mxu0 0.0
        %1372 = vmatmul.mubr.f32.gmra.mrb[0].mxu0 %v1102
        %v1373 = vpop.f32.mrb[0].mxu0
        %v1374 = vadd.f32 %v797, %v1373
        %v1375 = vpop.f32.mrb[0].mxu0
        %1376 = vmatprep.mubr.f32.mxu0 0.0
        %1377 = vmatmul.mubr.f32.gmra.mrb[0].mxu0 %v1105
        %v1378 = vpop.f32.mrb[0].mxu0
        %v1379 = vadd.f32 %v802, %v1378
        %v1380 = vpop.f32.mrb[0].mxu0
        %1381 = vmatprep.mubr.f32.mxu0 0.0
        %1382 = vmatmul.mubr.f32.gmra.mrb[0].mxu0 %v1108
        %v1383 = vpop.f32.mrb[0].mxu0
        %v1384 = vadd.f32 %v807, %v1383
        %v1385 = vpop.f32.mrb[0].mxu0
        %1386 = vmatprep.mubr.f32.mxu0 0.0
        %1387 = vmatmul.mubr.f32.gmra.mrb[0].mxu0 %v1111
        %v1388 = vpop.f32.mrb[0].mxu0
        %v1389 = vadd.f32 %v812, %v1388
        %v1390 = vpop.f32.mrb[0].mxu0
        %1391 = vmatprep.mubr.f32.mxu0 0.0
        %1392 = vmatmul.mubr.f32.gmra.mrb[0].mxu0 %v1114
        %v1393 = vpop.f32.mrb[0].mxu0
        %v1394 = vadd.f32 %v817, %v1393
        %v1395 = vpop.f32.mrb[0].mxu0
        %1396 = vmatprep.mubr.f32.mxu0 0.0
        %1397 = vmatmul.mubr.f32.gmra.mrb[0].mxu0 %v1117
        %v1398 = vpop.f32.mrb[0].mxu0
        %v1399 = vadd.f32 %v822, %v1398
        %v1400 = vpop.f32.mrb[0].mxu0
        %1401 = vmatprep.mubr.f32.mxu0 0.0
        %1402 = vmatmul.mubr.f32.gmra.mrb[0].mxu0 %v1120
        %v1403 = vpop.f32.mrb[0].mxu0
        %v1404 = vadd.f32 %v827, %v1403
        %v1405 = vpop.f32.mrb[0].mxu0
        %1406 = vmatprep.mubr.f32.mxu0 0.0
        %1407 = vmatmul.mubr.f32.gmra.mrb[0].mxu0 %v1123
        %v1408 = vpop.f32.mrb[0].mxu0
        %v1409 = vadd.f32 %v832, %v1408
        %v1410 = vpop.f32.mrb[0].mxu0
        %1411 = vmatprep.mubr.f32.mxu0 0.0
        %1412 = vmatmul.mubr.f32.gmra.mrb[0].mxu0 %v1126
        %v1413 = vpop.f32.mrb[0].mxu0
        %v1414 = vadd.f32 %v837, %v1413
        %v1415 = vpop.f32.mrb[0].mxu0
        %1416 = vmatprep.mubr.f32.mxu0 0.0
        %1417 = vmatmul.mubr.f32.gmra.mrb[0].mxu0 %v1129
        %v1418 = vpop.f32.mrb[0].mxu0
        %v1419 = vadd.f32 %v842, %v1418
        %v1420 = vpop.f32.mrb[0].mxu0
        %1421 = vmatprep.mubr.f32.mxu0 0.0
        %1422 = vmatmul.mubr.f32.gmra.mrb[0].mxu0 %v1132
        %v1423 = vpop.f32.mrb[0].mxu0
        %v1424 = vadd.f32 %v847, %v1423
        %v1425 = vpop.f32.mrb[0].mxu0
        %1426 = vmatprep.mubr.f32.mxu0 0.0
        %1427 = vmatmul.mubr.f32.gmra.mrb[0].mxu0 %v1135
        %v1428 = vpop.f32.mrb[0].mxu0
        %v1429 = vadd.f32 %v852, %v1428
        %v1430 = vpop.f32.mrb[0].mxu0
        %1431 = vmatprep.mubr.f32.mxu0 0.0
        %1432 = vmatmul.mubr.f32.gmra.mrb[0].mxu0 %v1138
        %v1433 = vpop.f32.mrb[0].mxu0
        %v1434 = vadd.f32 %v857, %v1433
        %v1435 = vpop.f32.mrb[0].mxu0
        %1436 = vmatprep.mubr.f32.mxu0 0.0
        %1437 = vmatmul.mubr.f32.gmra.mrb[0].mxu0 %v1141
        %v1438 = vpop.f32.mrb[0].mxu0
        %v1439 = vadd.f32 %v862, %v1438
        %v1440 = vpop.f32.mrb[0].mxu0
        %1441 = vmatprep.mubr.f32.mxu0 0.0
        %1442 = vmatmul.mubr.f32.gmra.mrb[0].mxu0 %v1144
        %v1443 = vpop.f32.mrb[0].mxu0
        %v1444 = vadd.f32 %v867, %v1443
        %v1445 = vpop.f32.mrb[0].mxu0
        %1446 = vmatprep.mubr.f32.mxu0 0.0
        %1447 = vmatmul.mubr.f32.gmra.mrb[0].mxu0 %v1147
        %v1448 = vpop.f32.mrb[0].mxu0
        %v1449 = vadd.f32 %v872, %v1448
        %v1450 = vpop.f32.mrb[0].mxu0
        %1451 = vmatprep.mubr.f32.mxu0 0.0
        %1452 = vmatmul.mubr.f32.gmra.mrb[0].mxu0 %v1150
        %v1453 = vpop.f32.mrb[0].mxu0
        %v1454 = vadd.f32 %v877, %v1453
        %v1455 = vpop.f32.mrb[0].mxu0
        %1456 = vmatprep.mubr.f32.mxu0 0.0
        %1457 = vmatmul.mubr.f32.gmra.mrb[0].mxu0 %v1153
        %v1458 = vpop.f32.mrb[0].mxu0
        %v1459 = vadd.f32 %v882, %v1458
        %v1460 = vpop.f32.mrb[0].mxu0
        %1461 = vmatprep.mubr.f32.mxu0 0.0
        %1462 = vmatmul.mubr.f32.gmra.mrb[0].mxu0 %v1156
        %v1463 = vpop.f32.mrb[0].mxu0
        %v1464 = vadd.f32 %v887, %v1463
        %v1465 = vpop.f32.mrb[0].mxu0
        %1466 = vmatprep.mubr.f32.mxu0 0.0
        %1467 = vmatmul.mubr.f32.gmra.mrb[0].mxu0 %v1159
        %v1468 = vpop.f32.mrb[0].mxu0
        %v1469 = vadd.f32 %v892, %v1468
        %v1470 = vpop.f32.mrb[0].mxu0
        %1471 = vmatprep.mubr.f32.mxu0 0.0
        %1472 = vmatmul.mubr.f32.gmra.mrb[0].mxu0 %v1162
        %v1473 = vpop.f32.mrb[0].mxu0
        %v1474 = vadd.f32 %v897, %v1473
        %v1475 = vpop.f32.mrb[0].mxu0
        %1476 = vmatprep.mubr.f32.mxu0 0.0
        %1477 = vmatmul.mubr.f32.gmra.mrb[0].mxu0 %v1165
        %v1478 = vpop.f32.mrb[0].mxu0
        %v1479 = vadd.f32 %v902, %v1478
        %v1480 = vpop.f32.mrb[0].mxu0
        %1481 = vmatprep.mubr.f32.mxu0 0.0
        %1482 = vmatmul.mubr.f32.gmra.mrb[0].mxu0 %v1168
        %v1483 = vpop.f32.mrb[0].mxu0
        %v1484 = vadd.f32 %v907, %v1483
        %v1485 = vpop.f32.mrb[0].mxu0
        %1486 = vmatprep.mubr.f32.mxu0 0.0
        %1487 = vmatmul.mubr.f32.gmra.mrb[0].mxu0 %v1171
        %v1488 = vpop.f32.mrb[0].mxu0
        %v1489 = vadd.f32 %v912, %v1488
        %v1490 = vpop.f32.mrb[0].mxu0
        %1491 = vmatprep.mubr.f32.mxu0 0.0
        %1492 = vmatmul.mubr.f32.gmra.mrb[0].mxu0 %v1174
        %v1493 = vpop.f32.mrb[0].mxu0
        %v1494 = vadd.f32 %v917, %v1493
        %v1495 = vpop.f32.mrb[0].mxu0
        %1496 = vmatprep.mubr.f32.mxu0 0.0
        %1497 = vmatmul.mubr.f32.gmra.mrb[0].mxu0 %v1177
        %v1498 = vpop.f32.mrb[0].mxu0
        %v1499 = vadd.f32 %v922, %v1498
        %v1500 = vpop.f32.mrb[0].mxu0
        %1501 = vmatprep.mubr.f32.mxu0 0.0
        %1502 = vmatmul.mubr.f32.gmra.mrb[0].mxu0 %v1180
        %v1503 = vpop.f32.mrb[0].mxu0
        %v1504 = vadd.f32 %v927, %v1503
        %v1505 = vpop.f32.mrb[0].mxu0
        %1506 = vmatprep.mubr.f32.mxu0 0.0
        %1507 = vmatmul.mubr.f32.gmra.mrb[0].mxu0 %v1183
        %v1508 = vpop.f32.mrb[0].mxu0
        %v1509 = vadd.f32 %v932, %v1508
        %v1510 = vpop.f32.mrb[0].mxu0
        %1511 = vmatprep.mubr.f32.mxu0 0.0
        %1512 = vmatmul.mubr.f32.gmra.mrb[0].mxu0 %v1186
        %v1513 = vpop.f32.mrb[0].mxu0
        %v1514 = vadd.f32 %v937, %v1513
        %v1515 = vpop.f32.mrb[0].mxu0
        %1516 = vmatprep.mubr.f32.mxu0 0.0
        %1517 = vmatmul.mubr.f32.gmra.mrb[0].mxu0 %v1189
        %v1518 = vpop.f32.mrb[0].mxu0
        %v1519 = vadd.f32 %v942, %v1518
        %v1520 = vpop.f32.mrb[0].mxu0
        %1521 = vmatprep.mubr.f32.mxu0 0.0
        %1522 = vmatmul.mubr.f32.gmra.mrb[0].mxu0 %v1192
        %v1523 = vpop.f32.mrb[0].mxu0
        %v1524 = vadd.f32 %v947, %v1523
        %v1525 = vpop.f32.mrb[0].mxu0
        %1526 = vmatprep.mubr.f32.mxu0 0.0
        %1527 = vmatmul.mubr.f32.gmra.mrb[0].mxu0 %v1195
        %v1528 = vpop.f32.mrb[0].mxu0
        %v1529 = vadd.f32 %v952, %v1528
        %v1530 = vpop.f32.mrb[0].mxu0
        %1531 = vmatprep.mubr.f32.mxu0 0.0
        %1532 = vmatmul.mubr.f32.gmra.mrb[0].mxu0 %v1198
        %v1533 = vpop.f32.mrb[0].mxu0
        %v1534 = vadd.f32 %v957, %v1533
        %v1535 = vpop.f32.mrb[0].mxu0
        %1536 = vmatprep.mubr.f32.mxu0 0.0
        %1537 = vmatmul.mubr.f32.gmra.mrb[0].mxu0 %v1201
        %v1538 = vpop.f32.mrb[0].mxu0
        %v1539 = vadd.f32 %v962, %v1538
        %v1540 = vpop.f32.mrb[0].mxu0
        %1541 = vmatprep.mubr.f32.mxu0 0.0
        %1542 = vmatmul.mubr.f32.gmra.mrb[0].mxu0 %v1204
        %v1543 = vpop.f32.mrb[0].mxu0
        %v1544 = vadd.f32 %v967, %v1543
        %v1545 = vpop.f32.mrb[0].mxu0
        %1546 = vmatprep.mubr.f32.mxu0 0.0
        %1547 = vmatmul.mubr.f32.gmra.mrb[0].mxu0 %v1207
        %v1548 = vpop.f32.mrb[0].mxu0
        %v1549 = vadd.f32 %v972, %v1548
        %v1550 = vpop.f32.mrb[0].mxu0
        %1551 = vmatprep.mubr.f32.mxu0 0.0
        %1552 = vmatmul.mubr.f32.gmra.mrb[0].mxu0 %v1210
        %v1553 = vpop.f32.mrb[0].mxu0
        %v1554 = vadd.f32 %v977, %v1553
        %v1555 = vpop.f32.mrb[0].mxu0
        %1556 = vmatprep.mubr.f32.mxu0 0.0
        %1557 = vmatmul.mubr.f32.gmra.mrb[0].mxu0 %v1213
        %v1558 = vpop.f32.mrb[0].mxu0
        %v1559 = vadd.f32 %v982, %v1558
        %v1560 = vpop.f32.mrb[0].mxu0
        %1561 = vmatprep.mubr.f32.mxu0 0.0
        %1562 = vmatmul.mubr.f32.gmra.mrb[0].mxu0 %v1216
        %v1563 = vpop.f32.mrb[0].mxu0
        %v1564 = vadd.f32 %v987, %v1563
        %v1565 = vpop.f32.mrb[0].mxu0
        %1566 = vmatprep.mubr.f32.mxu0 0.0
        %1567 = vmatmul.mubr.f32.gmra.mrb[0].mxu0 %v1219
        %v1568 = vpop.f32.mrb[0].mxu0
        %v1569 = vadd.f32 %v992, %v1568
        %v1570 = vpop.f32.mrb[0].mxu0
        %1571 = vmatprep.mubr.f32.mxu0 0.0
        %1572 = vmatmul.mubr.f32.gmra.mrb[0].mxu0 %v1222
        %v1573 = vpop.f32.mrb[0].mxu0
        %v1574 = vadd.f32 %v997, %v1573
        %v1575 = vpop.f32.mrb[0].mxu0
        %1576 = vmatprep.mubr.f32.mxu0 0.0
        %1577 = vmatmul.mubr.f32.gmra.mrb[0].mxu0 %v1225
        %v1578 = vpop.f32.mrb[0].mxu0
        %v1579 = vadd.f32 %v1002, %v1578
        %v1580 = vpop.f32.mrb[0].mxu0
        %1581 = vmatprep.mubr.f32.mxu0 0.0
        %1582 = vmatmul.mubr.f32.gmra.mrb[0].mxu0 %v1228
        %v1583 = vpop.f32.mrb[0].mxu0
        %v1584 = vadd.f32 %v1007, %v1583
        %v1585 = vpop.f32.mrb[0].mxu0
        %1586 = vmatprep.mubr.f32.mxu0 0.0
        %1587 = vmatmul.mubr.f32.gmra.mrb[0].mxu0 %v1231
        %v1588 = vpop.f32.mrb[0].mxu0
        %v1589 = vadd.f32 %v1012, %v1588
        %v1590 = vpop.f32.mrb[0].mxu0
        %1591 = vmatprep.mubr.f32.mxu0 0.0
        %1592 = vmatmul.mubr.f32.gmra.mrb[0].mxu0 %v1234
        %v1593 = vpop.f32.mrb[0].mxu0
        %v1594 = vadd.f32 %v1017, %v1593
        %v1595 = vpop.f32.mrb[0].mxu0
        %1596 = vmatprep.mubr.f32.mxu0 0.0
        %1597 = vmatmul.mubr.f32.gmra.mrb[0].mxu0 %v1237
        %v1598 = vpop.f32.mrb[0].mxu0
        %v1599 = vadd.f32 %v1022, %v1598
        %v1600 = vpop.f32.mrb[0].mxu0
        %1601 = vmatprep.mubr.f32.mxu0 0.0
        %1602 = vmatmul.mubr.f32.gmra.mrb[0].mxu0 %v1240
        %v1603 = vpop.f32.mrb[0].mxu0
        %v1604 = vadd.f32 %v1027, %v1603
        %v1605 = vpop.f32.mrb[0].mxu0
        %1606 = vmatprep.mubr.f32.mxu0 0.0
        %1607 = vmatmul.mubr.f32.gmra.mrb[0].mxu0 %v1243
        %v1608 = vpop.f32.mrb[0].mxu0
        %v1609 = vadd.f32 %v1032, %v1608
        %v1610 = vpop.f32.mrb[0].mxu0
        %1611 = vmatprep.mubr.f32.mxu0 0.0
        %1612 = vmatmul.mubr.f32.gmra.mrb[0].mxu0 %v1246
        %v1613 = vpop.f32.mrb[0].mxu0
        %v1614 = vadd.f32 %v1037, %v1613
        %v1615 = vpop.f32.mrb[0].mxu0
        %1616 = vmatprep.mubr.f32.mxu0 0.0
        %1617 = vmatmul.mubr.f32.gmra.mrb[0].mxu0 %v1249
        %v1618 = vpop.f32.mrb[0].mxu0
        %v1619 = vadd.f32 %v1042, %v1618
        %v1620 = vpop.f32.mrb[0].mxu0
        %1621 = vmatprep.mubr.f32.mxu0 0.0
        %1622 = vmatmul.mubr.f32.gmra.mrb[0].mxu0 %v1252
        %v1623 = vpop.f32.mrb[0].mxu0
        %v1624 = vadd.f32 %v1047, %v1623
        %v1625 = vpop.f32.mrb[0].mxu0
        %1626 = vmatprep.mubr.f32.mxu0 0.0
        %1627 = vmatmul.mubr.f32.gmra.mrb[0].mxu0 %v1255
        %v1628 = vpop.f32.mrb[0].mxu0
        %v1629 = vadd.f32 %v1052, %v1628
        %v1630 = vpop.f32.mrb[0].mxu0
        %1631 = vmatprep.mubr.f32.mxu0 0.0
        %1632 = vmatmul.mubr.f32.gmra.mrb[0].mxu0 %v1258
        %v1633 = vpop.f32.mrb[0].mxu0
        %v1634 = vadd.f32 %v1057, %v1633
        %v1635 = vpop.f32.mrb[0].mxu0
        %1636 = vmatprep.mubr.f32.mxu0 0.0
        %1637 = vmatmul.mubr.f32.gmra.mrb[0].mxu0 %v1261
        %v1638 = vpop.f32.mrb[0].mxu0
        %v1639 = vadd.f32 %v1062, %v1638
        %v1640 = vpop.f32.mrb[0].mxu0
        %1641 = vmatprep.mubr.f32.mxu0 0.0
        %1642 = vmatmul.mubr.f32.gmra.mrb[0].mxu0 %v1264
        %v1643 = vpop.f32.mrb[0].mxu0
        %v1644 = vadd.f32 %v1067, %v1643
        %v1645 = vpop.f32.mrb[0].mxu0
        %1646 = vmatprep.mubr.f32.mxu0 0.0
        %1647 = vmatmul.mubr.f32.gmra.mrb[0].mxu0 %v1267
        %v1648 = vpop.f32.mrb[0].mxu0
        %v1649 = vadd.f32 %v1072, %v1648
        %v1650 = vpop.f32.mrb[0].mxu0
        %1651 = vmatprep.mubr.f32.mxu0 0.0
        %1652 = vmatmul.mubr.f32.gmra.mrb[0].mxu0 %v1270
        %v1653 = vpop.f32.mrb[0].mxu0
        %v1654 = vadd.f32 %v1077, %v1653
        %v1655 = vpop.f32.mrb[0].mxu0
        %1656 = vdwg.mxu0
        %vm1657 = vcmask 31744
        %1658 = vst.msk [vmem:[#allocation2 + $0x8] sm:$0xff] %vm1657, %v1339
        %1659 = vst.msk [vmem:[#allocation2 + $0x20] sm:$0xff] %vm1657, %v1344
        %1660 = vst.msk [vmem:[#allocation2 + $0x38] sm:$0xff] %vm1657, %v1349
        %1661 = vst.msk [vmem:[#allocation2 + $0x50] sm:$0xff] %vm1657, %v1354
        %1662 = vst.msk [vmem:[#allocation2 + $0x68] sm:$0xff] %vm1657, %v1359
        %1663 = vst.msk [vmem:[#allocation2 + $0x80] sm:$0xff] %vm1657, %v1364
        %1664 = vst.msk [vmem:[#allocation2 + $0x98] sm:$0xff] %vm1657, %v1369
        %1665 = vst.msk [vmem:[#allocation2 + $0xb0] sm:$0xff] %vm1657, %v1374
        %1674 = vrot.lane.b32.xlu0 %v1379, 16
        %v1675 = vpop.permute.xlu0 %1674
        %1676 = vrot.lane.b32.xlu0 %v1384, 16
        %v1677 = vpop.permute.xlu0 %1676
        %1678 = vrot.lane.b32.xlu0 %v1389, 16
        %v1679 = vpop.permute.xlu0 %1678
        %1680 = vrot.lane.b32.xlu0 %v1394, 16
        %v1681 = vpop.permute.xlu0 %1680
        %1682 = vrot.lane.b32.xlu0 %v1399, 16
        %v1683 = vpop.permute.xlu0 %1682
        %1684 = vrot.lane.b32.xlu0 %v1404, 16
        %v1685 = vpop.permute.xlu0 %1684
        %1686 = vrot.lane.b32.xlu0 %v1409, 16
        %v1687 = vpop.permute.xlu0 %1686
        %1688 = vrot.lane.b32.xlu0 %v1414, 16
        %v1689 = vpop.permute.xlu0 %1688
        %vm1698 = vcmask 162944
        %1699 = vst.msk [vmem:[#allocation2 + $0x8] sm:$0xff] %vm1698, %v1675
        %1700 = vst.msk [vmem:[#allocation2 + $0x20] sm:$0xff] %vm1698, %v1677
        %1701 = vst.msk [vmem:[#allocation2 + $0x38] sm:$0xff] %vm1698, %v1679
        %1702 = vst.msk [vmem:[#allocation2 + $0x50] sm:$0xff] %vm1698, %v1681
        %1703 = vst.msk [vmem:[#allocation2 + $0x68] sm:$0xff] %vm1698, %v1683
        %1704 = vst.msk [vmem:[#allocation2 + $0x80] sm:$0xff] %vm1698, %v1685
        %1705 = vst.msk [vmem:[#allocation2 + $0x98] sm:$0xff] %vm1698, %v1687
        %1706 = vst.msk [vmem:[#allocation2 + $0xb0] sm:$0xff] %vm1698, %v1689
        %1715 = vrot.lane.b32.xlu0 %v1419, 32
        %v1716 = vpop.permute.xlu0 %1715
        %1717 = vrot.lane.b32.xlu0 %v1424, 32
        %v1718 = vpop.permute.xlu0 %1717
        %1719 = vrot.lane.b32.xlu0 %v1429, 32
        %v1720 = vpop.permute.xlu0 %1719
        %1721 = vrot.lane.b32.xlu0 %v1434, 32
        %v1722 = vpop.permute.xlu0 %1721
        %1723 = vrot.lane.b32.xlu0 %v1439, 32
        %v1724 = vpop.permute.xlu0 %1723
        %1725 = vrot.lane.b32.xlu0 %v1444, 32
        %v1726 = vpop.permute.xlu0 %1725
        %1727 = vrot.lane.b32.xlu0 %v1449, 32
        %v1728 = vpop.permute.xlu0 %1727
        %1729 = vrot.lane.b32.xlu0 %v1454, 32
        %v1730 = vpop.permute.xlu0 %1729
        %vm1739 = vcmask 294144
        %1740 = vst.msk [vmem:[#allocation2 + $0x8] sm:$0xff] %vm1739, %v1716
        %1741 = vst.msk [vmem:[#allocation2 + $0x20] sm:$0xff] %vm1739, %v1718
        %1742 = vst.msk [vmem:[#allocation2 + $0x38] sm:$0xff] %vm1739, %v1720
        %1743 = vst.msk [vmem:[#allocation2 + $0x50] sm:$0xff] %vm1739, %v1722
        %1744 = vst.msk [vmem:[#allocation2 + $0x68] sm:$0xff] %vm1739, %v1724
        %1745 = vst.msk [vmem:[#allocation2 + $0x80] sm:$0xff] %vm1739, %v1726
        %1746 = vst.msk [vmem:[#allocation2 + $0x98] sm:$0xff] %vm1739, %v1728
        %1747 = vst.msk [vmem:[#allocation2 + $0xb0] sm:$0xff] %vm1739, %v1730
        %1756 = vrot.lane.b32.xlu0 %v1459, 48
        %v1757 = vpop.permute.xlu0 %1756
        %1758 = vrot.lane.b32.xlu0 %v1464, 48
        %v1759 = vpop.permute.xlu0 %1758
        %1760 = vrot.lane.b32.xlu0 %v1469, 48
        %v1761 = vpop.permute.xlu0 %1760
        %1762 = vrot.lane.b32.xlu0 %v1474, 48
        %v1763 = vpop.permute.xlu0 %1762
        %1764 = vrot.lane.b32.xlu0 %v1479, 48
        %v1765 = vpop.permute.xlu0 %1764
        %1766 = vrot.lane.b32.xlu0 %v1484, 48
        %v1767 = vpop.permute.xlu0 %1766
        %1768 = vrot.lane.b32.xlu0 %v1489, 48
        %v1769 = vpop.permute.xlu0 %1768
        %1770 = vrot.lane.b32.xlu0 %v1494, 48
        %v1771 = vpop.permute.xlu0 %1770
        %vm1780 = vcmask 425344
        %1781 = vst.msk [vmem:[#allocation2 + $0x8] sm:$0xff] %vm1780, %v1757
        %1782 = vst.msk [vmem:[#allocation2 + $0x20] sm:$0xff] %vm1780, %v1759
        %1783 = vst.msk [vmem:[#allocation2 + $0x38] sm:$0xff] %vm1780, %v1761
        %1784 = vst.msk [vmem:[#allocation2 + $0x50] sm:$0xff] %vm1780, %v1763
        %1785 = vst.msk [vmem:[#allocation2 + $0x68] sm:$0xff] %vm1780, %v1765
        %1786 = vst.msk [vmem:[#allocation2 + $0x80] sm:$0xff] %vm1780, %v1767
        %1787 = vst.msk [vmem:[#allocation2 + $0x98] sm:$0xff] %vm1780, %v1769
        %1788 = vst.msk [vmem:[#allocation2 + $0xb0] sm:$0xff] %vm1780, %v1771
        %1797 = vrot.lane.b32.xlu0 %v1499, 64
        %v1798 = vpop.permute.xlu0 %1797
        %1799 = vrot.lane.b32.xlu0 %v1504, 64
        %v1800 = vpop.permute.xlu0 %1799
        %1801 = vrot.lane.b32.xlu0 %v1509, 64
        %v1802 = vpop.permute.xlu0 %1801
        %1803 = vrot.lane.b32.xlu0 %v1514, 64
        %v1804 = vpop.permute.xlu0 %1803
        %1805 = vrot.lane.b32.xlu0 %v1519, 64
        %v1806 = vpop.permute.xlu0 %1805
        %1807 = vrot.lane.b32.xlu0 %v1524, 64
        %v1808 = vpop.permute.xlu0 %1807
        %1809 = vrot.lane.b32.xlu0 %v1529, 64
        %v1810 = vpop.permute.xlu0 %1809
        %1811 = vrot.lane.b32.xlu0 %v1534, 64
        %v1812 = vpop.permute.xlu0 %1811
        %vm1821 = vcmask 556544
        %1822 = vst.msk [vmem:[#allocation2 + $0x8] sm:$0xff] %vm1821, %v1798
        %1823 = vst.msk [vmem:[#allocation2 + $0x20] sm:$0xff] %vm1821, %v1800
        %1824 = vst.msk [vmem:[#allocation2 + $0x38] sm:$0xff] %vm1821, %v1802
        %1825 = vst.msk [vmem:[#allocation2 + $0x50] sm:$0xff] %vm1821, %v1804
        %1826 = vst.msk [vmem:[#allocation2 + $0x68] sm:$0xff] %vm1821, %v1806
        %1827 = vst.msk [vmem:[#allocation2 + $0x80] sm:$0xff] %vm1821, %v1808
        %1828 = vst.msk [vmem:[#allocation2 + $0x98] sm:$0xff] %vm1821, %v1810
        %1829 = vst.msk [vmem:[#allocation2 + $0xb0] sm:$0xff] %vm1821, %v1812
        %1838 = vrot.lane.b32.xlu0 %v1539, 80
        %v1839 = vpop.permute.xlu0 %1838
        %1840 = vrot.lane.b32.xlu0 %v1544, 80
        %v1841 = vpop.permute.xlu0 %1840
        %1842 = vrot.lane.b32.xlu0 %v1549, 80
        %v1843 = vpop.permute.xlu0 %1842
        %1844 = vrot.lane.b32.xlu0 %v1554, 80
        %v1845 = vpop.permute.xlu0 %1844
        %1846 = vrot.lane.b32.xlu0 %v1559, 80
        %v1847 = vpop.permute.xlu0 %1846
        %1848 = vrot.lane.b32.xlu0 %v1564, 80
        %v1849 = vpop.permute.xlu0 %1848
        %1850 = vrot.lane.b32.xlu0 %v1569, 80
        %v1851 = vpop.permute.xlu0 %1850
        %1852 = vrot.lane.b32.xlu0 %v1574, 80
        %v1853 = vpop.permute.xlu0 %1852
        %vm1862 = vcmask 687744
        %1863 = vst.msk [vmem:[#allocation2 + $0x8] sm:$0xff] %vm1862, %v1839
        %1864 = vst.msk [vmem:[#allocation2 + $0x20] sm:$0xff] %vm1862, %v1841
        %1865 = vst.msk [vmem:[#allocation2 + $0x38] sm:$0xff] %vm1862, %v1843
        %1866 = vst.msk [vmem:[#allocation2 + $0x50] sm:$0xff] %vm1862, %v1845
        %1867 = vst.msk [vmem:[#allocation2 + $0x68] sm:$0xff] %vm1862, %v1847
        %1868 = vst.msk [vmem:[#allocation2 + $0x80] sm:$0xff] %vm1862, %v1849
        %1869 = vst.msk [vmem:[#allocation2 + $0x98] sm:$0xff] %vm1862, %v1851
        %1870 = vst.msk [vmem:[#allocation2 + $0xb0] sm:$0xff] %vm1862, %v1853
        %1879 = vrot.lane.b32.xlu0 %v1579, 96
        %v1880 = vpop.permute.xlu0 %1879
        %1881 = vrot.lane.b32.xlu0 %v1584, 96
        %v1882 = vpop.permute.xlu0 %1881
        %1883 = vrot.lane.b32.xlu0 %v1589, 96
        %v1884 = vpop.permute.xlu0 %1883
        %1885 = vrot.lane.b32.xlu0 %v1594, 96
        %v1886 = vpop.permute.xlu0 %1885
        %1887 = vrot.lane.b32.xlu0 %v1599, 96
        %v1888 = vpop.permute.xlu0 %1887
        %1889 = vrot.lane.b32.xlu0 %v1604, 96
        %v1890 = vpop.permute.xlu0 %1889
        %1891 = vrot.lane.b32.xlu0 %v1609, 96
        %v1892 = vpop.permute.xlu0 %1891
        %1893 = vrot.lane.b32.xlu0 %v1614, 96
        %v1894 = vpop.permute.xlu0 %1893
        %vm1903 = vcmask 818944
        %1904 = vst.msk [vmem:[#allocation2 + $0x8] sm:$0xff] %vm1903, %v1880
        %1905 = vst.msk [vmem:[#allocation2 + $0x20] sm:$0xff] %vm1903, %v1882
        %1906 = vst.msk [vmem:[#allocation2 + $0x38] sm:$0xff] %vm1903, %v1884
        %1907 = vst.msk [vmem:[#allocation2 + $0x50] sm:$0xff] %vm1903, %v1886
        %1908 = vst.msk [vmem:[#allocation2 + $0x68] sm:$0xff] %vm1903, %v1888
        %1909 = vst.msk [vmem:[#allocation2 + $0x80] sm:$0xff] %vm1903, %v1890
        %1910 = vst.msk [vmem:[#allocation2 + $0x98] sm:$0xff] %vm1903, %v1892
        %1911 = vst.msk [vmem:[#allocation2 + $0xb0] sm:$0xff] %vm1903, %v1894
        %1920 = vrot.lane.b32.xlu0 %v1619, 112
        %v1921 = vpop.permute.xlu0 %1920
        %1922 = vrot.lane.b32.xlu0 %v1624, 112
        %v1923 = vpop.permute.xlu0 %1922
        %1924 = vrot.lane.b32.xlu0 %v1629, 112
        %v1925 = vpop.permute.xlu0 %1924
        %1926 = vrot.lane.b32.xlu0 %v1634, 112
        %v1927 = vpop.permute.xlu0 %1926
        %1928 = vrot.lane.b32.xlu0 %v1639, 112
        %v1929 = vpop.permute.xlu0 %1928
        %1930 = vrot.lane.b32.xlu0 %v1644, 112
        %v1931 = vpop.permute.xlu0 %1930
        %1932 = vrot.lane.b32.xlu0 %v1649, 112
        %v1933 = vpop.permute.xlu0 %1932
        %1934 = vrot.lane.b32.xlu0 %v1654, 112
        %v1935 = vpop.permute.xlu0 %1934
        %vm1944 = vcmask 950144
        %1945 = vst.msk [vmem:[#allocation2 + $0x8] sm:$0xff] %vm1944, %v1921
        %1946 = vst.msk [vmem:[#allocation2 + $0x20] sm:$0xff] %vm1944, %v1923
        %1947 = vst.msk [vmem:[#allocation2 + $0x38] sm:$0xff] %vm1944, %v1925
        %1948 = vst.msk [vmem:[#allocation2 + $0x50] sm:$0xff] %vm1944, %v1927
        %1949 = vst.msk [vmem:[#allocation2 + $0x68] sm:$0xff] %vm1944, %v1929
        %1950 = vst.msk [vmem:[#allocation2 + $0x80] sm:$0xff] %vm1944, %v1931
        %1951 = vst.msk [vmem:[#allocation2 + $0x98] sm:$0xff] %vm1944, %v1933
        %1952 = vst.msk [vmem:[#allocation2 + $0xb0] sm:$0xff] %vm1944, %v1935
        %v1953 = vld [vmem:[#allocation2] sm:$0xff]
        %v1954 = vld [vmem:[#allocation2 + $0x8] sm:$0xff]
        %v1955 = vld [vmem:[#allocation2 + $0x18] sm:$0xff]
        %v1956 = vld [vmem:[#allocation2 + $0x20] sm:$0xff]
        %v1957 = vld [vmem:[#allocation2 + $0x30] sm:$0xff]
        %v1958 = vld [vmem:[#allocation2 + $0x38] sm:$0xff]
        %v1959 = vld [vmem:[#allocation2 + $0x48] sm:$0xff]
        %v1960 = vld [vmem:[#allocation2 + $0x50] sm:$0xff]
        %v1961 = vld [vmem:[#allocation2 + $0x60] sm:$0xff]
        %v1962 = vld [vmem:[#allocation2 + $0x68] sm:$0xff]
        %v1963 = vld [vmem:[#allocation2 + $0x78] sm:$0xff]
        %v1964 = vld [vmem:[#allocation2 + $0x80] sm:$0xff]
        %v1965 = vld [vmem:[#allocation2 + $0x90] sm:$0xff]
        %v1966 = vld [vmem:[#allocation2 + $0x98] sm:$0xff]
        %v1967 = vld [vmem:[#allocation2 + $0xa8] sm:$0xff]
        %v1968 = vld [vmem:[#allocation2 + $0xb0] sm:$0xff]
        %1985 = vrot.lane.b32.xlu0 %v1953, 36
        %v1986 = vpop.permute.xlu0 %1985
        %1987 = vrot.lane.b32.xlu0 %v1954, 36
        %v1988 = vpop.permute.xlu0 %1987
        %1989 = vrot.lane.b32.xlu0 %v1955, 36
        %v1990 = vpop.permute.xlu0 %1989
        %1991 = vrot.lane.b32.xlu0 %v1956, 36
        %v1992 = vpop.permute.xlu0 %1991
        %1993 = vrot.lane.b32.xlu0 %v1957, 36
        %v1994 = vpop.permute.xlu0 %1993
        %1995 = vrot.lane.b32.xlu0 %v1958, 36
        %v1996 = vpop.permute.xlu0 %1995
        %1997 = vrot.lane.b32.xlu0 %v1959, 36
        %v1998 = vpop.permute.xlu0 %1997
        %1999 = vrot.lane.b32.xlu0 %v1960, 36
        %v2000 = vpop.permute.xlu0 %1999
        %2001 = vrot.lane.b32.xlu0 %v1961, 36
        %v2002 = vpop.permute.xlu0 %2001
        %2003 = vrot.lane.b32.xlu0 %v1962, 36
        %v2004 = vpop.permute.xlu0 %2003
        %2005 = vrot.lane.b32.xlu0 %v1963, 36
        %v2006 = vpop.permute.xlu0 %2005
        %2007 = vrot.lane.b32.xlu0 %v1964, 36
        %v2008 = vpop.permute.xlu0 %2007
        %2009 = vrot.lane.b32.xlu0 %v1965, 36
        %v2010 = vpop.permute.xlu0 %2009
        %2011 = vrot.lane.b32.xlu0 %v1966, 36
        %v2012 = vpop.permute.xlu0 %2011
        %2013 = vrot.lane.b32.xlu0 %v1967, 36
        %v2014 = vpop.permute.xlu0 %2013
        %2015 = vrot.lane.b32.xlu0 %v1968, 36
        %v2016 = vpop.permute.xlu0 %2015
        %vm2017 = vcmask 293888
        %v2018 = vsel %vm2017, %v1986, %v1988
        %v2019 = vsel %vm2017, %v1990, %v1992
        %v2020 = vsel %vm2017, %v1994, %v1996
        %v2021 = vsel %vm2017, %v1998, %v2000
        %v2022 = vsel %vm2017, %v2002, %v2004
        %v2023 = vsel %vm2017, %v2006, %v2008
        %v2024 = vsel %vm2017, %v2010, %v2012
        %v2025 = vsel %vm2017, %v2014, %v2016
        %2034 = vst [vmem:[#allocation3] sm:$0xff] %v2018
        %2035 = vst [vmem:[#allocation3 + $0x8] sm:$0xff] %v2019
        %2036 = vst [vmem:[#allocation3 + $0x10] sm:$0xff] %v2020
        %2037 = vst [vmem:[#allocation3 + $0x18] sm:$0xff] %v2021
        %2038 = vst [vmem:[#allocation3 + $0x20] sm:$0xff] %v2022
        %2039 = vst [vmem:[#allocation3 + $0x28] sm:$0xff] %v2023
        %2040 = vst [vmem:[#allocation3 + $0x30] sm:$0xff] %v2024
        %2041 = vst [vmem:[#allocation3 + $0x38] sm:$0xff] %v2025
        %v2042 = vld [vmem:[#allocation2] sm:$0xff]
        %v2043 = vld [vmem:[#allocation2 + $0x8] sm:$0xff]
        %v2044 = vld [vmem:[#allocation2 + $0x18] sm:$0xff]
        %v2045 = vld [vmem:[#allocation2 + $0x20] sm:$0xff]
        %v2046 = vld [vmem:[#allocation2 + $0x30] sm:$0xff]
        %v2047 = vld [vmem:[#allocation2 + $0x38] sm:$0xff]
        %v2048 = vld [vmem:[#allocation2 + $0x48] sm:$0xff]
        %v2049 = vld [vmem:[#allocation2 + $0x50] sm:$0xff]
        %v2050 = vld [vmem:[#allocation2 + $0x60] sm:$0xff]
        %v2051 = vld [vmem:[#allocation2 + $0x68] sm:$0xff]
        %v2052 = vld [vmem:[#allocation2 + $0x78] sm:$0xff]
        %v2053 = vld [vmem:[#allocation2 + $0x80] sm:$0xff]
        %v2054 = vld [vmem:[#allocation2 + $0x90] sm:$0xff]
        %v2055 = vld [vmem:[#allocation2 + $0x98] sm:$0xff]
        %v2056 = vld [vmem:[#allocation2 + $0xa8] sm:$0xff]
        %v2057 = vld [vmem:[#allocation2 + $0xb0] sm:$0xff]
        %2074 = vrot.lane.b32.xlu0 %v2042, 32
        %v2075 = vpop.permute.xlu0 %2074
        %2076 = vrot.lane.b32.xlu0 %v2043, 32
        %v2077 = vpop.permute.xlu0 %2076
        %2078 = vrot.lane.b32.xlu0 %v2044, 32
        %v2079 = vpop.permute.xlu0 %2078
        %2080 = vrot.lane.b32.xlu0 %v2045, 32
        %v2081 = vpop.permute.xlu0 %2080
        %2082 = vrot.lane.b32.xlu0 %v2046, 32
        %v2083 = vpop.permute.xlu0 %2082
        %2084 = vrot.lane.b32.xlu0 %v2047, 32
        %v2085 = vpop.permute.xlu0 %2084
        %2086 = vrot.lane.b32.xlu0 %v2048, 32
        %v2087 = vpop.permute.xlu0 %2086
        %2088 = vrot.lane.b32.xlu0 %v2049, 32
        %v2089 = vpop.permute.xlu0 %2088
        %2090 = vrot.lane.b32.xlu0 %v2050, 32
        %v2091 = vpop.permute.xlu0 %2090
        %2092 = vrot.lane.b32.xlu0 %v2051, 32
        %v2093 = vpop.permute.xlu0 %2092
        %2094 = vrot.lane.b32.xlu0 %v2052, 32
        %v2095 = vpop.permute.xlu0 %2094
        %2096 = vrot.lane.b32.xlu0 %v2053, 32
        %v2097 = vpop.permute.xlu0 %2096
        %2098 = vrot.lane.b32.xlu0 %v2054, 32
        %v2099 = vpop.permute.xlu0 %2098
        %2100 = vrot.lane.b32.xlu0 %v2055, 32
        %v2101 = vpop.permute.xlu0 %2100
        %2102 = vrot.lane.b32.xlu0 %v2056, 32
        %v2103 = vpop.permute.xlu0 %2102
        %2104 = vrot.lane.b32.xlu0 %v2057, 32
        %v2105 = vpop.permute.xlu0 %2104
        %v2106 = vsel %vm1079, %v2075, %v2077
        %v2107 = vsel %vm1079, %v2079, %v2081
        %v2108 = vsel %vm1079, %v2083, %v2085
        %v2109 = vsel %vm1079, %v2087, %v2089
        %v2110 = vsel %vm1079, %v2091, %v2093
        %v2111 = vsel %vm1079, %v2095, %v2097
        %v2112 = vsel %vm1079, %v2099, %v2101
        %v2113 = vsel %vm1079, %v2103, %v2105
        %2122 = vst [vmem:[#allocation3 + $0x40] sm:$0xff] %v2106
        %2123 = vst [vmem:[#allocation3 + $0x48] sm:$0xff] %v2107
        %2124 = vst [vmem:[#allocation3 + $0x50] sm:$0xff] %v2108
        %2125 = vst [vmem:[#allocation3 + $0x58] sm:$0xff] %v2109
        %2126 = vst [vmem:[#allocation3 + $0x60] sm:$0xff] %v2110
        %2127 = vst [vmem:[#allocation3 + $0x68] sm:$0xff] %v2111
        %2128 = vst [vmem:[#allocation3 + $0x70] sm:$0xff] %v2112
        %2129 = vst [vmem:[#allocation3 + $0x78] sm:$0xff] %v2113
        %v2130 = vld [vmem:[#allocation2] sm:$0xff]
        %v2131 = vld [vmem:[#allocation2 + $0x8] sm:$0xff]
        %v2132 = vld [vmem:[#allocation2 + $0x18] sm:$0xff]
        %v2133 = vld [vmem:[#allocation2 + $0x20] sm:$0xff]
        %v2134 = vld [vmem:[#allocation2 + $0x30] sm:$0xff]
        %v2135 = vld [vmem:[#allocation2 + $0x38] sm:$0xff]
        %v2136 = vld [vmem:[#allocation2 + $0x48] sm:$0xff]
        %v2137 = vld [vmem:[#allocation2 + $0x50] sm:$0xff]
        %v2138 = vld [vmem:[#allocation2 + $0x60] sm:$0xff]
        %v2139 = vld [vmem:[#allocation2 + $0x68] sm:$0xff]
        %v2140 = vld [vmem:[#allocation2 + $0x78] sm:$0xff]
        %v2141 = vld [vmem:[#allocation2 + $0x80] sm:$0xff]
        %v2142 = vld [vmem:[#allocation2 + $0x90] sm:$0xff]
        %v2143 = vld [vmem:[#allocation2 + $0x98] sm:$0xff]
        %v2144 = vld [vmem:[#allocation2 + $0xa8] sm:$0xff]
        %v2145 = vld [vmem:[#allocation2 + $0xb0] sm:$0xff]
        %2162 = vrot.lane.b32.xlu0 %v2130, 28
        %v2163 = vpop.permute.xlu0 %2162
        %2164 = vrot.lane.b32.xlu0 %v2131, 28
        %v2165 = vpop.permute.xlu0 %2164
        %2166 = vrot.lane.b32.xlu0 %v2132, 28
        %v2167 = vpop.permute.xlu0 %2166
        %2168 = vrot.lane.b32.xlu0 %v2133, 28
        %v2169 = vpop.permute.xlu0 %2168
        %2170 = vrot.lane.b32.xlu0 %v2134, 28
        %v2171 = vpop.permute.xlu0 %2170
        %2172 = vrot.lane.b32.xlu0 %v2135, 28
        %v2173 = vpop.permute.xlu0 %2172
        %2174 = vrot.lane.b32.xlu0 %v2136, 28
        %v2175 = vpop.permute.xlu0 %2174
        %2176 = vrot.lane.b32.xlu0 %v2137, 28
        %v2177 = vpop.permute.xlu0 %2176
        %2178 = vrot.lane.b32.xlu0 %v2138, 28
        %v2179 = vpop.permute.xlu0 %2178
        %2180 = vrot.lane.b32.xlu0 %v2139, 28
        %v2181 = vpop.permute.xlu0 %2180
        %2182 = vrot.lane.b32.xlu0 %v2140, 28
        %v2183 = vpop.permute.xlu0 %2182
        %2184 = vrot.lane.b32.xlu0 %v2141, 28
        %v2185 = vpop.permute.xlu0 %2184
        %2186 = vrot.lane.b32.xlu0 %v2142, 28
        %v2187 = vpop.permute.xlu0 %2186
        %2188 = vrot.lane.b32.xlu0 %v2143, 28
        %v2189 = vpop.permute.xlu0 %2188
        %2190 = vrot.lane.b32.xlu0 %v2144, 28
        %v2191 = vpop.permute.xlu0 %2190
        %2192 = vrot.lane.b32.xlu0 %v2145, 28
        %v2193 = vpop.permute.xlu0 %2192
        %vm2194 = vcmask 228352
        %v2195 = vsel %vm2194, %v2163, %v2165
        %v2196 = vsel %vm2194, %v2167, %v2169
        %v2197 = vsel %vm2194, %v2171, %v2173
        %v2198 = vsel %vm2194, %v2175, %v2177
        %v2199 = vsel %vm2194, %v2179, %v2181
        %v2200 = vsel %vm2194, %v2183, %v2185
        %v2201 = vsel %vm2194, %v2187, %v2189
        %v2202 = vsel %vm2194, %v2191, %v2193
        %2211 = vst [vmem:[#allocation3 + $0x80] sm:$0xff] %v2195
        %2212 = vst [vmem:[#allocation3 + $0x88] sm:$0xff] %v2196
        %2213 = vst [vmem:[#allocation3 + $0x90] sm:$0xff] %v2197
        %2214 = vst [vmem:[#allocation3 + $0x98] sm:$0xff] %v2198
        %2215 = vst [vmem:[#allocation3 + $0xa0] sm:$0xff] %v2199
        %2216 = vst [vmem:[#allocation3 + $0xa8] sm:$0xff] %v2200
        %2217 = vst [vmem:[#allocation3 + $0xb0] sm:$0xff] %v2201
        %2218 = vst [vmem:[#allocation3 + $0xb8] sm:$0xff] %v2202
        %v2219 = vld [vmem:[#allocation2] sm:$0xff]
        %v2220 = vld [vmem:[#allocation2 + $0x8] sm:$0xff]
        %v2221 = vld [vmem:[#allocation2 + $0x18] sm:$0xff]
        %v2222 = vld [vmem:[#allocation2 + $0x20] sm:$0xff]
        %v2223 = vld [vmem:[#allocation2 + $0x30] sm:$0xff]
        %v2224 = vld [vmem:[#allocation2 + $0x38] sm:$0xff]
        %v2225 = vld [vmem:[#allocation2 + $0x48] sm:$0xff]
        %v2226 = vld [vmem:[#allocation2 + $0x50] sm:$0xff]
        %v2227 = vld [vmem:[#allocation2 + $0x60] sm:$0xff]
        %v2228 = vld [vmem:[#allocation2 + $0x68] sm:$0xff]
        %v2229 = vld [vmem:[#allocation2 + $0x78] sm:$0xff]
        %v2230 = vld [vmem:[#allocation2 + $0x80] sm:$0xff]
        %v2231 = vld [vmem:[#allocation2 + $0x90] sm:$0xff]
        %v2232 = vld [vmem:[#allocation2 + $0x98] sm:$0xff]
        %v2233 = vld [vmem:[#allocation2 + $0xa8] sm:$0xff]
        %v2234 = vld [vmem:[#allocation2 + $0xb0] sm:$0xff]
        %2251 = vrot.lane.b32.xlu0 %v2219, 24
        %v2252 = vpop.permute.xlu0 %2251
        %2253 = vrot.lane.b32.xlu0 %v2220, 24
        %v2254 = vpop.permute.xlu0 %2253
        %2255 = vrot.lane.b32.xlu0 %v2221, 24
        %v2256 = vpop.permute.xlu0 %2255
        %2257 = vrot.lane.b32.xlu0 %v2222, 24
        %v2258 = vpop.permute.xlu0 %2257
        %2259 = vrot.lane.b32.xlu0 %v2223, 24
        %v2260 = vpop.permute.xlu0 %2259
        %2261 = vrot.lane.b32.xlu0 %v2224, 24
        %v2262 = vpop.permute.xlu0 %2261
        %2263 = vrot.lane.b32.xlu0 %v2225, 24
        %v2264 = vpop.permute.xlu0 %2263
        %2265 = vrot.lane.b32.xlu0 %v2226, 24
        %v2266 = vpop.permute.xlu0 %2265
        %2267 = vrot.lane.b32.xlu0 %v2227, 24
        %v2268 = vpop.permute.xlu0 %2267
        %2269 = vrot.lane.b32.xlu0 %v2228, 24
        %v2270 = vpop.permute.xlu0 %2269
        %2271 = vrot.lane.b32.xlu0 %v2229, 24
        %v2272 = vpop.permute.xlu0 %2271
        %2273 = vrot.lane.b32.xlu0 %v2230, 24
        %v2274 = vpop.permute.xlu0 %2273
        %2275 = vrot.lane.b32.xlu0 %v2231, 24
        %v2276 = vpop.permute.xlu0 %2275
        %2277 = vrot.lane.b32.xlu0 %v2232, 24
        %v2278 = vpop.permute.xlu0 %2277
        %2279 = vrot.lane.b32.xlu0 %v2233, 24
        %v2280 = vpop.permute.xlu0 %2279
        %2281 = vrot.lane.b32.xlu0 %v2234, 24
        %v2282 = vpop.permute.xlu0 %2281
        %vm2283 = vcmask 195584
        %v2284 = vsel %vm2283, %v2252, %v2254
        %v2285 = vsel %vm2283, %v2256, %v2258
        %v2286 = vsel %vm2283, %v2260, %v2262
        %v2287 = vsel %vm2283, %v2264, %v2266
        %v2288 = vsel %vm2283, %v2268, %v2270
        %v2289 = vsel %vm2283, %v2272, %v2274
        %v2290 = vsel %vm2283, %v2276, %v2278
        %v2291 = vsel %vm2283, %v2280, %v2282
        %2300 = vst [vmem:[#allocation3 + $0xc0] sm:$0xff] %v2284
        %2301 = vst [vmem:[#allocation3 + $0xc8] sm:$0xff] %v2285
        %2302 = vst [vmem:[#allocation3 + $0xd0] sm:$0xff] %v2286
        %2303 = vst [vmem:[#allocation3 + $0xd8] sm:$0xff] %v2287
        %2304 = vst [vmem:[#allocation3 + $0xe0] sm:$0xff] %v2288
        %2305 = vst [vmem:[#allocation3 + $0xe8] sm:$0xff] %v2289
        %2306 = vst [vmem:[#allocation3 + $0xf0] sm:$0xff] %v2290
        %2307 = vst [vmem:[#allocation3 + $0xf8] sm:$0xff] %v2291
        %v2308 = vld [vmem:[%s3] sm:$0xff]
        %v2309 = vld [vmem:[%s3 + $0x8] sm:$0xff]
        %v2310 = vld [vmem:[%s3 + $0x40] sm:$0xff]
        %v2311 = vld [vmem:[%s3 + $0x48] sm:$0xff]
        %v2312 = vld [vmem:[%s3 + $0x80] sm:$0xff]
        %v2313 = vld [vmem:[%s3 + $0x88] sm:$0xff]
        %v2314 = vld [vmem:[%s3 + $0xc0] sm:$0xff]
        %v2315 = vld [vmem:[%s3 + $0xc8] sm:$0xff]
        %v2316 = vld [vmem:[%s3 + $0x100] sm:$0xff]
        %v2317 = vld [vmem:[%s3 + $0x108] sm:$0xff]
        %v2318 = vld [vmem:[%s3 + $0x140] sm:$0xff]
        %v2319 = vld [vmem:[%s3 + $0x148] sm:$0xff]
        %v2320 = vld [vmem:[%s3 + $0x180] sm:$0xff]
        %v2321 = vld [vmem:[%s3 + $0x188] sm:$0xff]
        %v2322 = vld [vmem:[%s3 + $0x1c0] sm:$0xff]
        %v2323 = vld [vmem:[%s3 + $0x1c8] sm:$0xff]
        %v2324 = vld [vmem:[#allocation3] sm:$0xff]
        %v2325 = vld [vmem:[#allocation3 + $0x8] sm:$0xff]
        %v2326 = vld [vmem:[#allocation3 + $0x10] sm:$0xff]
        %v2327 = vld [vmem:[#allocation3 + $0x18] sm:$0xff]
        %v2328 = vld [vmem:[#allocation3 + $0x20] sm:$0xff]
        %v2329 = vld [vmem:[#allocation3 + $0x28] sm:$0xff]
        %v2330 = vld [vmem:[#allocation3 + $0x30] sm:$0xff]
        %v2331 = vld [vmem:[#allocation3 + $0x38] sm:$0xff]
        %v2332 = vld [vmem:[#allocation3 + $0x40] sm:$0xff]
        %v2333 = vld [vmem:[#allocation3 + $0x48] sm:$0xff]
        %v2334 = vld [vmem:[#allocation3 + $0x50] sm:$0xff]
        %v2335 = vld [vmem:[#allocation3 + $0x58] sm:$0xff]
        %v2336 = vld [vmem:[#allocation3 + $0x60] sm:$0xff]
        %v2337 = vld [vmem:[#allocation3 + $0x68] sm:$0xff]
        %v2338 = vld [vmem:[#allocation3 + $0x70] sm:$0xff]
        %v2339 = vld [vmem:[#allocation3 + $0x78] sm:$0xff]
        %v2340 = vld [vmem:[#allocation3 + $0x80] sm:$0xff]
        %v2341 = vld [vmem:[#allocation3 + $0x88] sm:$0xff]
        %v2342 = vld [vmem:[#allocation3 + $0x90] sm:$0xff]
        %v2343 = vld [vmem:[#allocation3 + $0x98] sm:$0xff]
        %v2344 = vld [vmem:[#allocation3 + $0xa0] sm:$0xff]
        %v2345 = vld [vmem:[#allocation3 + $0xa8] sm:$0xff]
        %v2346 = vld [vmem:[#allocation3 + $0xb0] sm:$0xff]
        %v2347 = vld [vmem:[#allocation3 + $0xb8] sm:$0xff]
        %v2348 = vld [vmem:[#allocation3 + $0xc0] sm:$0xff]
        %v2349 = vld [vmem:[#allocation3 + $0xc8] sm:$0xff]
        %v2350 = vld [vmem:[#allocation3 + $0xd0] sm:$0xff]
        %v2351 = vld [vmem:[#allocation3 + $0xd8] sm:$0xff]
        %v2352 = vld [vmem:[#allocation3 + $0xe0] sm:$0xff]
        %v2353 = vld [vmem:[#allocation3 + $0xe8] sm:$0xff]
        %v2354 = vld [vmem:[#allocation3 + $0xf0] sm:$0xff]
        %v2355 = vld [vmem:[#allocation3 + $0xf8] sm:$0xff]
        %v2356 = vld [vmem:[#allocation2] sm:$0xff]
        %v2357 = vld [vmem:[#allocation2 + $0x8] sm:$0xff]
        %v2358 = vld [vmem:[#allocation2 + $0x18] sm:$0xff]
        %v2359 = vld [vmem:[#allocation2 + $0x20] sm:$0xff]
        %v2360 = vld [vmem:[#allocation2 + $0x30] sm:$0xff]
        %v2361 = vld [vmem:[#allocation2 + $0x38] sm:$0xff]
        %v2362 = vld [vmem:[#allocation2 + $0x48] sm:$0xff]
        %v2363 = vld [vmem:[#allocation2 + $0x50] sm:$0xff]
        %v2364 = vld [vmem:[#allocation2 + $0x60] sm:$0xff]
        %v2365 = vld [vmem:[#allocation2 + $0x68] sm:$0xff]
        %v2366 = vld [vmem:[#allocation2 + $0x78] sm:$0xff]
        %v2367 = vld [vmem:[#allocation2 + $0x80] sm:$0xff]
        %v2368 = vld [vmem:[#allocation2 + $0x90] sm:$0xff]
        %v2369 = vld [vmem:[#allocation2 + $0x98] sm:$0xff]
        %v2370 = vld [vmem:[#allocation2 + $0xa8] sm:$0xff]
        %v2371 = vld [vmem:[#allocation2 + $0xb0] sm:$0xff]
        %2388 = vrot.lane.b32.xlu0 %v2356, 20
        %v2389 = vpop.permute.xlu0 %2388
        %2390 = vrot.lane.b32.xlu0 %v2357, 20
        %v2391 = vpop.permute.xlu0 %2390
        %2392 = vrot.lane.b32.xlu0 %v2358, 20
        %v2393 = vpop.permute.xlu0 %2392
        %2394 = vrot.lane.b32.xlu0 %v2359, 20
        %v2395 = vpop.permute.xlu0 %2394
        %2396 = vrot.lane.b32.xlu0 %v2360, 20
        %v2397 = vpop.permute.xlu0 %2396
        %2398 = vrot.lane.b32.xlu0 %v2361, 20
        %v2399 = vpop.permute.xlu0 %2398
        %2400 = vrot.lane.b32.xlu0 %v2362, 20
        %v2401 = vpop.permute.xlu0 %2400
        %2402 = vrot.lane.b32.xlu0 %v2363, 20
        %v2403 = vpop.permute.xlu0 %2402
        %2404 = vrot.lane.b32.xlu0 %v2364, 20
        %v2405 = vpop.permute.xlu0 %2404
        %2406 = vrot.lane.b32.xlu0 %v2365, 20
        %v2407 = vpop.permute.xlu0 %2406
        %2408 = vrot.lane.b32.xlu0 %v2366, 20
        %v2409 = vpop.permute.xlu0 %2408
        %2410 = vrot.lane.b32.xlu0 %v2367, 20
        %v2411 = vpop.permute.xlu0 %2410
        %2412 = vrot.lane.b32.xlu0 %v2368, 20
        %v2413 = vpop.permute.xlu0 %2412
        %2414 = vrot.lane.b32.xlu0 %v2369, 20
        %v2415 = vpop.permute.xlu0 %2414
        %2416 = vrot.lane.b32.xlu0 %v2370, 20
        %v2417 = vpop.permute.xlu0 %2416
        %2418 = vrot.lane.b32.xlu0 %v2371, 20
        %v2419 = vpop.permute.xlu0 %2418
        %vm2420 = vcmask 162816
        %v2421 = vsel %vm2420, %v2389, %v2391
        %v2422 = vsel %vm2420, %v2393, %v2395
        %v2423 = vsel %vm2420, %v2397, %v2399
        %v2424 = vsel %vm2420, %v2401, %v2403
        %v2425 = vsel %vm2420, %v2405, %v2407
        %v2426 = vsel %vm2420, %v2409, %v2411
        %v2427 = vsel %vm2420, %v2413, %v2415
        %v2428 = vsel %vm2420, %v2417, %v2419
        %2437 = vst [vmem:[#allocation3] sm:$0xff] %v2421
        %2438 = vst [vmem:[#allocation3 + $0x8] sm:$0xff] %v2422
        %2439 = vst [vmem:[#allocation3 + $0x10] sm:$0xff] %v2423
        %2440 = vst [vmem:[#allocation3 + $0x18] sm:$0xff] %v2424
        %2441 = vst [vmem:[#allocation3 + $0x20] sm:$0xff] %v2425
        %2442 = vst [vmem:[#allocation3 + $0x28] sm:$0xff] %v2426
        %2443 = vst [vmem:[#allocation3 + $0x30] sm:$0xff] %v2427
        %2444 = vst [vmem:[#allocation3 + $0x38] sm:$0xff] %v2428
        %v2445 = vld [vmem:[#allocation2] sm:$0xff]
        %v2446 = vld [vmem:[#allocation2 + $0x8] sm:$0xff]
        %v2447 = vld [vmem:[#allocation2 + $0x18] sm:$0xff]
        %v2448 = vld [vmem:[#allocation2 + $0x20] sm:$0xff]
        %v2449 = vld [vmem:[#allocation2 + $0x30] sm:$0xff]
        %v2450 = vld [vmem:[#allocation2 + $0x38] sm:$0xff]
        %v2451 = vld [vmem:[#allocation2 + $0x48] sm:$0xff]
        %v2452 = vld [vmem:[#allocation2 + $0x50] sm:$0xff]
        %v2453 = vld [vmem:[#allocation2 + $0x60] sm:$0xff]
        %v2454 = vld [vmem:[#allocation2 + $0x68] sm:$0xff]
        %v2455 = vld [vmem:[#allocation2 + $0x78] sm:$0xff]
        %v2456 = vld [vmem:[#allocation2 + $0x80] sm:$0xff]
        %v2457 = vld [vmem:[#allocation2 + $0x90] sm:$0xff]
        %v2458 = vld [vmem:[#allocation2 + $0x98] sm:$0xff]
        %v2459 = vld [vmem:[#allocation2 + $0xa8] sm:$0xff]
        %v2460 = vld [vmem:[#allocation2 + $0xb0] sm:$0xff]
        %2477 = vrot.lane.b32.xlu0 %v2445, 16
        %v2478 = vpop.permute.xlu0 %2477
        %2479 = vrot.lane.b32.xlu0 %v2446, 16
        %v2480 = vpop.permute.xlu0 %2479
        %2481 = vrot.lane.b32.xlu0 %v2447, 16
        %v2482 = vpop.permute.xlu0 %2481
        %2483 = vrot.lane.b32.xlu0 %v2448, 16
        %v2484 = vpop.permute.xlu0 %2483
        %2485 = vrot.lane.b32.xlu0 %v2449, 16
        %v2486 = vpop.permute.xlu0 %2485
        %2487 = vrot.lane.b32.xlu0 %v2450, 16
        %v2488 = vpop.permute.xlu0 %2487
        %2489 = vrot.lane.b32.xlu0 %v2451, 16
        %v2490 = vpop.permute.xlu0 %2489
        %2491 = vrot.lane.b32.xlu0 %v2452, 16
        %v2492 = vpop.permute.xlu0 %2491
        %2493 = vrot.lane.b32.xlu0 %v2453, 16
        %v2494 = vpop.permute.xlu0 %2493
        %2495 = vrot.lane.b32.xlu0 %v2454, 16
        %v2496 = vpop.permute.xlu0 %2495
        %2497 = vrot.lane.b32.xlu0 %v2455, 16
        %v2498 = vpop.permute.xlu0 %2497
        %2499 = vrot.lane.b32.xlu0 %v2456, 16
        %v2500 = vpop.permute.xlu0 %2499
        %2501 = vrot.lane.b32.xlu0 %v2457, 16
        %v2502 = vpop.permute.xlu0 %2501
        %2503 = vrot.lane.b32.xlu0 %v2458, 16
        %v2504 = vpop.permute.xlu0 %2503
        %2505 = vrot.lane.b32.xlu0 %v2459, 16
        %v2506 = vpop.permute.xlu0 %2505
        %2507 = vrot.lane.b32.xlu0 %v2460, 16
        %v2508 = vpop.permute.xlu0 %2507
        %vm2509 = vcmask 130048
        %v2510 = vsel %vm2509, %v2478, %v2480
        %v2511 = vsel %vm2509, %v2482, %v2484
        %v2512 = vsel %vm2509, %v2486, %v2488
        %v2513 = vsel %vm2509, %v2490, %v2492
        %v2514 = vsel %vm2509, %v2494, %v2496
        %v2515 = vsel %vm2509, %v2498, %v2500
        %v2516 = vsel %vm2509, %v2502, %v2504
        %v2517 = vsel %vm2509, %v2506, %v2508
        %2526 = vst [vmem:[#allocation3 + $0x40] sm:$0xff] %v2510
        %2527 = vst [vmem:[#allocation3 + $0x48] sm:$0xff] %v2511
        %2528 = vst [vmem:[#allocation3 + $0x50] sm:$0xff] %v2512
        %2529 = vst [vmem:[#allocation3 + $0x58] sm:$0xff] %v2513
        %2530 = vst [vmem:[#allocation3 + $0x60] sm:$0xff] %v2514
        %2531 = vst [vmem:[#allocation3 + $0x68] sm:$0xff] %v2515
        %2532 = vst [vmem:[#allocation3 + $0x70] sm:$0xff] %v2516
        %2533 = vst [vmem:[#allocation3 + $0x78] sm:$0xff] %v2517
        %v2534 = vld [vmem:[#allocation2] sm:$0xff]
        %v2535 = vld [vmem:[#allocation2 + $0x8] sm:$0xff]
        %v2536 = vld [vmem:[#allocation2 + $0x18] sm:$0xff]
        %v2537 = vld [vmem:[#allocation2 + $0x20] sm:$0xff]
        %v2538 = vld [vmem:[#allocation2 + $0x30] sm:$0xff]
        %v2539 = vld [vmem:[#allocation2 + $0x38] sm:$0xff]
        %v2540 = vld [vmem:[#allocation2 + $0x48] sm:$0xff]
        %v2541 = vld [vmem:[#allocation2 + $0x50] sm:$0xff]
        %v2542 = vld [vmem:[#allocation2 + $0x60] sm:$0xff]
        %v2543 = vld [vmem:[#allocation2 + $0x68] sm:$0xff]
        %v2544 = vld [vmem:[#allocation2 + $0x78] sm:$0xff]
        %v2545 = vld [vmem:[#allocation2 + $0x80] sm:$0xff]
        %v2546 = vld [vmem:[#allocation2 + $0x90] sm:$0xff]
        %v2547 = vld [vmem:[#allocation2 + $0x98] sm:$0xff]
        %v2548 = vld [vmem:[#allocation2 + $0xa8] sm:$0xff]
        %v2549 = vld [vmem:[#allocation2 + $0xb0] sm:$0xff]
        %2566 = vrot.lane.b32.xlu0 %v2534, 12
        %v2567 = vpop.permute.xlu0 %2566
        %2568 = vrot.lane.b32.xlu0 %v2535, 12
        %v2569 = vpop.permute.xlu0 %2568
        %2570 = vrot.lane.b32.xlu0 %v2536, 12
        %v2571 = vpop.permute.xlu0 %2570
        %2572 = vrot.lane.b32.xlu0 %v2537, 12
        %v2573 = vpop.permute.xlu0 %2572
        %2574 = vrot.lane.b32.xlu0 %v2538, 12
        %v2575 = vpop.permute.xlu0 %2574
        %2576 = vrot.lane.b32.xlu0 %v2539, 12
        %v2577 = vpop.permute.xlu0 %2576
        %2578 = vrot.lane.b32.xlu0 %v2540, 12
        %v2579 = vpop.permute.xlu0 %2578
        %2580 = vrot.lane.b32.xlu0 %v2541, 12
        %v2581 = vpop.permute.xlu0 %2580
        %2582 = vrot.lane.b32.xlu0 %v2542, 12
        %v2583 = vpop.permute.xlu0 %2582
        %2584 = vrot.lane.b32.xlu0 %v2543, 12
        %v2585 = vpop.permute.xlu0 %2584
        %2586 = vrot.lane.b32.xlu0 %v2544, 12
        %v2587 = vpop.permute.xlu0 %2586
        %2588 = vrot.lane.b32.xlu0 %v2545, 12
        %v2589 = vpop.permute.xlu0 %2588
        %2590 = vrot.lane.b32.xlu0 %v2546, 12
        %v2591 = vpop.permute.xlu0 %2590
        %2592 = vrot.lane.b32.xlu0 %v2547, 12
        %v2593 = vpop.permute.xlu0 %2592
        %2594 = vrot.lane.b32.xlu0 %v2548, 12
        %v2595 = vpop.permute.xlu0 %2594
        %2596 = vrot.lane.b32.xlu0 %v2549, 12
        %v2597 = vpop.permute.xlu0 %2596
        %vm2598 = vcmask 97280
        %v2599 = vsel %vm2598, %v2567, %v2569
        %v2600 = vsel %vm2598, %v2571, %v2573
        %v2601 = vsel %vm2598, %v2575, %v2577
        %v2602 = vsel %vm2598, %v2579, %v2581
        %v2603 = vsel %vm2598, %v2583, %v2585
        %v2604 = vsel %vm2598, %v2587, %v2589
        %v2605 = vsel %vm2598, %v2591, %v2593
        %v2606 = vsel %vm2598, %v2595, %v2597
        %2615 = vst [vmem:[#allocation3 + $0x80] sm:$0xff] %v2599
        %2616 = vst [vmem:[#allocation3 + $0x88] sm:$0xff] %v2600
        %2617 = vst [vmem:[#allocation3 + $0x90] sm:$0xff] %v2601
        %2618 = vst [vmem:[#allocation3 + $0x98] sm:$0xff] %v2602
        %2619 = vst [vmem:[#allocation3 + $0xa0] sm:$0xff] %v2603
        %2620 = vst [vmem:[#allocation3 + $0xa8] sm:$0xff] %v2604
        %2621 = vst [vmem:[#allocation3 + $0xb0] sm:$0xff] %v2605
        %2622 = vst [vmem:[#allocation3 + $0xb8] sm:$0xff] %v2606
        %v2623 = vld [vmem:[#allocation2] sm:$0xff]
        %v2624 = vld [vmem:[#allocation2 + $0x8] sm:$0xff]
        %v2625 = vld [vmem:[#allocation2 + $0x18] sm:$0xff]
        %v2626 = vld [vmem:[#allocation2 + $0x20] sm:$0xff]
        %v2627 = vld [vmem:[#allocation2 + $0x30] sm:$0xff]
        %v2628 = vld [vmem:[#allocation2 + $0x38] sm:$0xff]
        %v2629 = vld [vmem:[#allocation2 + $0x48] sm:$0xff]
        %v2630 = vld [vmem:[#allocation2 + $0x50] sm:$0xff]
        %v2631 = vld [vmem:[#allocation2 + $0x60] sm:$0xff]
        %v2632 = vld [vmem:[#allocation2 + $0x68] sm:$0xff]
        %v2633 = vld [vmem:[#allocation2 + $0x78] sm:$0xff]
        %v2634 = vld [vmem:[#allocation2 + $0x80] sm:$0xff]
        %v2635 = vld [vmem:[#allocation2 + $0x90] sm:$0xff]
        %v2636 = vld [vmem:[#allocation2 + $0x98] sm:$0xff]
        %v2637 = vld [vmem:[#allocation2 + $0xa8] sm:$0xff]
        %v2638 = vld [vmem:[#allocation2 + $0xb0] sm:$0xff]
        %2655 = vrot.lane.b32.xlu0 %v2623, 8
        %v2656 = vpop.permute.xlu0 %2655
        %2657 = vrot.lane.b32.xlu0 %v2624, 8
        %v2658 = vpop.permute.xlu0 %2657
        %2659 = vrot.lane.b32.xlu0 %v2625, 8
        %v2660 = vpop.permute.xlu0 %2659
        %2661 = vrot.lane.b32.xlu0 %v2626, 8
        %v2662 = vpop.permute.xlu0 %2661
        %2663 = vrot.lane.b32.xlu0 %v2627, 8
        %v2664 = vpop.permute.xlu0 %2663
        %2665 = vrot.lane.b32.xlu0 %v2628, 8
        %v2666 = vpop.permute.xlu0 %2665
        %2667 = vrot.lane.b32.xlu0 %v2629, 8
        %v2668 = vpop.permute.xlu0 %2667
        %2669 = vrot.lane.b32.xlu0 %v2630, 8
        %v2670 = vpop.permute.xlu0 %2669
        %2671 = vrot.lane.b32.xlu0 %v2631, 8
        %v2672 = vpop.permute.xlu0 %2671
        %2673 = vrot.lane.b32.xlu0 %v2632, 8
        %v2674 = vpop.permute.xlu0 %2673
        %2675 = vrot.lane.b32.xlu0 %v2633, 8
        %v2676 = vpop.permute.xlu0 %2675
        %2677 = vrot.lane.b32.xlu0 %v2634, 8
        %v2678 = vpop.permute.xlu0 %2677
        %2679 = vrot.lane.b32.xlu0 %v2635, 8
        %v2680 = vpop.permute.xlu0 %2679
        %2681 = vrot.lane.b32.xlu0 %v2636, 8
        %v2682 = vpop.permute.xlu0 %2681
        %2683 = vrot.lane.b32.xlu0 %v2637, 8
        %v2684 = vpop.permute.xlu0 %2683
        %2685 = vrot.lane.b32.xlu0 %v2638, 8
        %v2686 = vpop.permute.xlu0 %2685
        %vm2687 = vcmask 64512
        %v2688 = vsel %vm2687, %v2656, %v2658
        %v2689 = vsel %vm2687, %v2660, %v2662
        %v2690 = vsel %vm2687, %v2664, %v2666
        %v2691 = vsel %vm2687, %v2668, %v2670
        %v2692 = vsel %vm2687, %v2672, %v2674
        %v2693 = vsel %vm2687, %v2676, %v2678
        %v2694 = vsel %vm2687, %v2680, %v2682
        %v2695 = vsel %vm2687, %v2684, %v2686
        %2704 = vst [vmem:[#allocation3 + $0xc0] sm:$0xff] %v2688
        %2705 = vst [vmem:[#allocation3 + $0xc8] sm:$0xff] %v2689
        %2706 = vst [vmem:[#allocation3 + $0xd0] sm:$0xff] %v2690
        %2707 = vst [vmem:[#allocation3 + $0xd8] sm:$0xff] %v2691
        %2708 = vst [vmem:[#allocation3 + $0xe0] sm:$0xff] %v2692
        %2709 = vst [vmem:[#allocation3 + $0xe8] sm:$0xff] %v2693
        %2710 = vst [vmem:[#allocation3 + $0xf0] sm:$0xff] %v2694
        %2711 = vst [vmem:[#allocation3 + $0xf8] sm:$0xff] %v2695
        %v2712 = vld [vmem:[%s3 + $0x10] sm:$0xff]
        %v2713 = vld [vmem:[%s3 + $0x18] sm:$0xff]
        %v2714 = vld [vmem:[%s3 + $0x50] sm:$0xff]
        %v2715 = vld [vmem:[%s3 + $0x58] sm:$0xff]
        %v2716 = vld [vmem:[%s3 + $0x90] sm:$0xff]
        %v2717 = vld [vmem:[%s3 + $0x98] sm:$0xff]
        %v2718 = vld [vmem:[%s3 + $0xd0] sm:$0xff]
        %v2719 = vld [vmem:[%s3 + $0xd8] sm:$0xff]
        %v2720 = vld [vmem:[%s3 + $0x110] sm:$0xff]
        %v2721 = vld [vmem:[%s3 + $0x118] sm:$0xff]
        %v2722 = vld [vmem:[%s3 + $0x150] sm:$0xff]
        %v2723 = vld [vmem:[%s3 + $0x158] sm:$0xff]
        %v2724 = vld [vmem:[%s3 + $0x190] sm:$0xff]
        %v2725 = vld [vmem:[%s3 + $0x198] sm:$0xff]
        %v2726 = vld [vmem:[%s3 + $0x1d0] sm:$0xff]
        %v2727 = vld [vmem:[%s3 + $0x1d8] sm:$0xff]
        %v2728 = vld [vmem:[#allocation3] sm:$0xff]
        %v2729 = vld [vmem:[#allocation3 + $0x8] sm:$0xff]
        %v2730 = vld [vmem:[#allocation3 + $0x10] sm:$0xff]
        %v2731 = vld [vmem:[#allocation3 + $0x18] sm:$0xff]
        %v2732 = vld [vmem:[#allocation3 + $0x20] sm:$0xff]
        %v2733 = vld [vmem:[#allocation3 + $0x28] sm:$0xff]
        %v2734 = vld [vmem:[#allocation3 + $0x30] sm:$0xff]
        %v2735 = vld [vmem:[#allocation3 + $0x38] sm:$0xff]
        %v2736 = vld [vmem:[#allocation3 + $0x40] sm:$0xff]
        %v2737 = vld [vmem:[#allocation3 + $0x48] sm:$0xff]
        %v2738 = vld [vmem:[#allocation3 + $0x50] sm:$0xff]
        %v2739 = vld [vmem:[#allocation3 + $0x58] sm:$0xff]
        %v2740 = vld [vmem:[#allocation3 + $0x60] sm:$0xff]
        %v2741 = vld [vmem:[#allocation3 + $0x68] sm:$0xff]
        %v2742 = vld [vmem:[#allocation3 + $0x70] sm:$0xff]
        %v2743 = vld [vmem:[#allocation3 + $0x78] sm:$0xff]
        %v2744 = vld [vmem:[#allocation3 + $0x80] sm:$0xff]
        %v2745 = vld [vmem:[#allocation3 + $0x88] sm:$0xff]
        %v2746 = vld [vmem:[#allocation3 + $0x90] sm:$0xff]
        %v2747 = vld [vmem:[#allocation3 + $0x98] sm:$0xff]
        %v2748 = vld [vmem:[#allocation3 + $0xa0] sm:$0xff]
        %v2749 = vld [vmem:[#allocation3 + $0xa8] sm:$0xff]
        %v2750 = vld [vmem:[#allocation3 + $0xb0] sm:$0xff]
        %v2751 = vld [vmem:[#allocation3 + $0xb8] sm:$0xff]
        %v2752 = vld [vmem:[#allocation3 + $0xc0] sm:$0xff]
        %v2753 = vld [vmem:[#allocation3 + $0xc8] sm:$0xff]
        %v2754 = vld [vmem:[#allocation3 + $0xd0] sm:$0xff]
        %v2755 = vld [vmem:[#allocation3 + $0xd8] sm:$0xff]
        %v2756 = vld [vmem:[#allocation3 + $0xe0] sm:$0xff]
        %v2757 = vld [vmem:[#allocation3 + $0xe8] sm:$0xff]
        %v2758 = vld [vmem:[#allocation3 + $0xf0] sm:$0xff]
        %v2759 = vld [vmem:[#allocation3 + $0xf8] sm:$0xff]
        %2760 = vmatprep.subr.mxu0 0.0
        %2761 = vmatpush1.msra.mxu0 %v2728
        %2762 = vmatprep.subr.mxu0 0.0
        %2763 = vmatpush1.msra.mxu0 %v2729
        %2764 = vmatprep.subr.mxu0 0.0
        %2765 = vmatpush1.msra.mxu0 %v2730
        %2766 = vmatprep.subr.mxu0 0.0
        %2767 = vmatpush1.msra.mxu0 %v2731
        %2768 = vmatprep.subr.mxu0 0.0
        %2769 = vmatpush1.msra.mxu0 %v2732
        %2770 = vmatprep.subr.mxu0 0.0
        %2771 = vmatpush1.msra.mxu0 %v2733
        %2772 = vmatprep.subr.mxu0 0.0
        %2773 = vmatpush1.msra.mxu0 %v2734
        %2774 = vmatprep.subr.mxu0 0.0
        %2775 = vmatpush1.msra.mxu0 %v2735
        %2776 = vmatprep.subr.mxu0 0.0
        %2777 = vmatpush1.msra.mxu0 %v2736
        %2778 = vmatprep.subr.mxu0 0.0
        %2779 = vmatpush1.msra.mxu0 %v2737
        %2780 = vmatprep.subr.mxu0 0.0
        %2781 = vmatpush1.msra.mxu0 %v2738
        %2782 = vmatprep.subr.mxu0 0.0
        %2783 = vmatpush1.msra.mxu0 %v2739
        %2784 = vmatprep.subr.mxu0 0.0
        %2785 = vmatpush1.msra.mxu0 %v2740
        %2786 = vmatprep.subr.mxu0 0.0
        %2787 = vmatpush1.msra.mxu0 %v2741
        %2788 = vmatprep.subr.mxu0 0.0
        %2789 = vmatpush1.msra.mxu0 %v2742
        %2790 = vmatprep.subr.mxu0 0.0
        %2791 = vmatpush1.msra.mxu0 %v2743
        %2792 = vmatprep.subr.mxu0 0.0
        %2793 = vmatpush1.msra.mxu0 %v2744
        %2794 = vmatprep.subr.mxu0 0.0
        %2795 = vmatpush1.msra.mxu0 %v2745
        %2796 = vmatprep.subr.mxu0 0.0
        %2797 = vmatpush1.msra.mxu0 %v2746
        %2798 = vmatprep.subr.mxu0 0.0
        %2799 = vmatpush1.msra.mxu0 %v2747
        %2800 = vmatprep.subr.mxu0 0.0
        %2801 = vmatpush1.msra.mxu0 %v2748
        %2802 = vmatprep.subr.mxu0 0.0
        %2803 = vmatpush1.msra.mxu0 %v2749
        %2804 = vmatprep.subr.mxu0 0.0
        %2805 = vmatpush1.msra.mxu0 %v2750
        %2806 = vmatprep.subr.mxu0 0.0
        %2807 = vmatpush1.msra.mxu0 %v2751
        %2808 = vmatprep.subr.mxu0 0.0
        %2809 = vmatpush1.msra.mxu0 %v2752
        %2810 = vmatprep.subr.mxu0 0.0
        %2811 = vmatpush1.msra.mxu0 %v2753
        %2812 = vmatprep.subr.mxu0 0.0
        %2813 = vmatpush1.msra.mxu0 %v2754
        %2814 = vmatprep.subr.mxu0 0.0
        %2815 = vmatpush1.msra.mxu0 %v2755
        %2816 = vmatprep.subr.mxu0 0.0
        %2817 = vmatpush1.msra.mxu0 %v2756
        %2818 = vmatprep.subr.mxu0 0.0
        %2819 = vmatpush1.msra.mxu0 %v2757
        %2820 = vmatprep.subr.mxu0 0.0
        %2821 = vmatpush1.msra.mxu0 %v2758
        %2822 = vmatprep.subr.mxu0 0.0
        %2823 = vmatpush1.msra.mxu0 %v2759
        %2824 = vmatprep.mubr.f32.mxu0 %v2713
        %2825 = vmatmul.mubr.f32.gmra.mrb[0].mxu0 %v2712
        %v2826 = vpop.f32.mrb[0].mxu0
        %v2827 = vadd.f32 0.0, %v2826
        %v2828 = vpop.f32.mrb[0].mxu0
        %2829 = vmatprep.mubr.f32.mxu0 %v2715
        %2830 = vmatmul.mubr.f32.gmra.mrb[0].mxu0 %v2714
        %v2831 = vpop.f32.mrb[0].mxu0
        %v2832 = vadd.f32 0.0, %v2831
        %v2833 = vpop.f32.mrb[0].mxu0
        %2834 = vmatprep.mubr.f32.mxu0 %v2717
        %2835 = vmatmul.mubr.f32.gmra.mrb[0].mxu0 %v2716
        %v2836 = vpop.f32.mrb[0].mxu0
        %v2837 = vadd.f32 0.0, %v2836
        %v2838 = vpop.f32.mrb[0].mxu0
        %2839 = vmatprep.mubr.f32.mxu0 %v2719
        %2840 = vmatmul.mubr.f32.gmra.mrb[0].mxu0 %v2718
        %v2841 = vpop.f32.mrb[0].mxu0
        %v2842 = vadd.f32 0.0, %v2841
        %v2843 = vpop.f32.mrb[0].mxu0
        %2844 = vmatprep.mubr.f32.mxu0 %v2721
        %2845 = vmatmul.mubr.f32.gmra.mrb[0].mxu0 %v2720
        %v2846 = vpop.f32.mrb[0].mxu0
        %v2847 = vadd.f32 0.0, %v2846
        %v2848 = vpop.f32.mrb[0].mxu0
        %2849 = vmatprep.mubr.f32.mxu0 %v2723
        %2850 = vmatmul.mubr.f32.gmra.mrb[0].mxu0 %v2722
        %v2851 = vpop.f32.mrb[0].mxu0
        %v2852 = vadd.f32 0.0, %v2851
        %v2853 = vpop.f32.mrb[0].mxu0
        %2854 = vmatprep.mubr.f32.mxu0 %v2725
        %2855 = vmatmul.mubr.f32.gmra.mrb[0].mxu0 %v2724
        %v2856 = vpop.f32.mrb[0].mxu0
        %v2857 = vadd.f32 0.0, %v2856
        %v2858 = vpop.f32.mrb[0].mxu0
        %2859 = vmatprep.mubr.f32.mxu0 %v2727
        %2860 = vmatmul.mubr.f32.gmra.mrb[0].mxu0 %v2726
        %v2861 = vpop.f32.mrb[0].mxu0
        %v2862 = vadd.f32 0.0, %v2861
        %v2863 = vpop.f32.mrb[0].mxu0
        %2864 = vdwg.mxu0
        %2865 = vmatprep.subr.mxu0 0.0
        %2866 = vmatpush1.msra.mxu0 %v2324
        %2867 = vmatprep.subr.mxu0 0.0
        %2868 = vmatpush1.msra.mxu0 %v2325
        %2869 = vmatprep.subr.mxu0 0.0
        %2870 = vmatpush1.msra.mxu0 %v2326
        %2871 = vmatprep.subr.mxu0 0.0
        %2872 = vmatpush1.msra.mxu0 %v2327
        %2873 = vmatprep.subr.mxu0 0.0
        %2874 = vmatpush1.msra.mxu0 %v2328
        %2875 = vmatprep.subr.mxu0 0.0
        %2876 = vmatpush1.msra.mxu0 %v2329
        %2877 = vmatprep.subr.mxu0 0.0
        %2878 = vmatpush1.msra.mxu0 %v2330
        %2879 = vmatprep.subr.mxu0 0.0
        %2880 = vmatpush1.msra.mxu0 %v2331
        %2881 = vmatprep.subr.mxu0 0.0
        %2882 = vmatpush1.msra.mxu0 %v2332
        %2883 = vmatprep.subr.mxu0 0.0
        %2884 = vmatpush1.msra.mxu0 %v2333
        %2885 = vmatprep.subr.mxu0 0.0
        %2886 = vmatpush1.msra.mxu0 %v2334
        %2887 = vmatprep.subr.mxu0 0.0
        %2888 = vmatpush1.msra.mxu0 %v2335
        %2889 = vmatprep.subr.mxu0 0.0
        %2890 = vmatpush1.msra.mxu0 %v2336
        %2891 = vmatprep.subr.mxu0 0.0
        %2892 = vmatpush1.msra.mxu0 %v2337
        %2893 = vmatprep.subr.mxu0 0.0
        %2894 = vmatpush1.msra.mxu0 %v2338
        %2895 = vmatprep.subr.mxu0 0.0
        %2896 = vmatpush1.msra.mxu0 %v2339
        %2897 = vmatprep.subr.mxu0 0.0
        %2898 = vmatpush1.msra.mxu0 %v2340
        %2899 = vmatprep.subr.mxu0 0.0
        %2900 = vmatpush1.msra.mxu0 %v2341
        %2901 = vmatprep.subr.mxu0 0.0
        %2902 = vmatpush1.msra.mxu0 %v2342
        %2903 = vmatprep.subr.mxu0 0.0
        %2904 = vmatpush1.msra.mxu0 %v2343
        %2905 = vmatprep.subr.mxu0 0.0
        %2906 = vmatpush1.msra.mxu0 %v2344
        %2907 = vmatprep.subr.mxu0 0.0
        %2908 = vmatpush1.msra.mxu0 %v2345
        %2909 = vmatprep.subr.mxu0 0.0
        %2910 = vmatpush1.msra.mxu0 %v2346
        %2911 = vmatprep.subr.mxu0 0.0
        %2912 = vmatpush1.msra.mxu0 %v2347
        %2913 = vmatprep.subr.mxu0 0.0
        %2914 = vmatpush1.msra.mxu0 %v2348
        %2915 = vmatprep.subr.mxu0 0.0
        %2916 = vmatpush1.msra.mxu0 %v2349
        %2917 = vmatprep.subr.mxu0 0.0
        %2918 = vmatpush1.msra.mxu0 %v2350
        %2919 = vmatprep.subr.mxu0 0.0
        %2920 = vmatpush1.msra.mxu0 %v2351
        %2921 = vmatprep.subr.mxu0 0.0
        %2922 = vmatpush1.msra.mxu0 %v2352
        %2923 = vmatprep.subr.mxu0 0.0
        %2924 = vmatpush1.msra.mxu0 %v2353
        %2925 = vmatprep.subr.mxu0 0.0
        %2926 = vmatpush1.msra.mxu0 %v2354
        %2927 = vmatprep.subr.mxu0 0.0
        %2928 = vmatpush1.msra.mxu0 %v2355
        %2929 = vmatprep.mubr.f32.mxu0 %v2309
        %2930 = vmatmul.mubr.f32.gmra.mrb[0].mxu0 %v2308
        %v2931 = vpop.f32.mrb[0].mxu0
        %v2932 = vadd.f32 %v2827, %v2931
        %v2933 = vpop.f32.mrb[0].mxu0
        %2934 = vmatprep.mubr.f32.mxu0 %v2311
        %2935 = vmatmul.mubr.f32.gmra.mrb[0].mxu0 %v2310
        %v2936 = vpop.f32.mrb[0].mxu0
        %v2937 = vadd.f32 %v2832, %v2936
        %v2938 = vpop.f32.mrb[0].mxu0
        %2939 = vmatprep.mubr.f32.mxu0 %v2313
        %2940 = vmatmul.mubr.f32.gmra.mrb[0].mxu0 %v2312
        %v2941 = vpop.f32.mrb[0].mxu0
        %v2942 = vadd.f32 %v2837, %v2941
        %v2943 = vpop.f32.mrb[0].mxu0
        %2944 = vmatprep.mubr.f32.mxu0 %v2315
        %2945 = vmatmul.mubr.f32.gmra.mrb[0].mxu0 %v2314
        %v2946 = vpop.f32.mrb[0].mxu0
        %v2947 = vadd.f32 %v2842, %v2946
        %v2948 = vpop.f32.mrb[0].mxu0
        %2949 = vmatprep.mubr.f32.mxu0 %v2317
        %2950 = vmatmul.mubr.f32.gmra.mrb[0].mxu0 %v2316
        %v2951 = vpop.f32.mrb[0].mxu0
        %v2952 = vadd.f32 %v2847, %v2951
        %v2953 = vpop.f32.mrb[0].mxu0
        %2954 = vmatprep.mubr.f32.mxu0 %v2319
        %2955 = vmatmul.mubr.f32.gmra.mrb[0].mxu0 %v2318
        %v2956 = vpop.f32.mrb[0].mxu0
        %v2957 = vadd.f32 %v2852, %v2956
        %v2958 = vpop.f32.mrb[0].mxu0
        %2959 = vmatprep.mubr.f32.mxu0 %v2321
        %2960 = vmatmul.mubr.f32.gmra.mrb[0].mxu0 %v2320
        %v2961 = vpop.f32.mrb[0].mxu0
        %v2962 = vadd.f32 %v2857, %v2961
        %v2963 = vpop.f32.mrb[0].mxu0
        %2964 = vmatprep.mubr.f32.mxu0 %v2323
        %2965 = vmatmul.mubr.f32.gmra.mrb[0].mxu0 %v2322
        %v2966 = vpop.f32.mrb[0].mxu0
        %v2967 = vadd.f32 %v2862, %v2966
        %v2968 = vpop.f32.mrb[0].mxu0
        %2969 = vdwg.mxu0
        %v2970 = vld [vmem:[#allocation2] sm:$0xff]
        %v2971 = vld [vmem:[#allocation2 + $0x8] sm:$0xff]
        %v2972 = vld [vmem:[#allocation2 + $0x18] sm:$0xff]
        %v2973 = vld [vmem:[#allocation2 + $0x20] sm:$0xff]
        %v2974 = vld [vmem:[#allocation2 + $0x30] sm:$0xff]
        %v2975 = vld [vmem:[#allocation2 + $0x38] sm:$0xff]
        %v2976 = vld [vmem:[#allocation2 + $0x48] sm:$0xff]
        %v2977 = vld [vmem:[#allocation2 + $0x50] sm:$0xff]
        %v2978 = vld [vmem:[#allocation2 + $0x60] sm:$0xff]
        %v2979 = vld [vmem:[#allocation2 + $0x68] sm:$0xff]
        %v2980 = vld [vmem:[#allocation2 + $0x78] sm:$0xff]
        %v2981 = vld [vmem:[#allocation2 + $0x80] sm:$0xff]
        %v2982 = vld [vmem:[#allocation2 + $0x90] sm:$0xff]
        %v2983 = vld [vmem:[#allocation2 + $0x98] sm:$0xff]
        %v2984 = vld [vmem:[#allocation2 + $0xa8] sm:$0xff]
        %v2985 = vld [vmem:[#allocation2 + $0xb0] sm:$0xff]
        %3002 = vrot.lane.b32.xlu0 %v2970, 4
        %v3003 = vpop.permute.xlu0 %3002
        %3004 = vrot.lane.b32.xlu0 %v2971, 4
        %v3005 = vpop.permute.xlu0 %3004
        %3006 = vrot.lane.b32.xlu0 %v2972, 4
        %v3007 = vpop.permute.xlu0 %3006
        %3008 = vrot.lane.b32.xlu0 %v2973, 4
        %v3009 = vpop.permute.xlu0 %3008
        %3010 = vrot.lane.b32.xlu0 %v2974, 4
        %v3011 = vpop.permute.xlu0 %3010
        %3012 = vrot.lane.b32.xlu0 %v2975, 4
        %v3013 = vpop.permute.xlu0 %3012
        %3014 = vrot.lane.b32.xlu0 %v2976, 4
        %v3015 = vpop.permute.xlu0 %3014
        %3016 = vrot.lane.b32.xlu0 %v2977, 4
        %v3017 = vpop.permute.xlu0 %3016
        %3018 = vrot.lane.b32.xlu0 %v2978, 4
        %v3019 = vpop.permute.xlu0 %3018
        %3020 = vrot.lane.b32.xlu0 %v2979, 4
        %v3021 = vpop.permute.xlu0 %3020
        %3022 = vrot.lane.b32.xlu0 %v2980, 4
        %v3023 = vpop.permute.xlu0 %3022
        %3024 = vrot.lane.b32.xlu0 %v2981, 4
        %v3025 = vpop.permute.xlu0 %3024
        %3026 = vrot.lane.b32.xlu0 %v2982, 4
        %v3027 = vpop.permute.xlu0 %3026
        %3028 = vrot.lane.b32.xlu0 %v2983, 4
        %v3029 = vpop.permute.xlu0 %3028
        %3030 = vrot.lane.b32.xlu0 %v2984, 4
        %v3031 = vpop.permute.xlu0 %3030
        %3032 = vrot.lane.b32.xlu0 %v2985, 4
        %v3033 = vpop.permute.xlu0 %3032
        %v3034 = vsel %vm1657, %v3003, %v3005
        %v3035 = vsel %vm1657, %v3007, %v3009
        %v3036 = vsel %vm1657, %v3011, %v3013
        %v3037 = vsel %vm1657, %v3015, %v3017
        %v3038 = vsel %vm1657, %v3019, %v3021
        %v3039 = vsel %vm1657, %v3023, %v3025
        %v3040 = vsel %vm1657, %v3027, %v3029
        %v3041 = vsel %vm1657, %v3031, %v3033
        %3050 = vst [vmem:[#allocation3] sm:$0xff] %v3034
        %3051 = vst [vmem:[#allocation3 + $0x8] sm:$0xff] %v3035
        %3052 = vst [vmem:[#allocation3 + $0x10] sm:$0xff] %v3036
        %3053 = vst [vmem:[#allocation3 + $0x18] sm:$0xff] %v3037
        %3054 = vst [vmem:[#allocation3 + $0x20] sm:$0xff] %v3038
        %3055 = vst [vmem:[#allocation3 + $0x28] sm:$0xff] %v3039
        %3056 = vst [vmem:[#allocation3 + $0x30] sm:$0xff] %v3040
        %3057 = vst [vmem:[#allocation3 + $0x38] sm:$0xff] %v3041
        %v3058 = vld [vmem:[#allocation2 + $0x8] sm:$0xff]
        %v3059 = vld [vmem:[#allocation2 + $0x20] sm:$0xff]
        %v3060 = vld [vmem:[#allocation2 + $0x38] sm:$0xff]
        %v3061 = vld [vmem:[#allocation2 + $0x50] sm:$0xff]
        %v3062 = vld [vmem:[#allocation2 + $0x68] sm:$0xff]
        %v3063 = vld [vmem:[#allocation2 + $0x80] sm:$0xff]
        %v3064 = vld [vmem:[#allocation2 + $0x98] sm:$0xff]
        %v3065 = vld [vmem:[#allocation2 + $0xb0] sm:$0xff]
        %3066 = vst [vmem:[#allocation3 + $0x40] sm:$0xff] %v3058
        %3067 = vst [vmem:[#allocation3 + $0x48] sm:$0xff] %v3059
        %3068 = vst [vmem:[#allocation3 + $0x50] sm:$0xff] %v3060
        %3069 = vst [vmem:[#allocation3 + $0x58] sm:$0xff] %v3061
        %3070 = vst [vmem:[#allocation3 + $0x60] sm:$0xff] %v3062
        %3071 = vst [vmem:[#allocation3 + $0x68] sm:$0xff] %v3063
        %3072 = vst [vmem:[#allocation3 + $0x70] sm:$0xff] %v3064
        %3073 = vst [vmem:[#allocation3 + $0x78] sm:$0xff] %v3065
        %v3074 = vld [vmem:[#allocation2 + $0x8] sm:$0xff]
        %v3075 = vld [vmem:[#allocation2 + $0x10] sm:$0xff]
        %v3076 = vld [vmem:[#allocation2 + $0x20] sm:$0xff]
        %v3077 = vld [vmem:[#allocation2 + $0x28] sm:$0xff]
        %v3078 = vld [vmem:[#allocation2 + $0x38] sm:$0xff]
        %v3079 = vld [vmem:[#allocation2 + $0x40] sm:$0xff]
        %v3080 = vld [vmem:[#allocation2 + $0x50] sm:$0xff]
        %v3081 = vld [vmem:[#allocation2 + $0x58] sm:$0xff]
        %v3082 = vld [vmem:[#allocation2 + $0x68] sm:$0xff]
        %v3083 = vld [vmem:[#allocation2 + $0x70] sm:$0xff]
        %v3084 = vld [vmem:[#allocation2 + $0x80] sm:$0xff]
        %v3085 = vld [vmem:[#allocation2 + $0x88] sm:$0xff]
        %v3086 = vld [vmem:[#allocation2 + $0x98] sm:$0xff]
        %v3087 = vld [vmem:[#allocation2 + $0xa0] sm:$0xff]
        %v3088 = vld [vmem:[#allocation2 + $0xb0] sm:$0xff]
        %v3089 = vld [vmem:[#allocation2 + $0xb8] sm:$0xff]
        %3106 = vrot.lane.b32.xlu0 %v3074, 124
        %v3107 = vpop.permute.xlu0 %3106
        %3108 = vrot.lane.b32.xlu0 %v3075, 124
        %v3109 = vpop.permute.xlu0 %3108
        %3110 = vrot.lane.b32.xlu0 %v3076, 124
        %v3111 = vpop.permute.xlu0 %3110
        %3112 = vrot.lane.b32.xlu0 %v3077, 124
        %v3113 = vpop.permute.xlu0 %3112
        %3114 = vrot.lane.b32.xlu0 %v3078, 124
        %v3115 = vpop.permute.xlu0 %3114
        %3116 = vrot.lane.b32.xlu0 %v3079, 124
        %v3117 = vpop.permute.xlu0 %3116
        %3118 = vrot.lane.b32.xlu0 %v3080, 124
        %v3119 = vpop.permute.xlu0 %3118
        %3120 = vrot.lane.b32.xlu0 %v3081, 124
        %v3121 = vpop.permute.xlu0 %3120
        %3122 = vrot.lane.b32.xlu0 %v3082, 124
        %v3123 = vpop.permute.xlu0 %3122
        %3124 = vrot.lane.b32.xlu0 %v3083, 124
        %v3125 = vpop.permute.xlu0 %3124
        %3126 = vrot.lane.b32.xlu0 %v3084, 124
        %v3127 = vpop.permute.xlu0 %3126
        %3128 = vrot.lane.b32.xlu0 %v3085, 124
        %v3129 = vpop.permute.xlu0 %3128
        %3130 = vrot.lane.b32.xlu0 %v3086, 124
        %v3131 = vpop.permute.xlu0 %3130
        %3132 = vrot.lane.b32.xlu0 %v3087, 124
        %v3133 = vpop.permute.xlu0 %3132
        %3134 = vrot.lane.b32.xlu0 %v3088, 124
        %v3135 = vpop.permute.xlu0 %3134
        %3136 = vrot.lane.b32.xlu0 %v3089, 124
        %v3137 = vpop.permute.xlu0 %3136
        %vm3138 = vcmask 1014784
        %v3139 = vsel %vm3138, %v3107, %v3109
        %v3140 = vsel %vm3138, %v3111, %v3113
        %v3141 = vsel %vm3138, %v3115, %v3117
        %v3142 = vsel %vm3138, %v3119, %v3121
        %v3143 = vsel %vm3138, %v3123, %v3125
        %v3144 = vsel %vm3138, %v3127, %v3129
        %v3145 = vsel %vm3138, %v3131, %v3133
        %v3146 = vsel %vm3138, %v3135, %v3137
        %3155 = vst [vmem:[#allocation3 + $0x80] sm:$0xff] %v3139
        %3156 = vst [vmem:[#allocation3 + $0x88] sm:$0xff] %v3140
        %3157 = vst [vmem:[#allocation3 + $0x90] sm:$0xff] %v3141
        %3158 = vst [vmem:[#allocation3 + $0x98] sm:$0xff] %v3142
        %3159 = vst [vmem:[#allocation3 + $0xa0] sm:$0xff] %v3143
        %3160 = vst [vmem:[#allocation3 + $0xa8] sm:$0xff] %v3144
        %3161 = vst [vmem:[#allocation3 + $0xb0] sm:$0xff] %v3145
        %3162 = vst [vmem:[#allocation3 + $0xb8] sm:$0xff] %v3146
        %v3163 = vld [vmem:[#allocation2 + $0x8] sm:$0xff]
        %v3164 = vld [vmem:[#allocation2 + $0x10] sm:$0xff]
        %v3165 = vld [vmem:[#allocation2 + $0x20] sm:$0xff]
        %v3166 = vld [vmem:[#allocation2 + $0x28] sm:$0xff]
        %v3167 = vld [vmem:[#allocation2 + $0x38] sm:$0xff]
        %v3168 = vld [vmem:[#allocation2 + $0x40] sm:$0xff]
        %v3169 = vld [vmem:[#allocation2 + $0x50] sm:$0xff]
        %v3170 = vld [vmem:[#allocation2 + $0x58] sm:$0xff]
        %v3171 = vld [vmem:[#allocation2 + $0x68] sm:$0xff]
        %v3172 = vld [vmem:[#allocation2 + $0x70] sm:$0xff]
        %v3173 = vld [vmem:[#allocation2 + $0x80] sm:$0xff]
        %v3174 = vld [vmem:[#allocation2 + $0x88] sm:$0xff]
        %v3175 = vld [vmem:[#allocation2 + $0x98] sm:$0xff]
        %v3176 = vld [vmem:[#allocation2 + $0xa0] sm:$0xff]
        %v3177 = vld [vmem:[#allocation2 + $0xb0] sm:$0xff]
        %v3178 = vld [vmem:[#allocation2 + $0xb8] sm:$0xff]
        %3195 = vrot.lane.b32.xlu0 %v3163, 120
        %v3196 = vpop.permute.xlu0 %3195
        %3197 = vrot.lane.b32.xlu0 %v3164, 120
        %v3198 = vpop.permute.xlu0 %3197
        %3199 = vrot.lane.b32.xlu0 %v3165, 120
        %v3200 = vpop.permute.xlu0 %3199
        %3201 = vrot.lane.b32.xlu0 %v3166, 120
        %v3202 = vpop.permute.xlu0 %3201
        %3203 = vrot.lane.b32.xlu0 %v3167, 120
        %v3204 = vpop.permute.xlu0 %3203
        %3205 = vrot.lane.b32.xlu0 %v3168, 120
        %v3206 = vpop.permute.xlu0 %3205
        %3207 = vrot.lane.b32.xlu0 %v3169, 120
        %v3208 = vpop.permute.xlu0 %3207
        %3209 = vrot.lane.b32.xlu0 %v3170, 120
        %v3210 = vpop.permute.xlu0 %3209
        %3211 = vrot.lane.b32.xlu0 %v3171, 120
        %v3212 = vpop.permute.xlu0 %3211
        %3213 = vrot.lane.b32.xlu0 %v3172, 120
        %v3214 = vpop.permute.xlu0 %3213
        %3215 = vrot.lane.b32.xlu0 %v3173, 120
        %v3216 = vpop.permute.xlu0 %3215
        %3217 = vrot.lane.b32.xlu0 %v3174, 120
        %v3218 = vpop.permute.xlu0 %3217
        %3219 = vrot.lane.b32.xlu0 %v3175, 120
        %v3220 = vpop.permute.xlu0 %3219
        %3221 = vrot.lane.b32.xlu0 %v3176, 120
        %v3222 = vpop.permute.xlu0 %3221
        %3223 = vrot.lane.b32.xlu0 %v3177, 120
        %v3224 = vpop.permute.xlu0 %3223
        %3225 = vrot.lane.b32.xlu0 %v3178, 120
        %v3226 = vpop.permute.xlu0 %3225
        %vm3227 = vcmask 982016
        %v3228 = vsel %vm3227, %v3196, %v3198
        %v3229 = vsel %vm3227, %v3200, %v3202
        %v3230 = vsel %vm3227, %v3204, %v3206
        %v3231 = vsel %vm3227, %v3208, %v3210
        %v3232 = vsel %vm3227, %v3212, %v3214
        %v3233 = vsel %vm3227, %v3216, %v3218
        %v3234 = vsel %vm3227, %v3220, %v3222
        %v3235 = vsel %vm3227, %v3224, %v3226
        %3244 = vst [vmem:[#allocation3 + $0xc0] sm:$0xff] %v3228
        %3245 = vst [vmem:[#allocation3 + $0xc8] sm:$0xff] %v3229
        %3246 = vst [vmem:[#allocation3 + $0xd0] sm:$0xff] %v3230
        %3247 = vst [vmem:[#allocation3 + $0xd8] sm:$0xff] %v3231
        %3248 = vst [vmem:[#allocation3 + $0xe0] sm:$0xff] %v3232
        %3249 = vst [vmem:[#allocation3 + $0xe8] sm:$0xff] %v3233
        %3250 = vst [vmem:[#allocation3 + $0xf0] sm:$0xff] %v3234
        %3251 = vst [vmem:[#allocation3 + $0xf8] sm:$0xff] %v3235
        %v3252 = vld [vmem:[%s3 + $0x20] sm:$0xff]
        %v3253 = vld [vmem:[%s3 + $0x28] sm:$0xff]
        %v3254 = vld [vmem:[%s3 + $0x60] sm:$0xff]
        %v3255 = vld [vmem:[%s3 + $0x68] sm:$0xff]
        %v3256 = vld [vmem:[%s3 + $0xa0] sm:$0xff]
        %v3257 = vld [vmem:[%s3 + $0xa8] sm:$0xff]
        %v3258 = vld [vmem:[%s3 + $0xe0] sm:$0xff]
        %v3259 = vld [vmem:[%s3 + $0xe8] sm:$0xff]
        %v3260 = vld [vmem:[%s3 + $0x120] sm:$0xff]
        %v3261 = vld [vmem:[%s3 + $0x128] sm:$0xff]
        %v3262 = vld [vmem:[%s3 + $0x160] sm:$0xff]
        %v3263 = vld [vmem:[%s3 + $0x168] sm:$0xff]
        %v3264 = vld [vmem:[%s3 + $0x1a0] sm:$0xff]
        %v3265 = vld [vmem:[%s3 + $0x1a8] sm:$0xff]
        %v3266 = vld [vmem:[%s3 + $0x1e0] sm:$0xff]
        %v3267 = vld [vmem:[%s3 + $0x1e8] sm:$0xff]
        %v3268 = vld [vmem:[#allocation3] sm:$0xff]
        %v3269 = vld [vmem:[#allocation3 + $0x8] sm:$0xff]
        %v3270 = vld [vmem:[#allocation3 + $0x10] sm:$0xff]
        %v3271 = vld [vmem:[#allocation3 + $0x18] sm:$0xff]
        %v3272 = vld [vmem:[#allocation3 + $0x20] sm:$0xff]
        %v3273 = vld [vmem:[#allocation3 + $0x28] sm:$0xff]
        %v3274 = vld [vmem:[#allocation3 + $0x30] sm:$0xff]
        %v3275 = vld [vmem:[#allocation3 + $0x38] sm:$0xff]
        %v3276 = vld [vmem:[#allocation3 + $0x40] sm:$0xff]
        %v3277 = vld [vmem:[#allocation3 + $0x48] sm:$0xff]
        %v3278 = vld [vmem:[#allocation3 + $0x50] sm:$0xff]
        %v3279 = vld [vmem:[#allocation3 + $0x58] sm:$0xff]
        %v3280 = vld [vmem:[#allocation3 + $0x60] sm:$0xff]
        %v3281 = vld [vmem:[#allocation3 + $0x68] sm:$0xff]
        %v3282 = vld [vmem:[#allocation3 + $0x70] sm:$0xff]
        %v3283 = vld [vmem:[#allocation3 + $0x78] sm:$0xff]
        %v3284 = vld [vmem:[#allocation3 + $0x80] sm:$0xff]
        %v3285 = vld [vmem:[#allocation3 + $0x88] sm:$0xff]
        %v3286 = vld [vmem:[#allocation3 + $0x90] sm:$0xff]
        %v3287 = vld [vmem:[#allocation3 + $0x98] sm:$0xff]
        %v3288 = vld [vmem:[#allocation3 + $0xa0] sm:$0xff]
        %v3289 = vld [vmem:[#allocation3 + $0xa8] sm:$0xff]
        %v3290 = vld [vmem:[#allocation3 + $0xb0] sm:$0xff]
        %v3291 = vld [vmem:[#allocation3 + $0xb8] sm:$0xff]
        %v3292 = vld [vmem:[#allocation3 + $0xc0] sm:$0xff]
        %v3293 = vld [vmem:[#allocation3 + $0xc8] sm:$0xff]
        %v3294 = vld [vmem:[#allocation3 + $0xd0] sm:$0xff]
        %v3295 = vld [vmem:[#allocation3 + $0xd8] sm:$0xff]
        %v3296 = vld [vmem:[#allocation3 + $0xe0] sm:$0xff]
        %v3297 = vld [vmem:[#allocation3 + $0xe8] sm:$0xff]
        %v3298 = vld [vmem:[#allocation3 + $0xf0] sm:$0xff]
        %v3299 = vld [vmem:[#allocation3 + $0xf8] sm:$0xff]
        %3300 = vmatprep.subr.mxu0 0.0
        %3301 = vmatpush1.msra.mxu0 %v3268
        %3302 = vmatprep.subr.mxu0 0.0
        %3303 = vmatpush1.msra.mxu0 %v3269
        %3304 = vmatprep.subr.mxu0 0.0
        %3305 = vmatpush1.msra.mxu0 %v3270
        %3306 = vmatprep.subr.mxu0 0.0
        %3307 = vmatpush1.msra.mxu0 %v3271
        %3308 = vmatprep.subr.mxu0 0.0
        %3309 = vmatpush1.msra.mxu0 %v3272
        %3310 = vmatprep.subr.mxu0 0.0
        %3311 = vmatpush1.msra.mxu0 %v3273
        %3312 = vmatprep.subr.mxu0 0.0
        %3313 = vmatpush1.msra.mxu0 %v3274
        %3314 = vmatprep.subr.mxu0 0.0
        %3315 = vmatpush1.msra.mxu0 %v3275
        %3316 = vmatprep.subr.mxu0 0.0
        %3317 = vmatpush1.msra.mxu0 %v3276
        %3318 = vmatprep.subr.mxu0 0.0
        %3319 = vmatpush1.msra.mxu0 %v3277
        %3320 = vmatprep.subr.mxu0 0.0
        %3321 = vmatpush1.msra.mxu0 %v3278
        %3322 = vmatprep.subr.mxu0 0.0
        %3323 = vmatpush1.msra.mxu0 %v3279
        %3324 = vmatprep.subr.mxu0 0.0
        %3325 = vmatpush1.msra.mxu0 %v3280
        %3326 = vmatprep.subr.mxu0 0.0
        %3327 = vmatpush1.msra.mxu0 %v3281
        %3328 = vmatprep.subr.mxu0 0.0
        %3329 = vmatpush1.msra.mxu0 %v3282
        %3330 = vmatprep.subr.mxu0 0.0
        %3331 = vmatpush1.msra.mxu0 %v3283
        %3332 = vmatprep.subr.mxu0 0.0
        %3333 = vmatpush1.msra.mxu0 %v3284
        %3334 = vmatprep.subr.mxu0 0.0
        %3335 = vmatpush1.msra.mxu0 %v3285
        %3336 = vmatprep.subr.mxu0 0.0
        %3337 = vmatpush1.msra.mxu0 %v3286
        %3338 = vmatprep.subr.mxu0 0.0
        %3339 = vmatpush1.msra.mxu0 %v3287
        %3340 = vmatprep.subr.mxu0 0.0
        %3341 = vmatpush1.msra.mxu0 %v3288
        %3342 = vmatprep.subr.mxu0 0.0
        %3343 = vmatpush1.msra.mxu0 %v3289
        %3344 = vmatprep.subr.mxu0 0.0
        %3345 = vmatpush1.msra.mxu0 %v3290
        %3346 = vmatprep.subr.mxu0 0.0
        %3347 = vmatpush1.msra.mxu0 %v3291
        %3348 = vmatprep.subr.mxu0 0.0
        %3349 = vmatpush1.msra.mxu0 %v3292
        %3350 = vmatprep.subr.mxu0 0.0
        %3351 = vmatpush1.msra.mxu0 %v3293
        %3352 = vmatprep.subr.mxu0 0.0
        %3353 = vmatpush1.msra.mxu0 %v3294
        %3354 = vmatprep.subr.mxu0 0.0
        %3355 = vmatpush1.msra.mxu0 %v3295
        %3356 = vmatprep.subr.mxu0 0.0
        %3357 = vmatpush1.msra.mxu0 %v3296
        %3358 = vmatprep.subr.mxu0 0.0
        %3359 = vmatpush1.msra.mxu0 %v3297
        %3360 = vmatprep.subr.mxu0 0.0
        %3361 = vmatpush1.msra.mxu0 %v3298
        %3362 = vmatprep.subr.mxu0 0.0
        %3363 = vmatpush1.msra.mxu0 %v3299
        %3364 = vmatprep.mubr.f32.mxu0 %v3253
        %3365 = vmatmul.mubr.f32.gmra.mrb[0].mxu0 %v3252
        %v3366 = vpop.f32.mrb[0].mxu0
        %v3367 = vadd.f32 0.0, %v3366
        %v3368 = vpop.f32.mrb[0].mxu0
        %3369 = vmatprep.mubr.f32.mxu0 %v3255
        %3370 = vmatmul.mubr.f32.gmra.mrb[0].mxu0 %v3254
        %v3371 = vpop.f32.mrb[0].mxu0
        %v3372 = vadd.f32 0.0, %v3371
        %v3373 = vpop.f32.mrb[0].mxu0
        %3374 = vmatprep.mubr.f32.mxu0 %v3257
        %3375 = vmatmul.mubr.f32.gmra.mrb[0].mxu0 %v3256
        %v3376 = vpop.f32.mrb[0].mxu0
        %v3377 = vadd.f32 0.0, %v3376
        %v3378 = vpop.f32.mrb[0].mxu0
        %3379 = vmatprep.mubr.f32.mxu0 %v3259
        %3380 = vmatmul.mubr.f32.gmra.mrb[0].mxu0 %v3258
        %v3381 = vpop.f32.mrb[0].mxu0
        %v3382 = vadd.f32 0.0, %v3381
        %v3383 = vpop.f32.mrb[0].mxu0
        %3384 = vmatprep.mubr.f32.mxu0 %v3261
        %3385 = vmatmul.mubr.f32.gmra.mrb[0].mxu0 %v3260
        %v3386 = vpop.f32.mrb[0].mxu0
        %v3387 = vadd.f32 0.0, %v3386
        %v3388 = vpop.f32.mrb[0].mxu0
        %3389 = vmatprep.mubr.f32.mxu0 %v3263
        %3390 = vmatmul.mubr.f32.gmra.mrb[0].mxu0 %v3262
        %v3391 = vpop.f32.mrb[0].mxu0
        %v3392 = vadd.f32 0.0, %v3391
        %v3393 = vpop.f32.mrb[0].mxu0
        %3394 = vmatprep.mubr.f32.mxu0 %v3265
        %3395 = vmatmul.mubr.f32.gmra.mrb[0].mxu0 %v3264
        %v3396 = vpop.f32.mrb[0].mxu0
        %v3397 = vadd.f32 0.0, %v3396
        %v3398 = vpop.f32.mrb[0].mxu0
        %3399 = vmatprep.mubr.f32.mxu0 %v3267
        %3400 = vmatmul.mubr.f32.gmra.mrb[0].mxu0 %v3266
        %v3401 = vpop.f32.mrb[0].mxu0
        %v3402 = vadd.f32 0.0, %v3401
        %v3403 = vpop.f32.mrb[0].mxu0
        %3404 = vdwg.mxu0
        %v3405 = vadd.f32 %v2932, %v3367
        %v3406 = vadd.f32 %v2937, %v3372
        %v3407 = vadd.f32 %v2942, %v3377
        %v3408 = vadd.f32 %v2947, %v3382
        %v3409 = vadd.f32 %v2952, %v3387
        %v3410 = vadd.f32 %v2957, %v3392
        %v3411 = vadd.f32 %v2962, %v3397
        %v3412 = vadd.f32 %v2967, %v3402
        %v3413 = vld [vmem:[#allocation2 + $0x8] sm:$0xff]
        %v3414 = vld [vmem:[#allocation2 + $0x10] sm:$0xff]
        %v3415 = vld [vmem:[#allocation2 + $0x20] sm:$0xff]
        %v3416 = vld [vmem:[#allocation2 + $0x28] sm:$0xff]
        %v3417 = vld [vmem:[#allocation2 + $0x38] sm:$0xff]
        %v3418 = vld [vmem:[#allocation2 + $0x40] sm:$0xff]
        %v3419 = vld [vmem:[#allocation2 + $0x50] sm:$0xff]
        %v3420 = vld [vmem:[#allocation2 + $0x58] sm:$0xff]
        %v3421 = vld [vmem:[#allocation2 + $0x68] sm:$0xff]
        %v3422 = vld [vmem:[#allocation2 + $0x70] sm:$0xff]
        %v3423 = vld [vmem:[#allocation2 + $0x80] sm:$0xff]
        %v3424 = vld [vmem:[#allocation2 + $0x88] sm:$0xff]
        %v3425 = vld [vmem:[#allocation2 + $0x98] sm:$0xff]
        %v3426 = vld [vmem:[#allocation2 + $0xa0] sm:$0xff]
        %v3427 = vld [vmem:[#allocation2 + $0xb0] sm:$0xff]
        %v3428 = vld [vmem:[#allocation2 + $0xb8] sm:$0xff]
        %3445 = vrot.lane.b32.xlu0 %v3413, 116
        %v3446 = vpop.permute.xlu0 %3445
        %3447 = vrot.lane.b32.xlu0 %v3414, 116
        %v3448 = vpop.permute.xlu0 %3447
        %3449 = vrot.lane.b32.xlu0 %v3415, 116
        %v3450 = vpop.permute.xlu0 %3449
        %3451 = vrot.lane.b32.xlu0 %v3416, 116
        %v3452 = vpop.permute.xlu0 %3451
        %3453 = vrot.lane.b32.xlu0 %v3417, 116
        %v3454 = vpop.permute.xlu0 %3453
        %3455 = vrot.lane.b32.xlu0 %v3418, 116
        %v3456 = vpop.permute.xlu0 %3455
        %3457 = vrot.lane.b32.xlu0 %v3419, 116
        %v3458 = vpop.permute.xlu0 %3457
        %3459 = vrot.lane.b32.xlu0 %v3420, 116
        %v3460 = vpop.permute.xlu0 %3459
        %3461 = vrot.lane.b32.xlu0 %v3421, 116
        %v3462 = vpop.permute.xlu0 %3461
        %3463 = vrot.lane.b32.xlu0 %v3422, 116
        %v3464 = vpop.permute.xlu0 %3463
        %3465 = vrot.lane.b32.xlu0 %v3423, 116
        %v3466 = vpop.permute.xlu0 %3465
        %3467 = vrot.lane.b32.xlu0 %v3424, 116
        %v3468 = vpop.permute.xlu0 %3467
        %3469 = vrot.lane.b32.xlu0 %v3425, 116
        %v3470 = vpop.permute.xlu0 %3469
        %3471 = vrot.lane.b32.xlu0 %v3426, 116
        %v3472 = vpop.permute.xlu0 %3471
        %3473 = vrot.lane.b32.xlu0 %v3427, 116
        %v3474 = vpop.permute.xlu0 %3473
        %3475 = vrot.lane.b32.xlu0 %v3428, 116
        %v3476 = vpop.permute.xlu0 %3475
        %vm3477 = vcmask 949248
        %v3478 = vsel %vm3477, %v3446, %v3448
        %v3479 = vsel %vm3477, %v3450, %v3452
        %v3480 = vsel %vm3477, %v3454, %v3456
        %v3481 = vsel %vm3477, %v3458, %v3460
        %v3482 = vsel %vm3477, %v3462, %v3464
        %v3483 = vsel %vm3477, %v3466, %v3468
        %v3484 = vsel %vm3477, %v3470, %v3472
        %v3485 = vsel %vm3477, %v3474, %v3476
        %3494 = vst [vmem:[#allocation3] sm:$0xff] %v3478
        %3495 = vst [vmem:[#allocation3 + $0x8] sm:$0xff] %v3479
        %3496 = vst [vmem:[#allocation3 + $0x10] sm:$0xff] %v3480
        %3497 = vst [vmem:[#allocation3 + $0x18] sm:$0xff] %v3481
        %3498 = vst [vmem:[#allocation3 + $0x20] sm:$0xff] %v3482
        %3499 = vst [vmem:[#allocation3 + $0x28] sm:$0xff] %v3483
        %3500 = vst [vmem:[#allocation3 + $0x30] sm:$0xff] %v3484
        %3501 = vst [vmem:[#allocation3 + $0x38] sm:$0xff] %v3485
        %v3502 = vld [vmem:[#allocation2 + $0x8] sm:$0xff]
        %v3503 = vld [vmem:[#allocation2 + $0x10] sm:$0xff]
        %v3504 = vld [vmem:[#allocation2 + $0x20] sm:$0xff]
        %v3505 = vld [vmem:[#allocation2 + $0x28] sm:$0xff]
        %v3506 = vld [vmem:[#allocation2 + $0x38] sm:$0xff]
        %v3507 = vld [vmem:[#allocation2 + $0x40] sm:$0xff]
        %v3508 = vld [vmem:[#allocation2 + $0x50] sm:$0xff]
        %v3509 = vld [vmem:[#allocation2 + $0x58] sm:$0xff]
        %v3510 = vld [vmem:[#allocation2 + $0x68] sm:$0xff]
        %v3511 = vld [vmem:[#allocation2 + $0x70] sm:$0xff]
        %v3512 = vld [vmem:[#allocation2 + $0x80] sm:$0xff]
        %v3513 = vld [vmem:[#allocation2 + $0x88] sm:$0xff]
        %v3514 = vld [vmem:[#allocation2 + $0x98] sm:$0xff]
        %v3515 = vld [vmem:[#allocation2 + $0xa0] sm:$0xff]
        %v3516 = vld [vmem:[#allocation2 + $0xb0] sm:$0xff]
        %v3517 = vld [vmem:[#allocation2 + $0xb8] sm:$0xff]
        %3534 = vrot.lane.b32.xlu0 %v3502, 112
        %v3535 = vpop.permute.xlu0 %3534
        %3536 = vrot.lane.b32.xlu0 %v3503, 112
        %v3537 = vpop.permute.xlu0 %3536
        %3538 = vrot.lane.b32.xlu0 %v3504, 112
        %v3539 = vpop.permute.xlu0 %3538
        %3540 = vrot.lane.b32.xlu0 %v3505, 112
        %v3541 = vpop.permute.xlu0 %3540
        %3542 = vrot.lane.b32.xlu0 %v3506, 112
        %v3543 = vpop.permute.xlu0 %3542
        %3544 = vrot.lane.b32.xlu0 %v3507, 112
        %v3545 = vpop.permute.xlu0 %3544
        %3546 = vrot.lane.b32.xlu0 %v3508, 112
        %v3547 = vpop.permute.xlu0 %3546
        %3548 = vrot.lane.b32.xlu0 %v3509, 112
        %v3549 = vpop.permute.xlu0 %3548
        %3550 = vrot.lane.b32.xlu0 %v3510, 112
        %v3551 = vpop.permute.xlu0 %3550
        %3552 = vrot.lane.b32.xlu0 %v3511, 112
        %v3553 = vpop.permute.xlu0 %3552
        %3554 = vrot.lane.b32.xlu0 %v3512, 112
        %v3555 = vpop.permute.xlu0 %3554
        %3556 = vrot.lane.b32.xlu0 %v3513, 112
        %v3557 = vpop.permute.xlu0 %3556
        %3558 = vrot.lane.b32.xlu0 %v3514, 112
        %v3559 = vpop.permute.xlu0 %3558
        %3560 = vrot.lane.b32.xlu0 %v3515, 112
        %v3561 = vpop.permute.xlu0 %3560
        %3562 = vrot.lane.b32.xlu0 %v3516, 112
        %v3563 = vpop.permute.xlu0 %3562
        %3564 = vrot.lane.b32.xlu0 %v3517, 112
        %v3565 = vpop.permute.xlu0 %3564
        %vm3566 = vcmask 916480
        %v3567 = vsel %vm3566, %v3535, %v3537
        %v3568 = vsel %vm3566, %v3539, %v3541
        %v3569 = vsel %vm3566, %v3543, %v3545
        %v3570 = vsel %vm3566, %v3547, %v3549
        %v3571 = vsel %vm3566, %v3551, %v3553
        %v3572 = vsel %vm3566, %v3555, %v3557
        %v3573 = vsel %vm3566, %v3559, %v3561
        %v3574 = vsel %vm3566, %v3563, %v3565
        %3583 = vst [vmem:[#allocation3 + $0x40] sm:$0xff] %v3567
        %3584 = vst [vmem:[#allocation3 + $0x48] sm:$0xff] %v3568
        %3585 = vst [vmem:[#allocation3 + $0x50] sm:$0xff] %v3569
        %3586 = vst [vmem:[#allocation3 + $0x58] sm:$0xff] %v3570
        %3587 = vst [vmem:[#allocation3 + $0x60] sm:$0xff] %v3571
        %3588 = vst [vmem:[#allocation3 + $0x68] sm:$0xff] %v3572
        %3589 = vst [vmem:[#allocation3 + $0x70] sm:$0xff] %v3573
        %3590 = vst [vmem:[#allocation3 + $0x78] sm:$0xff] %v3574
        %v3591 = vld [vmem:[#allocation2 + $0x8] sm:$0xff]
        %v3592 = vld [vmem:[#allocation2 + $0x10] sm:$0xff]
        %v3593 = vld [vmem:[#allocation2 + $0x20] sm:$0xff]
        %v3594 = vld [vmem:[#allocation2 + $0x28] sm:$0xff]
        %v3595 = vld [vmem:[#allocation2 + $0x38] sm:$0xff]
        %v3596 = vld [vmem:[#allocation2 + $0x40] sm:$0xff]
        %v3597 = vld [vmem:[#allocation2 + $0x50] sm:$0xff]
        %v3598 = vld [vmem:[#allocation2 + $0x58] sm:$0xff]
        %v3599 = vld [vmem:[#allocation2 + $0x68] sm:$0xff]
        %v3600 = vld [vmem:[#allocation2 + $0x70] sm:$0xff]
        %v3601 = vld [vmem:[#allocation2 + $0x80] sm:$0xff]
        %v3602 = vld [vmem:[#allocation2 + $0x88] sm:$0xff]
        %v3603 = vld [vmem:[#allocation2 + $0x98] sm:$0xff]
        %v3604 = vld [vmem:[#allocation2 + $0xa0] sm:$0xff]
        %v3605 = vld [vmem:[#allocation2 + $0xb0] sm:$0xff]
        %v3606 = vld [vmem:[#allocation2 + $0xb8] sm:$0xff]
        %3623 = vrot.lane.b32.xlu0 %v3591, 108
        %v3624 = vpop.permute.xlu0 %3623
        %3625 = vrot.lane.b32.xlu0 %v3592, 108
        %v3626 = vpop.permute.xlu0 %3625
        %3627 = vrot.lane.b32.xlu0 %v3593, 108
        %v3628 = vpop.permute.xlu0 %3627
        %3629 = vrot.lane.b32.xlu0 %v3594, 108
        %v3630 = vpop.permute.xlu0 %3629
        %3631 = vrot.lane.b32.xlu0 %v3595, 108
        %v3632 = vpop.permute.xlu0 %3631
        %3633 = vrot.lane.b32.xlu0 %v3596, 108
        %v3634 = vpop.permute.xlu0 %3633
        %3635 = vrot.lane.b32.xlu0 %v3597, 108
        %v3636 = vpop.permute.xlu0 %3635
        %3637 = vrot.lane.b32.xlu0 %v3598, 108
        %v3638 = vpop.permute.xlu0 %3637
        %3639 = vrot.lane.b32.xlu0 %v3599, 108
        %v3640 = vpop.permute.xlu0 %3639
        %3641 = vrot.lane.b32.xlu0 %v3600, 108
        %v3642 = vpop.permute.xlu0 %3641
        %3643 = vrot.lane.b32.xlu0 %v3601, 108
        %v3644 = vpop.permute.xlu0 %3643
        %3645 = vrot.lane.b32.xlu0 %v3602, 108
        %v3646 = vpop.permute.xlu0 %3645
        %3647 = vrot.lane.b32.xlu0 %v3603, 108
        %v3648 = vpop.permute.xlu0 %3647
        %3649 = vrot.lane.b32.xlu0 %v3604, 108
        %v3650 = vpop.permute.xlu0 %3649
        %3651 = vrot.lane.b32.xlu0 %v3605, 108
        %v3652 = vpop.permute.xlu0 %3651
        %3653 = vrot.lane.b32.xlu0 %v3606, 108
        %v3654 = vpop.permute.xlu0 %3653
        %vm3655 = vcmask 883712
        %v3656 = vsel %vm3655, %v3624, %v3626
        %v3657 = vsel %vm3655, %v3628, %v3630
        %v3658 = vsel %vm3655, %v3632, %v3634
        %v3659 = vsel %vm3655, %v3636, %v3638
        %v3660 = vsel %vm3655, %v3640, %v3642
        %v3661 = vsel %vm3655, %v3644, %v3646
        %v3662 = vsel %vm3655, %v3648, %v3650
        %v3663 = vsel %vm3655, %v3652, %v3654
        %3672 = vst [vmem:[#allocation3 + $0x80] sm:$0xff] %v3656
        %3673 = vst [vmem:[#allocation3 + $0x88] sm:$0xff] %v3657
        %3674 = vst [vmem:[#allocation3 + $0x90] sm:$0xff] %v3658
        %3675 = vst [vmem:[#allocation3 + $0x98] sm:$0xff] %v3659
        %3676 = vst [vmem:[#allocation3 + $0xa0] sm:$0xff] %v3660
        %3677 = vst [vmem:[#allocation3 + $0xa8] sm:$0xff] %v3661
        %3678 = vst [vmem:[#allocation3 + $0xb0] sm:$0xff] %v3662
        %3679 = vst [vmem:[#allocation3 + $0xb8] sm:$0xff] %v3663
        %v3680 = vld [vmem:[#allocation2 + $0x8] sm:$0xff]
        %v3681 = vld [vmem:[#allocation2 + $0x10] sm:$0xff]
        %v3682 = vld [vmem:[#allocation2 + $0x20] sm:$0xff]
        %v3683 = vld [vmem:[#allocation2 + $0x28] sm:$0xff]
        %v3684 = vld [vmem:[#allocation2 + $0x38] sm:$0xff]
        %v3685 = vld [vmem:[#allocation2 + $0x40] sm:$0xff]
        %v3686 = vld [vmem:[#allocation2 + $0x50] sm:$0xff]
        %v3687 = vld [vmem:[#allocation2 + $0x58] sm:$0xff]
        %v3688 = vld [vmem:[#allocation2 + $0x68] sm:$0xff]
        %v3689 = vld [vmem:[#allocation2 + $0x70] sm:$0xff]
        %v3690 = vld [vmem:[#allocation2 + $0x80] sm:$0xff]
        %v3691 = vld [vmem:[#allocation2 + $0x88] sm:$0xff]
        %v3692 = vld [vmem:[#allocation2 + $0x98] sm:$0xff]
        %v3693 = vld [vmem:[#allocation2 + $0xa0] sm:$0xff]
        %v3694 = vld [vmem:[#allocation2 + $0xb0] sm:$0xff]
        %v3695 = vld [vmem:[#allocation2 + $0xb8] sm:$0xff]
        %3712 = vrot.lane.b32.xlu0 %v3680, 104
        %v3713 = vpop.permute.xlu0 %3712
        %3714 = vrot.lane.b32.xlu0 %v3681, 104
        %v3715 = vpop.permute.xlu0 %3714
        %3716 = vrot.lane.b32.xlu0 %v3682, 104
        %v3717 = vpop.permute.xlu0 %3716
        %3718 = vrot.lane.b32.xlu0 %v3683, 104
        %v3719 = vpop.permute.xlu0 %3718
        %3720 = vrot.lane.b32.xlu0 %v3684, 104
        %v3721 = vpop.permute.xlu0 %3720
        %3722 = vrot.lane.b32.xlu0 %v3685, 104
        %v3723 = vpop.permute.xlu0 %3722
        %3724 = vrot.lane.b32.xlu0 %v3686, 104
        %v3725 = vpop.permute.xlu0 %3724
        %3726 = vrot.lane.b32.xlu0 %v3687, 104
        %v3727 = vpop.permute.xlu0 %3726
        %3728 = vrot.lane.b32.xlu0 %v3688, 104
        %v3729 = vpop.permute.xlu0 %3728
        %3730 = vrot.lane.b32.xlu0 %v3689, 104
        %v3731 = vpop.permute.xlu0 %3730
        %3732 = vrot.lane.b32.xlu0 %v3690, 104
        %v3733 = vpop.permute.xlu0 %3732
        %3734 = vrot.lane.b32.xlu0 %v3691, 104
        %v3735 = vpop.permute.xlu0 %3734
        %3736 = vrot.lane.b32.xlu0 %v3692, 104
        %v3737 = vpop.permute.xlu0 %3736
        %3738 = vrot.lane.b32.xlu0 %v3693, 104
        %v3739 = vpop.permute.xlu0 %3738
        %3740 = vrot.lane.b32.xlu0 %v3694, 104
        %v3741 = vpop.permute.xlu0 %3740
        %3742 = vrot.lane.b32.xlu0 %v3695, 104
        %v3743 = vpop.permute.xlu0 %3742
        %vm3744 = vcmask 850944
        %v3745 = vsel %vm3744, %v3713, %v3715
        %v3746 = vsel %vm3744, %v3717, %v3719
        %v3747 = vsel %vm3744, %v3721, %v3723
        %v3748 = vsel %vm3744, %v3725, %v3727
        %v3749 = vsel %vm3744, %v3729, %v3731
        %v3750 = vsel %vm3744, %v3733, %v3735
        %v3751 = vsel %vm3744, %v3737, %v3739
        %v3752 = vsel %vm3744, %v3741, %v3743
        %3761 = vst [vmem:[#allocation3 + $0xc0] sm:$0xff] %v3745
        %3762 = vst [vmem:[#allocation3 + $0xc8] sm:$0xff] %v3746
        %3763 = vst [vmem:[#allocation3 + $0xd0] sm:$0xff] %v3747
        %3764 = vst [vmem:[#allocation3 + $0xd8] sm:$0xff] %v3748
        %3765 = vst [vmem:[#allocation3 + $0xe0] sm:$0xff] %v3749
        %3766 = vst [vmem:[#allocation3 + $0xe8] sm:$0xff] %v3750
        %3767 = vst [vmem:[#allocation3 + $0xf0] sm:$0xff] %v3751
        %3768 = vst [vmem:[#allocation3 + $0xf8] sm:$0xff] %v3752
        %v3769 = vld [vmem:[%s3 + $0x30] sm:$0xff]
        %v3770 = vld [vmem:[%s3 + $0x38] sm:$0xff]
        %v3771 = vld [vmem:[%s3 + $0x70] sm:$0xff]
        %v3772 = vld [vmem:[%s3 + $0x78] sm:$0xff]
        %v3773 = vld [vmem:[%s3 + $0xb0] sm:$0xff]
        %v3774 = vld [vmem:[%s3 + $0xb8] sm:$0xff]
        %v3775 = vld [vmem:[%s3 + $0xf0] sm:$0xff]
        %v3776 = vld [vmem:[%s3 + $0xf8] sm:$0xff]
        %v3777 = vld [vmem:[%s3 + $0x130] sm:$0xff]
        %v3778 = vld [vmem:[%s3 + $0x138] sm:$0xff]
        %v3779 = vld [vmem:[%s3 + $0x170] sm:$0xff]
        %v3780 = vld [vmem:[%s3 + $0x178] sm:$0xff]
        %v3781 = vld [vmem:[%s3 + $0x1b0] sm:$0xff]
        %v3782 = vld [vmem:[%s3 + $0x1b8] sm:$0xff]
        %v3783 = vld [vmem:[%s3 + $0x1f0] sm:$0xff]
        %v3784 = vld [vmem:[%s3 + $0x1f8] sm:$0xff]
        %v3785 = vld [vmem:[#allocation3] sm:$0xff]
        %v3786 = vld [vmem:[#allocation3 + $0x8] sm:$0xff]
        %v3787 = vld [vmem:[#allocation3 + $0x10] sm:$0xff]
        %v3788 = vld [vmem:[#allocation3 + $0x18] sm:$0xff]
        %v3789 = vld [vmem:[#allocation3 + $0x20] sm:$0xff]
        %v3790 = vld [vmem:[#allocation3 + $0x28] sm:$0xff]
        %v3791 = vld [vmem:[#allocation3 + $0x30] sm:$0xff]
        %v3792 = vld [vmem:[#allocation3 + $0x38] sm:$0xff]
        %v3793 = vld [vmem:[#allocation3 + $0x40] sm:$0xff]
        %v3794 = vld [vmem:[#allocation3 + $0x48] sm:$0xff]
        %v3795 = vld [vmem:[#allocation3 + $0x50] sm:$0xff]
        %v3796 = vld [vmem:[#allocation3 + $0x58] sm:$0xff]
        %v3797 = vld [vmem:[#allocation3 + $0x60] sm:$0xff]
        %v3798 = vld [vmem:[#allocation3 + $0x68] sm:$0xff]
        %v3799 = vld [vmem:[#allocation3 + $0x70] sm:$0xff]
        %v3800 = vld [vmem:[#allocation3 + $0x78] sm:$0xff]
        %v3801 = vld [vmem:[#allocation3 + $0x80] sm:$0xff]
        %v3802 = vld [vmem:[#allocation3 + $0x88] sm:$0xff]
        %v3803 = vld [vmem:[#allocation3 + $0x90] sm:$0xff]
        %v3804 = vld [vmem:[#allocation3 + $0x98] sm:$0xff]
        %v3805 = vld [vmem:[#allocation3 + $0xa0] sm:$0xff]
        %v3806 = vld [vmem:[#allocation3 + $0xa8] sm:$0xff]
        %v3807 = vld [vmem:[#allocation3 + $0xb0] sm:$0xff]
        %v3808 = vld [vmem:[#allocation3 + $0xb8] sm:$0xff]
        %v3809 = vld [vmem:[#allocation3 + $0xc0] sm:$0xff]
        %v3810 = vld [vmem:[#allocation3 + $0xc8] sm:$0xff]
        %v3811 = vld [vmem:[#allocation3 + $0xd0] sm:$0xff]
        %v3812 = vld [vmem:[#allocation3 + $0xd8] sm:$0xff]
        %v3813 = vld [vmem:[#allocation3 + $0xe0] sm:$0xff]
        %v3814 = vld [vmem:[#allocation3 + $0xe8] sm:$0xff]
        %v3815 = vld [vmem:[#allocation3 + $0xf0] sm:$0xff]
        %v3816 = vld [vmem:[#allocation3 + $0xf8] sm:$0xff]
        %3817 = vmatprep.subr.mxu0 0.0
        %3818 = vmatpush1.msra.mxu0 %v3785
        %3819 = vmatprep.subr.mxu0 0.0
        %3820 = vmatpush1.msra.mxu0 %v3786
        %3821 = vmatprep.subr.mxu0 0.0
        %3822 = vmatpush1.msra.mxu0 %v3787
        %3823 = vmatprep.subr.mxu0 0.0
        %3824 = vmatpush1.msra.mxu0 %v3788
        %3825 = vmatprep.subr.mxu0 0.0
        %3826 = vmatpush1.msra.mxu0 %v3789
        %3827 = vmatprep.subr.mxu0 0.0
        %3828 = vmatpush1.msra.mxu0 %v3790
        %3829 = vmatprep.subr.mxu0 0.0
        %3830 = vmatpush1.msra.mxu0 %v3791
        %3831 = vmatprep.subr.mxu0 0.0
        %3832 = vmatpush1.msra.mxu0 %v3792
        %3833 = vmatprep.subr.mxu0 0.0
        %3834 = vmatpush1.msra.mxu0 %v3793
        %3835 = vmatprep.subr.mxu0 0.0
        %3836 = vmatpush1.msra.mxu0 %v3794
        %3837 = vmatprep.subr.mxu0 0.0
        %3838 = vmatpush1.msra.mxu0 %v3795
        %3839 = vmatprep.subr.mxu0 0.0
        %3840 = vmatpush1.msra.mxu0 %v3796
        %3841 = vmatprep.subr.mxu0 0.0
        %3842 = vmatpush1.msra.mxu0 %v3797
        %3843 = vmatprep.subr.mxu0 0.0
        %3844 = vmatpush1.msra.mxu0 %v3798
        %3845 = vmatprep.subr.mxu0 0.0
        %3846 = vmatpush1.msra.mxu0 %v3799
        %3847 = vmatprep.subr.mxu0 0.0
        %3848 = vmatpush1.msra.mxu0 %v3800
        %3849 = vmatprep.subr.mxu0 0.0
        %3850 = vmatpush1.msra.mxu0 %v3801
        %3851 = vmatprep.subr.mxu0 0.0
        %3852 = vmatpush1.msra.mxu0 %v3802
        %3853 = vmatprep.subr.mxu0 0.0
        %3854 = vmatpush1.msra.mxu0 %v3803
        %3855 = vmatprep.subr.mxu0 0.0
        %3856 = vmatpush1.msra.mxu0 %v3804
        %3857 = vmatprep.subr.mxu0 0.0
        %3858 = vmatpush1.msra.mxu0 %v3805
        %3859 = vmatprep.subr.mxu0 0.0
        %3860 = vmatpush1.msra.mxu0 %v3806
        %3861 = vmatprep.subr.mxu0 0.0
        %3862 = vmatpush1.msra.mxu0 %v3807
        %3863 = vmatprep.subr.mxu0 0.0
        %3864 = vmatpush1.msra.mxu0 %v3808
        %3865 = vmatprep.subr.mxu0 0.0
        %3866 = vmatpush1.msra.mxu0 %v3809
        %3867 = vmatprep.subr.mxu0 0.0
        %3868 = vmatpush1.msra.mxu0 %v3810
        %3869 = vmatprep.subr.mxu0 0.0
        %3870 = vmatpush1.msra.mxu0 %v3811
        %3871 = vmatprep.subr.mxu0 0.0
        %3872 = vmatpush1.msra.mxu0 %v3812
        %3873 = vmatprep.subr.mxu0 0.0
        %3874 = vmatpush1.msra.mxu0 %v3813
        %3875 = vmatprep.subr.mxu0 0.0
        %3876 = vmatpush1.msra.mxu0 %v3814
        %3877 = vmatprep.subr.mxu0 0.0
        %3878 = vmatpush1.msra.mxu0 %v3815
        %3879 = vmatprep.subr.mxu0 0.0
        %3880 = vmatpush1.msra.mxu0 %v3816
        %3881 = vmatprep.mubr.f32.mxu0 %v3770
        %3882 = vmatmul.mubr.f32.gmra.mrb[0].mxu0 %v3769
        %v3883 = vpop.f32.mrb[0].mxu0
        %v3884 = vadd.f32 0.0, %v3883
        %v3885 = vpop.f32.mrb[0].mxu0
        %3886 = vmatprep.mubr.f32.mxu0 %v3772
        %3887 = vmatmul.mubr.f32.gmra.mrb[0].mxu0 %v3771
        %v3888 = vpop.f32.mrb[0].mxu0
        %v3889 = vadd.f32 0.0, %v3888
        %v3890 = vpop.f32.mrb[0].mxu0
        %3891 = vmatprep.mubr.f32.mxu0 %v3774
        %3892 = vmatmul.mubr.f32.gmra.mrb[0].mxu0 %v3773
        %v3893 = vpop.f32.mrb[0].mxu0
        %v3894 = vadd.f32 0.0, %v3893
        %v3895 = vpop.f32.mrb[0].mxu0
        %3896 = vmatprep.mubr.f32.mxu0 %v3776
        %3897 = vmatmul.mubr.f32.gmra.mrb[0].mxu0 %v3775
        %v3898 = vpop.f32.mrb[0].mxu0
        %v3899 = vadd.f32 0.0, %v3898
        %v3900 = vpop.f32.mrb[0].mxu0
        %3901 = vmatprep.mubr.f32.mxu0 %v3778
        %3902 = vmatmul.mubr.f32.gmra.mrb[0].mxu0 %v3777
        %v3903 = vpop.f32.mrb[0].mxu0
        %v3904 = vadd.f32 0.0, %v3903
        %v3905 = vpop.f32.mrb[0].mxu0
        %3906 = vmatprep.mubr.f32.mxu0 %v3780
        %3907 = vmatmul.mubr.f32.gmra.mrb[0].mxu0 %v3779
        %v3908 = vpop.f32.mrb[0].mxu0
        %v3909 = vadd.f32 0.0, %v3908
        %v3910 = vpop.f32.mrb[0].mxu0
        %3911 = vmatprep.mubr.f32.mxu0 %v3782
        %3912 = vmatmul.mubr.f32.gmra.mrb[0].mxu0 %v3781
        %v3913 = vpop.f32.mrb[0].mxu0
        %v3914 = vadd.f32 0.0, %v3913
        %v3915 = vpop.f32.mrb[0].mxu0
        %3916 = vmatprep.mubr.f32.mxu0 %v3784
        %3917 = vmatmul.mubr.f32.gmra.mrb[0].mxu0 %v3783
        %v3918 = vpop.f32.mrb[0].mxu0
        %v3919 = vadd.f32 0.0, %v3918
        %v3920 = vpop.f32.mrb[0].mxu0
        %3921 = vdwg.mxu0
        %v3922 = vadd.f32 %v3405, %v3884
        %v3923 = vadd.f32 %v3406, %v3889
        %v3924 = vadd.f32 %v3407, %v3894
        %v3925 = vadd.f32 %v3408, %v3899
        %v3926 = vadd.f32 %v3409, %v3904
        %v3927 = vadd.f32 %v3410, %v3909
        %v3928 = vadd.f32 %v3411, %v3914
        %v3929 = vadd.f32 %v3412, %v3919
        %v3930 = vld [vmem:[%s4] sm:$0xff]
        %v3931 = vld [vmem:[%s4 + $0x8] sm:$0xff]
        %v3932 = vld [vmem:[%s4 + $0x10] sm:$0xff]
        %v3933 = vld [vmem:[%s4 + $0x18] sm:$0xff]
        %v3934 = vld [vmem:[%s4 + $0x20] sm:$0xff]
        %v3935 = vld [vmem:[%s4 + $0x28] sm:$0xff]
        %v3936 = vld [vmem:[%s4 + $0x30] sm:$0xff]
        %v3937 = vld [vmem:[%s4 + $0x38] sm:$0xff]
        %3939 = vset.pattern.permute.xlu0 0
        %3940 = vperm.xlu0 %3939, %v3930
        %v3941 = vpop.permute.xlu0 %3940
        %3944 = vset.pattern.permute.xlu0 0
        %3945 = vperm.xlu0 %3944, %v3931
        %v3946 = vpop.permute.xlu0 %3945
        %3949 = vset.pattern.permute.xlu0 0
        %3950 = vperm.xlu0 %3949, %v3932
        %v3951 = vpop.permute.xlu0 %3950
        %3954 = vset.pattern.permute.xlu0 0
        %3955 = vperm.xlu0 %3954, %v3933
        %v3956 = vpop.permute.xlu0 %3955
        %3959 = vset.pattern.permute.xlu0 0
        %3960 = vperm.xlu0 %3959, %v3934
        %v3961 = vpop.permute.xlu0 %3960
        %3964 = vset.pattern.permute.xlu0 0
        %3965 = vperm.xlu0 %3964, %v3935
        %v3966 = vpop.permute.xlu0 %3965
        %3969 = vset.pattern.permute.xlu0 0
        %3970 = vperm.xlu0 %3969, %v3936
        %v3971 = vpop.permute.xlu0 %3970
        %3974 = vset.pattern.permute.xlu0 0
        %3975 = vperm.xlu0 %3974, %v3937
        %v3976 = vpop.permute.xlu0 %3975
        %v3978 = vadd.f32 %v3922, %v3941
        %v3979 = vadd.f32 %v3923, %v3946
        %v3980 = vadd.f32 %v3924, %v3951
        %v3981 = vadd.f32 %v3925, %v3956
        %v3982 = vadd.f32 %v3926, %v3961
        %v3983 = vadd.f32 %v3927, %v3966
        %v3984 = vadd.f32 %v3928, %v3971
        %v3985 = vadd.f32 %v3929, %v3976
        %vm3986 = vcmp.ge.f32.partialorder %v3978, 0.0
        %vm3987 = vcmp.ge.f32.partialorder %v3979, 0.0
        %vm3988 = vcmp.ge.f32.partialorder %v3980, 0.0
        %vm3989 = vcmp.ge.f32.partialorder %v3981, 0.0
        %vm3990 = vcmp.ge.f32.partialorder %v3982, 0.0
        %vm3991 = vcmp.ge.f32.partialorder %v3983, 0.0
        %vm3992 = vcmp.ge.f32.partialorder %v3984, 0.0
        %vm3993 = vcmp.ge.f32.partialorder %v3985, 0.0
        %v3994 = vmul.f32 %v3978, 0.01
        %v3995 = vmul.f32 %v3979, 0.01
        %v3996 = vmul.f32 %v3980, 0.01
        %v3997 = vmul.f32 %v3981, 0.01
        %v3998 = vmul.f32 %v3982, 0.01
        %v3999 = vmul.f32 %v3983, 0.01
        %v4000 = vmul.f32 %v3984, 0.01
        %v4001 = vmul.f32 %v3985, 0.01
        %v4002 = vsel %vm3986, %v3978, %v3994
        %v4003 = vsel %vm3987, %v3979, %v3995
        %v4004 = vsel %vm3988, %v3980, %v3996
        %v4005 = vsel %vm3989, %v3981, %v3997
        %v4006 = vsel %vm3990, %v3982, %v3998
        %v4007 = vsel %vm3991, %v3983, %v3999
        %v4008 = vsel %vm3992, %v3984, %v4000
        %v4009 = vsel %vm3993, %v3985, %v4001
        %4010 = vst [vmem:[#allocation2 + $0x8] sm:$0xff] %v4002
        %4011 = vst [vmem:[#allocation2 + $0x20] sm:$0xff] %v4003
        %4012 = vst [vmem:[#allocation2 + $0x38] sm:$0xff] %v4004
        %4013 = vst [vmem:[#allocation2 + $0x50] sm:$0xff] %v4005
        %4014 = vst [vmem:[#allocation2 + $0x68] sm:$0xff] %v4006
        %4015 = vst [vmem:[#allocation2 + $0x80] sm:$0xff] %v4007
        %4016 = vst [vmem:[#allocation2 + $0x98] sm:$0xff] %v4008
        %4017 = vst [vmem:[#allocation2 + $0xb0] sm:$0xff] %v4009
        %v4018 = vld [vmem:[#allocation2] sm:$0xff]
        %v4019 = vld [vmem:[#allocation2 + $0x8] sm:$0xff]
        %v4020 = vld [vmem:[#allocation2 + $0x18] sm:$0xff]
        %v4021 = vld [vmem:[#allocation2 + $0x20] sm:$0xff]
        %v4022 = vld [vmem:[#allocation2 + $0x30] sm:$0xff]
        %v4023 = vld [vmem:[#allocation2 + $0x38] sm:$0xff]
        %v4024 = vld [vmem:[#allocation2 + $0x48] sm:$0xff]
        %v4025 = vld [vmem:[#allocation2 + $0x50] sm:$0xff]
        %v4026 = vld [vmem:[#allocation2 + $0x60] sm:$0xff]
        %v4027 = vld [vmem:[#allocation2 + $0x68] sm:$0xff]
        %v4028 = vld [vmem:[#allocation2 + $0x78] sm:$0xff]
        %v4029 = vld [vmem:[#allocation2 + $0x80] sm:$0xff]
        %v4030 = vld [vmem:[#allocation2 + $0x90] sm:$0xff]
        %v4031 = vld [vmem:[#allocation2 + $0x98] sm:$0xff]
        %v4032 = vld [vmem:[#allocation2 + $0xa8] sm:$0xff]
        %v4033 = vld [vmem:[#allocation2 + $0xb0] sm:$0xff]
        %4050 = vrot.lane.b32.xlu0 %v4018, 4
        %v4051 = vpop.permute.xlu0 %4050
        %4052 = vrot.lane.b32.xlu0 %v4019, 4
        %v4053 = vpop.permute.xlu0 %4052
        %4054 = vrot.lane.b32.xlu0 %v4020, 4
        %v4055 = vpop.permute.xlu0 %4054
        %4056 = vrot.lane.b32.xlu0 %v4021, 4
        %v4057 = vpop.permute.xlu0 %4056
        %4058 = vrot.lane.b32.xlu0 %v4022, 4
        %v4059 = vpop.permute.xlu0 %4058
        %4060 = vrot.lane.b32.xlu0 %v4023, 4
        %v4061 = vpop.permute.xlu0 %4060
        %4062 = vrot.lane.b32.xlu0 %v4024, 4
        %v4063 = vpop.permute.xlu0 %4062
        %4064 = vrot.lane.b32.xlu0 %v4025, 4
        %v4065 = vpop.permute.xlu0 %4064
        %4066 = vrot.lane.b32.xlu0 %v4026, 4
        %v4067 = vpop.permute.xlu0 %4066
        %4068 = vrot.lane.b32.xlu0 %v4027, 4
        %v4069 = vpop.permute.xlu0 %4068
        %4070 = vrot.lane.b32.xlu0 %v4028, 4
        %v4071 = vpop.permute.xlu0 %4070
        %4072 = vrot.lane.b32.xlu0 %v4029, 4
        %v4073 = vpop.permute.xlu0 %4072
        %4074 = vrot.lane.b32.xlu0 %v4030, 4
        %v4075 = vpop.permute.xlu0 %4074
        %4076 = vrot.lane.b32.xlu0 %v4031, 4
        %v4077 = vpop.permute.xlu0 %4076
        %4078 = vrot.lane.b32.xlu0 %v4032, 4
        %v4079 = vpop.permute.xlu0 %4078
        %4080 = vrot.lane.b32.xlu0 %v4033, 4
        %v4081 = vpop.permute.xlu0 %4080
        %v4082 = vsel %vm1657, %v4051, %v4053
        %v4083 = vsel %vm1657, %v4055, %v4057
        %v4084 = vsel %vm1657, %v4059, %v4061
        %v4085 = vsel %vm1657, %v4063, %v4065
        %v4086 = vsel %vm1657, %v4067, %v4069
        %v4087 = vsel %vm1657, %v4071, %v4073
        %v4088 = vsel %vm1657, %v4075, %v4077
        %v4089 = vsel %vm1657, %v4079, %v4081
        %4098 = vst [vmem:[#allocation3] sm:$0xff] %v4082
        %4099 = vst [vmem:[#allocation3 + $0x8] sm:$0xff] %v4083
        %4100 = vst [vmem:[#allocation3 + $0x10] sm:$0xff] %v4084
        %4101 = vst [vmem:[#allocation3 + $0x18] sm:$0xff] %v4085
        %4102 = vst [vmem:[#allocation3 + $0x20] sm:$0xff] %v4086
        %4103 = vst [vmem:[#allocation3 + $0x28] sm:$0xff] %v4087
        %4104 = vst [vmem:[#allocation3 + $0x30] sm:$0xff] %v4088
        %4105 = vst [vmem:[#allocation3 + $0x38] sm:$0xff] %v4089
        %v4106 = vld [vmem:[#allocation2 + $0x8] sm:$0xff]
        %v4107 = vld [vmem:[#allocation2 + $0x20] sm:$0xff]
        %v4108 = vld [vmem:[#allocation2 + $0x38] sm:$0xff]
        %v4109 = vld [vmem:[#allocation2 + $0x50] sm:$0xff]
        %v4110 = vld [vmem:[#allocation2 + $0x68] sm:$0xff]
        %v4111 = vld [vmem:[#allocation2 + $0x80] sm:$0xff]
        %v4112 = vld [vmem:[#allocation2 + $0x98] sm:$0xff]
        %v4113 = vld [vmem:[#allocation2 + $0xb0] sm:$0xff]
        %4114 = vst [vmem:[#allocation3 + $0x40] sm:$0xff] %v4106
        %4115 = vst [vmem:[#allocation3 + $0x48] sm:$0xff] %v4107
        %4116 = vst [vmem:[#allocation3 + $0x50] sm:$0xff] %v4108
        %4117 = vst [vmem:[#allocation3 + $0x58] sm:$0xff] %v4109
        %4118 = vst [vmem:[#allocation3 + $0x60] sm:$0xff] %v4110
        %4119 = vst [vmem:[#allocation3 + $0x68] sm:$0xff] %v4111
        %4120 = vst [vmem:[#allocation3 + $0x70] sm:$0xff] %v4112
        %4121 = vst [vmem:[#allocation3 + $0x78] sm:$0xff] %v4113
        %v4122 = vld [vmem:[#allocation2 + $0x8] sm:$0xff]
        %v4123 = vld [vmem:[#allocation2 + $0x10] sm:$0xff]
        %v4124 = vld [vmem:[#allocation2 + $0x20] sm:$0xff]
        %v4125 = vld [vmem:[#allocation2 + $0x28] sm:$0xff]
        %v4126 = vld [vmem:[#allocation2 + $0x38] sm:$0xff]
        %v4127 = vld [vmem:[#allocation2 + $0x40] sm:$0xff]
        %v4128 = vld [vmem:[#allocation2 + $0x50] sm:$0xff]
        %v4129 = vld [vmem:[#allocation2 + $0x58] sm:$0xff]
        %v4130 = vld [vmem:[#allocation2 + $0x68] sm:$0xff]
        %v4131 = vld [vmem:[#allocation2 + $0x70] sm:$0xff]
        %v4132 = vld [vmem:[#allocation2 + $0x80] sm:$0xff]
        %v4133 = vld [vmem:[#allocation2 + $0x88] sm:$0xff]
        %v4134 = vld [vmem:[#allocation2 + $0x98] sm:$0xff]
        %v4135 = vld [vmem:[#allocation2 + $0xa0] sm:$0xff]
        %v4136 = vld [vmem:[#allocation2 + $0xb0] sm:$0xff]
        %v4137 = vld [vmem:[#allocation2 + $0xb8] sm:$0xff]
        %4154 = vrot.lane.b32.xlu0 %v4122, 124
        %v4155 = vpop.permute.xlu0 %4154
        %4156 = vrot.lane.b32.xlu0 %v4123, 124
        %v4157 = vpop.permute.xlu0 %4156
        %4158 = vrot.lane.b32.xlu0 %v4124, 124
        %v4159 = vpop.permute.xlu0 %4158
        %4160 = vrot.lane.b32.xlu0 %v4125, 124
        %v4161 = vpop.permute.xlu0 %4160
        %4162 = vrot.lane.b32.xlu0 %v4126, 124
        %v4163 = vpop.permute.xlu0 %4162
        %4164 = vrot.lane.b32.xlu0 %v4127, 124
        %v4165 = vpop.permute.xlu0 %4164
        %4166 = vrot.lane.b32.xlu0 %v4128, 124
        %v4167 = vpop.permute.xlu0 %4166
        %4168 = vrot.lane.b32.xlu0 %v4129, 124
        %v4169 = vpop.permute.xlu0 %4168
        %4170 = vrot.lane.b32.xlu0 %v4130, 124
        %v4171 = vpop.permute.xlu0 %4170
        %4172 = vrot.lane.b32.xlu0 %v4131, 124
        %v4173 = vpop.permute.xlu0 %4172
        %4174 = vrot.lane.b32.xlu0 %v4132, 124
        %v4175 = vpop.permute.xlu0 %4174
        %4176 = vrot.lane.b32.xlu0 %v4133, 124
        %v4177 = vpop.permute.xlu0 %4176
        %4178 = vrot.lane.b32.xlu0 %v4134, 124
        %v4179 = vpop.permute.xlu0 %4178
        %4180 = vrot.lane.b32.xlu0 %v4135, 124
        %v4181 = vpop.permute.xlu0 %4180
        %4182 = vrot.lane.b32.xlu0 %v4136, 124
        %v4183 = vpop.permute.xlu0 %4182
        %4184 = vrot.lane.b32.xlu0 %v4137, 124
        %v4185 = vpop.permute.xlu0 %4184
        %v4186 = vsel %vm3138, %v4155, %v4157
        %v4187 = vsel %vm3138, %v4159, %v4161
        %v4188 = vsel %vm3138, %v4163, %v4165
        %v4189 = vsel %vm3138, %v4167, %v4169
        %v4190 = vsel %vm3138, %v4171, %v4173
        %v4191 = vsel %vm3138, %v4175, %v4177
        %v4192 = vsel %vm3138, %v4179, %v4181
        %v4193 = vsel %vm3138, %v4183, %v4185
        %4202 = vst [vmem:[#allocation3 + $0x80] sm:$0xff] %v4186
        %4203 = vst [vmem:[#allocation3 + $0x88] sm:$0xff] %v4187
        %4204 = vst [vmem:[#allocation3 + $0x90] sm:$0xff] %v4188
        %4205 = vst [vmem:[#allocation3 + $0x98] sm:$0xff] %v4189
        %4206 = vst [vmem:[#allocation3 + $0xa0] sm:$0xff] %v4190
        %4207 = vst [vmem:[#allocation3 + $0xa8] sm:$0xff] %v4191
        %4208 = vst [vmem:[#allocation3 + $0xb0] sm:$0xff] %v4192
        %4209 = vst [vmem:[#allocation3 + $0xb8] sm:$0xff] %v4193
        %v4210 = vld [vmem:[%s5] sm:$0xff]
        %v4211 = vld [vmem:[%s5 + $0x8] sm:$0xff]
        %v4212 = vld [vmem:[%s5 + $0x10] sm:$0xff]
        %v4213 = vld [vmem:[%s5 + $0x18] sm:$0xff]
        %v4214 = vld [vmem:[%s5 + $0x20] sm:$0xff]
        %v4215 = vld [vmem:[%s5 + $0x28] sm:$0xff]
        %v4216 = vld [vmem:[%s5 + $0x30] sm:$0xff]
        %v4217 = vld [vmem:[%s5 + $0x38] sm:$0xff]
        %v4218 = vld [vmem:[%s5 + $0x40] sm:$0xff]
        %v4219 = vld [vmem:[%s5 + $0x48] sm:$0xff]
        %v4220 = vld [vmem:[%s5 + $0x50] sm:$0xff]
        %v4221 = vld [vmem:[%s5 + $0x58] sm:$0xff]
        %v4222 = vld [vmem:[%s5 + $0x60] sm:$0xff]
        %v4223 = vld [vmem:[%s5 + $0x68] sm:$0xff]
        %v4224 = vld [vmem:[%s5 + $0x70] sm:$0xff]
        %v4225 = vld [vmem:[%s5 + $0x78] sm:$0xff]
        %v4226 = vld [vmem:[#allocation3] sm:$0xff]
        %v4227 = vld [vmem:[#allocation3 + $0x8] sm:$0xff]
        %v4228 = vld [vmem:[#allocation3 + $0x10] sm:$0xff]
        %v4229 = vld [vmem:[#allocation3 + $0x18] sm:$0xff]
        %v4230 = vld [vmem:[#allocation3 + $0x20] sm:$0xff]
        %v4231 = vld [vmem:[#allocation3 + $0x28] sm:$0xff]
        %v4232 = vld [vmem:[#allocation3 + $0x30] sm:$0xff]
        %v4233 = vld [vmem:[#allocation3 + $0x38] sm:$0xff]
        %v4234 = vld [vmem:[#allocation3 + $0x40] sm:$0xff]
        %v4235 = vld [vmem:[#allocation3 + $0x48] sm:$0xff]
        %v4236 = vld [vmem:[#allocation3 + $0x50] sm:$0xff]
        %v4237 = vld [vmem:[#allocation3 + $0x58] sm:$0xff]
        %v4238 = vld [vmem:[#allocation3 + $0x60] sm:$0xff]
        %v4239 = vld [vmem:[#allocation3 + $0x68] sm:$0xff]
        %v4240 = vld [vmem:[#allocation3 + $0x70] sm:$0xff]
        %v4241 = vld [vmem:[#allocation3 + $0x78] sm:$0xff]
        %v4242 = vld [vmem:[#allocation3 + $0x80] sm:$0xff]
        %v4243 = vld [vmem:[#allocation3 + $0x88] sm:$0xff]
        %v4244 = vld [vmem:[#allocation3 + $0x90] sm:$0xff]
        %v4245 = vld [vmem:[#allocation3 + $0x98] sm:$0xff]
        %v4246 = vld [vmem:[#allocation3 + $0xa0] sm:$0xff]
        %v4247 = vld [vmem:[#allocation3 + $0xa8] sm:$0xff]
        %v4248 = vld [vmem:[#allocation3 + $0xb0] sm:$0xff]
        %v4249 = vld [vmem:[#allocation3 + $0xb8] sm:$0xff]
        %v4250 = vld [vmem:[%s6] sm:$0xff]
        %v4251 = vld [vmem:[%s6 + $0x8] sm:$0xff]
        %v4252 = vld [vmem:[%s6 + $0x10] sm:$0xff]
        %v4253 = vld [vmem:[%s6 + $0x18] sm:$0xff]
        %v4254 = vld [vmem:[%s6 + $0x20] sm:$0xff]
        %v4255 = vld [vmem:[%s6 + $0x28] sm:$0xff]
        %v4256 = vld [vmem:[%s6 + $0x30] sm:$0xff]
        %v4257 = vld [vmem:[%s6 + $0x38] sm:$0xff]
        %4259 = vset.pattern.permute.xlu0 0
        %4260 = vperm.xlu0 %4259, %v4250
        %v4261 = vpop.permute.xlu0 %4260
        %4264 = vset.pattern.permute.xlu0 0
        %4265 = vperm.xlu0 %4264, %v4251
        %v4266 = vpop.permute.xlu0 %4265
        %4269 = vset.pattern.permute.xlu0 0
        %4270 = vperm.xlu0 %4269, %v4252
        %v4271 = vpop.permute.xlu0 %4270
        %4274 = vset.pattern.permute.xlu0 0
        %4275 = vperm.xlu0 %4274, %v4253
        %v4276 = vpop.permute.xlu0 %4275
        %4279 = vset.pattern.permute.xlu0 0
        %4280 = vperm.xlu0 %4279, %v4254
        %v4281 = vpop.permute.xlu0 %4280
        %4284 = vset.pattern.permute.xlu0 0
        %4285 = vperm.xlu0 %4284, %v4255
        %v4286 = vpop.permute.xlu0 %4285
        %4289 = vset.pattern.permute.xlu0 0
        %4290 = vperm.xlu0 %4289, %v4256
        %v4291 = vpop.permute.xlu0 %4290
        %4294 = vset.pattern.permute.xlu0 0
        %4295 = vperm.xlu0 %4294, %v4257
        %v4296 = vpop.permute.xlu0 %4295
        %v4299 = vsel %vm604, %v4211, 0
        %v4302 = vsel %vm604, %v4213, 0
        %v4305 = vsel %vm604, %v4215, 0
        %v4308 = vsel %vm604, %v4217, 0
        %v4311 = vsel %vm604, %v4219, 0
        %v4314 = vsel %vm604, %v4221, 0
        %v4317 = vsel %vm604, %v4223, 0
        %v4320 = vsel %vm604, %v4225, 0
        %4322 = vmatprep.subr.mxu0 0.0
        %4323 = vmatpush1.msra.mxu0 %v4226
        %4324 = vmatprep.subr.mxu0 0.0
        %4325 = vmatpush1.msra.mxu0 %v4227
        %4326 = vmatprep.subr.mxu0 0.0
        %4327 = vmatpush1.msra.mxu0 %v4228
        %4328 = vmatprep.subr.mxu0 0.0
        %4329 = vmatpush1.msra.mxu0 %v4229
        %4330 = vmatprep.subr.mxu0 0.0
        %4331 = vmatpush1.msra.mxu0 %v4230
        %4332 = vmatprep.subr.mxu0 0.0
        %4333 = vmatpush1.msra.mxu0 %v4231
        %4334 = vmatprep.subr.mxu0 0.0
        %4335 = vmatpush1.msra.mxu0 %v4232
        %4336 = vmatprep.subr.mxu0 0.0
        %4337 = vmatpush1.msra.mxu0 %v4233
        %4338 = vmatprep.subr.mxu0 0.0
        %4339 = vmatpush1.msra.mxu0 %v4234
        %4340 = vmatprep.subr.mxu0 0.0
        %4341 = vmatpush1.msra.mxu0 %v4235
        %4342 = vmatprep.subr.mxu0 0.0
        %4343 = vmatpush1.msra.mxu0 %v4236
        %4344 = vmatprep.subr.mxu0 0.0
        %4345 = vmatpush1.msra.mxu0 %v4237
        %4346 = vmatprep.subr.mxu0 0.0
        %4347 = vmatpush1.msra.mxu0 %v4238
        %4348 = vmatprep.subr.mxu0 0.0
        %4349 = vmatpush1.msra.mxu0 %v4239
        %4350 = vmatprep.subr.mxu0 0.0
        %4351 = vmatpush1.msra.mxu0 %v4240
        %4352 = vmatprep.subr.mxu0 0.0
        %4353 = vmatpush1.msra.mxu0 %v4241
        %4354 = vmatprep.subr.mxu0 0.0
        %4355 = vmatpush1.msra.mxu0 %v4242
        %4356 = vmatprep.subr.mxu0 0.0
        %4357 = vmatpush1.msra.mxu0 %v4243
        %4358 = vmatprep.subr.mxu0 0.0
        %4359 = vmatpush1.msra.mxu0 %v4244
        %4360 = vmatprep.subr.mxu0 0.0
        %4361 = vmatpush1.msra.mxu0 %v4245
        %4362 = vmatprep.subr.mxu0 0.0
        %4363 = vmatpush1.msra.mxu0 %v4246
        %4364 = vmatprep.subr.mxu0 0.0
        %4365 = vmatpush1.msra.mxu0 %v4247
        %4366 = vmatprep.subr.mxu0 0.0
        %4367 = vmatpush1.msra.mxu0 %v4248
        %4368 = vmatprep.subr.mxu0 0.0
        %4369 = vmatpush1.msra.mxu0 %v4249
        %4370 = vmatprep.subr.mxu0 0.0
        %4371 = vmatpush1.msra.mxu0 0.0
        %4372 = vmatprep.subr.mxu0 0.0
        %4373 = vmatpush1.msra.mxu0 0.0
        %4374 = vmatprep.subr.mxu0 0.0
        %4375 = vmatpush1.msra.mxu0 0.0
        %4376 = vmatprep.subr.mxu0 0.0
        %4377 = vmatpush1.msra.mxu0 0.0
        %4378 = vmatprep.subr.mxu0 0.0
        %4379 = vmatpush1.msra.mxu0 0.0
        %4380 = vmatprep.subr.mxu0 0.0
        %4381 = vmatpush1.msra.mxu0 0.0
        %4382 = vmatprep.subr.mxu0 0.0
        %4383 = vmatpush1.msra.mxu0 0.0
        %4384 = vmatprep.subr.mxu0 0.0
        %4385 = vmatpush1.msra.mxu0 0.0
        %4386 = vmatprep.mubr.f32.mxu0 %v4299
        %4387 = vmatmul.mubr.f32.gmra.mrb[0].mxu0 %v4210
        %v4388 = vpop.f32.mrb[0].mxu0
        %v4389 = vadd.f32 %v4261, %v4388
        %v4390 = vpop.f32.mrb[0].mxu0
        %4391 = vmatprep.mubr.f32.mxu0 %v4302
        %4392 = vmatmul.mubr.f32.gmra.mrb[0].mxu0 %v4212
        %v4393 = vpop.f32.mrb[0].mxu0
        %v4394 = vadd.f32 %v4266, %v4393
        %v4395 = vpop.f32.mrb[0].mxu0
        %4396 = vmatprep.mubr.f32.mxu0 %v4305
        %4397 = vmatmul.mubr.f32.gmra.mrb[0].mxu0 %v4214
        %v4398 = vpop.f32.mrb[0].mxu0
        %v4399 = vadd.f32 %v4271, %v4398
        %v4400 = vpop.f32.mrb[0].mxu0
        %4401 = vmatprep.mubr.f32.mxu0 %v4308
        %4402 = vmatmul.mubr.f32.gmra.mrb[0].mxu0 %v4216
        %v4403 = vpop.f32.mrb[0].mxu0
        %v4404 = vadd.f32 %v4276, %v4403
        %v4405 = vpop.f32.mrb[0].mxu0
        %4406 = vmatprep.mubr.f32.mxu0 %v4311
        %4407 = vmatmul.mubr.f32.gmra.mrb[0].mxu0 %v4218
        %v4408 = vpop.f32.mrb[0].mxu0
        %v4409 = vadd.f32 %v4281, %v4408
        %v4410 = vpop.f32.mrb[0].mxu0
        %4411 = vmatprep.mubr.f32.mxu0 %v4314
        %4412 = vmatmul.mubr.f32.gmra.mrb[0].mxu0 %v4220
        %v4413 = vpop.f32.mrb[0].mxu0
        %v4414 = vadd.f32 %v4286, %v4413
        %v4415 = vpop.f32.mrb[0].mxu0
        %4416 = vmatprep.mubr.f32.mxu0 %v4317
        %4417 = vmatmul.mubr.f32.gmra.mrb[0].mxu0 %v4222
        %v4418 = vpop.f32.mrb[0].mxu0
        %v4419 = vadd.f32 %v4291, %v4418
        %v4420 = vpop.f32.mrb[0].mxu0
        %4421 = vmatprep.mubr.f32.mxu0 %v4320
        %4422 = vmatmul.mubr.f32.gmra.mrb[0].mxu0 %v4224
        %v4423 = vpop.f32.mrb[0].mxu0
        %v4424 = vadd.f32 %v4296, %v4423
        %v4425 = vpop.f32.mrb[0].mxu0
        %4426 = vdwg.mxu0
        %vm4427 = vcmp.ge.f32.partialorder %v4389, 0.0
        %vm4428 = vcmp.ge.f32.partialorder %v4394, 0.0
        %vm4429 = vcmp.ge.f32.partialorder %v4399, 0.0
        %vm4430 = vcmp.ge.f32.partialorder %v4404, 0.0
        %vm4431 = vcmp.ge.f32.partialorder %v4409, 0.0
        %vm4432 = vcmp.ge.f32.partialorder %v4414, 0.0
        %vm4433 = vcmp.ge.f32.partialorder %v4419, 0.0
        %vm4434 = vcmp.ge.f32.partialorder %v4424, 0.0
        %v4435 = vmul.f32 %v4389, 0.01
        %v4436 = vmul.f32 %v4394, 0.01
        %v4437 = vmul.f32 %v4399, 0.01
        %v4438 = vmul.f32 %v4404, 0.01
        %v4439 = vmul.f32 %v4409, 0.01
        %v4440 = vmul.f32 %v4414, 0.01
        %v4441 = vmul.f32 %v4419, 0.01
        %v4442 = vmul.f32 %v4424, 0.01
        %v4443 = vsel %vm4427, %v4389, %v4435
        %v4444 = vsel %vm4428, %v4394, %v4436
        %v4445 = vsel %vm4429, %v4399, %v4437
        %v4446 = vsel %vm4430, %v4404, %v4438
        %v4447 = vsel %vm4431, %v4409, %v4439
        %v4448 = vsel %vm4432, %v4414, %v4440
        %v4449 = vsel %vm4433, %v4419, %v4441
        %v4450 = vsel %vm4434, %v4424, %v4442
        %4451 = vst [vmem:[#allocation2 + $0x8] sm:$0xff] %v4443
        %4452 = vst [vmem:[#allocation2 + $0x20] sm:$0xff] %v4444
        %4453 = vst [vmem:[#allocation2 + $0x38] sm:$0xff] %v4445
        %4454 = vst [vmem:[#allocation2 + $0x50] sm:$0xff] %v4446
        %4455 = vst [vmem:[#allocation2 + $0x68] sm:$0xff] %v4447
        %4456 = vst [vmem:[#allocation2 + $0x80] sm:$0xff] %v4448
        %4457 = vst [vmem:[#allocation2 + $0x98] sm:$0xff] %v4449
        %4458 = vst [vmem:[#allocation2 + $0xb0] sm:$0xff] %v4450
        %v4459 = vld [vmem:[#allocation2] sm:$0xff]
        %v4460 = vld [vmem:[#allocation2 + $0x8] sm:$0xff]
        %v4461 = vld [vmem:[#allocation2 + $0x18] sm:$0xff]
        %v4462 = vld [vmem:[#allocation2 + $0x20] sm:$0xff]
        %v4463 = vld [vmem:[#allocation2 + $0x30] sm:$0xff]
        %v4464 = vld [vmem:[#allocation2 + $0x38] sm:$0xff]
        %v4465 = vld [vmem:[#allocation2 + $0x48] sm:$0xff]
        %v4466 = vld [vmem:[#allocation2 + $0x50] sm:$0xff]
        %v4467 = vld [vmem:[#allocation2 + $0x60] sm:$0xff]
        %v4468 = vld [vmem:[#allocation2 + $0x68] sm:$0xff]
        %v4469 = vld [vmem:[#allocation2 + $0x78] sm:$0xff]
        %v4470 = vld [vmem:[#allocation2 + $0x80] sm:$0xff]
        %v4471 = vld [vmem:[#allocation2 + $0x90] sm:$0xff]
        %v4472 = vld [vmem:[#allocation2 + $0x98] sm:$0xff]
        %v4473 = vld [vmem:[#allocation2 + $0xa8] sm:$0xff]
        %v4474 = vld [vmem:[#allocation2 + $0xb0] sm:$0xff]
        %4491 = vrot.lane.b32.xlu0 %v4459, 4
        %v4492 = vpop.permute.xlu0 %4491
        %4493 = vrot.lane.b32.xlu0 %v4460, 4
        %v4494 = vpop.permute.xlu0 %4493
        %4495 = vrot.lane.b32.xlu0 %v4461, 4
        %v4496 = vpop.permute.xlu0 %4495
        %4497 = vrot.lane.b32.xlu0 %v4462, 4
        %v4498 = vpop.permute.xlu0 %4497
        %4499 = vrot.lane.b32.xlu0 %v4463, 4
        %v4500 = vpop.permute.xlu0 %4499
        %4501 = vrot.lane.b32.xlu0 %v4464, 4
        %v4502 = vpop.permute.xlu0 %4501
        %4503 = vrot.lane.b32.xlu0 %v4465, 4
        %v4504 = vpop.permute.xlu0 %4503
        %4505 = vrot.lane.b32.xlu0 %v4466, 4
        %v4506 = vpop.permute.xlu0 %4505
        %4507 = vrot.lane.b32.xlu0 %v4467, 4
        %v4508 = vpop.permute.xlu0 %4507
        %4509 = vrot.lane.b32.xlu0 %v4468, 4
        %v4510 = vpop.permute.xlu0 %4509
        %4511 = vrot.lane.b32.xlu0 %v4469, 4
        %v4512 = vpop.permute.xlu0 %4511
        %4513 = vrot.lane.b32.xlu0 %v4470, 4
        %v4514 = vpop.permute.xlu0 %4513
        %4515 = vrot.lane.b32.xlu0 %v4471, 4
        %v4516 = vpop.permute.xlu0 %4515
        %4517 = vrot.lane.b32.xlu0 %v4472, 4
        %v4518 = vpop.permute.xlu0 %4517
        %4519 = vrot.lane.b32.xlu0 %v4473, 4
        %v4520 = vpop.permute.xlu0 %4519
        %4521 = vrot.lane.b32.xlu0 %v4474, 4
        %v4522 = vpop.permute.xlu0 %4521
        %v4523 = vsel %vm1657, %v4492, %v4494
        %v4524 = vsel %vm1657, %v4496, %v4498
        %v4525 = vsel %vm1657, %v4500, %v4502
        %v4526 = vsel %vm1657, %v4504, %v4506
        %v4527 = vsel %vm1657, %v4508, %v4510
        %v4528 = vsel %vm1657, %v4512, %v4514
        %v4529 = vsel %vm1657, %v4516, %v4518
        %v4530 = vsel %vm1657, %v4520, %v4522
        %4539 = vst [vmem:[#allocation3] sm:$0xff] %v4523
        %4540 = vst [vmem:[#allocation3 + $0x8] sm:$0xff] %v4524
        %4541 = vst [vmem:[#allocation3 + $0x10] sm:$0xff] %v4525
        %4542 = vst [vmem:[#allocation3 + $0x18] sm:$0xff] %v4526
        %4543 = vst [vmem:[#allocation3 + $0x20] sm:$0xff] %v4527
        %4544 = vst [vmem:[#allocation3 + $0x28] sm:$0xff] %v4528
        %4545 = vst [vmem:[#allocation3 + $0x30] sm:$0xff] %v4529
        %4546 = vst [vmem:[#allocation3 + $0x38] sm:$0xff] %v4530
        %v4547 = vld [vmem:[#allocation2 + $0x8] sm:$0xff]
        %v4548 = vld [vmem:[#allocation2 + $0x20] sm:$0xff]
        %v4549 = vld [vmem:[#allocation2 + $0x38] sm:$0xff]
        %v4550 = vld [vmem:[#allocation2 + $0x50] sm:$0xff]
        %v4551 = vld [vmem:[#allocation2 + $0x68] sm:$0xff]
        %v4552 = vld [vmem:[#allocation2 + $0x80] sm:$0xff]
        %v4553 = vld [vmem:[#allocation2 + $0x98] sm:$0xff]
        %v4554 = vld [vmem:[#allocation2 + $0xb0] sm:$0xff]
        %4555 = vst [vmem:[#allocation3 + $0x40] sm:$0xff] %v4547
        %4556 = vst [vmem:[#allocation3 + $0x48] sm:$0xff] %v4548
        %4557 = vst [vmem:[#allocation3 + $0x50] sm:$0xff] %v4549
        %4558 = vst [vmem:[#allocation3 + $0x58] sm:$0xff] %v4550
        %4559 = vst [vmem:[#allocation3 + $0x60] sm:$0xff] %v4551
        %4560 = vst [vmem:[#allocation3 + $0x68] sm:$0xff] %v4552
        %4561 = vst [vmem:[#allocation3 + $0x70] sm:$0xff] %v4553
        %4562 = vst [vmem:[#allocation3 + $0x78] sm:$0xff] %v4554
        %v4563 = vld [vmem:[#allocation2 + $0x8] sm:$0xff]
        %v4564 = vld [vmem:[#allocation2 + $0x10] sm:$0xff]
        %v4565 = vld [vmem:[#allocation2 + $0x20] sm:$0xff]
        %v4566 = vld [vmem:[#allocation2 + $0x28] sm:$0xff]
        %v4567 = vld [vmem:[#allocation2 + $0x38] sm:$0xff]
        %v4568 = vld [vmem:[#allocation2 + $0x40] sm:$0xff]
        %v4569 = vld [vmem:[#allocation2 + $0x50] sm:$0xff]
        %v4570 = vld [vmem:[#allocation2 + $0x58] sm:$0xff]
        %v4571 = vld [vmem:[#allocation2 + $0x68] sm:$0xff]
        %v4572 = vld [vmem:[#allocation2 + $0x70] sm:$0xff]
        %v4573 = vld [vmem:[#allocation2 + $0x80] sm:$0xff]
        %v4574 = vld [vmem:[#allocation2 + $0x88] sm:$0xff]
        %v4575 = vld [vmem:[#allocation2 + $0x98] sm:$0xff]
        %v4576 = vld [vmem:[#allocation2 + $0xa0] sm:$0xff]
        %v4577 = vld [vmem:[#allocation2 + $0xb0] sm:$0xff]
        %v4578 = vld [vmem:[#allocation2 + $0xb8] sm:$0xff]
        %4595 = vrot.lane.b32.xlu0 %v4563, 124
        %v4596 = vpop.permute.xlu0 %4595
        %4597 = vrot.lane.b32.xlu0 %v4564, 124
        %v4598 = vpop.permute.xlu0 %4597
        %4599 = vrot.lane.b32.xlu0 %v4565, 124
        %v4600 = vpop.permute.xlu0 %4599
        %4601 = vrot.lane.b32.xlu0 %v4566, 124
        %v4602 = vpop.permute.xlu0 %4601
        %4603 = vrot.lane.b32.xlu0 %v4567, 124
        %v4604 = vpop.permute.xlu0 %4603
        %4605 = vrot.lane.b32.xlu0 %v4568, 124
        %v4606 = vpop.permute.xlu0 %4605
        %4607 = vrot.lane.b32.xlu0 %v4569, 124
        %v4608 = vpop.permute.xlu0 %4607
        %4609 = vrot.lane.b32.xlu0 %v4570, 124
        %v4610 = vpop.permute.xlu0 %4609
        %4611 = vrot.lane.b32.xlu0 %v4571, 124
        %v4612 = vpop.permute.xlu0 %4611
        %4613 = vrot.lane.b32.xlu0 %v4572, 124
        %v4614 = vpop.permute.xlu0 %4613
        %4615 = vrot.lane.b32.xlu0 %v4573, 124
        %v4616 = vpop.permute.xlu0 %4615
        %4617 = vrot.lane.b32.xlu0 %v4574, 124
        %v4618 = vpop.permute.xlu0 %4617
        %4619 = vrot.lane.b32.xlu0 %v4575, 124
        %v4620 = vpop.permute.xlu0 %4619
        %4621 = vrot.lane.b32.xlu0 %v4576, 124
        %v4622 = vpop.permute.xlu0 %4621
        %4623 = vrot.lane.b32.xlu0 %v4577, 124
        %v4624 = vpop.permute.xlu0 %4623
        %4625 = vrot.lane.b32.xlu0 %v4578, 124
        %v4626 = vpop.permute.xlu0 %4625
        %v4627 = vsel %vm3138, %v4596, %v4598
        %v4628 = vsel %vm3138, %v4600, %v4602
        %v4629 = vsel %vm3138, %v4604, %v4606
        %v4630 = vsel %vm3138, %v4608, %v4610
        %v4631 = vsel %vm3138, %v4612, %v4614
        %v4632 = vsel %vm3138, %v4616, %v4618
        %v4633 = vsel %vm3138, %v4620, %v4622
        %v4634 = vsel %vm3138, %v4624, %v4626
        %4643 = vst [vmem:[#allocation3 + $0x80] sm:$0xff] %v4627
        %4644 = vst [vmem:[#allocation3 + $0x88] sm:$0xff] %v4628
        %4645 = vst [vmem:[#allocation3 + $0x90] sm:$0xff] %v4629
        %4646 = vst [vmem:[#allocation3 + $0x98] sm:$0xff] %v4630
        %4647 = vst [vmem:[#allocation3 + $0xa0] sm:$0xff] %v4631
        %4648 = vst [vmem:[#allocation3 + $0xa8] sm:$0xff] %v4632
        %4649 = vst [vmem:[#allocation3 + $0xb0] sm:$0xff] %v4633
        %4650 = vst [vmem:[#allocation3 + $0xb8] sm:$0xff] %v4634
        %v4651 = vld [vmem:[%s7] sm:$0xff]
        %v4652 = vld [vmem:[%s7 + $0x8] sm:$0xff]
        %v4653 = vld [vmem:[%s7 + $0x10] sm:$0xff]
        %v4654 = vld [vmem:[%s7 + $0x18] sm:$0xff]
        %v4655 = vld [vmem:[%s7 + $0x20] sm:$0xff]
        %v4656 = vld [vmem:[%s7 + $0x28] sm:$0xff]
        %v4657 = vld [vmem:[%s7 + $0x30] sm:$0xff]
        %v4658 = vld [vmem:[%s7 + $0x38] sm:$0xff]
        %v4659 = vld [vmem:[%s7 + $0x40] sm:$0xff]
        %v4660 = vld [vmem:[%s7 + $0x48] sm:$0xff]
        %v4661 = vld [vmem:[%s7 + $0x50] sm:$0xff]
        %v4662 = vld [vmem:[%s7 + $0x58] sm:$0xff]
        %v4663 = vld [vmem:[%s7 + $0x60] sm:$0xff]
        %v4664 = vld [vmem:[%s7 + $0x68] sm:$0xff]
        %v4665 = vld [vmem:[%s7 + $0x70] sm:$0xff]
        %v4666 = vld [vmem:[%s7 + $0x78] sm:$0xff]
        %v4667 = vld [vmem:[#allocation3] sm:$0xff]
        %v4668 = vld [vmem:[#allocation3 + $0x8] sm:$0xff]
        %v4669 = vld [vmem:[#allocation3 + $0x10] sm:$0xff]
        %v4670 = vld [vmem:[#allocation3 + $0x18] sm:$0xff]
        %v4671 = vld [vmem:[#allocation3 + $0x20] sm:$0xff]
        %v4672 = vld [vmem:[#allocation3 + $0x28] sm:$0xff]
        %v4673 = vld [vmem:[#allocation3 + $0x30] sm:$0xff]
        %v4674 = vld [vmem:[#allocation3 + $0x38] sm:$0xff]
        %v4675 = vld [vmem:[#allocation3 + $0x40] sm:$0xff]
        %v4676 = vld [vmem:[#allocation3 + $0x48] sm:$0xff]
        %v4677 = vld [vmem:[#allocation3 + $0x50] sm:$0xff]
        %v4678 = vld [vmem:[#allocation3 + $0x58] sm:$0xff]
        %v4679 = vld [vmem:[#allocation3 + $0x60] sm:$0xff]
        %v4680 = vld [vmem:[#allocation3 + $0x68] sm:$0xff]
        %v4681 = vld [vmem:[#allocation3 + $0x70] sm:$0xff]
        %v4682 = vld [vmem:[#allocation3 + $0x78] sm:$0xff]
        %v4683 = vld [vmem:[#allocation3 + $0x80] sm:$0xff]
        %v4684 = vld [vmem:[#allocation3 + $0x88] sm:$0xff]
        %v4685 = vld [vmem:[#allocation3 + $0x90] sm:$0xff]
        %v4686 = vld [vmem:[#allocation3 + $0x98] sm:$0xff]
        %v4687 = vld [vmem:[#allocation3 + $0xa0] sm:$0xff]
        %v4688 = vld [vmem:[#allocation3 + $0xa8] sm:$0xff]
        %v4689 = vld [vmem:[#allocation3 + $0xb0] sm:$0xff]
        %v4690 = vld [vmem:[#allocation3 + $0xb8] sm:$0xff]
        %v4691 = vld [vmem:[%s8] sm:$0xff]
        %v4692 = vld [vmem:[%s8 + $0x8] sm:$0xff]
        %v4693 = vld [vmem:[%s8 + $0x10] sm:$0xff]
        %v4694 = vld [vmem:[%s8 + $0x18] sm:$0xff]
        %v4695 = vld [vmem:[%s8 + $0x20] sm:$0xff]
        %v4696 = vld [vmem:[%s8 + $0x28] sm:$0xff]
        %v4697 = vld [vmem:[%s8 + $0x30] sm:$0xff]
        %v4698 = vld [vmem:[%s8 + $0x38] sm:$0xff]
        %4700 = vset.pattern.permute.xlu0 0
        %4701 = vperm.xlu0 %4700, %v4691
        %v4702 = vpop.permute.xlu0 %4701
        %4705 = vset.pattern.permute.xlu0 0
        %4706 = vperm.xlu0 %4705, %v4692
        %v4707 = vpop.permute.xlu0 %4706
        %4710 = vset.pattern.permute.xlu0 0
        %4711 = vperm.xlu0 %4710, %v4693
        %v4712 = vpop.permute.xlu0 %4711
        %4715 = vset.pattern.permute.xlu0 0
        %4716 = vperm.xlu0 %4715, %v4694
        %v4717 = vpop.permute.xlu0 %4716
        %4720 = vset.pattern.permute.xlu0 0
        %4721 = vperm.xlu0 %4720, %v4695
        %v4722 = vpop.permute.xlu0 %4721
        %4725 = vset.pattern.permute.xlu0 0
        %4726 = vperm.xlu0 %4725, %v4696
        %v4727 = vpop.permute.xlu0 %4726
        %4730 = vset.pattern.permute.xlu0 0
        %4731 = vperm.xlu0 %4730, %v4697
        %v4732 = vpop.permute.xlu0 %4731
        %4735 = vset.pattern.permute.xlu0 0
        %4736 = vperm.xlu0 %4735, %v4698
        %v4737 = vpop.permute.xlu0 %4736
        %v4740 = vsel %vm604, %v4652, 0
        %v4743 = vsel %vm604, %v4654, 0
        %v4746 = vsel %vm604, %v4656, 0
        %v4749 = vsel %vm604, %v4658, 0
        %v4752 = vsel %vm604, %v4660, 0
        %v4755 = vsel %vm604, %v4662, 0
        %v4758 = vsel %vm604, %v4664, 0
        %v4761 = vsel %vm604, %v4666, 0
        %4763 = vmatprep.subr.mxu0 0.0
        %4764 = vmatpush1.msra.mxu0 %v4667
        %4765 = vmatprep.subr.mxu0 0.0
        %4766 = vmatpush1.msra.mxu0 %v4668
        %4767 = vmatprep.subr.mxu0 0.0
        %4768 = vmatpush1.msra.mxu0 %v4669
        %4769 = vmatprep.subr.mxu0 0.0
        %4770 = vmatpush1.msra.mxu0 %v4670
        %4771 = vmatprep.subr.mxu0 0.0
        %4772 = vmatpush1.msra.mxu0 %v4671
        %4773 = vmatprep.subr.mxu0 0.0
        %4774 = vmatpush1.msra.mxu0 %v4672
        %4775 = vmatprep.subr.mxu0 0.0
        %4776 = vmatpush1.msra.mxu0 %v4673
        %4777 = vmatprep.subr.mxu0 0.0
        %4778 = vmatpush1.msra.mxu0 %v4674
        %4779 = vmatprep.subr.mxu0 0.0
        %4780 = vmatpush1.msra.mxu0 %v4675
        %4781 = vmatprep.subr.mxu0 0.0
        %4782 = vmatpush1.msra.mxu0 %v4676
        %4783 = vmatprep.subr.mxu0 0.0
        %4784 = vmatpush1.msra.mxu0 %v4677
        %4785 = vmatprep.subr.mxu0 0.0
        %4786 = vmatpush1.msra.mxu0 %v4678
        %4787 = vmatprep.subr.mxu0 0.0
        %4788 = vmatpush1.msra.mxu0 %v4679
        %4789 = vmatprep.subr.mxu0 0.0
        %4790 = vmatpush1.msra.mxu0 %v4680
        %4791 = vmatprep.subr.mxu0 0.0
        %4792 = vmatpush1.msra.mxu0 %v4681
        %4793 = vmatprep.subr.mxu0 0.0
        %4794 = vmatpush1.msra.mxu0 %v4682
        %4795 = vmatprep.subr.mxu0 0.0
        %4796 = vmatpush1.msra.mxu0 %v4683
        %4797 = vmatprep.subr.mxu0 0.0
        %4798 = vmatpush1.msra.mxu0 %v4684
        %4799 = vmatprep.subr.mxu0 0.0
        %4800 = vmatpush1.msra.mxu0 %v4685
        %4801 = vmatprep.subr.mxu0 0.0
        %4802 = vmatpush1.msra.mxu0 %v4686
        %4803 = vmatprep.subr.mxu0 0.0
        %4804 = vmatpush1.msra.mxu0 %v4687
        %4805 = vmatprep.subr.mxu0 0.0
        %4806 = vmatpush1.msra.mxu0 %v4688
        %4807 = vmatprep.subr.mxu0 0.0
        %4808 = vmatpush1.msra.mxu0 %v4689
        %4809 = vmatprep.subr.mxu0 0.0
        %4810 = vmatpush1.msra.mxu0 %v4690
        %4811 = vmatprep.subr.mxu0 0.0
        %4812 = vmatpush1.msra.mxu0 0.0
        %4813 = vmatprep.subr.mxu0 0.0
        %4814 = vmatpush1.msra.mxu0 0.0
        %4815 = vmatprep.subr.mxu0 0.0
        %4816 = vmatpush1.msra.mxu0 0.0
        %4817 = vmatprep.subr.mxu0 0.0
        %4818 = vmatpush1.msra.mxu0 0.0
        %4819 = vmatprep.subr.mxu0 0.0
        %4820 = vmatpush1.msra.mxu0 0.0
        %4821 = vmatprep.subr.mxu0 0.0
        %4822 = vmatpush1.msra.mxu0 0.0
        %4823 = vmatprep.subr.mxu0 0.0
        %4824 = vmatpush1.msra.mxu0 0.0
        %4825 = vmatprep.subr.mxu0 0.0
        %4826 = vmatpush1.msra.mxu0 0.0
        %4827 = vmatprep.mubr.f32.mxu0 %v4740
        %4828 = vmatmul.mubr.f32.gmra.mrb[0].mxu0 %v4651
        %v4829 = vpop.f32.mrb[0].mxu0
        %v4830 = vadd.f32 %v4702, %v4829
        %v4831 = vpop.f32.mrb[0].mxu0
        %4832 = vmatprep.mubr.f32.mxu0 %v4743
        %4833 = vmatmul.mubr.f32.gmra.mrb[0].mxu0 %v4653
        %v4834 = vpop.f32.mrb[0].mxu0
        %v4835 = vadd.f32 %v4707, %v4834
        %v4836 = vpop.f32.mrb[0].mxu0
        %4837 = vmatprep.mubr.f32.mxu0 %v4746
        %4838 = vmatmul.mubr.f32.gmra.mrb[0].mxu0 %v4655
        %v4839 = vpop.f32.mrb[0].mxu0
        %v4840 = vadd.f32 %v4712, %v4839
        %v4841 = vpop.f32.mrb[0].mxu0
        %4842 = vmatprep.mubr.f32.mxu0 %v4749
        %4843 = vmatmul.mubr.f32.gmra.mrb[0].mxu0 %v4657
        %v4844 = vpop.f32.mrb[0].mxu0
        %v4845 = vadd.f32 %v4717, %v4844
        %v4846 = vpop.f32.mrb[0].mxu0
        %4847 = vmatprep.mubr.f32.mxu0 %v4752
        %4848 = vmatmul.mubr.f32.gmra.mrb[0].mxu0 %v4659
        %v4849 = vpop.f32.mrb[0].mxu0
        %v4850 = vadd.f32 %v4722, %v4849
        %v4851 = vpop.f32.mrb[0].mxu0
        %4852 = vmatprep.mubr.f32.mxu0 %v4755
        %4853 = vmatmul.mubr.f32.gmra.mrb[0].mxu0 %v4661
        %v4854 = vpop.f32.mrb[0].mxu0
        %v4855 = vadd.f32 %v4727, %v4854
        %v4856 = vpop.f32.mrb[0].mxu0
        %4857 = vmatprep.mubr.f32.mxu0 %v4758
        %4858 = vmatmul.mubr.f32.gmra.mrb[0].mxu0 %v4663
        %v4859 = vpop.f32.mrb[0].mxu0
        %v4860 = vadd.f32 %v4732, %v4859
        %v4861 = vpop.f32.mrb[0].mxu0
        %4862 = vmatprep.mubr.f32.mxu0 %v4761
        %4863 = vmatmul.mubr.f32.gmra.mrb[0].mxu0 %v4665
        %v4864 = vpop.f32.mrb[0].mxu0
        %v4865 = vadd.f32 %v4737, %v4864
        %v4866 = vpop.f32.mrb[0].mxu0
        %4867 = vdwg.mxu0
        %v4868 = vadd.f32 %v4830, %v4002
        %v4869 = vadd.f32 %v4835, %v4003
        %v4870 = vadd.f32 %v4840, %v4004
        %v4871 = vadd.f32 %v4845, %v4005
        %v4872 = vadd.f32 %v4850, %v4006
        %v4873 = vadd.f32 %v4855, %v4007
        %v4874 = vadd.f32 %v4860, %v4008
        %v4875 = vadd.f32 %v4865, %v4009
        %vm4876 = vcmp.ge.f32.partialorder %v4868, 0.0
        %vm4877 = vcmp.ge.f32.partialorder %v4869, 0.0
        %vm4878 = vcmp.ge.f32.partialorder %v4870, 0.0
        %vm4879 = vcmp.ge.f32.partialorder %v4871, 0.0
        %vm4880 = vcmp.ge.f32.partialorder %v4872, 0.0
        %vm4881 = vcmp.ge.f32.partialorder %v4873, 0.0
        %vm4882 = vcmp.ge.f32.partialorder %v4874, 0.0
        %vm4883 = vcmp.ge.f32.partialorder %v4875, 0.0
        %v4884 = vmul.f32 %v4868, 0.01
        %v4885 = vmul.f32 %v4869, 0.01
        %v4886 = vmul.f32 %v4870, 0.01
        %v4887 = vmul.f32 %v4871, 0.01
        %v4888 = vmul.f32 %v4872, 0.01
        %v4889 = vmul.f32 %v4873, 0.01
        %v4890 = vmul.f32 %v4874, 0.01
        %v4891 = vmul.f32 %v4875, 0.01
        %v4892 = vsel %vm4876, %v4868, %v4884
        %v4893 = vsel %vm4877, %v4869, %v4885
        %v4894 = vsel %vm4878, %v4870, %v4886
        %v4895 = vsel %vm4879, %v4871, %v4887
        %v4896 = vsel %vm4880, %v4872, %v4888
        %v4897 = vsel %vm4881, %v4873, %v4889
        %v4898 = vsel %vm4882, %v4874, %v4890
        %v4899 = vsel %vm4883, %v4875, %v4891
        %4900 = vst [vmem:[#allocation2 + $0x8] sm:$0xff] %v4892
        %4901 = vst [vmem:[#allocation2 + $0x20] sm:$0xff] %v4893
        %4902 = vst [vmem:[#allocation2 + $0x38] sm:$0xff] %v4894
        %4903 = vst [vmem:[#allocation2 + $0x50] sm:$0xff] %v4895
        %4904 = vst [vmem:[#allocation2 + $0x68] sm:$0xff] %v4896
        %4905 = vst [vmem:[#allocation2 + $0x80] sm:$0xff] %v4897
        %4906 = vst [vmem:[#allocation2 + $0x98] sm:$0xff] %v4898
        %4907 = vst [vmem:[#allocation2 + $0xb0] sm:$0xff] %v4899
        %v4908 = vld [vmem:[#allocation2] sm:$0xff]
        %v4909 = vld [vmem:[#allocation2 + $0x8] sm:$0xff]
        %v4910 = vld [vmem:[#allocation2 + $0x18] sm:$0xff]
        %v4911 = vld [vmem:[#allocation2 + $0x20] sm:$0xff]
        %v4912 = vld [vmem:[#allocation2 + $0x30] sm:$0xff]
        %v4913 = vld [vmem:[#allocation2 + $0x38] sm:$0xff]
        %v4914 = vld [vmem:[#allocation2 + $0x48] sm:$0xff]
        %v4915 = vld [vmem:[#allocation2 + $0x50] sm:$0xff]
        %v4916 = vld [vmem:[#allocation2 + $0x60] sm:$0xff]
        %v4917 = vld [vmem:[#allocation2 + $0x68] sm:$0xff]
        %v4918 = vld [vmem:[#allocation2 + $0x78] sm:$0xff]
        %v4919 = vld [vmem:[#allocation2 + $0x80] sm:$0xff]
        %v4920 = vld [vmem:[#allocation2 + $0x90] sm:$0xff]
        %v4921 = vld [vmem:[#allocation2 + $0x98] sm:$0xff]
        %v4922 = vld [vmem:[#allocation2 + $0xa8] sm:$0xff]
        %v4923 = vld [vmem:[#allocation2 + $0xb0] sm:$0xff]
        %4940 = vrot.lane.b32.xlu0 %v4908, 12
        %v4941 = vpop.permute.xlu0 %4940
        %4942 = vrot.lane.b32.xlu0 %v4909, 12
        %v4943 = vpop.permute.xlu0 %4942
        %4944 = vrot.lane.b32.xlu0 %v4910, 12
        %v4945 = vpop.permute.xlu0 %4944
        %4946 = vrot.lane.b32.xlu0 %v4911, 12
        %v4947 = vpop.permute.xlu0 %4946
        %4948 = vrot.lane.b32.xlu0 %v4912, 12
        %v4949 = vpop.permute.xlu0 %4948
        %4950 = vrot.lane.b32.xlu0 %v4913, 12
        %v4951 = vpop.permute.xlu0 %4950
        %4952 = vrot.lane.b32.xlu0 %v4914, 12
        %v4953 = vpop.permute.xlu0 %4952
        %4954 = vrot.lane.b32.xlu0 %v4915, 12
        %v4955 = vpop.permute.xlu0 %4954
        %4956 = vrot.lane.b32.xlu0 %v4916, 12
        %v4957 = vpop.permute.xlu0 %4956
        %4958 = vrot.lane.b32.xlu0 %v4917, 12
        %v4959 = vpop.permute.xlu0 %4958
        %4960 = vrot.lane.b32.xlu0 %v4918, 12
        %v4961 = vpop.permute.xlu0 %4960
        %4962 = vrot.lane.b32.xlu0 %v4919, 12
        %v4963 = vpop.permute.xlu0 %4962
        %4964 = vrot.lane.b32.xlu0 %v4920, 12
        %v4965 = vpop.permute.xlu0 %4964
        %4966 = vrot.lane.b32.xlu0 %v4921, 12
        %v4967 = vpop.permute.xlu0 %4966
        %4968 = vrot.lane.b32.xlu0 %v4922, 12
        %v4969 = vpop.permute.xlu0 %4968
        %4970 = vrot.lane.b32.xlu0 %v4923, 12
        %v4971 = vpop.permute.xlu0 %4970
        %v4972 = vsel %vm2598, %v4941, %v4943
        %v4973 = vsel %vm2598, %v4945, %v4947
        %v4974 = vsel %vm2598, %v4949, %v4951
        %v4975 = vsel %vm2598, %v4953, %v4955
        %v4976 = vsel %vm2598, %v4957, %v4959
        %v4977 = vsel %vm2598, %v4961, %v4963
        %v4978 = vsel %vm2598, %v4965, %v4967
        %v4979 = vsel %vm2598, %v4969, %v4971
        %4988 = vst [vmem:[#allocation3] sm:$0xff] %v4972
        %4989 = vst [vmem:[#allocation3 + $0x8] sm:$0xff] %v4973
        %4990 = vst [vmem:[#allocation3 + $0x10] sm:$0xff] %v4974
        %4991 = vst [vmem:[#allocation3 + $0x18] sm:$0xff] %v4975
        %4992 = vst [vmem:[#allocation3 + $0x20] sm:$0xff] %v4976
        %4993 = vst [vmem:[#allocation3 + $0x28] sm:$0xff] %v4977
        %4994 = vst [vmem:[#allocation3 + $0x30] sm:$0xff] %v4978
        %4995 = vst [vmem:[#allocation3 + $0x38] sm:$0xff] %v4979
        %v4996 = vld [vmem:[#allocation2 + $0x8] sm:$0xff]
        %v4997 = vld [vmem:[#allocation2 + $0x20] sm:$0xff]
        %v4998 = vld [vmem:[#allocation2 + $0x38] sm:$0xff]
        %v4999 = vld [vmem:[#allocation2 + $0x50] sm:$0xff]
        %v5000 = vld [vmem:[#allocation2 + $0x68] sm:$0xff]
        %v5001 = vld [vmem:[#allocation2 + $0x80] sm:$0xff]
        %v5002 = vld [vmem:[#allocation2 + $0x98] sm:$0xff]
        %v5003 = vld [vmem:[#allocation2 + $0xb0] sm:$0xff]
        %5004 = vst [vmem:[#allocation3 + $0x40] sm:$0xff] %v4996
        %5005 = vst [vmem:[#allocation3 + $0x48] sm:$0xff] %v4997
        %5006 = vst [vmem:[#allocation3 + $0x50] sm:$0xff] %v4998
        %5007 = vst [vmem:[#allocation3 + $0x58] sm:$0xff] %v4999
        %5008 = vst [vmem:[#allocation3 + $0x60] sm:$0xff] %v5000
        %5009 = vst [vmem:[#allocation3 + $0x68] sm:$0xff] %v5001
        %5010 = vst [vmem:[#allocation3 + $0x70] sm:$0xff] %v5002
        %5011 = vst [vmem:[#allocation3 + $0x78] sm:$0xff] %v5003
        %v5012 = vld [vmem:[#allocation2 + $0x8] sm:$0xff]
        %v5013 = vld [vmem:[#allocation2 + $0x10] sm:$0xff]
        %v5014 = vld [vmem:[#allocation2 + $0x20] sm:$0xff]
        %v5015 = vld [vmem:[#allocation2 + $0x28] sm:$0xff]
        %v5016 = vld [vmem:[#allocation2 + $0x38] sm:$0xff]
        %v5017 = vld [vmem:[#allocation2 + $0x40] sm:$0xff]
        %v5018 = vld [vmem:[#allocation2 + $0x50] sm:$0xff]
        %v5019 = vld [vmem:[#allocation2 + $0x58] sm:$0xff]
        %v5020 = vld [vmem:[#allocation2 + $0x68] sm:$0xff]
        %v5021 = vld [vmem:[#allocation2 + $0x70] sm:$0xff]
        %v5022 = vld [vmem:[#allocation2 + $0x80] sm:$0xff]
        %v5023 = vld [vmem:[#allocation2 + $0x88] sm:$0xff]
        %v5024 = vld [vmem:[#allocation2 + $0x98] sm:$0xff]
        %v5025 = vld [vmem:[#allocation2 + $0xa0] sm:$0xff]
        %v5026 = vld [vmem:[#allocation2 + $0xb0] sm:$0xff]
        %v5027 = vld [vmem:[#allocation2 + $0xb8] sm:$0xff]
        %5044 = vrot.lane.b32.xlu0 %v5012, 116
        %v5045 = vpop.permute.xlu0 %5044
        %5046 = vrot.lane.b32.xlu0 %v5013, 116
        %v5047 = vpop.permute.xlu0 %5046
        %5048 = vrot.lane.b32.xlu0 %v5014, 116
        %v5049 = vpop.permute.xlu0 %5048
        %5050 = vrot.lane.b32.xlu0 %v5015, 116
        %v5051 = vpop.permute.xlu0 %5050
        %5052 = vrot.lane.b32.xlu0 %v5016, 116
        %v5053 = vpop.permute.xlu0 %5052
        %5054 = vrot.lane.b32.xlu0 %v5017, 116
        %v5055 = vpop.permute.xlu0 %5054
        %5056 = vrot.lane.b32.xlu0 %v5018, 116
        %v5057 = vpop.permute.xlu0 %5056
        %5058 = vrot.lane.b32.xlu0 %v5019, 116
        %v5059 = vpop.permute.xlu0 %5058
        %5060 = vrot.lane.b32.xlu0 %v5020, 116
        %v5061 = vpop.permute.xlu0 %5060
        %5062 = vrot.lane.b32.xlu0 %v5021, 116
        %v5063 = vpop.permute.xlu0 %5062
        %5064 = vrot.lane.b32.xlu0 %v5022, 116
        %v5065 = vpop.permute.xlu0 %5064
        %5066 = vrot.lane.b32.xlu0 %v5023, 116
        %v5067 = vpop.permute.xlu0 %5066
        %5068 = vrot.lane.b32.xlu0 %v5024, 116
        %v5069 = vpop.permute.xlu0 %5068
        %5070 = vrot.lane.b32.xlu0 %v5025, 116
        %v5071 = vpop.permute.xlu0 %5070
        %5072 = vrot.lane.b32.xlu0 %v5026, 116
        %v5073 = vpop.permute.xlu0 %5072
        %5074 = vrot.lane.b32.xlu0 %v5027, 116
        %v5075 = vpop.permute.xlu0 %5074
        %v5076 = vsel %vm3477, %v5045, %v5047
        %v5077 = vsel %vm3477, %v5049, %v5051
        %v5078 = vsel %vm3477, %v5053, %v5055
        %v5079 = vsel %vm3477, %v5057, %v5059
        %v5080 = vsel %vm3477, %v5061, %v5063
        %v5081 = vsel %vm3477, %v5065, %v5067
        %v5082 = vsel %vm3477, %v5069, %v5071
        %v5083 = vsel %vm3477, %v5073, %v5075
        %5092 = vst [vmem:[#allocation3 + $0x80] sm:$0xff] %v5076
        %5093 = vst [vmem:[#allocation3 + $0x88] sm:$0xff] %v5077
        %5094 = vst [vmem:[#allocation3 + $0x90] sm:$0xff] %v5078
        %5095 = vst [vmem:[#allocation3 + $0x98] sm:$0xff] %v5079
        %5096 = vst [vmem:[#allocation3 + $0xa0] sm:$0xff] %v5080
        %5097 = vst [vmem:[#allocation3 + $0xa8] sm:$0xff] %v5081
        %5098 = vst [vmem:[#allocation3 + $0xb0] sm:$0xff] %v5082
        %5099 = vst [vmem:[#allocation3 + $0xb8] sm:$0xff] %v5083
        %v5100 = vld [vmem:[%s9] sm:$0xff]
        %v5101 = vld [vmem:[%s9 + $0x8] sm:$0xff]
        %v5102 = vld [vmem:[%s9 + $0x10] sm:$0xff]
        %v5103 = vld [vmem:[%s9 + $0x18] sm:$0xff]
        %v5104 = vld [vmem:[%s9 + $0x20] sm:$0xff]
        %v5105 = vld [vmem:[%s9 + $0x28] sm:$0xff]
        %v5106 = vld [vmem:[%s9 + $0x30] sm:$0xff]
        %v5107 = vld [vmem:[%s9 + $0x38] sm:$0xff]
        %v5108 = vld [vmem:[%s9 + $0x40] sm:$0xff]
        %v5109 = vld [vmem:[%s9 + $0x48] sm:$0xff]
        %v5110 = vld [vmem:[%s9 + $0x50] sm:$0xff]
        %v5111 = vld [vmem:[%s9 + $0x58] sm:$0xff]
        %v5112 = vld [vmem:[%s9 + $0x60] sm:$0xff]
        %v5113 = vld [vmem:[%s9 + $0x68] sm:$0xff]
        %v5114 = vld [vmem:[%s9 + $0x70] sm:$0xff]
        %v5115 = vld [vmem:[%s9 + $0x78] sm:$0xff]
        %v5116 = vld [vmem:[#allocation3] sm:$0xff]
        %v5117 = vld [vmem:[#allocation3 + $0x8] sm:$0xff]
        %v5118 = vld [vmem:[#allocation3 + $0x10] sm:$0xff]
        %v5119 = vld [vmem:[#allocation3 + $0x18] sm:$0xff]
        %v5120 = vld [vmem:[#allocation3 + $0x20] sm:$0xff]
        %v5121 = vld [vmem:[#allocation3 + $0x28] sm:$0xff]
        %v5122 = vld [vmem:[#allocation3 + $0x30] sm:$0xff]
        %v5123 = vld [vmem:[#allocation3 + $0x38] sm:$0xff]
        %v5124 = vld [vmem:[#allocation3 + $0x40] sm:$0xff]
        %v5125 = vld [vmem:[#allocation3 + $0x48] sm:$0xff]
        %v5126 = vld [vmem:[#allocation3 + $0x50] sm:$0xff]
        %v5127 = vld [vmem:[#allocation3 + $0x58] sm:$0xff]
        %v5128 = vld [vmem:[#allocation3 + $0x60] sm:$0xff]
        %v5129 = vld [vmem:[#allocation3 + $0x68] sm:$0xff]
        %v5130 = vld [vmem:[#allocation3 + $0x70] sm:$0xff]
        %v5131 = vld [vmem:[#allocation3 + $0x78] sm:$0xff]
        %v5132 = vld [vmem:[#allocation3 + $0x80] sm:$0xff]
        %v5133 = vld [vmem:[#allocation3 + $0x88] sm:$0xff]
        %v5134 = vld [vmem:[#allocation3 + $0x90] sm:$0xff]
        %v5135 = vld [vmem:[#allocation3 + $0x98] sm:$0xff]
        %v5136 = vld [vmem:[#allocation3 + $0xa0] sm:$0xff]
        %v5137 = vld [vmem:[#allocation3 + $0xa8] sm:$0xff]
        %v5138 = vld [vmem:[#allocation3 + $0xb0] sm:$0xff]
        %v5139 = vld [vmem:[#allocation3 + $0xb8] sm:$0xff]
        %v5140 = vld [vmem:[%s10] sm:$0xff]
        %v5141 = vld [vmem:[%s10 + $0x8] sm:$0xff]
        %v5142 = vld [vmem:[%s10 + $0x10] sm:$0xff]
        %v5143 = vld [vmem:[%s10 + $0x18] sm:$0xff]
        %v5144 = vld [vmem:[%s10 + $0x20] sm:$0xff]
        %v5145 = vld [vmem:[%s10 + $0x28] sm:$0xff]
        %v5146 = vld [vmem:[%s10 + $0x30] sm:$0xff]
        %v5147 = vld [vmem:[%s10 + $0x38] sm:$0xff]
        %5149 = vset.pattern.permute.xlu0 0
        %5150 = vperm.xlu0 %5149, %v5140
        %v5151 = vpop.permute.xlu0 %5150
        %5154 = vset.pattern.permute.xlu0 0
        %5155 = vperm.xlu0 %5154, %v5141
        %v5156 = vpop.permute.xlu0 %5155
        %5159 = vset.pattern.permute.xlu0 0
        %5160 = vperm.xlu0 %5159, %v5142
        %v5161 = vpop.permute.xlu0 %5160
        %5164 = vset.pattern.permute.xlu0 0
        %5165 = vperm.xlu0 %5164, %v5143
        %v5166 = vpop.permute.xlu0 %5165
        %5169 = vset.pattern.permute.xlu0 0
        %5170 = vperm.xlu0 %5169, %v5144
        %v5171 = vpop.permute.xlu0 %5170
        %5174 = vset.pattern.permute.xlu0 0
        %5175 = vperm.xlu0 %5174, %v5145
        %v5176 = vpop.permute.xlu0 %5175
        %5179 = vset.pattern.permute.xlu0 0
        %5180 = vperm.xlu0 %5179, %v5146
        %v5181 = vpop.permute.xlu0 %5180
        %5184 = vset.pattern.permute.xlu0 0
        %5185 = vperm.xlu0 %5184, %v5147
        %v5186 = vpop.permute.xlu0 %5185
        %v5189 = vsel %vm604, %v5101, 0
        %v5192 = vsel %vm604, %v5103, 0
        %v5195 = vsel %vm604, %v5105, 0
        %v5198 = vsel %vm604, %v5107, 0
        %v5201 = vsel %vm604, %v5109, 0
        %v5204 = vsel %vm604, %v5111, 0
        %v5207 = vsel %vm604, %v5113, 0
        %v5210 = vsel %vm604, %v5115, 0
        %5212 = vmatprep.subr.mxu0 0.0
        %5213 = vmatpush1.msra.mxu0 %v5116
        %5214 = vmatprep.subr.mxu0 0.0
        %5215 = vmatpush1.msra.mxu0 %v5117
        %5216 = vmatprep.subr.mxu0 0.0
        %5217 = vmatpush1.msra.mxu0 %v5118
        %5218 = vmatprep.subr.mxu0 0.0
        %5219 = vmatpush1.msra.mxu0 %v5119
        %5220 = vmatprep.subr.mxu0 0.0
        %5221 = vmatpush1.msra.mxu0 %v5120
        %5222 = vmatprep.subr.mxu0 0.0
        %5223 = vmatpush1.msra.mxu0 %v5121
        %5224 = vmatprep.subr.mxu0 0.0
        %5225 = vmatpush1.msra.mxu0 %v5122
        %5226 = vmatprep.subr.mxu0 0.0
        %5227 = vmatpush1.msra.mxu0 %v5123
        %5228 = vmatprep.subr.mxu0 0.0
        %5229 = vmatpush1.msra.mxu0 %v5124
        %5230 = vmatprep.subr.mxu0 0.0
        %5231 = vmatpush1.msra.mxu0 %v5125
        %5232 = vmatprep.subr.mxu0 0.0
        %5233 = vmatpush1.msra.mxu0 %v5126
        %5234 = vmatprep.subr.mxu0 0.0
        %5235 = vmatpush1.msra.mxu0 %v5127
        %5236 = vmatprep.subr.mxu0 0.0
        %5237 = vmatpush1.msra.mxu0 %v5128
        %5238 = vmatprep.subr.mxu0 0.0
        %5239 = vmatpush1.msra.mxu0 %v5129
        %5240 = vmatprep.subr.mxu0 0.0
        %5241 = vmatpush1.msra.mxu0 %v5130
        %5242 = vmatprep.subr.mxu0 0.0
        %5243 = vmatpush1.msra.mxu0 %v5131
        %5244 = vmatprep.subr.mxu0 0.0
        %5245 = vmatpush1.msra.mxu0 %v5132
        %5246 = vmatprep.subr.mxu0 0.0
        %5247 = vmatpush1.msra.mxu0 %v5133
        %5248 = vmatprep.subr.mxu0 0.0
        %5249 = vmatpush1.msra.mxu0 %v5134
        %5250 = vmatprep.subr.mxu0 0.0
        %5251 = vmatpush1.msra.mxu0 %v5135
        %5252 = vmatprep.subr.mxu0 0.0
        %5253 = vmatpush1.msra.mxu0 %v5136
        %5254 = vmatprep.subr.mxu0 0.0
        %5255 = vmatpush1.msra.mxu0 %v5137
        %5256 = vmatprep.subr.mxu0 0.0
        %5257 = vmatpush1.msra.mxu0 %v5138
        %5258 = vmatprep.subr.mxu0 0.0
        %5259 = vmatpush1.msra.mxu0 %v5139
        %5260 = vmatprep.subr.mxu0 0.0
        %5261 = vmatpush1.msra.mxu0 0.0
        %5262 = vmatprep.subr.mxu0 0.0
        %5263 = vmatpush1.msra.mxu0 0.0
        %5264 = vmatprep.subr.mxu0 0.0
        %5265 = vmatpush1.msra.mxu0 0.0
        %5266 = vmatprep.subr.mxu0 0.0
        %5267 = vmatpush1.msra.mxu0 0.0
        %5268 = vmatprep.subr.mxu0 0.0
        %5269 = vmatpush1.msra.mxu0 0.0
        %5270 = vmatprep.subr.mxu0 0.0
        %5271 = vmatpush1.msra.mxu0 0.0
        %5272 = vmatprep.subr.mxu0 0.0
        %5273 = vmatpush1.msra.mxu0 0.0
        %5274 = vmatprep.subr.mxu0 0.0
        %5275 = vmatpush1.msra.mxu0 0.0
        %5276 = vmatprep.mubr.f32.mxu0 %v5189
        %5277 = vmatmul.mubr.f32.gmra.mrb[0].mxu0 %v5100
        %v5278 = vpop.f32.mrb[0].mxu0
        %v5279 = vadd.f32 %v5151, %v5278
        %v5280 = vpop.f32.mrb[0].mxu0
        %5281 = vmatprep.mubr.f32.mxu0 %v5192
        %5282 = vmatmul.mubr.f32.gmra.mrb[0].mxu0 %v5102
        %v5283 = vpop.f32.mrb[0].mxu0
        %v5284 = vadd.f32 %v5156, %v5283
        %v5285 = vpop.f32.mrb[0].mxu0
        %5286 = vmatprep.mubr.f32.mxu0 %v5195
        %5287 = vmatmul.mubr.f32.gmra.mrb[0].mxu0 %v5104
        %v5288 = vpop.f32.mrb[0].mxu0
        %v5289 = vadd.f32 %v5161, %v5288
        %v5290 = vpop.f32.mrb[0].mxu0
        %5291 = vmatprep.mubr.f32.mxu0 %v5198
        %5292 = vmatmul.mubr.f32.gmra.mrb[0].mxu0 %v5106
        %v5293 = vpop.f32.mrb[0].mxu0
        %v5294 = vadd.f32 %v5166, %v5293
        %v5295 = vpop.f32.mrb[0].mxu0
        %5296 = vmatprep.mubr.f32.mxu0 %v5201
        %5297 = vmatmul.mubr.f32.gmra.mrb[0].mxu0 %v5108
        %v5298 = vpop.f32.mrb[0].mxu0
        %v5299 = vadd.f32 %v5171, %v5298
        %v5300 = vpop.f32.mrb[0].mxu0
        %5301 = vmatprep.mubr.f32.mxu0 %v5204
        %5302 = vmatmul.mubr.f32.gmra.mrb[0].mxu0 %v5110
        %v5303 = vpop.f32.mrb[0].mxu0
        %v5304 = vadd.f32 %v5176, %v5303
        %v5305 = vpop.f32.mrb[0].mxu0
        %5306 = vmatprep.mubr.f32.mxu0 %v5207
        %5307 = vmatmul.mubr.f32.gmra.mrb[0].mxu0 %v5112
        %v5308 = vpop.f32.mrb[0].mxu0
        %v5309 = vadd.f32 %v5181, %v5308
        %v5310 = vpop.f32.mrb[0].mxu0
        %5311 = vmatprep.mubr.f32.mxu0 %v5210
        %5312 = vmatmul.mubr.f32.gmra.mrb[0].mxu0 %v5114
        %v5313 = vpop.f32.mrb[0].mxu0
        %v5314 = vadd.f32 %v5186, %v5313
        %v5315 = vpop.f32.mrb[0].mxu0
        %5316 = vdwg.mxu0
        %vm5317 = vcmp.ge.f32.partialorder %v5279, 0.0
        %vm5318 = vcmp.ge.f32.partialorder %v5284, 0.0
        %vm5319 = vcmp.ge.f32.partialorder %v5289, 0.0
        %vm5320 = vcmp.ge.f32.partialorder %v5294, 0.0
        %vm5321 = vcmp.ge.f32.partialorder %v5299, 0.0
        %vm5322 = vcmp.ge.f32.partialorder %v5304, 0.0
        %vm5323 = vcmp.ge.f32.partialorder %v5309, 0.0
        %vm5324 = vcmp.ge.f32.partialorder %v5314, 0.0
        %v5325 = vmul.f32 %v5279, 0.01
        %v5326 = vmul.f32 %v5284, 0.01
        %v5327 = vmul.f32 %v5289, 0.01
        %v5328 = vmul.f32 %v5294, 0.01
        %v5329 = vmul.f32 %v5299, 0.01
        %v5330 = vmul.f32 %v5304, 0.01
        %v5331 = vmul.f32 %v5309, 0.01
        %v5332 = vmul.f32 %v5314, 0.01
        %v5333 = vsel %vm5317, %v5279, %v5325
        %v5334 = vsel %vm5318, %v5284, %v5326
        %v5335 = vsel %vm5319, %v5289, %v5327
        %v5336 = vsel %vm5320, %v5294, %v5328
        %v5337 = vsel %vm5321, %v5299, %v5329
        %v5338 = vsel %vm5322, %v5304, %v5330
        %v5339 = vsel %vm5323, %v5309, %v5331
        %v5340 = vsel %vm5324, %v5314, %v5332
        %5341 = vst [vmem:[#allocation2 + $0x8] sm:$0xff] %v5333
        %5342 = vst [vmem:[#allocation2 + $0x20] sm:$0xff] %v5334
        %5343 = vst [vmem:[#allocation2 + $0x38] sm:$0xff] %v5335
        %5344 = vst [vmem:[#allocation2 + $0x50] sm:$0xff] %v5336
        %5345 = vst [vmem:[#allocation2 + $0x68] sm:$0xff] %v5337
        %5346 = vst [vmem:[#allocation2 + $0x80] sm:$0xff] %v5338
        %5347 = vst [vmem:[#allocation2 + $0x98] sm:$0xff] %v5339
        %5348 = vst [vmem:[#allocation2 + $0xb0] sm:$0xff] %v5340
        %v5349 = vld [vmem:[#allocation2] sm:$0xff]
        %v5350 = vld [vmem:[#allocation2 + $0x8] sm:$0xff]
        %v5351 = vld [vmem:[#allocation2 + $0x18] sm:$0xff]
        %v5352 = vld [vmem:[#allocation2 + $0x20] sm:$0xff]
        %v5353 = vld [vmem:[#allocation2 + $0x30] sm:$0xff]
        %v5354 = vld [vmem:[#allocation2 + $0x38] sm:$0xff]
        %v5355 = vld [vmem:[#allocation2 + $0x48] sm:$0xff]
        %v5356 = vld [vmem:[#allocation2 + $0x50] sm:$0xff]
        %v5357 = vld [vmem:[#allocation2 + $0x60] sm:$0xff]
        %v5358 = vld [vmem:[#allocation2 + $0x68] sm:$0xff]
        %v5359 = vld [vmem:[#allocation2 + $0x78] sm:$0xff]
        %v5360 = vld [vmem:[#allocation2 + $0x80] sm:$0xff]
        %v5361 = vld [vmem:[#allocation2 + $0x90] sm:$0xff]
        %v5362 = vld [vmem:[#allocation2 + $0x98] sm:$0xff]
        %v5363 = vld [vmem:[#allocation2 + $0xa8] sm:$0xff]
        %v5364 = vld [vmem:[#allocation2 + $0xb0] sm:$0xff]
        %5381 = vrot.lane.b32.xlu0 %v5349, 4
        %v5382 = vpop.permute.xlu0 %5381
        %5383 = vrot.lane.b32.xlu0 %v5350, 4
        %v5384 = vpop.permute.xlu0 %5383
        %5385 = vrot.lane.b32.xlu0 %v5351, 4
        %v5386 = vpop.permute.xlu0 %5385
        %5387 = vrot.lane.b32.xlu0 %v5352, 4
        %v5388 = vpop.permute.xlu0 %5387
        %5389 = vrot.lane.b32.xlu0 %v5353, 4
        %v5390 = vpop.permute.xlu0 %5389
        %5391 = vrot.lane.b32.xlu0 %v5354, 4
        %v5392 = vpop.permute.xlu0 %5391
        %5393 = vrot.lane.b32.xlu0 %v5355, 4
        %v5394 = vpop.permute.xlu0 %5393
        %5395 = vrot.lane.b32.xlu0 %v5356, 4
        %v5396 = vpop.permute.xlu0 %5395
        %5397 = vrot.lane.b32.xlu0 %v5357, 4
        %v5398 = vpop.permute.xlu0 %5397
        %5399 = vrot.lane.b32.xlu0 %v5358, 4
        %v5400 = vpop.permute.xlu0 %5399
        %5401 = vrot.lane.b32.xlu0 %v5359, 4
        %v5402 = vpop.permute.xlu0 %5401
        %5403 = vrot.lane.b32.xlu0 %v5360, 4
        %v5404 = vpop.permute.xlu0 %5403
        %5405 = vrot.lane.b32.xlu0 %v5361, 4
        %v5406 = vpop.permute.xlu0 %5405
        %5407 = vrot.lane.b32.xlu0 %v5362, 4
        %v5408 = vpop.permute.xlu0 %5407
        %5409 = vrot.lane.b32.xlu0 %v5363, 4
        %v5410 = vpop.permute.xlu0 %5409
        %5411 = vrot.lane.b32.xlu0 %v5364, 4
        %v5412 = vpop.permute.xlu0 %5411
        %v5413 = vsel %vm1657, %v5382, %v5384
        %v5414 = vsel %vm1657, %v5386, %v5388
        %v5415 = vsel %vm1657, %v5390, %v5392
        %v5416 = vsel %vm1657, %v5394, %v5396
        %v5417 = vsel %vm1657, %v5398, %v5400
        %v5418 = vsel %vm1657, %v5402, %v5404
        %v5419 = vsel %vm1657, %v5406, %v5408
        %v5420 = vsel %vm1657, %v5410, %v5412
        %5429 = vst [vmem:[#allocation3] sm:$0xff] %v5413
        %5430 = vst [vmem:[#allocation3 + $0x8] sm:$0xff] %v5414
        %5431 = vst [vmem:[#allocation3 + $0x10] sm:$0xff] %v5415
        %5432 = vst [vmem:[#allocation3 + $0x18] sm:$0xff] %v5416
        %5433 = vst [vmem:[#allocation3 + $0x20] sm:$0xff] %v5417
        %5434 = vst [vmem:[#allocation3 + $0x28] sm:$0xff] %v5418
        %5435 = vst [vmem:[#allocation3 + $0x30] sm:$0xff] %v5419
        %5436 = vst [vmem:[#allocation3 + $0x38] sm:$0xff] %v5420
        %v5437 = vld [vmem:[#allocation2 + $0x8] sm:$0xff]
        %v5438 = vld [vmem:[#allocation2 + $0x20] sm:$0xff]
        %v5439 = vld [vmem:[#allocation2 + $0x38] sm:$0xff]
        %v5440 = vld [vmem:[#allocation2 + $0x50] sm:$0xff]
        %v5441 = vld [vmem:[#allocation2 + $0x68] sm:$0xff]
        %v5442 = vld [vmem:[#allocation2 + $0x80] sm:$0xff]
        %v5443 = vld [vmem:[#allocation2 + $0x98] sm:$0xff]
        %v5444 = vld [vmem:[#allocation2 + $0xb0] sm:$0xff]
        %5445 = vst [vmem:[#allocation3 + $0x40] sm:$0xff] %v5437
        %5446 = vst [vmem:[#allocation3 + $0x48] sm:$0xff] %v5438
        %5447 = vst [vmem:[#allocation3 + $0x50] sm:$0xff] %v5439
        %5448 = vst [vmem:[#allocation3 + $0x58] sm:$0xff] %v5440
        %5449 = vst [vmem:[#allocation3 + $0x60] sm:$0xff] %v5441
        %5450 = vst [vmem:[#allocation3 + $0x68] sm:$0xff] %v5442
        %5451 = vst [vmem:[#allocation3 + $0x70] sm:$0xff] %v5443
        %5452 = vst [vmem:[#allocation3 + $0x78] sm:$0xff] %v5444
        %v5453 = vld [vmem:[#allocation2 + $0x8] sm:$0xff]
        %v5454 = vld [vmem:[#allocation2 + $0x10] sm:$0xff]
        %v5455 = vld [vmem:[#allocation2 + $0x20] sm:$0xff]
        %v5456 = vld [vmem:[#allocation2 + $0x28] sm:$0xff]
        %v5457 = vld [vmem:[#allocation2 + $0x38] sm:$0xff]
        %v5458 = vld [vmem:[#allocation2 + $0x40] sm:$0xff]
        %v5459 = vld [vmem:[#allocation2 + $0x50] sm:$0xff]
        %v5460 = vld [vmem:[#allocation2 + $0x58] sm:$0xff]
        %v5461 = vld [vmem:[#allocation2 + $0x68] sm:$0xff]
        %v5462 = vld [vmem:[#allocation2 + $0x70] sm:$0xff]
        %v5463 = vld [vmem:[#allocation2 + $0x80] sm:$0xff]
        %v5464 = vld [vmem:[#allocation2 + $0x88] sm:$0xff]
        %v5465 = vld [vmem:[#allocation2 + $0x98] sm:$0xff]
        %v5466 = vld [vmem:[#allocation2 + $0xa0] sm:$0xff]
        %v5467 = vld [vmem:[#allocation2 + $0xb0] sm:$0xff]
        %v5468 = vld [vmem:[#allocation2 + $0xb8] sm:$0xff]
        %5485 = vrot.lane.b32.xlu0 %v5453, 124
        %v5486 = vpop.permute.xlu0 %5485
        %5487 = vrot.lane.b32.xlu0 %v5454, 124
        %v5488 = vpop.permute.xlu0 %5487
        %5489 = vrot.lane.b32.xlu0 %v5455, 124
        %v5490 = vpop.permute.xlu0 %5489
        %5491 = vrot.lane.b32.xlu0 %v5456, 124
        %v5492 = vpop.permute.xlu0 %5491
        %5493 = vrot.lane.b32.xlu0 %v5457, 124
        %v5494 = vpop.permute.xlu0 %5493
        %5495 = vrot.lane.b32.xlu0 %v5458, 124
        %v5496 = vpop.permute.xlu0 %5495
        %5497 = vrot.lane.b32.xlu0 %v5459, 124
        %v5498 = vpop.permute.xlu0 %5497
        %5499 = vrot.lane.b32.xlu0 %v5460, 124
        %v5500 = vpop.permute.xlu0 %5499
        %5501 = vrot.lane.b32.xlu0 %v5461, 124
        %v5502 = vpop.permute.xlu0 %5501
        %5503 = vrot.lane.b32.xlu0 %v5462, 124
        %v5504 = vpop.permute.xlu0 %5503
        %5505 = vrot.lane.b32.xlu0 %v5463, 124
        %v5506 = vpop.permute.xlu0 %5505
        %5507 = vrot.lane.b32.xlu0 %v5464, 124
        %v5508 = vpop.permute.xlu0 %5507
        %5509 = vrot.lane.b32.xlu0 %v5465, 124
        %v5510 = vpop.permute.xlu0 %5509
        %5511 = vrot.lane.b32.xlu0 %v5466, 124
        %v5512 = vpop.permute.xlu0 %5511
        %5513 = vrot.lane.b32.xlu0 %v5467, 124
        %v5514 = vpop.permute.xlu0 %5513
        %5515 = vrot.lane.b32.xlu0 %v5468, 124
        %v5516 = vpop.permute.xlu0 %5515
        %v5517 = vsel %vm3138, %v5486, %v5488
        %v5518 = vsel %vm3138, %v5490, %v5492
        %v5519 = vsel %vm3138, %v5494, %v5496
        %v5520 = vsel %vm3138, %v5498, %v5500
        %v5521 = vsel %vm3138, %v5502, %v5504
        %v5522 = vsel %vm3138, %v5506, %v5508
        %v5523 = vsel %vm3138, %v5510, %v5512
        %v5524 = vsel %vm3138, %v5514, %v5516
        %5533 = vst [vmem:[#allocation3 + $0x80] sm:$0xff] %v5517
        %5534 = vst [vmem:[#allocation3 + $0x88] sm:$0xff] %v5518
        %5535 = vst [vmem:[#allocation3 + $0x90] sm:$0xff] %v5519
        %5536 = vst [vmem:[#allocation3 + $0x98] sm:$0xff] %v5520
        %5537 = vst [vmem:[#allocation3 + $0xa0] sm:$0xff] %v5521
        %5538 = vst [vmem:[#allocation3 + $0xa8] sm:$0xff] %v5522
        %5539 = vst [vmem:[#allocation3 + $0xb0] sm:$0xff] %v5523
        %5540 = vst [vmem:[#allocation3 + $0xb8] sm:$0xff] %v5524
        %v5541 = vld [vmem:[%s11] sm:$0xff]
        %v5542 = vld [vmem:[%s11 + $0x8] sm:$0xff]
        %v5543 = vld [vmem:[%s11 + $0x10] sm:$0xff]
        %v5544 = vld [vmem:[%s11 + $0x18] sm:$0xff]
        %v5545 = vld [vmem:[%s11 + $0x20] sm:$0xff]
        %v5546 = vld [vmem:[%s11 + $0x28] sm:$0xff]
        %v5547 = vld [vmem:[%s11 + $0x30] sm:$0xff]
        %v5548 = vld [vmem:[%s11 + $0x38] sm:$0xff]
        %v5549 = vld [vmem:[%s11 + $0x40] sm:$0xff]
        %v5550 = vld [vmem:[%s11 + $0x48] sm:$0xff]
        %v5551 = vld [vmem:[%s11 + $0x50] sm:$0xff]
        %v5552 = vld [vmem:[%s11 + $0x58] sm:$0xff]
        %v5553 = vld [vmem:[%s11 + $0x60] sm:$0xff]
        %v5554 = vld [vmem:[%s11 + $0x68] sm:$0xff]
        %v5555 = vld [vmem:[%s11 + $0x70] sm:$0xff]
        %v5556 = vld [vmem:[%s11 + $0x78] sm:$0xff]
        %v5557 = vld [vmem:[#allocation3] sm:$0xff]
        %v5558 = vld [vmem:[#allocation3 + $0x8] sm:$0xff]
        %v5559 = vld [vmem:[#allocation3 + $0x10] sm:$0xff]
        %v5560 = vld [vmem:[#allocation3 + $0x18] sm:$0xff]
        %v5561 = vld [vmem:[#allocation3 + $0x20] sm:$0xff]
        %v5562 = vld [vmem:[#allocation3 + $0x28] sm:$0xff]
        %v5563 = vld [vmem:[#allocation3 + $0x30] sm:$0xff]
        %v5564 = vld [vmem:[#allocation3 + $0x38] sm:$0xff]
        %v5565 = vld [vmem:[#allocation3 + $0x40] sm:$0xff]
        %v5566 = vld [vmem:[#allocation3 + $0x48] sm:$0xff]
        %v5567 = vld [vmem:[#allocation3 + $0x50] sm:$0xff]
        %v5568 = vld [vmem:[#allocation3 + $0x58] sm:$0xff]
        %v5569 = vld [vmem:[#allocation3 + $0x60] sm:$0xff]
        %v5570 = vld [vmem:[#allocation3 + $0x68] sm:$0xff]
        %v5571 = vld [vmem:[#allocation3 + $0x70] sm:$0xff]
        %v5572 = vld [vmem:[#allocation3 + $0x78] sm:$0xff]
        %v5573 = vld [vmem:[#allocation3 + $0x80] sm:$0xff]
        %v5574 = vld [vmem:[#allocation3 + $0x88] sm:$0xff]
        %v5575 = vld [vmem:[#allocation3 + $0x90] sm:$0xff]
        %v5576 = vld [vmem:[#allocation3 + $0x98] sm:$0xff]
        %v5577 = vld [vmem:[#allocation3 + $0xa0] sm:$0xff]
        %v5578 = vld [vmem:[#allocation3 + $0xa8] sm:$0xff]
        %v5579 = vld [vmem:[#allocation3 + $0xb0] sm:$0xff]
        %v5580 = vld [vmem:[#allocation3 + $0xb8] sm:$0xff]
        %v5581 = vld [vmem:[%s12] sm:$0xff]
        %v5582 = vld [vmem:[%s12 + $0x8] sm:$0xff]
        %v5583 = vld [vmem:[%s12 + $0x10] sm:$0xff]
        %v5584 = vld [vmem:[%s12 + $0x18] sm:$0xff]
        %v5585 = vld [vmem:[%s12 + $0x20] sm:$0xff]
        %v5586 = vld [vmem:[%s12 + $0x28] sm:$0xff]
        %v5587 = vld [vmem:[%s12 + $0x30] sm:$0xff]
        %v5588 = vld [vmem:[%s12 + $0x38] sm:$0xff]
        %5590 = vset.pattern.permute.xlu0 0
        %5591 = vperm.xlu0 %5590, %v5581
        %v5592 = vpop.permute.xlu0 %5591
        %5595 = vset.pattern.permute.xlu0 0
        %5596 = vperm.xlu0 %5595, %v5582
        %v5597 = vpop.permute.xlu0 %5596
        %5600 = vset.pattern.permute.xlu0 0
        %5601 = vperm.xlu0 %5600, %v5583
        %v5602 = vpop.permute.xlu0 %5601
        %5605 = vset.pattern.permute.xlu0 0
        %5606 = vperm.xlu0 %5605, %v5584
        %v5607 = vpop.permute.xlu0 %5606
        %5610 = vset.pattern.permute.xlu0 0
        %5611 = vperm.xlu0 %5610, %v5585
        %v5612 = vpop.permute.xlu0 %5611
        %5615 = vset.pattern.permute.xlu0 0
        %5616 = vperm.xlu0 %5615, %v5586
        %v5617 = vpop.permute.xlu0 %5616
        %5620 = vset.pattern.permute.xlu0 0
        %5621 = vperm.xlu0 %5620, %v5587
        %v5622 = vpop.permute.xlu0 %5621
        %5625 = vset.pattern.permute.xlu0 0
        %5626 = vperm.xlu0 %5625, %v5588
        %v5627 = vpop.permute.xlu0 %5626
        %v5630 = vsel %vm604, %v5542, 0
        %v5633 = vsel %vm604, %v5544, 0
        %v5636 = vsel %vm604, %v5546, 0
        %v5639 = vsel %vm604, %v5548, 0
        %v5642 = vsel %vm604, %v5550, 0
        %v5645 = vsel %vm604, %v5552, 0
        %v5648 = vsel %vm604, %v5554, 0
        %v5651 = vsel %vm604, %v5556, 0
        %5653 = vmatprep.subr.mxu0 0.0
        %5654 = vmatpush1.msra.mxu0 %v5557
        %5655 = vmatprep.subr.mxu0 0.0
        %5656 = vmatpush1.msra.mxu0 %v5558
        %5657 = vmatprep.subr.mxu0 0.0
        %5658 = vmatpush1.msra.mxu0 %v5559
        %5659 = vmatprep.subr.mxu0 0.0
        %5660 = vmatpush1.msra.mxu0 %v5560
        %5661 = vmatprep.subr.mxu0 0.0
        %5662 = vmatpush1.msra.mxu0 %v5561
        %5663 = vmatprep.subr.mxu0 0.0
        %5664 = vmatpush1.msra.mxu0 %v5562
        %5665 = vmatprep.subr.mxu0 0.0
        %5666 = vmatpush1.msra.mxu0 %v5563
        %5667 = vmatprep.subr.mxu0 0.0
        %5668 = vmatpush1.msra.mxu0 %v5564
        %5669 = vmatprep.subr.mxu0 0.0
        %5670 = vmatpush1.msra.mxu0 %v5565
        %5671 = vmatprep.subr.mxu0 0.0
        %5672 = vmatpush1.msra.mxu0 %v5566
        %5673 = vmatprep.subr.mxu0 0.0
        %5674 = vmatpush1.msra.mxu0 %v5567
        %5675 = vmatprep.subr.mxu0 0.0
        %5676 = vmatpush1.msra.mxu0 %v5568
        %5677 = vmatprep.subr.mxu0 0.0
        %5678 = vmatpush1.msra.mxu0 %v5569
        %5679 = vmatprep.subr.mxu0 0.0
        %5680 = vmatpush1.msra.mxu0 %v5570
        %5681 = vmatprep.subr.mxu0 0.0
        %5682 = vmatpush1.msra.mxu0 %v5571
        %5683 = vmatprep.subr.mxu0 0.0
        %5684 = vmatpush1.msra.mxu0 %v5572
        %5685 = vmatprep.subr.mxu0 0.0
        %5686 = vmatpush1.msra.mxu0 %v5573
        %5687 = vmatprep.subr.mxu0 0.0
        %5688 = vmatpush1.msra.mxu0 %v5574
        %5689 = vmatprep.subr.mxu0 0.0
        %5690 = vmatpush1.msra.mxu0 %v5575
        %5691 = vmatprep.subr.mxu0 0.0
        %5692 = vmatpush1.msra.mxu0 %v5576
        %5693 = vmatprep.subr.mxu0 0.0
        %5694 = vmatpush1.msra.mxu0 %v5577
        %5695 = vmatprep.subr.mxu0 0.0
        %5696 = vmatpush1.msra.mxu0 %v5578
        %5697 = vmatprep.subr.mxu0 0.0
        %5698 = vmatpush1.msra.mxu0 %v5579
        %5699 = vmatprep.subr.mxu0 0.0
        %5700 = vmatpush1.msra.mxu0 %v5580
        %5701 = vmatprep.subr.mxu0 0.0
        %5702 = vmatpush1.msra.mxu0 0.0
        %5703 = vmatprep.subr.mxu0 0.0
        %5704 = vmatpush1.msra.mxu0 0.0
        %5705 = vmatprep.subr.mxu0 0.0
        %5706 = vmatpush1.msra.mxu0 0.0
        %5707 = vmatprep.subr.mxu0 0.0
        %5708 = vmatpush1.msra.mxu0 0.0
        %5709 = vmatprep.subr.mxu0 0.0
        %5710 = vmatpush1.msra.mxu0 0.0
        %5711 = vmatprep.subr.mxu0 0.0
        %5712 = vmatpush1.msra.mxu0 0.0
        %5713 = vmatprep.subr.mxu0 0.0
        %5714 = vmatpush1.msra.mxu0 0.0
        %5715 = vmatprep.subr.mxu0 0.0
        %5716 = vmatpush1.msra.mxu0 0.0
        %5717 = vmatprep.mubr.f32.mxu0 %v5630
        %5718 = vmatmul.mubr.f32.gmra.mrb[0].mxu0 %v5541
        %v5719 = vpop.f32.mrb[0].mxu0
        %v5720 = vadd.f32 %v5592, %v5719
        %v5721 = vpop.f32.mrb[0].mxu0
        %5722 = vmatprep.mubr.f32.mxu0 %v5633
        %5723 = vmatmul.mubr.f32.gmra.mrb[0].mxu0 %v5543
        %v5724 = vpop.f32.mrb[0].mxu0
        %v5725 = vadd.f32 %v5597, %v5724
        %v5726 = vpop.f32.mrb[0].mxu0
        %5727 = vmatprep.mubr.f32.mxu0 %v5636
        %5728 = vmatmul.mubr.f32.gmra.mrb[0].mxu0 %v5545
        %v5729 = vpop.f32.mrb[0].mxu0
        %v5730 = vadd.f32 %v5602, %v5729
        %v5731 = vpop.f32.mrb[0].mxu0
        %5732 = vmatprep.mubr.f32.mxu0 %v5639
        %5733 = vmatmul.mubr.f32.gmra.mrb[0].mxu0 %v5547
        %v5734 = vpop.f32.mrb[0].mxu0
        %v5735 = vadd.f32 %v5607, %v5734
        %v5736 = vpop.f32.mrb[0].mxu0
        %5737 = vmatprep.mubr.f32.mxu0 %v5642
        %5738 = vmatmul.mubr.f32.gmra.mrb[0].mxu0 %v5549
        %v5739 = vpop.f32.mrb[0].mxu0
        %v5740 = vadd.f32 %v5612, %v5739
        %v5741 = vpop.f32.mrb[0].mxu0
        %5742 = vmatprep.mubr.f32.mxu0 %v5645
        %5743 = vmatmul.mubr.f32.gmra.mrb[0].mxu0 %v5551
        %v5744 = vpop.f32.mrb[0].mxu0
        %v5745 = vadd.f32 %v5617, %v5744
        %v5746 = vpop.f32.mrb[0].mxu0
        %5747 = vmatprep.mubr.f32.mxu0 %v5648
        %5748 = vmatmul.mubr.f32.gmra.mrb[0].mxu0 %v5553
        %v5749 = vpop.f32.mrb[0].mxu0
        %v5750 = vadd.f32 %v5622, %v5749
        %v5751 = vpop.f32.mrb[0].mxu0
        %5752 = vmatprep.mubr.f32.mxu0 %v5651
        %5753 = vmatmul.mubr.f32.gmra.mrb[0].mxu0 %v5555
        %v5754 = vpop.f32.mrb[0].mxu0
        %v5755 = vadd.f32 %v5627, %v5754
        %v5756 = vpop.f32.mrb[0].mxu0
        %5757 = vdwg.mxu0
        %v5758 = vadd.f32 %v5720, %v4868
        %v5759 = vadd.f32 %v5725, %v4869
        %v5760 = vadd.f32 %v5730, %v4870
        %v5761 = vadd.f32 %v5735, %v4871
        %v5762 = vadd.f32 %v5740, %v4872
        %v5763 = vadd.f32 %v5745, %v4873
        %v5764 = vadd.f32 %v5750, %v4874
        %v5765 = vadd.f32 %v5755, %v4875
        %vm5766 = vcmp.ge.f32.partialorder %v5758, 0.0
        %vm5767 = vcmp.ge.f32.partialorder %v5759, 0.0
        %vm5768 = vcmp.ge.f32.partialorder %v5760, 0.0
        %vm5769 = vcmp.ge.f32.partialorder %v5761, 0.0
        %vm5770 = vcmp.ge.f32.partialorder %v5762, 0.0
        %vm5771 = vcmp.ge.f32.partialorder %v5763, 0.0
        %vm5772 = vcmp.ge.f32.partialorder %v5764, 0.0
        %vm5773 = vcmp.ge.f32.partialorder %v5765, 0.0
        %v5774 = vmul.f32 %v5758, 0.01
        %v5775 = vmul.f32 %v5759, 0.01
        %v5776 = vmul.f32 %v5760, 0.01
        %v5777 = vmul.f32 %v5761, 0.01
        %v5778 = vmul.f32 %v5762, 0.01
        %v5779 = vmul.f32 %v5763, 0.01
        %v5780 = vmul.f32 %v5764, 0.01
        %v5781 = vmul.f32 %v5765, 0.01
        %v5782 = vsel %vm5766, %v5758, %v5774
        %v5783 = vsel %vm5767, %v5759, %v5775
        %v5784 = vsel %vm5768, %v5760, %v5776
        %v5785 = vsel %vm5769, %v5761, %v5777
        %v5786 = vsel %vm5770, %v5762, %v5778
        %v5787 = vsel %vm5771, %v5763, %v5779
        %v5788 = vsel %vm5772, %v5764, %v5780
        %v5789 = vsel %vm5773, %v5765, %v5781
        %5790 = vst [vmem:[#allocation2 + $0x8] sm:$0xff] %v5782
        %5791 = vst [vmem:[#allocation2 + $0x20] sm:$0xff] %v5783
        %5792 = vst [vmem:[#allocation2 + $0x38] sm:$0xff] %v5784
        %5793 = vst [vmem:[#allocation2 + $0x50] sm:$0xff] %v5785
        %5794 = vst [vmem:[#allocation2 + $0x68] sm:$0xff] %v5786
        %5795 = vst [vmem:[#allocation2 + $0x80] sm:$0xff] %v5787
        %5796 = vst [vmem:[#allocation2 + $0x98] sm:$0xff] %v5788
        %5797 = vst [vmem:[#allocation2 + $0xb0] sm:$0xff] %v5789
        %v5798 = vld [vmem:[#allocation2] sm:$0xff]
        %v5799 = vld [vmem:[#allocation2 + $0x8] sm:$0xff]
        %v5800 = vld [vmem:[#allocation2 + $0x18] sm:$0xff]
        %v5801 = vld [vmem:[#allocation2 + $0x20] sm:$0xff]
        %v5802 = vld [vmem:[#allocation2 + $0x30] sm:$0xff]
        %v5803 = vld [vmem:[#allocation2 + $0x38] sm:$0xff]
        %v5804 = vld [vmem:[#allocation2 + $0x48] sm:$0xff]
        %v5805 = vld [vmem:[#allocation2 + $0x50] sm:$0xff]
        %v5806 = vld [vmem:[#allocation2 + $0x60] sm:$0xff]
        %v5807 = vld [vmem:[#allocation2 + $0x68] sm:$0xff]
        %v5808 = vld [vmem:[#allocation2 + $0x78] sm:$0xff]
        %v5809 = vld [vmem:[#allocation2 + $0x80] sm:$0xff]
        %v5810 = vld [vmem:[#allocation2 + $0x90] sm:$0xff]
        %v5811 = vld [vmem:[#allocation2 + $0x98] sm:$0xff]
        %v5812 = vld [vmem:[#allocation2 + $0xa8] sm:$0xff]
        %v5813 = vld [vmem:[#allocation2 + $0xb0] sm:$0xff]
        %5830 = vrot.lane.b32.xlu0 %v5798, 36
        %v5831 = vpop.permute.xlu0 %5830
        %5832 = vrot.lane.b32.xlu0 %v5799, 36
        %v5833 = vpop.permute.xlu0 %5832
        %5834 = vrot.lane.b32.xlu0 %v5800, 36
        %v5835 = vpop.permute.xlu0 %5834
        %5836 = vrot.lane.b32.xlu0 %v5801, 36
        %v5837 = vpop.permute.xlu0 %5836
        %5838 = vrot.lane.b32.xlu0 %v5802, 36
        %v5839 = vpop.permute.xlu0 %5838
        %5840 = vrot.lane.b32.xlu0 %v5803, 36
        %v5841 = vpop.permute.xlu0 %5840
        %5842 = vrot.lane.b32.xlu0 %v5804, 36
        %v5843 = vpop.permute.xlu0 %5842
        %5844 = vrot.lane.b32.xlu0 %v5805, 36
        %v5845 = vpop.permute.xlu0 %5844
        %5846 = vrot.lane.b32.xlu0 %v5806, 36
        %v5847 = vpop.permute.xlu0 %5846
        %5848 = vrot.lane.b32.xlu0 %v5807, 36
        %v5849 = vpop.permute.xlu0 %5848
        %5850 = vrot.lane.b32.xlu0 %v5808, 36
        %v5851 = vpop.permute.xlu0 %5850
        %5852 = vrot.lane.b32.xlu0 %v5809, 36
        %v5853 = vpop.permute.xlu0 %5852
        %5854 = vrot.lane.b32.xlu0 %v5810, 36
        %v5855 = vpop.permute.xlu0 %5854
        %5856 = vrot.lane.b32.xlu0 %v5811, 36
        %v5857 = vpop.permute.xlu0 %5856
        %5858 = vrot.lane.b32.xlu0 %v5812, 36
        %v5859 = vpop.permute.xlu0 %5858
        %5860 = vrot.lane.b32.xlu0 %v5813, 36
        %v5861 = vpop.permute.xlu0 %5860
        %v5862 = vsel %vm2017, %v5831, %v5833
        %v5863 = vsel %vm2017, %v5835, %v5837
        %v5864 = vsel %vm2017, %v5839, %v5841
        %v5865 = vsel %vm2017, %v5843, %v5845
        %v5866 = vsel %vm2017, %v5847, %v5849
        %v5867 = vsel %vm2017, %v5851, %v5853
        %v5868 = vsel %vm2017, %v5855, %v5857
        %v5869 = vsel %vm2017, %v5859, %v5861
        %5878 = vst [vmem:[#allocation3] sm:$0xff] %v5862
        %5879 = vst [vmem:[#allocation3 + $0x8] sm:$0xff] %v5863
        %5880 = vst [vmem:[#allocation3 + $0x10] sm:$0xff] %v5864
        %5881 = vst [vmem:[#allocation3 + $0x18] sm:$0xff] %v5865
        %5882 = vst [vmem:[#allocation3 + $0x20] sm:$0xff] %v5866
        %5883 = vst [vmem:[#allocation3 + $0x28] sm:$0xff] %v5867
        %5884 = vst [vmem:[#allocation3 + $0x30] sm:$0xff] %v5868
        %5885 = vst [vmem:[#allocation3 + $0x38] sm:$0xff] %v5869
        %v5886 = vld [vmem:[#allocation2 + $0x8] sm:$0xff]
        %v5887 = vld [vmem:[#allocation2 + $0x20] sm:$0xff]
        %v5888 = vld [vmem:[#allocation2 + $0x38] sm:$0xff]
        %v5889 = vld [vmem:[#allocation2 + $0x50] sm:$0xff]
        %v5890 = vld [vmem:[#allocation2 + $0x68] sm:$0xff]
        %v5891 = vld [vmem:[#allocation2 + $0x80] sm:$0xff]
        %v5892 = vld [vmem:[#allocation2 + $0x98] sm:$0xff]
        %v5893 = vld [vmem:[#allocation2 + $0xb0] sm:$0xff]
        %5894 = vst [vmem:[#allocation3 + $0x40] sm:$0xff] %v5886
        %5895 = vst [vmem:[#allocation3 + $0x48] sm:$0xff] %v5887
        %5896 = vst [vmem:[#allocation3 + $0x50] sm:$0xff] %v5888
        %5897 = vst [vmem:[#allocation3 + $0x58] sm:$0xff] %v5889
        %5898 = vst [vmem:[#allocation3 + $0x60] sm:$0xff] %v5890
        %5899 = vst [vmem:[#allocation3 + $0x68] sm:$0xff] %v5891
        %5900 = vst [vmem:[#allocation3 + $0x70] sm:$0xff] %v5892
        %5901 = vst [vmem:[#allocation3 + $0x78] sm:$0xff] %v5893
        %v5902 = vld [vmem:[#allocation2 + $0x8] sm:$0xff]
        %v5903 = vld [vmem:[#allocation2 + $0x10] sm:$0xff]
        %v5904 = vld [vmem:[#allocation2 + $0x20] sm:$0xff]
        %v5905 = vld [vmem:[#allocation2 + $0x28] sm:$0xff]
        %v5906 = vld [vmem:[#allocation2 + $0x38] sm:$0xff]
        %v5907 = vld [vmem:[#allocation2 + $0x40] sm:$0xff]
        %v5908 = vld [vmem:[#allocation2 + $0x50] sm:$0xff]
        %v5909 = vld [vmem:[#allocation2 + $0x58] sm:$0xff]
        %v5910 = vld [vmem:[#allocation2 + $0x68] sm:$0xff]
        %v5911 = vld [vmem:[#allocation2 + $0x70] sm:$0xff]
        %v5912 = vld [vmem:[#allocation2 + $0x80] sm:$0xff]
        %v5913 = vld [vmem:[#allocation2 + $0x88] sm:$0xff]
        %v5914 = vld [vmem:[#allocation2 + $0x98] sm:$0xff]
        %v5915 = vld [vmem:[#allocation2 + $0xa0] sm:$0xff]
        %v5916 = vld [vmem:[#allocation2 + $0xb0] sm:$0xff]
        %v5917 = vld [vmem:[#allocation2 + $0xb8] sm:$0xff]
        %5934 = vrot.lane.b32.xlu0 %v5902, 92
        %v5935 = vpop.permute.xlu0 %5934
        %5936 = vrot.lane.b32.xlu0 %v5903, 92
        %v5937 = vpop.permute.xlu0 %5936
        %5938 = vrot.lane.b32.xlu0 %v5904, 92
        %v5939 = vpop.permute.xlu0 %5938
        %5940 = vrot.lane.b32.xlu0 %v5905, 92
        %v5941 = vpop.permute.xlu0 %5940
        %5942 = vrot.lane.b32.xlu0 %v5906, 92
        %v5943 = vpop.permute.xlu0 %5942
        %5944 = vrot.lane.b32.xlu0 %v5907, 92
        %v5945 = vpop.permute.xlu0 %5944
        %5946 = vrot.lane.b32.xlu0 %v5908, 92
        %v5947 = vpop.permute.xlu0 %5946
        %5948 = vrot.lane.b32.xlu0 %v5909, 92
        %v5949 = vpop.permute.xlu0 %5948
        %5950 = vrot.lane.b32.xlu0 %v5910, 92
        %v5951 = vpop.permute.xlu0 %5950
        %5952 = vrot.lane.b32.xlu0 %v5911, 92
        %v5953 = vpop.permute.xlu0 %5952
        %5954 = vrot.lane.b32.xlu0 %v5912, 92
        %v5955 = vpop.permute.xlu0 %5954
        %5956 = vrot.lane.b32.xlu0 %v5913, 92
        %v5957 = vpop.permute.xlu0 %5956
        %5958 = vrot.lane.b32.xlu0 %v5914, 92
        %v5959 = vpop.permute.xlu0 %5958
        %5960 = vrot.lane.b32.xlu0 %v5915, 92
        %v5961 = vpop.permute.xlu0 %5960
        %5962 = vrot.lane.b32.xlu0 %v5916, 92
        %v5963 = vpop.permute.xlu0 %5962
        %5964 = vrot.lane.b32.xlu0 %v5917, 92
        %v5965 = vpop.permute.xlu0 %5964
        %vm5966 = vcmask 752640
        %v5967 = vsel %vm5966, %v5935, %v5937
        %v5968 = vsel %vm5966, %v5939, %v5941
        %v5969 = vsel %vm5966, %v5943, %v5945
        %v5970 = vsel %vm5966, %v5947, %v5949
        %v5971 = vsel %vm5966, %v5951, %v5953
        %v5972 = vsel %vm5966, %v5955, %v5957
        %v5973 = vsel %vm5966, %v5959, %v5961
        %v5974 = vsel %vm5966, %v5963, %v5965
        %5983 = vst [vmem:[#allocation3 + $0x80] sm:$0xff] %v5967
        %5984 = vst [vmem:[#allocation3 + $0x88] sm:$0xff] %v5968
        %5985 = vst [vmem:[#allocation3 + $0x90] sm:$0xff] %v5969
        %5986 = vst [vmem:[#allocation3 + $0x98] sm:$0xff] %v5970
        %5987 = vst [vmem:[#allocation3 + $0xa0] sm:$0xff] %v5971
        %5988 = vst [vmem:[#allocation3 + $0xa8] sm:$0xff] %v5972
        %5989 = vst [vmem:[#allocation3 + $0xb0] sm:$0xff] %v5973
        %5990 = vst [vmem:[#allocation3 + $0xb8] sm:$0xff] %v5974
        %v5991 = vld [vmem:[%s13] sm:$0xff]
        %v5992 = vld [vmem:[%s13 + $0x8] sm:$0xff]
        %v5993 = vld [vmem:[%s13 + $0x10] sm:$0xff]
        %v5994 = vld [vmem:[%s13 + $0x18] sm:$0xff]
        %v5995 = vld [vmem:[%s13 + $0x20] sm:$0xff]
        %v5996 = vld [vmem:[%s13 + $0x28] sm:$0xff]
        %v5997 = vld [vmem:[%s13 + $0x30] sm:$0xff]
        %v5998 = vld [vmem:[%s13 + $0x38] sm:$0xff]
        %v5999 = vld [vmem:[%s13 + $0x40] sm:$0xff]
        %v6000 = vld [vmem:[%s13 + $0x48] sm:$0xff]
        %v6001 = vld [vmem:[%s13 + $0x50] sm:$0xff]
        %v6002 = vld [vmem:[%s13 + $0x58] sm:$0xff]
        %v6003 = vld [vmem:[%s13 + $0x60] sm:$0xff]
        %v6004 = vld [vmem:[%s13 + $0x68] sm:$0xff]
        %v6005 = vld [vmem:[%s13 + $0x70] sm:$0xff]
        %v6006 = vld [vmem:[%s13 + $0x78] sm:$0xff]
        %v6007 = vld [vmem:[#allocation3] sm:$0xff]
        %v6008 = vld [vmem:[#allocation3 + $0x8] sm:$0xff]
        %v6009 = vld [vmem:[#allocation3 + $0x10] sm:$0xff]
        %v6010 = vld [vmem:[#allocation3 + $0x18] sm:$0xff]
        %v6011 = vld [vmem:[#allocation3 + $0x20] sm:$0xff]
        %v6012 = vld [vmem:[#allocation3 + $0x28] sm:$0xff]
        %v6013 = vld [vmem:[#allocation3 + $0x30] sm:$0xff]
        %v6014 = vld [vmem:[#allocation3 + $0x38] sm:$0xff]
        %v6015 = vld [vmem:[#allocation3 + $0x40] sm:$0xff]
        %v6016 = vld [vmem:[#allocation3 + $0x48] sm:$0xff]
        %v6017 = vld [vmem:[#allocation3 + $0x50] sm:$0xff]
        %v6018 = vld [vmem:[#allocation3 + $0x58] sm:$0xff]
        %v6019 = vld [vmem:[#allocation3 + $0x60] sm:$0xff]
        %v6020 = vld [vmem:[#allocation3 + $0x68] sm:$0xff]
        %v6021 = vld [vmem:[#allocation3 + $0x70] sm:$0xff]
        %v6022 = vld [vmem:[#allocation3 + $0x78] sm:$0xff]
        %v6023 = vld [vmem:[#allocation3 + $0x80] sm:$0xff]
        %v6024 = vld [vmem:[#allocation3 + $0x88] sm:$0xff]
        %v6025 = vld [vmem:[#allocation3 + $0x90] sm:$0xff]
        %v6026 = vld [vmem:[#allocation3 + $0x98] sm:$0xff]
        %v6027 = vld [vmem:[#allocation3 + $0xa0] sm:$0xff]
        %v6028 = vld [vmem:[#allocation3 + $0xa8] sm:$0xff]
        %v6029 = vld [vmem:[#allocation3 + $0xb0] sm:$0xff]
        %v6030 = vld [vmem:[#allocation3 + $0xb8] sm:$0xff]
        %v6031 = vld [vmem:[%s14] sm:$0xff]
        %v6032 = vld [vmem:[%s14 + $0x8] sm:$0xff]
        %v6033 = vld [vmem:[%s14 + $0x10] sm:$0xff]
        %v6034 = vld [vmem:[%s14 + $0x18] sm:$0xff]
        %v6035 = vld [vmem:[%s14 + $0x20] sm:$0xff]
        %v6036 = vld [vmem:[%s14 + $0x28] sm:$0xff]
        %v6037 = vld [vmem:[%s14 + $0x30] sm:$0xff]
        %v6038 = vld [vmem:[%s14 + $0x38] sm:$0xff]
        %6040 = vset.pattern.permute.xlu0 0
        %6041 = vperm.xlu0 %6040, %v6031
        %v6042 = vpop.permute.xlu0 %6041
        %6045 = vset.pattern.permute.xlu0 0
        %6046 = vperm.xlu0 %6045, %v6032
        %v6047 = vpop.permute.xlu0 %6046
        %6050 = vset.pattern.permute.xlu0 0
        %6051 = vperm.xlu0 %6050, %v6033
        %v6052 = vpop.permute.xlu0 %6051
        %6055 = vset.pattern.permute.xlu0 0
        %6056 = vperm.xlu0 %6055, %v6034
        %v6057 = vpop.permute.xlu0 %6056
        %6060 = vset.pattern.permute.xlu0 0
        %6061 = vperm.xlu0 %6060, %v6035
        %v6062 = vpop.permute.xlu0 %6061
        %6065 = vset.pattern.permute.xlu0 0
        %6066 = vperm.xlu0 %6065, %v6036
        %v6067 = vpop.permute.xlu0 %6066
        %6070 = vset.pattern.permute.xlu0 0
        %6071 = vperm.xlu0 %6070, %v6037
        %v6072 = vpop.permute.xlu0 %6071
        %6075 = vset.pattern.permute.xlu0 0
        %6076 = vperm.xlu0 %6075, %v6038
        %v6077 = vpop.permute.xlu0 %6076
        %v6080 = vsel %vm604, %v5992, 0
        %v6083 = vsel %vm604, %v5994, 0
        %v6086 = vsel %vm604, %v5996, 0
        %v6089 = vsel %vm604, %v5998, 0
        %v6092 = vsel %vm604, %v6000, 0
        %v6095 = vsel %vm604, %v6002, 0
        %v6098 = vsel %vm604, %v6004, 0
        %v6101 = vsel %vm604, %v6006, 0
        %6103 = vmatprep.subr.mxu0 0.0
        %6104 = vmatpush1.msra.mxu0 %v6007
        %6105 = vmatprep.subr.mxu0 0.0
        %6106 = vmatpush1.msra.mxu0 %v6008
        %6107 = vmatprep.subr.mxu0 0.0
        %6108 = vmatpush1.msra.mxu0 %v6009
        %6109 = vmatprep.subr.mxu0 0.0
        %6110 = vmatpush1.msra.mxu0 %v6010
        %6111 = vmatprep.subr.mxu0 0.0
        %6112 = vmatpush1.msra.mxu0 %v6011
        %6113 = vmatprep.subr.mxu0 0.0
        %6114 = vmatpush1.msra.mxu0 %v6012
        %6115 = vmatprep.subr.mxu0 0.0
        %6116 = vmatpush1.msra.mxu0 %v6013
        %6117 = vmatprep.subr.mxu0 0.0
        %6118 = vmatpush1.msra.mxu0 %v6014
        %6119 = vmatprep.subr.mxu0 0.0
        %6120 = vmatpush1.msra.mxu0 %v6015
        %6121 = vmatprep.subr.mxu0 0.0
        %6122 = vmatpush1.msra.mxu0 %v6016
        %6123 = vmatprep.subr.mxu0 0.0
        %6124 = vmatpush1.msra.mxu0 %v6017
        %6125 = vmatprep.subr.mxu0 0.0
        %6126 = vmatpush1.msra.mxu0 %v6018
        %6127 = vmatprep.subr.mxu0 0.0
        %6128 = vmatpush1.msra.mxu0 %v6019
        %6129 = vmatprep.subr.mxu0 0.0
        %6130 = vmatpush1.msra.mxu0 %v6020
        %6131 = vmatprep.subr.mxu0 0.0
        %6132 = vmatpush1.msra.mxu0 %v6021
        %6133 = vmatprep.subr.mxu0 0.0
        %6134 = vmatpush1.msra.mxu0 %v6022
        %6135 = vmatprep.subr.mxu0 0.0
        %6136 = vmatpush1.msra.mxu0 %v6023
        %6137 = vmatprep.subr.mxu0 0.0
        %6138 = vmatpush1.msra.mxu0 %v6024
        %6139 = vmatprep.subr.mxu0 0.0
        %6140 = vmatpush1.msra.mxu0 %v6025
        %6141 = vmatprep.subr.mxu0 0.0
        %6142 = vmatpush1.msra.mxu0 %v6026
        %6143 = vmatprep.subr.mxu0 0.0
        %6144 = vmatpush1.msra.mxu0 %v6027
        %6145 = vmatprep.subr.mxu0 0.0
        %6146 = vmatpush1.msra.mxu0 %v6028
        %6147 = vmatprep.subr.mxu0 0.0
        %6148 = vmatpush1.msra.mxu0 %v6029
        %6149 = vmatprep.subr.mxu0 0.0
        %6150 = vmatpush1.msra.mxu0 %v6030
        %6151 = vmatprep.subr.mxu0 0.0
        %6152 = vmatpush1.msra.mxu0 0.0
        %6153 = vmatprep.subr.mxu0 0.0
        %6154 = vmatpush1.msra.mxu0 0.0
        %6155 = vmatprep.subr.mxu0 0.0
        %6156 = vmatpush1.msra.mxu0 0.0
        %6157 = vmatprep.subr.mxu0 0.0
        %6158 = vmatpush1.msra.mxu0 0.0
        %6159 = vmatprep.subr.mxu0 0.0
        %6160 = vmatpush1.msra.mxu0 0.0
        %6161 = vmatprep.subr.mxu0 0.0
        %6162 = vmatpush1.msra.mxu0 0.0
        %6163 = vmatprep.subr.mxu0 0.0
        %6164 = vmatpush1.msra.mxu0 0.0
        %6165 = vmatprep.subr.mxu0 0.0
        %6166 = vmatpush1.msra.mxu0 0.0
        %6167 = vmatprep.mubr.f32.mxu0 %v6080
        %6168 = vmatmul.mubr.f32.gmra.mrb[0].mxu0 %v5991
        %v6169 = vpop.f32.mrb[0].mxu0
        %v6170 = vadd.f32 %v6042, %v6169
        %v6171 = vpop.f32.mrb[0].mxu0
        %6172 = vmatprep.mubr.f32.mxu0 %v6083
        %6173 = vmatmul.mubr.f32.gmra.mrb[0].mxu0 %v5993
        %v6174 = vpop.f32.mrb[0].mxu0
        %v6175 = vadd.f32 %v6047, %v6174
        %v6176 = vpop.f32.mrb[0].mxu0
        %6177 = vmatprep.mubr.f32.mxu0 %v6086
        %6178 = vmatmul.mubr.f32.gmra.mrb[0].mxu0 %v5995
        %v6179 = vpop.f32.mrb[0].mxu0
        %v6180 = vadd.f32 %v6052, %v6179
        %v6181 = vpop.f32.mrb[0].mxu0
        %6182 = vmatprep.mubr.f32.mxu0 %v6089
        %6183 = vmatmul.mubr.f32.gmra.mrb[0].mxu0 %v5997
        %v6184 = vpop.f32.mrb[0].mxu0
        %v6185 = vadd.f32 %v6057, %v6184
        %v6186 = vpop.f32.mrb[0].mxu0
        %6187 = vmatprep.mubr.f32.mxu0 %v6092
        %6188 = vmatmul.mubr.f32.gmra.mrb[0].mxu0 %v5999
        %v6189 = vpop.f32.mrb[0].mxu0
        %v6190 = vadd.f32 %v6062, %v6189
        %v6191 = vpop.f32.mrb[0].mxu0
        %6192 = vmatprep.mubr.f32.mxu0 %v6095
        %6193 = vmatmul.mubr.f32.gmra.mrb[0].mxu0 %v6001
        %v6194 = vpop.f32.mrb[0].mxu0
        %v6195 = vadd.f32 %v6067, %v6194
        %v6196 = vpop.f32.mrb[0].mxu0
        %6197 = vmatprep.mubr.f32.mxu0 %v6098
        %6198 = vmatmul.mubr.f32.gmra.mrb[0].mxu0 %v6003
        %v6199 = vpop.f32.mrb[0].mxu0
        %v6200 = vadd.f32 %v6072, %v6199
        %v6201 = vpop.f32.mrb[0].mxu0
        %6202 = vmatprep.mubr.f32.mxu0 %v6101
        %6203 = vmatmul.mubr.f32.gmra.mrb[0].mxu0 %v6005
        %v6204 = vpop.f32.mrb[0].mxu0
        %v6205 = vadd.f32 %v6077, %v6204
        %v6206 = vpop.f32.mrb[0].mxu0
        %6207 = vdwg.mxu0
        %vm6208 = vcmp.ge.f32.partialorder %v6170, 0.0
        %vm6209 = vcmp.ge.f32.partialorder %v6175, 0.0
        %vm6210 = vcmp.ge.f32.partialorder %v6180, 0.0
        %vm6211 = vcmp.ge.f32.partialorder %v6185, 0.0
        %vm6212 = vcmp.ge.f32.partialorder %v6190, 0.0
        %vm6213 = vcmp.ge.f32.partialorder %v6195, 0.0
        %vm6214 = vcmp.ge.f32.partialorder %v6200, 0.0
        %vm6215 = vcmp.ge.f32.partialorder %v6205, 0.0
        %v6216 = vmul.f32 %v6170, 0.01
        %v6217 = vmul.f32 %v6175, 0.01
        %v6218 = vmul.f32 %v6180, 0.01
        %v6219 = vmul.f32 %v6185, 0.01
        %v6220 = vmul.f32 %v6190, 0.01
        %v6221 = vmul.f32 %v6195, 0.01
        %v6222 = vmul.f32 %v6200, 0.01
        %v6223 = vmul.f32 %v6205, 0.01
        %v6224 = vsel %vm6208, %v6170, %v6216
        %v6225 = vsel %vm6209, %v6175, %v6217
        %v6226 = vsel %vm6210, %v6180, %v6218
        %v6227 = vsel %vm6211, %v6185, %v6219
        %v6228 = vsel %vm6212, %v6190, %v6220
        %v6229 = vsel %vm6213, %v6195, %v6221
        %v6230 = vsel %vm6214, %v6200, %v6222
        %v6231 = vsel %vm6215, %v6205, %v6223
        %6232 = vst [vmem:[#allocation2 + $0x8] sm:$0xff] %v6224
        %6233 = vst [vmem:[#allocation2 + $0x20] sm:$0xff] %v6225
        %6234 = vst [vmem:[#allocation2 + $0x38] sm:$0xff] %v6226
        %6235 = vst [vmem:[#allocation2 + $0x50] sm:$0xff] %v6227
        %6236 = vst [vmem:[#allocation2 + $0x68] sm:$0xff] %v6228
        %6237 = vst [vmem:[#allocation2 + $0x80] sm:$0xff] %v6229
        %6238 = vst [vmem:[#allocation2 + $0x98] sm:$0xff] %v6230
        %6239 = vst [vmem:[#allocation2 + $0xb0] sm:$0xff] %v6231
        %v6240 = vld [vmem:[#allocation2] sm:$0xff]
        %v6241 = vld [vmem:[#allocation2 + $0x8] sm:$0xff]
        %v6242 = vld [vmem:[#allocation2 + $0x18] sm:$0xff]
        %v6243 = vld [vmem:[#allocation2 + $0x20] sm:$0xff]
        %v6244 = vld [vmem:[#allocation2 + $0x30] sm:$0xff]
        %v6245 = vld [vmem:[#allocation2 + $0x38] sm:$0xff]
        %v6246 = vld [vmem:[#allocation2 + $0x48] sm:$0xff]
        %v6247 = vld [vmem:[#allocation2 + $0x50] sm:$0xff]
        %v6248 = vld [vmem:[#allocation2 + $0x60] sm:$0xff]
        %v6249 = vld [vmem:[#allocation2 + $0x68] sm:$0xff]
        %v6250 = vld [vmem:[#allocation2 + $0x78] sm:$0xff]
        %v6251 = vld [vmem:[#allocation2 + $0x80] sm:$0xff]
        %v6252 = vld [vmem:[#allocation2 + $0x90] sm:$0xff]
        %v6253 = vld [vmem:[#allocation2 + $0x98] sm:$0xff]
        %v6254 = vld [vmem:[#allocation2 + $0xa8] sm:$0xff]
        %v6255 = vld [vmem:[#allocation2 + $0xb0] sm:$0xff]
        %6272 = vrot.lane.b32.xlu0 %v6240, 4
        %v6273 = vpop.permute.xlu0 %6272
        %6274 = vrot.lane.b32.xlu0 %v6241, 4
        %v6275 = vpop.permute.xlu0 %6274
        %6276 = vrot.lane.b32.xlu0 %v6242, 4
        %v6277 = vpop.permute.xlu0 %6276
        %6278 = vrot.lane.b32.xlu0 %v6243, 4
        %v6279 = vpop.permute.xlu0 %6278
        %6280 = vrot.lane.b32.xlu0 %v6244, 4
        %v6281 = vpop.permute.xlu0 %6280
        %6282 = vrot.lane.b32.xlu0 %v6245, 4
        %v6283 = vpop.permute.xlu0 %6282
        %6284 = vrot.lane.b32.xlu0 %v6246, 4
        %v6285 = vpop.permute.xlu0 %6284
        %6286 = vrot.lane.b32.xlu0 %v6247, 4
        %v6287 = vpop.permute.xlu0 %6286
        %6288 = vrot.lane.b32.xlu0 %v6248, 4
        %v6289 = vpop.permute.xlu0 %6288
        %6290 = vrot.lane.b32.xlu0 %v6249, 4
        %v6291 = vpop.permute.xlu0 %6290
        %6292 = vrot.lane.b32.xlu0 %v6250, 4
        %v6293 = vpop.permute.xlu0 %6292
        %6294 = vrot.lane.b32.xlu0 %v6251, 4
        %v6295 = vpop.permute.xlu0 %6294
        %6296 = vrot.lane.b32.xlu0 %v6252, 4
        %v6297 = vpop.permute.xlu0 %6296
        %6298 = vrot.lane.b32.xlu0 %v6253, 4
        %v6299 = vpop.permute.xlu0 %6298
        %6300 = vrot.lane.b32.xlu0 %v6254, 4
        %v6301 = vpop.permute.xlu0 %6300
        %6302 = vrot.lane.b32.xlu0 %v6255, 4
        %v6303 = vpop.permute.xlu0 %6302
        %v6304 = vsel %vm1657, %v6273, %v6275
        %v6305 = vsel %vm1657, %v6277, %v6279
        %v6306 = vsel %vm1657, %v6281, %v6283
        %v6307 = vsel %vm1657, %v6285, %v6287
        %v6308 = vsel %vm1657, %v6289, %v6291
        %v6309 = vsel %vm1657, %v6293, %v6295
        %v6310 = vsel %vm1657, %v6297, %v6299
        %v6311 = vsel %vm1657, %v6301, %v6303
        %6320 = vst [vmem:[#allocation3] sm:$0xff] %v6304
        %6321 = vst [vmem:[#allocation3 + $0x8] sm:$0xff] %v6305
        %6322 = vst [vmem:[#allocation3 + $0x10] sm:$0xff] %v6306
        %6323 = vst [vmem:[#allocation3 + $0x18] sm:$0xff] %v6307
        %6324 = vst [vmem:[#allocation3 + $0x20] sm:$0xff] %v6308
        %6325 = vst [vmem:[#allocation3 + $0x28] sm:$0xff] %v6309
        %6326 = vst [vmem:[#allocation3 + $0x30] sm:$0xff] %v6310
        %6327 = vst [vmem:[#allocation3 + $0x38] sm:$0xff] %v6311
        %v6328 = vld [vmem:[#allocation2 + $0x8] sm:$0xff]
        %v6329 = vld [vmem:[#allocation2 + $0x20] sm:$0xff]
        %v6330 = vld [vmem:[#allocation2 + $0x38] sm:$0xff]
        %v6331 = vld [vmem:[#allocation2 + $0x50] sm:$0xff]
        %v6332 = vld [vmem:[#allocation2 + $0x68] sm:$0xff]
        %v6333 = vld [vmem:[#allocation2 + $0x80] sm:$0xff]
        %v6334 = vld [vmem:[#allocation2 + $0x98] sm:$0xff]
        %v6335 = vld [vmem:[#allocation2 + $0xb0] sm:$0xff]
        %6336 = vst [vmem:[#allocation3 + $0x40] sm:$0xff] %v6328
        %6337 = vst [vmem:[#allocation3 + $0x48] sm:$0xff] %v6329
        %6338 = vst [vmem:[#allocation3 + $0x50] sm:$0xff] %v6330
        %6339 = vst [vmem:[#allocation3 + $0x58] sm:$0xff] %v6331
        %6340 = vst [vmem:[#allocation3 + $0x60] sm:$0xff] %v6332
        %6341 = vst [vmem:[#allocation3 + $0x68] sm:$0xff] %v6333
        %6342 = vst [vmem:[#allocation3 + $0x70] sm:$0xff] %v6334
        %6343 = vst [vmem:[#allocation3 + $0x78] sm:$0xff] %v6335
        %v6344 = vld [vmem:[#allocation2 + $0x8] sm:$0xff]
        %v6345 = vld [vmem:[#allocation2 + $0x10] sm:$0xff]
        %v6346 = vld [vmem:[#allocation2 + $0x20] sm:$0xff]
        %v6347 = vld [vmem:[#allocation2 + $0x28] sm:$0xff]
        %v6348 = vld [vmem:[#allocation2 + $0x38] sm:$0xff]
        %v6349 = vld [vmem:[#allocation2 + $0x40] sm:$0xff]
        %v6350 = vld [vmem:[#allocation2 + $0x50] sm:$0xff]
        %v6351 = vld [vmem:[#allocation2 + $0x58] sm:$0xff]
        %v6352 = vld [vmem:[#allocation2 + $0x68] sm:$0xff]
        %v6353 = vld [vmem:[#allocation2 + $0x70] sm:$0xff]
        %v6354 = vld [vmem:[#allocation2 + $0x80] sm:$0xff]
        %v6355 = vld [vmem:[#allocation2 + $0x88] sm:$0xff]
        %v6356 = vld [vmem:[#allocation2 + $0x98] sm:$0xff]
        %v6357 = vld [vmem:[#allocation2 + $0xa0] sm:$0xff]
        %v6358 = vld [vmem:[#allocation2 + $0xb0] sm:$0xff]
        %v6359 = vld [vmem:[#allocation2 + $0xb8] sm:$0xff]
        %6376 = vrot.lane.b32.xlu0 %v6344, 124
        %v6377 = vpop.permute.xlu0 %6376
        %6378 = vrot.lane.b32.xlu0 %v6345, 124
        %v6379 = vpop.permute.xlu0 %6378
        %6380 = vrot.lane.b32.xlu0 %v6346, 124
        %v6381 = vpop.permute.xlu0 %6380
        %6382 = vrot.lane.b32.xlu0 %v6347, 124
        %v6383 = vpop.permute.xlu0 %6382
        %6384 = vrot.lane.b32.xlu0 %v6348, 124
        %v6385 = vpop.permute.xlu0 %6384
        %6386 = vrot.lane.b32.xlu0 %v6349, 124
        %v6387 = vpop.permute.xlu0 %6386
        %6388 = vrot.lane.b32.xlu0 %v6350, 124
        %v6389 = vpop.permute.xlu0 %6388
        %6390 = vrot.lane.b32.xlu0 %v6351, 124
        %v6391 = vpop.permute.xlu0 %6390
        %6392 = vrot.lane.b32.xlu0 %v6352, 124
        %v6393 = vpop.permute.xlu0 %6392
        %6394 = vrot.lane.b32.xlu0 %v6353, 124
        %v6395 = vpop.permute.xlu0 %6394
        %6396 = vrot.lane.b32.xlu0 %v6354, 124
        %v6397 = vpop.permute.xlu0 %6396
        %6398 = vrot.lane.b32.xlu0 %v6355, 124
        %v6399 = vpop.permute.xlu0 %6398
        %6400 = vrot.lane.b32.xlu0 %v6356, 124
        %v6401 = vpop.permute.xlu0 %6400
        %6402 = vrot.lane.b32.xlu0 %v6357, 124
        %v6403 = vpop.permute.xlu0 %6402
        %6404 = vrot.lane.b32.xlu0 %v6358, 124
        %v6405 = vpop.permute.xlu0 %6404
        %6406 = vrot.lane.b32.xlu0 %v6359, 124
        %v6407 = vpop.permute.xlu0 %6406
        %v6408 = vsel %vm3138, %v6377, %v6379
        %v6409 = vsel %vm3138, %v6381, %v6383
        %v6410 = vsel %vm3138, %v6385, %v6387
        %v6411 = vsel %vm3138, %v6389, %v6391
        %v6412 = vsel %vm3138, %v6393, %v6395
        %v6413 = vsel %vm3138, %v6397, %v6399
        %v6414 = vsel %vm3138, %v6401, %v6403
        %v6415 = vsel %vm3138, %v6405, %v6407
        %6424 = vst [vmem:[#allocation3 + $0x80] sm:$0xff] %v6408
        %6425 = vst [vmem:[#allocation3 + $0x88] sm:$0xff] %v6409
        %6426 = vst [vmem:[#allocation3 + $0x90] sm:$0xff] %v6410
        %6427 = vst [vmem:[#allocation3 + $0x98] sm:$0xff] %v6411
        %6428 = vst [vmem:[#allocation3 + $0xa0] sm:$0xff] %v6412
        %6429 = vst [vmem:[#allocation3 + $0xa8] sm:$0xff] %v6413
        %6430 = vst [vmem:[#allocation3 + $0xb0] sm:$0xff] %v6414
        %6431 = vst [vmem:[#allocation3 + $0xb8] sm:$0xff] %v6415
        %v6432 = vld [vmem:[%s15] sm:$0xff]
        %v6433 = vld [vmem:[%s15 + $0x8] sm:$0xff]
        %v6434 = vld [vmem:[%s15 + $0x10] sm:$0xff]
        %v6435 = vld [vmem:[%s15 + $0x18] sm:$0xff]
        %v6436 = vld [vmem:[%s15 + $0x20] sm:$0xff]
        %v6437 = vld [vmem:[%s15 + $0x28] sm:$0xff]
        %v6438 = vld [vmem:[%s15 + $0x30] sm:$0xff]
        %v6439 = vld [vmem:[%s15 + $0x38] sm:$0xff]
        %v6440 = vld [vmem:[%s15 + $0x40] sm:$0xff]
        %v6441 = vld [vmem:[%s15 + $0x48] sm:$0xff]
        %v6442 = vld [vmem:[%s15 + $0x50] sm:$0xff]
        %v6443 = vld [vmem:[%s15 + $0x58] sm:$0xff]
        %v6444 = vld [vmem:[%s15 + $0x60] sm:$0xff]
        %v6445 = vld [vmem:[%s15 + $0x68] sm:$0xff]
        %v6446 = vld [vmem:[%s15 + $0x70] sm:$0xff]
        %v6447 = vld [vmem:[%s15 + $0x78] sm:$0xff]
        %v6448 = vld [vmem:[#allocation3] sm:$0xff]
        %v6449 = vld [vmem:[#allocation3 + $0x8] sm:$0xff]
        %v6450 = vld [vmem:[#allocation3 + $0x10] sm:$0xff]
        %v6451 = vld [vmem:[#allocation3 + $0x18] sm:$0xff]
        %v6452 = vld [vmem:[#allocation3 + $0x20] sm:$0xff]
        %v6453 = vld [vmem:[#allocation3 + $0x28] sm:$0xff]
        %v6454 = vld [vmem:[#allocation3 + $0x30] sm:$0xff]
        %v6455 = vld [vmem:[#allocation3 + $0x38] sm:$0xff]
        %v6456 = vld [vmem:[#allocation3 + $0x40] sm:$0xff]
        %v6457 = vld [vmem:[#allocation3 + $0x48] sm:$0xff]
        %v6458 = vld [vmem:[#allocation3 + $0x50] sm:$0xff]
        %v6459 = vld [vmem:[#allocation3 + $0x58] sm:$0xff]
        %v6460 = vld [vmem:[#allocation3 + $0x60] sm:$0xff]
        %v6461 = vld [vmem:[#allocation3 + $0x68] sm:$0xff]
        %v6462 = vld [vmem:[#allocation3 + $0x70] sm:$0xff]
        %v6463 = vld [vmem:[#allocation3 + $0x78] sm:$0xff]
        %v6464 = vld [vmem:[#allocation3 + $0x80] sm:$0xff]
        %v6465 = vld [vmem:[#allocation3 + $0x88] sm:$0xff]
        %v6466 = vld [vmem:[#allocation3 + $0x90] sm:$0xff]
        %v6467 = vld [vmem:[#allocation3 + $0x98] sm:$0xff]
        %v6468 = vld [vmem:[#allocation3 + $0xa0] sm:$0xff]
        %v6469 = vld [vmem:[#allocation3 + $0xa8] sm:$0xff]
        %v6470 = vld [vmem:[#allocation3 + $0xb0] sm:$0xff]
        %v6471 = vld [vmem:[#allocation3 + $0xb8] sm:$0xff]
        %v6472 = vld [vmem:[%s16] sm:$0xff]
        %v6473 = vld [vmem:[%s16 + $0x8] sm:$0xff]
        %v6474 = vld [vmem:[%s16 + $0x10] sm:$0xff]
        %v6475 = vld [vmem:[%s16 + $0x18] sm:$0xff]
        %v6476 = vld [vmem:[%s16 + $0x20] sm:$0xff]
        %v6477 = vld [vmem:[%s16 + $0x28] sm:$0xff]
        %v6478 = vld [vmem:[%s16 + $0x30] sm:$0xff]
        %v6479 = vld [vmem:[%s16 + $0x38] sm:$0xff]
        %6481 = vset.pattern.permute.xlu0 0
        %6482 = vperm.xlu0 %6481, %v6472
        %v6483 = vpop.permute.xlu0 %6482
        %6486 = vset.pattern.permute.xlu0 0
        %6487 = vperm.xlu0 %6486, %v6473
        %v6488 = vpop.permute.xlu0 %6487
        %6491 = vset.pattern.permute.xlu0 0
        %6492 = vperm.xlu0 %6491, %v6474
        %v6493 = vpop.permute.xlu0 %6492
        %6496 = vset.pattern.permute.xlu0 0
        %6497 = vperm.xlu0 %6496, %v6475
        %v6498 = vpop.permute.xlu0 %6497
        %6501 = vset.pattern.permute.xlu0 0
        %6502 = vperm.xlu0 %6501, %v6476
        %v6503 = vpop.permute.xlu0 %6502
        %6506 = vset.pattern.permute.xlu0 0
        %6507 = vperm.xlu0 %6506, %v6477
        %v6508 = vpop.permute.xlu0 %6507
        %6511 = vset.pattern.permute.xlu0 0
        %6512 = vperm.xlu0 %6511, %v6478
        %v6513 = vpop.permute.xlu0 %6512
        %6516 = vset.pattern.permute.xlu0 0
        %6517 = vperm.xlu0 %6516, %v6479
        %v6518 = vpop.permute.xlu0 %6517
        %v6521 = vsel %vm604, %v6433, 0
        %v6524 = vsel %vm604, %v6435, 0
        %v6527 = vsel %vm604, %v6437, 0
        %v6530 = vsel %vm604, %v6439, 0
        %v6533 = vsel %vm604, %v6441, 0
        %v6536 = vsel %vm604, %v6443, 0
        %v6539 = vsel %vm604, %v6445, 0
        %v6542 = vsel %vm604, %v6447, 0
        %6544 = vmatprep.subr.mxu0 0.0
        %6545 = vmatpush1.msra.mxu0 %v6448
        %6546 = vmatprep.subr.mxu0 0.0
        %6547 = vmatpush1.msra.mxu0 %v6449
        %6548 = vmatprep.subr.mxu0 0.0
        %6549 = vmatpush1.msra.mxu0 %v6450
        %6550 = vmatprep.subr.mxu0 0.0
        %6551 = vmatpush1.msra.mxu0 %v6451
        %6552 = vmatprep.subr.mxu0 0.0
        %6553 = vmatpush1.msra.mxu0 %v6452
        %6554 = vmatprep.subr.mxu0 0.0
        %6555 = vmatpush1.msra.mxu0 %v6453
        %6556 = vmatprep.subr.mxu0 0.0
        %6557 = vmatpush1.msra.mxu0 %v6454
        %6558 = vmatprep.subr.mxu0 0.0
        %6559 = vmatpush1.msra.mxu0 %v6455
        %6560 = vmatprep.subr.mxu0 0.0
        %6561 = vmatpush1.msra.mxu0 %v6456
        %6562 = vmatprep.subr.mxu0 0.0
        %6563 = vmatpush1.msra.mxu0 %v6457
        %6564 = vmatprep.subr.mxu0 0.0
        %6565 = vmatpush1.msra.mxu0 %v6458
        %6566 = vmatprep.subr.mxu0 0.0
        %6567 = vmatpush1.msra.mxu0 %v6459
        %6568 = vmatprep.subr.mxu0 0.0
        %6569 = vmatpush1.msra.mxu0 %v6460
        %6570 = vmatprep.subr.mxu0 0.0
        %6571 = vmatpush1.msra.mxu0 %v6461
        %6572 = vmatprep.subr.mxu0 0.0
        %6573 = vmatpush1.msra.mxu0 %v6462
        %6574 = vmatprep.subr.mxu0 0.0
        %6575 = vmatpush1.msra.mxu0 %v6463
        %6576 = vmatprep.subr.mxu0 0.0
        %6577 = vmatpush1.msra.mxu0 %v6464
        %6578 = vmatprep.subr.mxu0 0.0
        %6579 = vmatpush1.msra.mxu0 %v6465
        %6580 = vmatprep.subr.mxu0 0.0
        %6581 = vmatpush1.msra.mxu0 %v6466
        %6582 = vmatprep.subr.mxu0 0.0
        %6583 = vmatpush1.msra.mxu0 %v6467
        %6584 = vmatprep.subr.mxu0 0.0
        %6585 = vmatpush1.msra.mxu0 %v6468
        %6586 = vmatprep.subr.mxu0 0.0
        %6587 = vmatpush1.msra.mxu0 %v6469
        %6588 = vmatprep.subr.mxu0 0.0
        %6589 = vmatpush1.msra.mxu0 %v6470
        %6590 = vmatprep.subr.mxu0 0.0
        %6591 = vmatpush1.msra.mxu0 %v6471
        %6592 = vmatprep.subr.mxu0 0.0
        %6593 = vmatpush1.msra.mxu0 0.0
        %6594 = vmatprep.subr.mxu0 0.0
        %6595 = vmatpush1.msra.mxu0 0.0
        %6596 = vmatprep.subr.mxu0 0.0
        %6597 = vmatpush1.msra.mxu0 0.0
        %6598 = vmatprep.subr.mxu0 0.0
        %6599 = vmatpush1.msra.mxu0 0.0
        %6600 = vmatprep.subr.mxu0 0.0
        %6601 = vmatpush1.msra.mxu0 0.0
        %6602 = vmatprep.subr.mxu0 0.0
        %6603 = vmatpush1.msra.mxu0 0.0
        %6604 = vmatprep.subr.mxu0 0.0
        %6605 = vmatpush1.msra.mxu0 0.0
        %6606 = vmatprep.subr.mxu0 0.0
        %6607 = vmatpush1.msra.mxu0 0.0
        %6608 = vmatprep.mubr.f32.mxu0 %v6521
        %6609 = vmatmul.mubr.f32.gmra.mrb[0].mxu0 %v6432
        %v6610 = vpop.f32.mrb[0].mxu0
        %v6611 = vadd.f32 %v6483, %v6610
        %v6612 = vpop.f32.mrb[0].mxu0
        %6613 = vmatprep.mubr.f32.mxu0 %v6524
        %6614 = vmatmul.mubr.f32.gmra.mrb[0].mxu0 %v6434
        %v6615 = vpop.f32.mrb[0].mxu0
        %v6616 = vadd.f32 %v6488, %v6615
        %v6617 = vpop.f32.mrb[0].mxu0
        %6618 = vmatprep.mubr.f32.mxu0 %v6527
        %6619 = vmatmul.mubr.f32.gmra.mrb[0].mxu0 %v6436
        %v6620 = vpop.f32.mrb[0].mxu0
        %v6621 = vadd.f32 %v6493, %v6620
        %v6622 = vpop.f32.mrb[0].mxu0
        %6623 = vmatprep.mubr.f32.mxu0 %v6530
        %6624 = vmatmul.mubr.f32.gmra.mrb[0].mxu0 %v6438
        %v6625 = vpop.f32.mrb[0].mxu0
        %v6626 = vadd.f32 %v6498, %v6625
        %v6627 = vpop.f32.mrb[0].mxu0
        %6628 = vmatprep.mubr.f32.mxu0 %v6533
        %6629 = vmatmul.mubr.f32.gmra.mrb[0].mxu0 %v6440
        %v6630 = vpop.f32.mrb[0].mxu0
        %v6631 = vadd.f32 %v6503, %v6630
        %v6632 = vpop.f32.mrb[0].mxu0
        %6633 = vmatprep.mubr.f32.mxu0 %v6536
        %6634 = vmatmul.mubr.f32.gmra.mrb[0].mxu0 %v6442
        %v6635 = vpop.f32.mrb[0].mxu0
        %v6636 = vadd.f32 %v6508, %v6635
        %v6637 = vpop.f32.mrb[0].mxu0
        %6638 = vmatprep.mubr.f32.mxu0 %v6539
        %6639 = vmatmul.mubr.f32.gmra.mrb[0].mxu0 %v6444
        %v6640 = vpop.f32.mrb[0].mxu0
        %v6641 = vadd.f32 %v6513, %v6640
        %v6642 = vpop.f32.mrb[0].mxu0
        %6643 = vmatprep.mubr.f32.mxu0 %v6542
        %6644 = vmatmul.mubr.f32.gmra.mrb[0].mxu0 %v6446
        %v6645 = vpop.f32.mrb[0].mxu0
        %v6646 = vadd.f32 %v6518, %v6645
        %v6647 = vpop.f32.mrb[0].mxu0
        %6648 = vdwg.mxu0
        %v6649 = vadd.f32 %v6611, %v5758
        %v6650 = vadd.f32 %v6616, %v5759
        %v6651 = vadd.f32 %v6621, %v5760
        %v6652 = vadd.f32 %v6626, %v5761
        %v6653 = vadd.f32 %v6631, %v5762
        %v6654 = vadd.f32 %v6636, %v5763
        %v6655 = vadd.f32 %v6641, %v5764
        %v6656 = vadd.f32 %v6646, %v5765
        %vm6657 = vcmp.ge.f32.partialorder %v6649, 0.0
        %vm6658 = vcmp.ge.f32.partialorder %v6650, 0.0
        %vm6659 = vcmp.ge.f32.partialorder %v6651, 0.0
        %vm6660 = vcmp.ge.f32.partialorder %v6652, 0.0
        %vm6661 = vcmp.ge.f32.partialorder %v6653, 0.0
        %vm6662 = vcmp.ge.f32.partialorder %v6654, 0.0
        %vm6663 = vcmp.ge.f32.partialorder %v6655, 0.0
        %vm6664 = vcmp.ge.f32.partialorder %v6656, 0.0
        %v6665 = vmul.f32 %v6649, 0.01
        %v6666 = vmul.f32 %v6650, 0.01
        %v6667 = vmul.f32 %v6651, 0.01
        %v6668 = vmul.f32 %v6652, 0.01
        %v6669 = vmul.f32 %v6653, 0.01
        %v6670 = vmul.f32 %v6654, 0.01
        %v6671 = vmul.f32 %v6655, 0.01
        %v6672 = vmul.f32 %v6656, 0.01
        %v6673 = vsel %vm6657, %v6649, %v6665
        %v6674 = vsel %vm6658, %v6650, %v6666
        %v6675 = vsel %vm6659, %v6651, %v6667
        %v6676 = vsel %vm6660, %v6652, %v6668
        %v6677 = vsel %vm6661, %v6653, %v6669
        %v6678 = vsel %vm6662, %v6654, %v6670
        %v6679 = vsel %vm6663, %v6655, %v6671
        %v6680 = vsel %vm6664, %v6656, %v6672
        %6681 = vst [vmem:[#allocation2 + $0x8] sm:$0xff] %v6673
        %6682 = vst [vmem:[#allocation2 + $0x20] sm:$0xff] %v6674
        %6683 = vst [vmem:[#allocation2 + $0x38] sm:$0xff] %v6675
        %6684 = vst [vmem:[#allocation2 + $0x50] sm:$0xff] %v6676
        %6685 = vst [vmem:[#allocation2 + $0x68] sm:$0xff] %v6677
        %6686 = vst [vmem:[#allocation2 + $0x80] sm:$0xff] %v6678
        %6687 = vst [vmem:[#allocation2 + $0x98] sm:$0xff] %v6679
        %6688 = vst [vmem:[#allocation2 + $0xb0] sm:$0xff] %v6680
        %v6689 = vld [vmem:[#allocation2] sm:$0xff]
        %v6690 = vld [vmem:[#allocation2 + $0x8] sm:$0xff]
        %v6691 = vld [vmem:[#allocation2 + $0x18] sm:$0xff]
        %v6692 = vld [vmem:[#allocation2 + $0x20] sm:$0xff]
        %v6693 = vld [vmem:[#allocation2 + $0x30] sm:$0xff]
        %v6694 = vld [vmem:[#allocation2 + $0x38] sm:$0xff]
        %v6695 = vld [vmem:[#allocation2 + $0x48] sm:$0xff]
        %v6696 = vld [vmem:[#allocation2 + $0x50] sm:$0xff]
        %v6697 = vld [vmem:[#allocation2 + $0x60] sm:$0xff]
        %v6698 = vld [vmem:[#allocation2 + $0x68] sm:$0xff]
        %v6699 = vld [vmem:[#allocation2 + $0x78] sm:$0xff]
        %v6700 = vld [vmem:[#allocation2 + $0x80] sm:$0xff]
        %v6701 = vld [vmem:[#allocation2 + $0x90] sm:$0xff]
        %v6702 = vld [vmem:[#allocation2 + $0x98] sm:$0xff]
        %v6703 = vld [vmem:[#allocation2 + $0xa8] sm:$0xff]
        %v6704 = vld [vmem:[#allocation2 + $0xb0] sm:$0xff]
        %v6705 = vld [vmem:[%s17] sm:$0xff]
        %v6706 = vld [vmem:[%s17 + $0x8] sm:$0xff]
        %v6707 = vld [vmem:[%s17 + $0x10] sm:$0xff]
        %v6708 = vld [vmem:[%s17 + $0x18] sm:$0xff]
        %v6709 = vld [vmem:[%s17 + $0x20] sm:$0xff]
        %v6710 = vld [vmem:[%s17 + $0x28] sm:$0xff]
        %v6711 = vld [vmem:[%s17 + $0x30] sm:$0xff]
        %v6712 = vld [vmem:[%s17 + $0x38] sm:$0xff]
        %6714 = vset.pattern.permute.xlu0 0
        %6715 = vperm.xlu0 %6714, %v6705
        %v6716 = vpop.permute.xlu0 %6715
        %6719 = vset.pattern.permute.xlu0 0
        %6720 = vperm.xlu0 %6719, %v6706
        %v6721 = vpop.permute.xlu0 %6720
        %6724 = vset.pattern.permute.xlu0 0
        %6725 = vperm.xlu0 %6724, %v6707
        %v6726 = vpop.permute.xlu0 %6725
        %6729 = vset.pattern.permute.xlu0 0
        %6730 = vperm.xlu0 %6729, %v6708
        %v6731 = vpop.permute.xlu0 %6730
        %6734 = vset.pattern.permute.xlu0 0
        %6735 = vperm.xlu0 %6734, %v6709
        %v6736 = vpop.permute.xlu0 %6735
        %6739 = vset.pattern.permute.xlu0 0
        %6740 = vperm.xlu0 %6739, %v6710
        %v6741 = vpop.permute.xlu0 %6740
        %6744 = vset.pattern.permute.xlu0 0
        %6745 = vperm.xlu0 %6744, %v6711
        %v6746 = vpop.permute.xlu0 %6745
        %6749 = vset.pattern.permute.xlu0 0
        %6750 = vperm.xlu0 %6749, %v6712
        %v6751 = vpop.permute.xlu0 %6750
        %v6753 = vmul.f32 %v6716, %v6689
        %v6754 = vmul.f32 %v6716, %v6690
        %v6755 = vmul.f32 %v6721, %v6691
        %v6756 = vmul.f32 %v6721, %v6692
        %v6757 = vmul.f32 %v6726, %v6693
        %v6758 = vmul.f32 %v6726, %v6694
        %v6759 = vmul.f32 %v6731, %v6695
        %v6760 = vmul.f32 %v6731, %v6696
        %v6761 = vmul.f32 %v6736, %v6697
        %v6762 = vmul.f32 %v6736, %v6698
        %v6763 = vmul.f32 %v6741, %v6699
        %v6764 = vmul.f32 %v6741, %v6700
        %v6765 = vmul.f32 %v6746, %v6701
        %v6766 = vmul.f32 %v6746, %v6702
        %v6767 = vmul.f32 %v6751, %v6703
        %v6768 = vmul.f32 %v6751, %v6704
        %6769 = vset.pattern.permute.xlu0 1
        %6770 = vperm.xlu0 %6769, %v6705
        %v6771 = vpop.permute.xlu0 %6770
        %6773 = vset.pattern.permute.xlu0 1
        %6774 = vperm.xlu0 %6773, %v6706
        %v6775 = vpop.permute.xlu0 %6774
        %6777 = vset.pattern.permute.xlu0 1
        %6778 = vperm.xlu0 %6777, %v6707
        %v6779 = vpop.permute.xlu0 %6778
        %6781 = vset.pattern.permute.xlu0 1
        %6782 = vperm.xlu0 %6781, %v6708
        %v6783 = vpop.permute.xlu0 %6782
        %6785 = vset.pattern.permute.xlu0 1
        %6786 = vperm.xlu0 %6785, %v6709
        %v6787 = vpop.permute.xlu0 %6786
        %6789 = vset.pattern.permute.xlu0 1
        %6790 = vperm.xlu0 %6789, %v6710
        %v6791 = vpop.permute.xlu0 %6790
        %6793 = vset.pattern.permute.xlu0 1
        %6794 = vperm.xlu0 %6793, %v6711
        %v6795 = vpop.permute.xlu0 %6794
        %6797 = vset.pattern.permute.xlu0 1
        %6798 = vperm.xlu0 %6797, %v6712
        %v6799 = vpop.permute.xlu0 %6798
        %v6801 = vmul.f32 %v6771, %v6689
        %v6802 = vmul.f32 %v6771, %v6690
        %v6803 = vmul.f32 %v6775, %v6691
        %v6804 = vmul.f32 %v6775, %v6692
        %v6805 = vmul.f32 %v6779, %v6693
        %v6806 = vmul.f32 %v6779, %v6694
        %v6807 = vmul.f32 %v6783, %v6695
        %v6808 = vmul.f32 %v6783, %v6696
        %v6809 = vmul.f32 %v6787, %v6697
        %v6810 = vmul.f32 %v6787, %v6698
        %v6811 = vmul.f32 %v6791, %v6699
        %v6812 = vmul.f32 %v6791, %v6700
        %v6813 = vmul.f32 %v6795, %v6701
        %v6814 = vmul.f32 %v6795, %v6702
        %v6815 = vmul.f32 %v6799, %v6703
        %v6816 = vmul.f32 %v6799, %v6704
        %6833 = vrot.lane.b32.xlu0 %v6801, 124
        %v6834 = vpop.permute.xlu0 %6833
        %6835 = vrot.lane.b32.xlu0 %v6802, 124
        %v6836 = vpop.permute.xlu0 %6835
        %6837 = vrot.lane.b32.xlu0 %v6803, 124
        %v6838 = vpop.permute.xlu0 %6837
        %6839 = vrot.lane.b32.xlu0 %v6804, 124
        %v6840 = vpop.permute.xlu0 %6839
        %6841 = vrot.lane.b32.xlu0 %v6805, 124
        %v6842 = vpop.permute.xlu0 %6841
        %6843 = vrot.lane.b32.xlu0 %v6806, 124
        %v6844 = vpop.permute.xlu0 %6843
        %6845 = vrot.lane.b32.xlu0 %v6807, 124
        %v6846 = vpop.permute.xlu0 %6845
        %6847 = vrot.lane.b32.xlu0 %v6808, 124
        %v6848 = vpop.permute.xlu0 %6847
        %6849 = vrot.lane.b32.xlu0 %v6809, 124
        %v6850 = vpop.permute.xlu0 %6849
        %6851 = vrot.lane.b32.xlu0 %v6810, 124
        %v6852 = vpop.permute.xlu0 %6851
        %6853 = vrot.lane.b32.xlu0 %v6811, 124
        %v6854 = vpop.permute.xlu0 %6853
        %6855 = vrot.lane.b32.xlu0 %v6812, 124
        %v6856 = vpop.permute.xlu0 %6855
        %6857 = vrot.lane.b32.xlu0 %v6813, 124
        %v6858 = vpop.permute.xlu0 %6857
        %6859 = vrot.lane.b32.xlu0 %v6814, 124
        %v6860 = vpop.permute.xlu0 %6859
        %6861 = vrot.lane.b32.xlu0 %v6815, 124
        %v6862 = vpop.permute.xlu0 %6861
        %6863 = vrot.lane.b32.xlu0 %v6816, 124
        %v6864 = vpop.permute.xlu0 %6863
        %v6865 = vsel %vm3138, %v6834, %v6836
        %v6866 = vsel %vm3138, %v6838, %v6840
        %v6867 = vsel %vm3138, %v6842, %v6844
        %v6868 = vsel %vm3138, %v6846, %v6848
        %v6869 = vsel %vm3138, %v6850, %v6852
        %v6870 = vsel %vm3138, %v6854, %v6856
        %v6871 = vsel %vm3138, %v6858, %v6860
        %v6872 = vsel %vm3138, %v6862, %v6864
        %v6889 = vadd.f32 %v6753, %v6865
        %v6890 = vadd.f32 %v6754, %v6836
        %v6891 = vadd.f32 %v6755, %v6866
        %v6892 = vadd.f32 %v6756, %v6840
        %v6893 = vadd.f32 %v6757, %v6867
        %v6894 = vadd.f32 %v6758, %v6844
        %v6895 = vadd.f32 %v6759, %v6868
        %v6896 = vadd.f32 %v6760, %v6848
        %v6897 = vadd.f32 %v6761, %v6869
        %v6898 = vadd.f32 %v6762, %v6852
        %v6899 = vadd.f32 %v6763, %v6870
        %v6900 = vadd.f32 %v6764, %v6856
        %v6901 = vadd.f32 %v6765, %v6871
        %v6902 = vadd.f32 %v6766, %v6860
        %v6903 = vadd.f32 %v6767, %v6872
        %v6904 = vadd.f32 %v6768, %v6864
        %6905 = vset.pattern.permute.xlu0 2
        %6906 = vperm.xlu0 %6905, %v6705
        %v6907 = vpop.permute.xlu0 %6906
        %6909 = vset.pattern.permute.xlu0 2
        %6910 = vperm.xlu0 %6909, %v6706
        %v6911 = vpop.permute.xlu0 %6910
        %6913 = vset.pattern.permute.xlu0 2
        %6914 = vperm.xlu0 %6913, %v6707
        %v6915 = vpop.permute.xlu0 %6914
        %6917 = vset.pattern.permute.xlu0 2
        %6918 = vperm.xlu0 %6917, %v6708
        %v6919 = vpop.permute.xlu0 %6918
        %6921 = vset.pattern.permute.xlu0 2
        %6922 = vperm.xlu0 %6921, %v6709
        %v6923 = vpop.permute.xlu0 %6922
        %6925 = vset.pattern.permute.xlu0 2
        %6926 = vperm.xlu0 %6925, %v6710
        %v6927 = vpop.permute.xlu0 %6926
        %6929 = vset.pattern.permute.xlu0 2
        %6930 = vperm.xlu0 %6929, %v6711
        %v6931 = vpop.permute.xlu0 %6930
        %6933 = vset.pattern.permute.xlu0 2
        %6934 = vperm.xlu0 %6933, %v6712
        %v6935 = vpop.permute.xlu0 %6934
        %v6937 = vmul.f32 %v6907, %v6689
        %v6938 = vmul.f32 %v6907, %v6690
        %v6939 = vmul.f32 %v6911, %v6691
        %v6940 = vmul.f32 %v6911, %v6692
        %v6941 = vmul.f32 %v6915, %v6693
        %v6942 = vmul.f32 %v6915, %v6694
        %v6943 = vmul.f32 %v6919, %v6695
        %v6944 = vmul.f32 %v6919, %v6696
        %v6945 = vmul.f32 %v6923, %v6697
        %v6946 = vmul.f32 %v6923, %v6698
        %v6947 = vmul.f32 %v6927, %v6699
        %v6948 = vmul.f32 %v6927, %v6700
        %v6949 = vmul.f32 %v6931, %v6701
        %v6950 = vmul.f32 %v6931, %v6702
        %v6951 = vmul.f32 %v6935, %v6703
        %v6952 = vmul.f32 %v6935, %v6704
        %6969 = vrot.lane.b32.xlu0 %v6937, 120
        %v6970 = vpop.permute.xlu0 %6969
        %6971 = vrot.lane.b32.xlu0 %v6938, 120
        %v6972 = vpop.permute.xlu0 %6971
        %6973 = vrot.lane.b32.xlu0 %v6939, 120
        %v6974 = vpop.permute.xlu0 %6973
        %6975 = vrot.lane.b32.xlu0 %v6940, 120
        %v6976 = vpop.permute.xlu0 %6975
        %6977 = vrot.lane.b32.xlu0 %v6941, 120
        %v6978 = vpop.permute.xlu0 %6977
        %6979 = vrot.lane.b32.xlu0 %v6942, 120
        %v6980 = vpop.permute.xlu0 %6979
        %6981 = vrot.lane.b32.xlu0 %v6943, 120
        %v6982 = vpop.permute.xlu0 %6981
        %6983 = vrot.lane.b32.xlu0 %v6944, 120
        %v6984 = vpop.permute.xlu0 %6983
        %6985 = vrot.lane.b32.xlu0 %v6945, 120
        %v6986 = vpop.permute.xlu0 %6985
        %6987 = vrot.lane.b32.xlu0 %v6946, 120
        %v6988 = vpop.permute.xlu0 %6987
        %6989 = vrot.lane.b32.xlu0 %v6947, 120
        %v6990 = vpop.permute.xlu0 %6989
        %6991 = vrot.lane.b32.xlu0 %v6948, 120
        %v6992 = vpop.permute.xlu0 %6991
        %6993 = vrot.lane.b32.xlu0 %v6949, 120
        %v6994 = vpop.permute.xlu0 %6993
        %6995 = vrot.lane.b32.xlu0 %v6950, 120
        %v6996 = vpop.permute.xlu0 %6995
        %6997 = vrot.lane.b32.xlu0 %v6951, 120
        %v6998 = vpop.permute.xlu0 %6997
        %6999 = vrot.lane.b32.xlu0 %v6952, 120
        %v7000 = vpop.permute.xlu0 %6999
        %v7001 = vsel %vm3227, %v6970, %v6972
        %v7002 = vsel %vm3227, %v6974, %v6976
        %v7003 = vsel %vm3227, %v6978, %v6980
        %v7004 = vsel %vm3227, %v6982, %v6984
        %v7005 = vsel %vm3227, %v6986, %v6988
        %v7006 = vsel %vm3227, %v6990, %v6992
        %v7007 = vsel %vm3227, %v6994, %v6996
        %v7008 = vsel %vm3227, %v6998, %v7000
        %v7025 = vadd.f32 %v6889, %v7001
        %v7026 = vadd.f32 %v6890, %v6972
        %v7027 = vadd.f32 %v6891, %v7002
        %v7028 = vadd.f32 %v6892, %v6976
        %v7029 = vadd.f32 %v6893, %v7003
        %v7030 = vadd.f32 %v6894, %v6980
        %v7031 = vadd.f32 %v6895, %v7004
        %v7032 = vadd.f32 %v6896, %v6984
        %v7033 = vadd.f32 %v6897, %v7005
        %v7034 = vadd.f32 %v6898, %v6988
        %v7035 = vadd.f32 %v6899, %v7006
        %v7036 = vadd.f32 %v6900, %v6992
        %v7037 = vadd.f32 %v6901, %v7007
        %v7038 = vadd.f32 %v6902, %v6996
        %v7039 = vadd.f32 %v6903, %v7008
        %v7040 = vadd.f32 %v6904, %v7000
        %7041 = vset.pattern.permute.xlu0 3
        %7042 = vperm.xlu0 %7041, %v6705
        %v7043 = vpop.permute.xlu0 %7042
        %7045 = vset.pattern.permute.xlu0 3
        %7046 = vperm.xlu0 %7045, %v6706
        %v7047 = vpop.permute.xlu0 %7046
        %7049 = vset.pattern.permute.xlu0 3
        %7050 = vperm.xlu0 %7049, %v6707
        %v7051 = vpop.permute.xlu0 %7050
        %7053 = vset.pattern.permute.xlu0 3
        %7054 = vperm.xlu0 %7053, %v6708
        %v7055 = vpop.permute.xlu0 %7054
        %7057 = vset.pattern.permute.xlu0 3
        %7058 = vperm.xlu0 %7057, %v6709
        %v7059 = vpop.permute.xlu0 %7058
        %7061 = vset.pattern.permute.xlu0 3
        %7062 = vperm.xlu0 %7061, %v6710
        %v7063 = vpop.permute.xlu0 %7062
        %7065 = vset.pattern.permute.xlu0 3
        %7066 = vperm.xlu0 %7065, %v6711
        %v7067 = vpop.permute.xlu0 %7066
        %7069 = vset.pattern.permute.xlu0 3
        %7070 = vperm.xlu0 %7069, %v6712
        %v7071 = vpop.permute.xlu0 %7070
        %v7073 = vmul.f32 %v7043, %v6690
        %v7074 = vmul.f32 %v7047, %v6692
        %v7075 = vmul.f32 %v7051, %v6694
        %v7076 = vmul.f32 %v7055, %v6696
        %v7077 = vmul.f32 %v7059, %v6698
        %v7078 = vmul.f32 %v7063, %v6700
        %v7079 = vmul.f32 %v7067, %v6702
        %v7080 = vmul.f32 %v7071, %v6704
        %7089 = vrot.lane.b32.xlu0 %v7073, 116
        %v7090 = vpop.permute.xlu0 %7089
        %7091 = vrot.lane.b32.xlu0 %v7074, 116
        %v7092 = vpop.permute.xlu0 %7091
        %7093 = vrot.lane.b32.xlu0 %v7075, 116
        %v7094 = vpop.permute.xlu0 %7093
        %7095 = vrot.lane.b32.xlu0 %v7076, 116
        %v7096 = vpop.permute.xlu0 %7095
        %7097 = vrot.lane.b32.xlu0 %v7077, 116
        %v7098 = vpop.permute.xlu0 %7097
        %7099 = vrot.lane.b32.xlu0 %v7078, 116
        %v7100 = vpop.permute.xlu0 %7099
        %7101 = vrot.lane.b32.xlu0 %v7079, 116
        %v7102 = vpop.permute.xlu0 %7101
        %7103 = vrot.lane.b32.xlu0 %v7080, 116
        %v7104 = vpop.permute.xlu0 %7103
        %v7113 = vadd.f32 %v7025, %v7090
        %v7114 = vadd.f32 %v7026, %v7090
        %v7115 = vadd.f32 %v7027, %v7092
        %v7116 = vadd.f32 %v7028, %v7092
        %v7117 = vadd.f32 %v7029, %v7094
        %v7118 = vadd.f32 %v7030, %v7094
        %v7119 = vadd.f32 %v7031, %v7096
        %v7120 = vadd.f32 %v7032, %v7096
        %v7121 = vadd.f32 %v7033, %v7098
        %v7122 = vadd.f32 %v7034, %v7098
        %v7123 = vadd.f32 %v7035, %v7100
        %v7124 = vadd.f32 %v7036, %v7100
        %v7125 = vadd.f32 %v7037, %v7102
        %v7126 = vadd.f32 %v7038, %v7102
        %v7127 = vadd.f32 %v7039, %v7104
        %v7128 = vadd.f32 %v7040, %v7104
        %v7129 = vld [vmem:[#allocation2 + $0x8] sm:$0xff]
        %v7130 = vld [vmem:[#allocation2 + $0x10] sm:$0xff]
        %v7131 = vld [vmem:[#allocation2 + $0x20] sm:$0xff]
        %v7132 = vld [vmem:[#allocation2 + $0x28] sm:$0xff]
        %v7133 = vld [vmem:[#allocation2 + $0x38] sm:$0xff]
        %v7134 = vld [vmem:[#allocation2 + $0x40] sm:$0xff]
        %v7135 = vld [vmem:[#allocation2 + $0x50] sm:$0xff]
        %v7136 = vld [vmem:[#allocation2 + $0x58] sm:$0xff]
        %v7137 = vld [vmem:[#allocation2 + $0x68] sm:$0xff]
        %v7138 = vld [vmem:[#allocation2 + $0x70] sm:$0xff]
        %v7139 = vld [vmem:[#allocation2 + $0x80] sm:$0xff]
        %v7140 = vld [vmem:[#allocation2 + $0x88] sm:$0xff]
        %v7141 = vld [vmem:[#allocation2 + $0x98] sm:$0xff]
        %v7142 = vld [vmem:[#allocation2 + $0xa0] sm:$0xff]
        %v7143 = vld [vmem:[#allocation2 + $0xb0] sm:$0xff]
        %v7144 = vld [vmem:[#allocation2 + $0xb8] sm:$0xff]
        %7145 = vset.pattern.permute.xlu0 4
        %7146 = vperm.xlu0 %7145, %v6705
        %v7147 = vpop.permute.xlu0 %7146
        %7149 = vset.pattern.permute.xlu0 4
        %7150 = vperm.xlu0 %7149, %v6706
        %v7151 = vpop.permute.xlu0 %7150
        %7153 = vset.pattern.permute.xlu0 4
        %7154 = vperm.xlu0 %7153, %v6707
        %v7155 = vpop.permute.xlu0 %7154
        %7157 = vset.pattern.permute.xlu0 4
        %7158 = vperm.xlu0 %7157, %v6708
        %v7159 = vpop.permute.xlu0 %7158
        %7161 = vset.pattern.permute.xlu0 4
        %7162 = vperm.xlu0 %7161, %v6709
        %v7163 = vpop.permute.xlu0 %7162
        %7165 = vset.pattern.permute.xlu0 4
        %7166 = vperm.xlu0 %7165, %v6710
        %v7167 = vpop.permute.xlu0 %7166
        %7169 = vset.pattern.permute.xlu0 4
        %7170 = vperm.xlu0 %7169, %v6711
        %v7171 = vpop.permute.xlu0 %7170
        %7173 = vset.pattern.permute.xlu0 4
        %7174 = vperm.xlu0 %7173, %v6712
        %v7175 = vpop.permute.xlu0 %7174
        %v7177 = vmul.f32 %v7147, %v7129
        %v7178 = vmul.f32 %v7147, %v7130
        %v7179 = vmul.f32 %v7151, %v7131
        %v7180 = vmul.f32 %v7151, %v7132
        %v7181 = vmul.f32 %v7155, %v7133
        %v7182 = vmul.f32 %v7155, %v7134
        %v7183 = vmul.f32 %v7159, %v7135
        %v7184 = vmul.f32 %v7159, %v7136
        %v7185 = vmul.f32 %v7163, %v7137
        %v7186 = vmul.f32 %v7163, %v7138
        %v7187 = vmul.f32 %v7167, %v7139
        %v7188 = vmul.f32 %v7167, %v7140
        %v7189 = vmul.f32 %v7171, %v7141
        %v7190 = vmul.f32 %v7171, %v7142
        %v7191 = vmul.f32 %v7175, %v7143
        %v7192 = vmul.f32 %v7175, %v7144
        %7209 = vrot.lane.b32.xlu0 %v7177, 112
        %v7210 = vpop.permute.xlu0 %7209
        %7211 = vrot.lane.b32.xlu0 %v7178, 112
        %v7212 = vpop.permute.xlu0 %7211
        %7213 = vrot.lane.b32.xlu0 %v7179, 112
        %v7214 = vpop.permute.xlu0 %7213
        %7215 = vrot.lane.b32.xlu0 %v7180, 112
        %v7216 = vpop.permute.xlu0 %7215
        %7217 = vrot.lane.b32.xlu0 %v7181, 112
        %v7218 = vpop.permute.xlu0 %7217
        %7219 = vrot.lane.b32.xlu0 %v7182, 112
        %v7220 = vpop.permute.xlu0 %7219
        %7221 = vrot.lane.b32.xlu0 %v7183, 112
        %v7222 = vpop.permute.xlu0 %7221
        %7223 = vrot.lane.b32.xlu0 %v7184, 112
        %v7224 = vpop.permute.xlu0 %7223
        %7225 = vrot.lane.b32.xlu0 %v7185, 112
        %v7226 = vpop.permute.xlu0 %7225
        %7227 = vrot.lane.b32.xlu0 %v7186, 112
        %v7228 = vpop.permute.xlu0 %7227
        %7229 = vrot.lane.b32.xlu0 %v7187, 112
        %v7230 = vpop.permute.xlu0 %7229
        %7231 = vrot.lane.b32.xlu0 %v7188, 112
        %v7232 = vpop.permute.xlu0 %7231
        %7233 = vrot.lane.b32.xlu0 %v7189, 112
        %v7234 = vpop.permute.xlu0 %7233
        %7235 = vrot.lane.b32.xlu0 %v7190, 112
        %v7236 = vpop.permute.xlu0 %7235
        %7237 = vrot.lane.b32.xlu0 %v7191, 112
        %v7238 = vpop.permute.xlu0 %7237
        %7239 = vrot.lane.b32.xlu0 %v7192, 112
        %v7240 = vpop.permute.xlu0 %7239
        %v7241 = vsel %vm3566, %v7210, %v7212
        %v7242 = vsel %vm3566, %v7214, %v7216
        %v7243 = vsel %vm3566, %v7218, %v7220
        %v7244 = vsel %vm3566, %v7222, %v7224
        %v7245 = vsel %vm3566, %v7226, %v7228
        %v7246 = vsel %vm3566, %v7230, %v7232
        %v7247 = vsel %vm3566, %v7234, %v7236
        %v7248 = vsel %vm3566, %v7238, %v7240
        %v7265 = vadd.f32 %v7113, %v7210
        %v7266 = vadd.f32 %v7114, %v7241
        %v7267 = vadd.f32 %v7115, %v7214
        %v7268 = vadd.f32 %v7116, %v7242
        %v7269 = vadd.f32 %v7117, %v7218
        %v7270 = vadd.f32 %v7118, %v7243
        %v7271 = vadd.f32 %v7119, %v7222
        %v7272 = vadd.f32 %v7120, %v7244
        %v7273 = vadd.f32 %v7121, %v7226
        %v7274 = vadd.f32 %v7122, %v7245
        %v7275 = vadd.f32 %v7123, %v7230
        %v7276 = vadd.f32 %v7124, %v7246
        %v7277 = vadd.f32 %v7125, %v7234
        %v7278 = vadd.f32 %v7126, %v7247
        %v7279 = vadd.f32 %v7127, %v7238
        %v7280 = vadd.f32 %v7128, %v7248
        %7281 = vset.pattern.permute.xlu0 5
        %7282 = vperm.xlu0 %7281, %v6705
        %v7283 = vpop.permute.xlu0 %7282
        %7285 = vset.pattern.permute.xlu0 5
        %7286 = vperm.xlu0 %7285, %v6706
        %v7287 = vpop.permute.xlu0 %7286
        %7289 = vset.pattern.permute.xlu0 5
        %7290 = vperm.xlu0 %7289, %v6707
        %v7291 = vpop.permute.xlu0 %7290
        %7293 = vset.pattern.permute.xlu0 5
        %7294 = vperm.xlu0 %7293, %v6708
        %v7295 = vpop.permute.xlu0 %7294
        %7297 = vset.pattern.permute.xlu0 5
        %7298 = vperm.xlu0 %7297, %v6709
        %v7299 = vpop.permute.xlu0 %7298
        %7301 = vset.pattern.permute.xlu0 5
        %7302 = vperm.xlu0 %7301, %v6710
        %v7303 = vpop.permute.xlu0 %7302
        %7305 = vset.pattern.permute.xlu0 5
        %7306 = vperm.xlu0 %7305, %v6711
        %v7307 = vpop.permute.xlu0 %7306
        %7309 = vset.pattern.permute.xlu0 5
        %7310 = vperm.xlu0 %7309, %v6712
        %v7311 = vpop.permute.xlu0 %7310
        %v7313 = vmul.f32 %v7283, %v7129
        %v7314 = vmul.f32 %v7283, %v7130
        %v7315 = vmul.f32 %v7287, %v7131
        %v7316 = vmul.f32 %v7287, %v7132
        %v7317 = vmul.f32 %v7291, %v7133
        %v7318 = vmul.f32 %v7291, %v7134
        %v7319 = vmul.f32 %v7295, %v7135
        %v7320 = vmul.f32 %v7295, %v7136
        %v7321 = vmul.f32 %v7299, %v7137
        %v7322 = vmul.f32 %v7299, %v7138
        %v7323 = vmul.f32 %v7303, %v7139
        %v7324 = vmul.f32 %v7303, %v7140
        %v7325 = vmul.f32 %v7307, %v7141
        %v7326 = vmul.f32 %v7307, %v7142
        %v7327 = vmul.f32 %v7311, %v7143
        %v7328 = vmul.f32 %v7311, %v7144
        %7345 = vrot.lane.b32.xlu0 %v7313, 108
        %v7346 = vpop.permute.xlu0 %7345
        %7347 = vrot.lane.b32.xlu0 %v7314, 108
        %v7348 = vpop.permute.xlu0 %7347
        %7349 = vrot.lane.b32.xlu0 %v7315, 108
        %v7350 = vpop.permute.xlu0 %7349
        %7351 = vrot.lane.b32.xlu0 %v7316, 108
        %v7352 = vpop.permute.xlu0 %7351
        %7353 = vrot.lane.b32.xlu0 %v7317, 108
        %v7354 = vpop.permute.xlu0 %7353
        %7355 = vrot.lane.b32.xlu0 %v7318, 108
        %v7356 = vpop.permute.xlu0 %7355
        %7357 = vrot.lane.b32.xlu0 %v7319, 108
        %v7358 = vpop.permute.xlu0 %7357
        %7359 = vrot.lane.b32.xlu0 %v7320, 108
        %v7360 = vpop.permute.xlu0 %7359
        %7361 = vrot.lane.b32.xlu0 %v7321, 108
        %v7362 = vpop.permute.xlu0 %7361
        %7363 = vrot.lane.b32.xlu0 %v7322, 108
        %v7364 = vpop.permute.xlu0 %7363
        %7365 = vrot.lane.b32.xlu0 %v7323, 108
        %v7366 = vpop.permute.xlu0 %7365
        %7367 = vrot.lane.b32.xlu0 %v7324, 108
        %v7368 = vpop.permute.xlu0 %7367
        %7369 = vrot.lane.b32.xlu0 %v7325, 108
        %v7370 = vpop.permute.xlu0 %7369
        %7371 = vrot.lane.b32.xlu0 %v7326, 108
        %v7372 = vpop.permute.xlu0 %7371
        %7373 = vrot.lane.b32.xlu0 %v7327, 108
        %v7374 = vpop.permute.xlu0 %7373
        %7375 = vrot.lane.b32.xlu0 %v7328, 108
        %v7376 = vpop.permute.xlu0 %7375
        %v7377 = vsel %vm3655, %v7346, %v7348
        %v7378 = vsel %vm3655, %v7350, %v7352
        %v7379 = vsel %vm3655, %v7354, %v7356
        %v7380 = vsel %vm3655, %v7358, %v7360
        %v7381 = vsel %vm3655, %v7362, %v7364
        %v7382 = vsel %vm3655, %v7366, %v7368
        %v7383 = vsel %vm3655, %v7370, %v7372
        %v7384 = vsel %vm3655, %v7374, %v7376
        %v7401 = vadd.f32 %v7265, %v7346
        %v7402 = vadd.f32 %v7266, %v7377
        %v7403 = vadd.f32 %v7267, %v7350
        %v7404 = vadd.f32 %v7268, %v7378
        %v7405 = vadd.f32 %v7269, %v7354
        %v7406 = vadd.f32 %v7270, %v7379
        %v7407 = vadd.f32 %v7271, %v7358
        %v7408 = vadd.f32 %v7272, %v7380
        %v7409 = vadd.f32 %v7273, %v7362
        %v7410 = vadd.f32 %v7274, %v7381
        %v7411 = vadd.f32 %v7275, %v7366
        %v7412 = vadd.f32 %v7276, %v7382
        %v7413 = vadd.f32 %v7277, %v7370
        %v7414 = vadd.f32 %v7278, %v7383
        %v7415 = vadd.f32 %v7279, %v7374
        %v7416 = vadd.f32 %v7280, %v7384
        %7417 = vset.pattern.permute.xlu0 6
        %7418 = vperm.xlu0 %7417, %v6705
        %v7419 = vpop.permute.xlu0 %7418
        %7421 = vset.pattern.permute.xlu0 6
        %7422 = vperm.xlu0 %7421, %v6706
        %v7423 = vpop.permute.xlu0 %7422
        %7425 = vset.pattern.permute.xlu0 6
        %7426 = vperm.xlu0 %7425, %v6707
        %v7427 = vpop.permute.xlu0 %7426
        %7429 = vset.pattern.permute.xlu0 6
        %7430 = vperm.xlu0 %7429, %v6708
        %v7431 = vpop.permute.xlu0 %7430
        %7433 = vset.pattern.permute.xlu0 6
        %7434 = vperm.xlu0 %7433, %v6709
        %v7435 = vpop.permute.xlu0 %7434
        %7437 = vset.pattern.permute.xlu0 6
        %7438 = vperm.xlu0 %7437, %v6710
        %v7439 = vpop.permute.xlu0 %7438
        %7441 = vset.pattern.permute.xlu0 6
        %7442 = vperm.xlu0 %7441, %v6711
        %v7443 = vpop.permute.xlu0 %7442
        %7445 = vset.pattern.permute.xlu0 6
        %7446 = vperm.xlu0 %7445, %v6712
        %v7447 = vpop.permute.xlu0 %7446
        %v7449 = vmul.f32 %v7419, %v7129
        %v7450 = vmul.f32 %v7419, %v7130
        %v7451 = vmul.f32 %v7423, %v7131
        %v7452 = vmul.f32 %v7423, %v7132
        %v7453 = vmul.f32 %v7427, %v7133
        %v7454 = vmul.f32 %v7427, %v7134
        %v7455 = vmul.f32 %v7431, %v7135
        %v7456 = vmul.f32 %v7431, %v7136
        %v7457 = vmul.f32 %v7435, %v7137
        %v7458 = vmul.f32 %v7435, %v7138
        %v7459 = vmul.f32 %v7439, %v7139
        %v7460 = vmul.f32 %v7439, %v7140
        %v7461 = vmul.f32 %v7443, %v7141
        %v7462 = vmul.f32 %v7443, %v7142
        %v7463 = vmul.f32 %v7447, %v7143
        %v7464 = vmul.f32 %v7447, %v7144
        %7481 = vrot.lane.b32.xlu0 %v7449, 104
        %v7482 = vpop.permute.xlu0 %7481
        %7483 = vrot.lane.b32.xlu0 %v7450, 104
        %v7484 = vpop.permute.xlu0 %7483
        %7485 = vrot.lane.b32.xlu0 %v7451, 104
        %v7486 = vpop.permute.xlu0 %7485
        %7487 = vrot.lane.b32.xlu0 %v7452, 104
        %v7488 = vpop.permute.xlu0 %7487
        %7489 = vrot.lane.b32.xlu0 %v7453, 104
        %v7490 = vpop.permute.xlu0 %7489
        %7491 = vrot.lane.b32.xlu0 %v7454, 104
        %v7492 = vpop.permute.xlu0 %7491
        %7493 = vrot.lane.b32.xlu0 %v7455, 104
        %v7494 = vpop.permute.xlu0 %7493
        %7495 = vrot.lane.b32.xlu0 %v7456, 104
        %v7496 = vpop.permute.xlu0 %7495
        %7497 = vrot.lane.b32.xlu0 %v7457, 104
        %v7498 = vpop.permute.xlu0 %7497
        %7499 = vrot.lane.b32.xlu0 %v7458, 104
        %v7500 = vpop.permute.xlu0 %7499
        %7501 = vrot.lane.b32.xlu0 %v7459, 104
        %v7502 = vpop.permute.xlu0 %7501
        %7503 = vrot.lane.b32.xlu0 %v7460, 104
        %v7504 = vpop.permute.xlu0 %7503
        %7505 = vrot.lane.b32.xlu0 %v7461, 104
        %v7506 = vpop.permute.xlu0 %7505
        %7507 = vrot.lane.b32.xlu0 %v7462, 104
        %v7508 = vpop.permute.xlu0 %7507
        %7509 = vrot.lane.b32.xlu0 %v7463, 104
        %v7510 = vpop.permute.xlu0 %7509
        %7511 = vrot.lane.b32.xlu0 %v7464, 104
        %v7512 = vpop.permute.xlu0 %7511
        %v7513 = vsel %vm3744, %v7482, %v7484
        %v7514 = vsel %vm3744, %v7486, %v7488
        %v7515 = vsel %vm3744, %v7490, %v7492
        %v7516 = vsel %vm3744, %v7494, %v7496
        %v7517 = vsel %vm3744, %v7498, %v7500
        %v7518 = vsel %vm3744, %v7502, %v7504
        %v7519 = vsel %vm3744, %v7506, %v7508
        %v7520 = vsel %vm3744, %v7510, %v7512
        %v7537 = vadd.f32 %v7401, %v7482
        %v7538 = vadd.f32 %v7402, %v7513
        %v7539 = vadd.f32 %v7403, %v7486
        %v7540 = vadd.f32 %v7404, %v7514
        %v7541 = vadd.f32 %v7405, %v7490
        %v7542 = vadd.f32 %v7406, %v7515
        %v7543 = vadd.f32 %v7407, %v7494
        %v7544 = vadd.f32 %v7408, %v7516
        %v7545 = vadd.f32 %v7409, %v7498
        %v7546 = vadd.f32 %v7410, %v7517
        %v7547 = vadd.f32 %v7411, %v7502
        %v7548 = vadd.f32 %v7412, %v7518
        %v7549 = vadd.f32 %v7413, %v7506
        %v7550 = vadd.f32 %v7414, %v7519
        %v7551 = vadd.f32 %v7415, %v7510
        %v7552 = vadd.f32 %v7416, %v7520
        %vm7553 = vcmask 1048480
        %v7554 = vsel %vm7553, %v7537, 0.0
        %v7555 = vsel %vm7553, %v7539, 0.0
        %v7556 = vadd.f32 %v7554, %v7555
        %v7557 = vsel %vm7553, %v7541, 0.0
        %v7558 = vadd.f32 %v7556, %v7557
        %v7559 = vsel %vm7553, %v7543, 0.0
        %v7560 = vadd.f32 %v7558, %v7559
        %v7561 = vsel %vm7553, %v7545, 0.0
        %v7562 = vadd.f32 %v7560, %v7561
        %v7563 = vsel %vm7553, %v7547, 0.0
        %v7564 = vadd.f32 %v7562, %v7563
        %v7565 = vsel %vm7553, %v7549, 0.0
        %v7566 = vadd.f32 %v7564, %v7565
        %v7567 = vsel %vm7553, %v7551, 0.0
        %v7568 = vadd.f32 %v7566, %v7567
        %v7569 = vrot.slane %v7568, 4
        %v7570 = vadd.f32 %v7568, %v7569
        %v7571 = vrot.slane %v7570, 2
        %v7572 = vadd.f32 %v7570, %v7571
        %v7573 = vrot.slane %v7572, 1
        %v7574 = vadd.f32 %v7572, %v7573
        %v7575 = vsel %vm3477, %v7538, 0.0
        %v7576 = vsel %vm3477, %v7540, 0.0
        %v7577 = vadd.f32 %v7575, %v7576
        %v7578 = vsel %vm3477, %v7542, 0.0
        %v7579 = vadd.f32 %v7577, %v7578
        %v7580 = vsel %vm3477, %v7544, 0.0
        %v7581 = vadd.f32 %v7579, %v7580
        %v7582 = vsel %vm3477, %v7546, 0.0
        %v7583 = vadd.f32 %v7581, %v7582
        %v7584 = vsel %vm3477, %v7548, 0.0
        %v7585 = vadd.f32 %v7583, %v7584
        %v7586 = vsel %vm3477, %v7550, 0.0
        %v7587 = vadd.f32 %v7585, %v7586
        %v7588 = vsel %vm3477, %v7552, 0.0
        %v7589 = vadd.f32 %v7587, %v7588
        %v7590 = vrot.slane %v7589, 4
        %v7591 = vadd.f32 %v7589, %v7590
        %v7592 = vrot.slane %v7591, 2
        %v7593 = vadd.f32 %v7591, %v7592
        %v7594 = vrot.slane %v7593, 1
        %v7595 = vadd.f32 %v7593, %v7594
        %v7596 = vld [vmem:[#allocation4] sm:$0x1]
        %7598 = vset.pattern.permute.xlu0 0
        %7599 = vperm.xlu0 %7598, %v7596
        %v7600 = vpop.permute.xlu0 %7599
        %v7602 = vlaneseq
        %v7603 = vshrl.u32 %v7602, 7
        %v7604 = vsub.s32 0, %v7603
        %v7605 = vrot.slane %v7600, %v7604
        %v7606 = vadd.f32 %v7574, %v7605
        %v7607 = vadd.f32 %v7595, %v7605
        %v7608 = vtanh.pop %v7606
        %v7609 = vtanh.pop %v7607
        %7612 = vrot.lane.b32.xlu0 %v7608, 12
        %v7613 = vpop.permute.xlu0 %7612
        %7614 = vrot.lane.b32.xlu0 %v7609, 12
        %v7615 = vpop.permute.xlu0 %7614
        %v7616 = vsel %vm2598, %v7613, %v7615
        %7618 = vst [vmem:[%s596] sm:$0x1] %v7616
        %s7619 = sand.u32 %s447, 1
        %s7620 = scalar_lea.sflag [#allocation6], %s7619
        %s7621 = sand.u32 %s447, 1
        %s7622 = scalar_lea.vmem [#allocation5], %s7621
        // Predicated region
        $region97: #{tpu_custom_call.1} parent=95 // pred_check
          %p7623 = pneg %p457
        $region98: #{tpu_custom_call.1} parent=95 // pred_check_branch
          %7625 = sbr.rel (%p7623) target = $region100
        $region99: #{tpu_custom_call.1} parent=95 // pred_region
          %s7627 = ssub.s32 16, 16
          %7628 = vsyncadd %s7620, %s7627
          %s7629 = smul.addr %s35, 16
          %s7630 = scalar_lea.hbm %s19, %s7629
          %s7632 = sshll.u32 %s7622, 4
          %s7633 = int_to_ptr.vmem [resolvable:$true] %s7632
          %7635 = dma.vmem_to_hbm [thread:$0]  %s7633, 16, %s7630, %s7620
        $region100: #{tpu_custom_call.1} parent=95 // pred_fallthru
          _
      $region96: #{tpu_custom_call.1} parent=5 // pred_fallthru
        _
      %p7636 = scmp.le.s32.totalorder 2, %s30
      // Predicated region
      $region101: #{tpu_custom_call.1} parent=5 // pred_check
        %p7637 = pneg %p7636
      $region102: #{tpu_custom_call.1} parent=5 // pred_check_branch
        %7639 = sbr.rel (%p7637) target = $region104
      $region103: #{tpu_custom_call.1} parent=5 // pred_region
        %s7640 = ssub.s32 %s30, 2
        // Predicated region
        $region105: #{tpu_custom_call.1} parent=103 // pred_check
          %p7641 = pneg %p463
        $region106: #{tpu_custom_call.1} parent=103 // pred_check_branch
          %7643 = sbr.rel (%p7641) target = $region108
        $region107: #{tpu_custom_call.1} parent=103 // pred_region
          %s7644 = sand.u32 %s448, 1
          %s7645 = scalar_lea.sflag [#allocation6], %s7644
          %s7646 = sand.u32 %s448, 1
          %s7647 = scalar_lea.vmem [#allocation5], %s7646
          %7648 = dma.done %s7645, 16
        $region108: #{tpu_custom_call.1} parent=103 // pred_fallthru
          _
      $region104: #{tpu_custom_call.1} parent=5 // pred_fallthru
        _
    $region6: #{tpu_custom_call.1} parent=1 // loop_footer
      %s34 = sadd.s32 1, %s30
    $region7: #{tpu_custom_call.1} parent=1 // loop_footer_branch
      %29 = sbr.rel target = $region3
    $region8: #{tpu_custom_call.1} parent=1 // loop_exit
      _
    %7649 = vsyncpa [#allocation6], 1
    %s7650 = scalar_lea.sflag [#allocation6], 1
    %7651 = vsyncpa %s7650, 1

</llo_original>
